<compile_context>
chip_gen: v7x
topology: tpu7x:2x2x1
jax: 0.10.0
libtpu: 0.0.40
codegen_flags: <defaults>
</compile_context>

<pallas_src>
import functools
import math

import jax
import jax.numpy as jnp
from jax.experimental import pallas as pl
from jax.experimental.pallas import tpu as pltpu

# --- module hyperparameters (instance we implement) -------------------------
IN_CHANNELS = 8
OUT_CHANNELS = 16
KERNEL_SIZE = 3
STRIDE = 2
PADDING = 1
OUTPUT_PADDING = 1
PW_PAD = 1  # pointwise ConvTranspose2d uses padding=1 with k=1 -> crops border by 1


def _fused_sep_convt_kernel(wdw_ref, wpw_ref, x_ref, o_ref, *, C, Cout, K, H, W):
    """Fused depthwise transpose-conv (k=3,s=2,p=1,op=1) + 1px crop + 1x1 channel mix.

    wdw_ref: (C, K*K)   depthwise taps, SMEM (scalar prefetch)
    wpw_ref: (C, Cout)  pointwise weights, SMEM (scalar prefetch)
    x_ref  : (1, C, H, W)        one batch element, NCHW, VMEM
    o_ref  : (1, Cout, H2, W2)   output, NCHW, VMEM
    """
    Hh, Wh = H - 1, W - 1          # polyphase (quadrant) plane size
    H2, W2 = 2 * Hh, 2 * Wh        # cropped output spatial size
    f32 = jnp.float32

    # 0/1 spread matrices (from 2-D iota).  Right-multiplying a (Hh, Wh) parity plane by
    # S0/S1 scatters its columns into the even/odd columns of a (Hh, W2) row-slab;
    # left-multiplying by R0/R1 scatters rows into even/odd output rows.  This performs
    # the stride-2 interleave on the MXU with no lane-reshape ops.
    bidx = jax.lax.broadcasted_iota(jnp.int32, (Wh, W2), 0)
    jidx = jax.lax.broadcasted_iota(jnp.int32, (Wh, W2), 1)
    S0 = jnp.where(jidx == 2 * bidx, 1.0, 0.0).astype(f32)       # cols j = 2b
    S1 = jnp.where(jidx == 2 * bidx + 1, 1.0, 0.0).astype(f32)   # cols j = 2b+1
    iidx = jax.lax.broadcasted_iota(jnp.int32, (H2, Hh), 0)
    aidx = jax.lax.broadcasted_iota(jnp.int32, (H2, Hh), 1)
    R0 = jnp.where(iidx == 2 * aidx, 1.0, 0.0).astype(f32)       # rows i = 2a
    R1 = jnp.where(iidx == 2 * aidx + 1, 1.0, 0.0).astype(f32)   # rows i = 2a+1

    def wd(c, kh, kw):                       # depthwise tap (scalar read from SMEM)
        return wdw_ref[c, kh * K + kw]

    def mm(a, b):
        return jnp.dot(a, b, preferred_element_type=f32)

    # --- depthwise transpose conv (polyphase) fused with the 1-px crop, per channel ---
    # Cropped depthwise output dw[i, j] (i = 2a + pa, j = 2b + pb), derived from
    # oh = 2*ih - 1 + kh, ow = 2*iw - 1 + kw and the 1-px crop:
    #   (even, even): x[a+1,b+1]*w00 + x[a+1,b]*w02 + x[a,b+1]*w20 + x[a,b]*w22
    #   (even, odd ): x[a+1,b+1]*w01 + x[a,b+1]*w21
    #   (odd , even): x[a+1,b+1]*w10 + x[a+1,b]*w12
    #   (odd , odd ): x[a+1,b+1]*w11
    dw = []
    for c in range(C):
        xc = x_ref[0, c, :, :].astype(f32)                 # (H, W)
        A = xc[1:, 1:]                                     # x[a+1, b+1]
        B = xc[1:, :-1]                                    # x[a+1, b  ]
        Cc = xc[:-1, 1:]                                   # x[a,   b+1]
        D = xc[:-1, :-1]                                   # x[a,   b  ]

        q_ee = A * wd(c, 0, 0) + B * wd(c, 0, 2) + Cc * wd(c, 2, 0) + D * wd(c, 2, 2)
        q_eo = A * wd(c, 0, 1) + Cc * wd(c, 2, 1)
        q_oe = A * wd(c, 1, 0) + B * wd(c, 1, 2)
        q_oo = A * wd(c, 1, 1)

        t_even = mm(q_ee, S0) + mm(q_eo, S1)               # even output rows, (Hh, W2)
        t_odd = mm(q_oe, S0) + mm(q_oo, S1)                # odd  output rows, (Hh, W2)
        dw.append(mm(R0, t_even) + mm(R1, t_odd))          # (H2, W2), f32

    # --- pointwise 1x1 transpose conv == channel mix (VPU FMAs); store directly NCHW ---
    for co in range(Cout):
        acc = dw[0] * wpw_ref[0, co]
        for c in range(1, C):
            acc = acc + dw[c] * wpw_ref[c, co]
        o_ref[0, co, :, :] = acc.astype(o_ref.dtype)


def separable_conv_transpose2d(x_nchw, w_dw, w_pw):
    """x_nchw: (N, C, H, W); w_dw: (C, 1, K, K) depthwise ConvTranspose2d weight;
       w_pw: (C, Cout, 1, 1) pointwise ConvTranspose2d weight.  Returns NCHW output."""
    N, C, H, W = x_nchw.shape
    Cout = w_pw.shape[1]
    K, S, P, OP = KERNEL_SIZE, STRIDE, PADDING, OUTPUT_PADDING
    # The in-kernel polyphase algebra is specialized to this module instance.
    assert (K, S, P, OP, PW_PAD) == (3, 2, 1, 1, 1)

    H1 = (H - 1) * S - 2 * P + K + OP          # depthwise transpose-conv output size
    W1 = (W - 1) * S - 2 * P + K + OP
    H2 = H1 - 2 * PW_PAD                       # after pointwise (k=1, padding=1) crop
    W2 = W1 - 2 * PW_PAD
    assert H2 == 2 * (H - 1) and W2 == 2 * (W - 1)

    # glue (cheap, contiguous reshapes only -- no transposes / stuffing / padding):
    wdw_flat = w_dw.reshape(C, K * K)          # (C, 9)    -> SMEM via scalar prefetch
    wpw_flat = w_pw.reshape(C, Cout)           # (C, Cout) -> SMEM via scalar prefetch

    kernel = functools.partial(_fused_sep_convt_kernel, C=C, Cout=Cout, K=K, H=H, W=W)
    return pl.pallas_call(
        kernel,
        out_shape=jax.ShapeDtypeStruct((N, Cout, H2, W2), x_nchw.dtype),
        grid_spec=pltpu.PrefetchScalarGridSpec(
            num_scalar_prefetch=2,
            grid=(N,),
            in_specs=[pl.BlockSpec((1, C, H, W), lambda n, *_: (n, 0, 0, 0))],
            out_specs=pl.BlockSpec((1, Cout, H2, W2), lambda n, *_: (n, 0, 0, 0)),
        ),
        compiler_params=pltpu.CompilerParams(dimension_semantics=("parallel",)),
    )(wdw_flat, wpw_flat, x_nchw)


# --- pure-JAX reference (for validation) -------------------------------------
def reference(x_nchw, w_dw, w_pw):
    K, S, P, OP = KERNEL_SIZE, STRIDE, PADDING, OUTPUT_PADDING
    C = x_nchw.shape[1]
    w_flip = w_dw[:, :, ::-1, ::-1]
    y = jax.lax.conv_general_dilated(
        x_nchw, w_flip,
        window_strides=(1, 1),
        padding=[(K - 1 - P, K - 1 - P + OP)] * 2,
        lhs_dilation=(S, S),
        dimension_numbers=("NCHW", "OIHW", "NCHW"),
        feature_group_count=C)
    y = y[:, :, PW_PAD:-PW_PAD, PW_PAD:-PW_PAD]
    return jnp.einsum("nchw,co->nohw", y, w_pw[:, :, 0, 0])


if __name__ == "__main__":
    key = jax.random.PRNGKey(0)
    k1, k2, k3 = jax.random.split(key, 3)

    N, C, H, W = 2, IN_CHANNELS, 8, 8
    x = jax.random.normal(k1, (N, C, H, W), jnp.float32)

    # deterministic parameter init (shapes match nn.ConvTranspose2d weights; bias=False)
    w_dw = jax.random.uniform(k2, (C, 1, KERNEL_SIZE, KERNEL_SIZE),
                              jnp.float32, -1.0, 1.0) / math.sqrt(KERNEL_SIZE * KERNEL_SIZE)
    w_pw = jax.random.uniform(k3, (C, OUT_CHANNELS, 1, 1),
                              jnp.float32, -1.0, 1.0) / math.sqrt(C)

    out = separable_conv_transpose2d(x, w_dw, w_pw)
    out = jax.block_until_ready(out)

    ref = reference(x, w_dw, w_pw)
    assert out.shape == ref.shape, (out.shape, ref.shape)
    assert jnp.allclose(out, ref, atol=2e-2, rtol=2e-2), float(jnp.max(jnp.abs(out - ref)))

    print("KERNEL_OK")
</pallas_src>

<mosaic_0001>
module attributes {stable_mosaic.version = 11 : i64} {
  func.func @_fused_sep_convt_kernel(%arg0: i32, %arg1: memref<8x9xf32, #tpu.memory_space<smem>>, %arg2: memref<8x16xf32, #tpu.memory_space<smem>>, %arg3: memref<1x8x8x8xf32, #tpu.memory_space<vmem>>, %arg4: memref<1x16x14x14xf32, #tpu.memory_space<vmem>>) attributes {dimension_semantics = [#tpu.dimension_semantics<parallel>], iteration_bounds = array<i64: 2>, scalar_prefetch = 2 : i64, scratch_operands = 0 : i64, tpu.core_type = #tpu.core_type<tc>, window_params = [{transform_indices = @transform_0, window_bounds = array<i64: 1, 8, 8, 8>}, {transform_indices = @transform_1, window_bounds = array<i64: 1, 16, 14, 14>}]} {
    %0 = tpu.iota {dimensions = array<i32: 0>} : vector<7x14xi32>
    %1 = tpu.iota {dimensions = array<i32: 1>} : vector<7x14xi32>
    %c2_i32 = arith.constant 2 : i32
    %2 = vector.broadcast %c2_i32 : i32 to vector<7x14xi32>
    %3 = arith.muli %2, %0 : vector<7x14xi32>
    %4 = arith.cmpi eq, %1, %3 : vector<7x14xi32>
    %cst = arith.constant 1.000000e+00 : f32
    %cst_0 = arith.constant 0.000000e+00 : f32
    %5 = vector.broadcast %cst : f32 to vector<7x14xf32>
    %6 = vector.broadcast %cst_0 : f32 to vector<7x14xf32>
    %7 = arith.select %4, %5, %6 : vector<7x14xi1>, vector<7x14xf32>
    %c2_i32_1 = arith.constant 2 : i32
    %8 = vector.broadcast %c2_i32_1 : i32 to vector<7x14xi32>
    %9 = arith.muli %8, %0 : vector<7x14xi32>
    %c1_i32 = arith.constant 1 : i32
    %10 = vector.broadcast %c1_i32 : i32 to vector<7x14xi32>
    %11 = arith.addi %9, %10 : vector<7x14xi32>
    %12 = arith.cmpi eq, %1, %11 : vector<7x14xi32>
    %cst_2 = arith.constant 1.000000e+00 : f32
    %cst_3 = arith.constant 0.000000e+00 : f32
    %13 = vector.broadcast %cst_2 : f32 to vector<7x14xf32>
    %14 = vector.broadcast %cst_3 : f32 to vector<7x14xf32>
    %15 = arith.select %12, %13, %14 : vector<7x14xi1>, vector<7x14xf32>
    %16 = tpu.iota {dimensions = array<i32: 0>} : vector<14x7xi32>
    %17 = tpu.iota {dimensions = array<i32: 1>} : vector<14x7xi32>
    %c2_i32_4 = arith.constant 2 : i32
    %18 = vector.broadcast %c2_i32_4 : i32 to vector<14x7xi32>
    %19 = arith.muli %18, %17 : vector<14x7xi32>
    %20 = arith.cmpi eq, %16, %19 : vector<14x7xi32>
    %cst_5 = arith.constant 1.000000e+00 : f32
    %cst_6 = arith.constant 0.000000e+00 : f32
    %21 = vector.broadcast %cst_5 : f32 to vector<14x7xf32>
    %22 = vector.broadcast %cst_6 : f32 to vector<14x7xf32>
    %23 = arith.select %20, %21, %22 : vector<14x7xi1>, vector<14x7xf32>
    %c2_i32_7 = arith.constant 2 : i32
    %24 = vector.broadcast %c2_i32_7 : i32 to vector<14x7xi32>
    %25 = arith.muli %24, %17 : vector<14x7xi32>
    %c1_i32_8 = arith.constant 1 : i32
    %26 = vector.broadcast %c1_i32_8 : i32 to vector<14x7xi32>
    %27 = arith.addi %25, %26 : vector<14x7xi32>
    %28 = arith.cmpi eq, %16, %27 : vector<14x7xi32>
    %cst_9 = arith.constant 1.000000e+00 : f32
    %cst_10 = arith.constant 0.000000e+00 : f32
    %29 = vector.broadcast %cst_9 : f32 to vector<14x7xf32>
    %30 = vector.broadcast %cst_10 : f32 to vector<14x7xf32>
    %31 = arith.select %28, %29, %30 : vector<14x7xi1>, vector<14x7xf32>
    %c0 = arith.constant 0 : index
    %c0_11 = arith.constant 0 : index
    %c0_12 = arith.constant 0 : index
    %c0_13 = arith.constant 0 : index
    %32 = vector.load %arg3[%c0, %c0_11, %c0_12, %c0_13] : memref<1x8x8x8xf32, #tpu.memory_space<vmem>>, vector<1x1x8x8xf32>
    %33 = vector.shape_cast %32 : vector<1x1x8x8xf32> to vector<8x8xf32>
    %34 = vector.extract_strided_slice %33 {offsets = [1, 1], sizes = [7, 7], strides = [1, 1]} : vector<8x8xf32> to vector<7x7xf32>
    %35 = vector.extract_strided_slice %33 {offsets = [1, 0], sizes = [7, 7], strides = [1, 1]} : vector<8x8xf32> to vector<7x7xf32>
    %36 = vector.extract_strided_slice %33 {offsets = [0, 1], sizes = [7, 7], strides = [1, 1]} : vector<8x8xf32> to vector<7x7xf32>
    %37 = vector.extract_strided_slice %33 {offsets = [0, 0], sizes = [7, 7], strides = [1, 1]} : vector<8x8xf32> to vector<7x7xf32>
    %c0_14 = arith.constant 0 : index
    %c0_15 = arith.constant 0 : index
    %38 = memref.load %arg1[%c0_14, %c0_15] : memref<8x9xf32, #tpu.memory_space<smem>>
    %39 = vector.broadcast %38 : f32 to vector<7x7xf32>
    %40 = arith.mulf %34, %39 : vector<7x7xf32>
    %c0_16 = arith.constant 0 : index
    %c2 = arith.constant 2 : index
    %41 = memref.load %arg1[%c0_16, %c2] : memref<8x9xf32, #tpu.memory_space<smem>>
    %42 = vector.broadcast %41 : f32 to vector<7x7xf32>
    %43 = arith.mulf %35, %42 : vector<7x7xf32>
    %44 = arith.addf %40, %43 : vector<7x7xf32>
    %c0_17 = arith.constant 0 : index
    %c6 = arith.constant 6 : index
    %45 = memref.load %arg1[%c0_17, %c6] : memref<8x9xf32, #tpu.memory_space<smem>>
    %46 = vector.broadcast %45 : f32 to vector<7x7xf32>
    %47 = arith.mulf %36, %46 : vector<7x7xf32>
    %48 = arith.addf %44, %47 : vector<7x7xf32>
    %c0_18 = arith.constant 0 : index
    %c8 = arith.constant 8 : index
    %49 = memref.load %arg1[%c0_18, %c8] : memref<8x9xf32, #tpu.memory_space<smem>>
    %50 = vector.broadcast %49 : f32 to vector<7x7xf32>
    %51 = arith.mulf %37, %50 : vector<7x7xf32>
    %52 = arith.addf %48, %51 : vector<7x7xf32>
    %c0_19 = arith.constant 0 : index
    %c1 = arith.constant 1 : index
    %53 = memref.load %arg1[%c0_19, %c1] : memref<8x9xf32, #tpu.memory_space<smem>>
    %54 = vector.broadcast %53 : f32 to vector<7x7xf32>
    %55 = arith.mulf %34, %54 : vector<7x7xf32>
    %c0_20 = arith.constant 0 : index
    %c7 = arith.constant 7 : index
    %56 = memref.load %arg1[%c0_20, %c7] : memref<8x9xf32, #tpu.memory_space<smem>>
    %57 = vector.broadcast %56 : f32 to vector<7x7xf32>
    %58 = arith.mulf %36, %57 : vector<7x7xf32>
    %59 = arith.addf %55, %58 : vector<7x7xf32>
    %c0_21 = arith.constant 0 : index
    %c3 = arith.constant 3 : index
    %60 = memref.load %arg1[%c0_21, %c3] : memref<8x9xf32, #tpu.memory_space<smem>>
    %61 = vector.broadcast %60 : f32 to vector<7x7xf32>
    %62 = arith.mulf %34, %61 : vector<7x7xf32>
    %c0_22 = arith.constant 0 : index
    %c5 = arith.constant 5 : index
    %63 = memref.load %arg1[%c0_22, %c5] : memref<8x9xf32, #tpu.memory_space<smem>>
    %64 = vector.broadcast %63 : f32 to vector<7x7xf32>
    %65 = arith.mulf %35, %64 : vector<7x7xf32>
    %66 = arith.addf %62, %65 : vector<7x7xf32>
    %c0_23 = arith.constant 0 : index
    %c4 = arith.constant 4 : index
    %67 = memref.load %arg1[%c0_23, %c4] : memref<8x9xf32, #tpu.memory_space<smem>>
    %68 = vector.broadcast %67 : f32 to vector<7x7xf32>
    %69 = arith.mulf %34, %68 : vector<7x7xf32>
    %cst_24 = arith.constant dense<0.000000e+00> : vector<7x14xf32>
    %70 = tpu.matmul %52, %7, %cst_24 {dimension_numbers = #tpu.dot_dimension_numbers<[1], [0], [0], [1], [0, 0, 1, 1], [], []>} : vector<7x7xf32>, vector<7x14xf32>, vector<7x14xf32> -> vector<7x14xf32>
    %cst_25 = arith.constant dense<0.000000e+00> : vector<7x14xf32>
    %71 = tpu.matmul %59, %15, %cst_25 {dimension_numbers = #tpu.dot_dimension_numbers<[1], [0], [0], [1], [0, 0, 1, 1], [], []>} : vector<7x7xf32>, vector<7x14xf32>, vector<7x14xf32> -> vector<7x14xf32>
    %72 = arith.addf %70, %71 : vector<7x14xf32>
    %cst_26 = arith.constant dense<0.000000e+00> : vector<7x14xf32>
    %73 = tpu.matmul %66, %7, %cst_26 {dimension_numbers = #tpu.dot_dimension_numbers<[1], [0], [0], [1], [0, 0, 1, 1], [], []>} : vector<7x7xf32>, vector<7x14xf32>, vector<7x14xf32> -> vector<7x14xf32>
    %cst_27 = arith.constant dense<0.000000e+00> : vector<7x14xf32>
    %74 = tpu.matmul %69, %15, %cst_27 {dimension_numbers = #tpu.dot_dimension_numbers<[1], [0], [0], [1], [0, 0, 1, 1], [], []>} : vector<7x7xf32>, vector<7x14xf32>, vector<7x14xf32> -> vector<7x14xf32>
    %75 = arith.addf %73, %74 : vector<7x14xf32>
    %cst_28 = arith.constant dense<0.000000e+00> : vector<14x14xf32>
    %76 = tpu.matmul %23, %72, %cst_28 {dimension_numbers = #tpu.dot_dimension_numbers<[1], [0], [0], [1], [0, 0, 1, 1], [], []>} : vector<14x7xf32>, vector<7x14xf32>, vector<14x14xf32> -> vector<14x14xf32>
    %cst_29 = arith.constant dense<0.000000e+00> : vector<14x14xf32>
    %77 = tpu.matmul %31, %75, %cst_29 {dimension_numbers = #tpu.dot_dimension_numbers<[1], [0], [0], [1], [0, 0, 1, 1], [], []>} : vector<14x7xf32>, vector<7x14xf32>, vector<14x14xf32> -> vector<14x14xf32>
    %78 = arith.addf %76, %77 : vector<14x14xf32>
    %c0_30 = arith.constant 0 : index
    %c1_31 = arith.constant 1 : index
    %c0_32 = arith.constant 0 : index
    %c0_33 = arith.constant 0 : index
    %79 = vector.load %arg3[%c0_30, %c1_31, %c0_32, %c0_33] : memref<1x8x8x8xf32, #tpu.memory_space<vmem>>, vector<1x1x8x8xf32>
    %80 = vector.shape_cast %79 : vector<1x1x8x8xf32> to vector<8x8xf32>
    %81 = vector.extract_strided_slice %80 {offsets = [1, 1], sizes = [7, 7], strides = [1, 1]} : vector<8x8xf32> to vector<7x7xf32>
    %82 = vector.extract_strided_slice %80 {offsets = [1, 0], sizes = [7, 7], strides = [1, 1]} : vector<8x8xf32> to vector<7x7xf32>
    %83 = vector.extract_strided_slice %80 {offsets = [0, 1], sizes = [7, 7], strides = [1, 1]} : vector<8x8xf32> to vector<7x7xf32>
    %84 = vector.extract_strided_slice %80 {offsets = [0, 0], sizes = [7, 7], strides = [1, 1]} : vector<8x8xf32> to vector<7x7xf32>
    %c1_34 = arith.constant 1 : index
    %c0_35 = arith.constant 0 : index
    %85 = memref.load %arg1[%c1_34, %c0_35] : memref<8x9xf32, #tpu.memory_space<smem>>
    %86 = vector.broadcast %85 : f32 to vector<7x7xf32>
    %87 = arith.mulf %81, %86 : vector<7x7xf32>
    %c1_36 = arith.constant 1 : index
    %c2_37 = arith.constant 2 : index
    %88 = memref.load %arg1[%c1_36, %c2_37] : memref<8x9xf32, #tpu.memory_space<smem>>
    %89 = vector.broadcast %88 : f32 to vector<7x7xf32>
    %90 = arith.mulf %82, %89 : vector<7x7xf32>
    %91 = arith.addf %87, %90 : vector<7x7xf32>
    %c1_38 = arith.constant 1 : index
    %c6_39 = arith.constant 6 : index
    %92 = memref.load %arg1[%c1_38, %c6_39] : memref<8x9xf32, #tpu.memory_space<smem>>
    %93 = vector.broadcast %92 : f32 to vector<7x7xf32>
    %94 = arith.mulf %83, %93 : vector<7x7xf32>
    %95 = arith.addf %91, %94 : vector<7x7xf32>
    %c1_40 = arith.constant 1 : index
    %c8_41 = arith.constant 8 : index
    %96 = memref.load %arg1[%c1_40, %c8_41] : memref<8x9xf32, #tpu.memory_space<smem>>
    %97 = vector.broadcast %96 : f32 to vector<7x7xf32>
    %98 = arith.mulf %84, %97 : vector<7x7xf32>
    %99 = arith.addf %95, %98 : vector<7x7xf32>
    %c1_42 = arith.constant 1 : index
    %c1_43 = arith.constant 1 : index
    %100 = memref.load %arg1[%c1_42, %c1_43] : memref<8x9xf32, #tpu.memory_space<smem>>
    %101 = vector.broadcast %100 : f32 to vector<7x7xf32>
    %102 = arith.mulf %81, %101 : vector<7x7xf32>
    %c1_44 = arith.constant 1 : index
    %c7_45 = arith.constant 7 : index
    %103 = memref.load %arg1[%c1_44, %c7_45] : memref<8x9xf32, #tpu.memory_space<smem>>
    %104 = vector.broadcast %103 : f32 to vector<7x7xf32>
    %105 = arith.mulf %83, %104 : vector<7x7xf32>
    %106 = arith.addf %102, %105 : vector<7x7xf32>
    %c1_46 = arith.constant 1 : index
    %c3_47 = arith.constant 3 : index
    %107 = memref.load %arg1[%c1_46, %c3_47] : memref<8x9xf32, #tpu.memory_space<smem>>
    %108 = vector.broadcast %107 : f32 to vector<7x7xf32>
    %109 = arith.mulf %81, %108 : vector<7x7xf32>
    %c1_48 = arith.constant 1 : index
    %c5_49 = arith.constant 5 : index
    %110 = memref.load %arg1[%c1_48, %c5_49] : memref<8x9xf32, #tpu.memory_space<smem>>
    %111 = vector.broadcast %110 : f32 to vector<7x7xf32>
    %112 = arith.mulf %82, %111 : vector<7x7xf32>
    %113 = arith.addf %109, %112 : vector<7x7xf32>
    %c1_50 = arith.constant 1 : index
    %c4_51 = arith.constant 4 : index
    %114 = memref.load %arg1[%c1_50, %c4_51] : memref<8x9xf32, #tpu.memory_space<smem>>
    %115 = vector.broadcast %114 : f32 to vector<7x7xf32>
    %116 = arith.mulf %81, %115 : vector<7x7xf32>
    %cst_52 = arith.constant dense<0.000000e+00> : vector<7x14xf32>
    %117 = tpu.matmul %99, %7, %cst_52 {dimension_numbers = #tpu.dot_dimension_numbers<[1], [0], [0], [1], [0, 0, 1, 1], [], []>} : vector<7x7xf32>, vector<7x14xf32>, vector<7x14xf32> -> vector<7x14xf32>
    %cst_53 = arith.constant dense<0.000000e+00> : vector<7x14xf32>
    %118 = tpu.matmul %106, %15, %cst_53 {dimension_numbers = #tpu.dot_dimension_numbers<[1], [0], [0], [1], [0, 0, 1, 1], [], []>} : vector<7x7xf32>, vector<7x14xf32>, vector<7x14xf32> -> vector<7x14xf32>
    %119 = arith.addf %117, %118 : vector<7x14xf32>
    %cst_54 = arith.constant dense<0.000000e+00> : vector<7x14xf32>
    %120 = tpu.matmul %113, %7, %cst_54 {dimension_numbers = #tpu.dot_dimension_numbers<[1], [0], [0], [1], [0, 0, 1, 1], [], []>} : vector<7x7xf32>, vector<7x14xf32>, vector<7x14xf32> -> vector<7x14xf32>
    %cst_55 = arith.constant dense<0.000000e+00> : vector<7x14xf32>
    %121 = tpu.matmul %116, %15, %cst_55 {dimension_numbers = #tpu.dot_dimension_numbers<[1], [0], [0], [1], [0, 0, 1, 1], [], []>} : vector<7x7xf32>, vector<7x14xf32>, vector<7x14xf32> -> vector<7x14xf32>
    %122 = arith.addf %120, %121 : vector<7x14xf32>
    %cst_56 = arith.constant dense<0.000000e+00> : vector<14x14xf32>
    %123 = tpu.matmul %23, %119, %cst_56 {dimension_numbers = #tpu.dot_dimension_numbers<[1], [0], [0], [1], [0, 0, 1, 1], [], []>} : vector<14x7xf32>, vector<7x14xf32>, vector<14x14xf32> -> vector<14x14xf32>
    %cst_57 = arith.constant dense<0.000000e+00> : vector<14x14xf32>
    %124 = tpu.matmul %31, %122, %cst_57 {dimension_numbers = #tpu.dot_dimension_numbers<[1], [0], [0], [1], [0, 0, 1, 1], [], []>} : vector<14x7xf32>, vector<7x14xf32>, vector<14x14xf32> -> vector<14x14xf32>
    %125 = arith.addf %123, %124 : vector<14x14xf32>
    %c0_58 = arith.constant 0 : index
    %c2_59 = arith.constant 2 : index
    %c0_60 = arith.constant 0 : index
    %c0_61 = arith.constant 0 : index
    %126 = vector.load %arg3[%c0_58, %c2_59, %c0_60, %c0_61] : memref<1x8x8x8xf32, #tpu.memory_space<vmem>>, vector<1x1x8x8xf32>
    %127 = vector.shape_cast %126 : vector<1x1x8x8xf32> to vector<8x8xf32>
    %128 = vector.extract_strided_slice %127 {offsets = [1, 1], sizes = [7, 7], strides = [1, 1]} : vector<8x8xf32> to vector<7x7xf32>
    %129 = vector.extract_strided_slice %127 {offsets = [1, 0], sizes = [7, 7], strides = [1, 1]} : vector<8x8xf32> to vector<7x7xf32>
    %130 = vector.extract_strided_slice %127 {offsets = [0, 1], sizes = [7, 7], strides = [1, 1]} : vector<8x8xf32> to vector<7x7xf32>
    %131 = vector.extract_strided_slice %127 {offsets = [0, 0], sizes = [7, 7], strides = [1, 1]} : vector<8x8xf32> to vector<7x7xf32>
    %c2_62 = arith.constant 2 : index
    %c0_63 = arith.constant 0 : index
    %132 = memref.load %arg1[%c2_62, %c0_63] : memref<8x9xf32, #tpu.memory_space<smem>>
    %133 = vector.broadcast %132 : f32 to vector<7x7xf32>
    %134 = arith.mulf %128, %133 : vector<7x7xf32>
    %c2_64 = arith.constant 2 : index
    %c2_65 = arith.constant 2 : index
    %135 = memref.load %arg1[%c2_64, %c2_65] : memref<8x9xf32, #tpu.memory_space<smem>>
    %136 = vector.broadcast %135 : f32 to vector<7x7xf32>
    %137 = arith.mulf %129, %136 : vector<7x7xf32>
    %138 = arith.addf %134, %137 : vector<7x7xf32>
    %c2_66 = arith.constant 2 : index
    %c6_67 = arith.constant 6 : index
    %139 = memref.load %arg1[%c2_66, %c6_67] : memref<8x9xf32, #tpu.memory_space<smem>>
    %140 = vector.broadcast %139 : f32 to vector<7x7xf32>
    %141 = arith.mulf %130, %140 : vector<7x7xf32>
    %142 = arith.addf %138, %141 : vector<7x7xf32>
    %c2_68 = arith.constant 2 : index
    %c8_69 = arith.constant 8 : index
    %143 = memref.load %arg1[%c2_68, %c8_69] : memref<8x9xf32, #tpu.memory_space<smem>>
    %144 = vector.broadcast %143 : f32 to vector<7x7xf32>
    %145 = arith.mulf %131, %144 : vector<7x7xf32>
    %146 = arith.addf %142, %145 : vector<7x7xf32>
    %c2_70 = arith.constant 2 : index
    %c1_71 = arith.constant 1 : index
    %147 = memref.load %arg1[%c2_70, %c1_71] : memref<8x9xf32, #tpu.memory_space<smem>>
    %148 = vector.broadcast %147 : f32 to vector<7x7xf32>
    %149 = arith.mulf %128, %148 : vector<7x7xf32>
    %c2_72 = arith.constant 2 : index
    %c7_73 = arith.constant 7 : index
    %150 = memref.load %arg1[%c2_72, %c7_73] : memref<8x9xf32, #tpu.memory_space<smem>>
    %151 = vector.broadcast %150 : f32 to vector<7x7xf32>
    %152 = arith.mulf %130, %151 : vector<7x7xf32>
    %153 = arith.addf %149, %152 : vector<7x7xf32>
    %c2_74 = arith.constant 2 : index
    %c3_75 = arith.constant 3 : index
    %154 = memref.load %arg1[%c2_74, %c3_75] : memref<8x9xf32, #tpu.memory_space<smem>>
    %155 = vector.broadcast %154 : f32 to vector<7x7xf32>
    %156 = arith.mulf %128, %155 : vector<7x7xf32>
    %c2_76 = arith.constant 2 : index
    %c5_77 = arith.constant 5 : index
    %157 = memref.load %arg1[%c2_76, %c5_77] : memref<8x9xf32, #tpu.memory_space<smem>>
    %158 = vector.broadcast %157 : f32 to vector<7x7xf32>
    %159 = arith.mulf %129, %158 : vector<7x7xf32>
    %160 = arith.addf %156, %159 : vector<7x7xf32>
    %c2_78 = arith.constant 2 : index
    %c4_79 = arith.constant 4 : index
    %161 = memref.load %arg1[%c2_78, %c4_79] : memref<8x9xf32, #tpu.memory_space<smem>>
    %162 = vector.broadcast %161 : f32 to vector<7x7xf32>
    %163 = arith.mulf %128, %162 : vector<7x7xf32>
    %cst_80 = arith.constant dense<0.000000e+00> : vector<7x14xf32>
    %164 = tpu.matmul %146, %7, %cst_80 {dimension_numbers = #tpu.dot_dimension_numbers<[1], [0], [0], [1], [0, 0, 1, 1], [], []>} : vector<7x7xf32>, vector<7x14xf32>, vector<7x14xf32> -> vector<7x14xf32>
    %cst_81 = arith.constant dense<0.000000e+00> : vector<7x14xf32>
    %165 = tpu.matmul %153, %15, %cst_81 {dimension_numbers = #tpu.dot_dimension_numbers<[1], [0], [0], [1], [0, 0, 1, 1], [], []>} : vector<7x7xf32>, vector<7x14xf32>, vector<7x14xf32> -> vector<7x14xf32>
    %166 = arith.addf %164, %165 : vector<7x14xf32>
    %cst_82 = arith.constant dense<0.000000e+00> : vector<7x14xf32>
    %167 = tpu.matmul %160, %7, %cst_82 {dimension_numbers = #tpu.dot_dimension_numbers<[1], [0], [0], [1], [0, 0, 1, 1], [], []>} : vector<7x7xf32>, vector<7x14xf32>, vector<7x14xf32> -> vector<7x14xf32>
    %cst_83 = arith.constant dense<0.000000e+00> : vector<7x14xf32>
    %168 = tpu.matmul %163, %15, %cst_83 {dimension_numbers = #tpu.dot_dimension_numbers<[1], [0], [0], [1], [0, 0, 1, 1], [], []>} : vector<7x7xf32>, vector<7x14xf32>, vector<7x14xf32> -> vector<7x14xf32>
    %169 = arith.addf %167, %168 : vector<7x14xf32>
    %cst_84 = arith.constant dense<0.000000e+00> : vector<14x14xf32>
    %170 = tpu.matmul %23, %166, %cst_84 {dimension_numbers = #tpu.dot_dimension_numbers<[1], [0], [0], [1], [0, 0, 1, 1], [], []>} : vector<14x7xf32>, vector<7x14xf32>, vector<14x14xf32> -> vector<14x14xf32>
    %cst_85 = arith.constant dense<0.000000e+00> : vector<14x14xf32>
    %171 = tpu.matmul %31, %169, %cst_85 {dimension_numbers = #tpu.dot_dimension_numbers<[1], [0], [0], [1], [0, 0, 1, 1], [], []>} : vector<14x7xf32>, vector<7x14xf32>, vector<14x14xf32> -> vector<14x14xf32>
    %172 = arith.addf %170, %171 : vector<14x14xf32>
    %c0_86 = arith.constant 0 : index
    %c3_87 = arith.constant 3 : index
    %c0_88 = arith.constant 0 : index
    %c0_89 = arith.constant 0 : index
    %173 = vector.load %arg3[%c0_86, %c3_87, %c0_88, %c0_89] : memref<1x8x8x8xf32, #tpu.memory_space<vmem>>, vector<1x1x8x8xf32>
    %174 = vector.shape_cast %173 : vector<1x1x8x8xf32> to vector<8x8xf32>
    %175 = vector.extract_strided_slice %174 {offsets = [1, 1], sizes = [7, 7], strides = [1, 1]} : vector<8x8xf32> to vector<7x7xf32>
    %176 = vector.extract_strided_slice %174 {offsets = [1, 0], sizes = [7, 7], strides = [1, 1]} : vector<8x8xf32> to vector<7x7xf32>
    %177 = vector.extract_strided_slice %174 {offsets = [0, 1], sizes = [7, 7], strides = [1, 1]} : vector<8x8xf32> to vector<7x7xf32>
    %178 = vector.extract_strided_slice %174 {offsets = [0, 0], sizes = [7, 7], strides = [1, 1]} : vector<8x8xf32> to vector<7x7xf32>
    %c3_90 = arith.constant 3 : index
    %c0_91 = arith.constant 0 : index
    %179 = memref.load %arg1[%c3_90, %c0_91] : memref<8x9xf32, #tpu.memory_space<smem>>
    %180 = vector.broadcast %179 : f32 to vector<7x7xf32>
    %181 = arith.mulf %175, %180 : vector<7x7xf32>
    %c3_92 = arith.constant 3 : index
    %c2_93 = arith.constant 2 : index
    %182 = memref.load %arg1[%c3_92, %c2_93] : memref<8x9xf32, #tpu.memory_space<smem>>
    %183 = vector.broadcast %182 : f32 to vector<7x7xf32>
    %184 = arith.mulf %176, %183 : vector<7x7xf32>
    %185 = arith.addf %181, %184 : vector<7x7xf32>
    %c3_94 = arith.constant 3 : index
    %c6_95 = arith.constant 6 : index
    %186 = memref.load %arg1[%c3_94, %c6_95] : memref<8x9xf32, #tpu.memory_space<smem>>
    %187 = vector.broadcast %186 : f32 to vector<7x7xf32>
    %188 = arith.mulf %177, %187 : vector<7x7xf32>
    %189 = arith.addf %185, %188 : vector<7x7xf32>
    %c3_96 = arith.constant 3 : index
    %c8_97 = arith.constant 8 : index
    %190 = memref.load %arg1[%c3_96, %c8_97] : memref<8x9xf32, #tpu.memory_space<smem>>
    %191 = vector.broadcast %190 : f32 to vector<7x7xf32>
    %192 = arith.mulf %178, %191 : vector<7x7xf32>
    %193 = arith.addf %189, %192 : vector<7x7xf32>
    %c3_98 = arith.constant 3 : index
    %c1_99 = arith.constant 1 : index
    %194 = memref.load %arg1[%c3_98, %c1_99] : memref<8x9xf32, #tpu.memory_space<smem>>
    %195 = vector.broadcast %194 : f32 to vector<7x7xf32>
    %196 = arith.mulf %175, %195 : vector<7x7xf32>
    %c3_100 = arith.constant 3 : index
    %c7_101 = arith.constant 7 : index
    %197 = memref.load %arg1[%c3_100, %c7_101] : memref<8x9xf32, #tpu.memory_space<smem>>
    %198 = vector.broadcast %197 : f32 to vector<7x7xf32>
    %199 = arith.mulf %177, %198 : vector<7x7xf32>
    %200 = arith.addf %196, %199 : vector<7x7xf32>
    %c3_102 = arith.constant 3 : index
    %c3_103 = arith.constant 3 : index
    %201 = memref.load %arg1[%c3_102, %c3_103] : memref<8x9xf32, #tpu.memory_space<smem>>
    %202 = vector.broadcast %201 : f32 to vector<7x7xf32>
    %203 = arith.mulf %175, %202 : vector<7x7xf32>
    %c3_104 = arith.constant 3 : index
    %c5_105 = arith.constant 5 : index
    %204 = memref.load %arg1[%c3_104, %c5_105] : memref<8x9xf32, #tpu.memory_space<smem>>
    %205 = vector.broadcast %204 : f32 to vector<7x7xf32>
    %206 = arith.mulf %176, %205 : vector<7x7xf32>
    %207 = arith.addf %203, %206 : vector<7x7xf32>
    %c3_106 = arith.constant 3 : index
    %c4_107 = arith.constant 4 : index
    %208 = memref.load %arg1[%c3_106, %c4_107] : memref<8x9xf32, #tpu.memory_space<smem>>
    %209 = vector.broadcast %208 : f32 to vector<7x7xf32>
    %210 = arith.mulf %175, %209 : vector<7x7xf32>
    %cst_108 = arith.constant dense<0.000000e+00> : vector<7x14xf32>
    %211 = tpu.matmul %193, %7, %cst_108 {dimension_numbers = #tpu.dot_dimension_numbers<[1], [0], [0], [1], [0, 0, 1, 1], [], []>} : vector<7x7xf32>, vector<7x14xf32>, vector<7x14xf32> -> vector<7x14xf32>
    %cst_109 = arith.constant dense<0.000000e+00> : vector<7x14xf32>
    %212 = tpu.matmul %200, %15, %cst_109 {dimension_numbers = #tpu.dot_dimension_numbers<[1], [0], [0], [1], [0, 0, 1, 1], [], []>} : vector<7x7xf32>, vector<7x14xf32>, vector<7x14xf32> -> vector<7x14xf32>
    %213 = arith.addf %211, %212 : vector<7x14xf32>
    %cst_110 = arith.constant dense<0.000000e+00> : vector<7x14xf32>
    %214 = tpu.matmul %207, %7, %cst_110 {dimension_numbers = #tpu.dot_dimension_numbers<[1], [0], [0], [1], [0, 0, 1, 1], [], []>} : vector<7x7xf32>, vector<7x14xf32>, vector<7x14xf32> -> vector<7x14xf32>
    %cst_111 = arith.constant dense<0.000000e+00> : vector<7x14xf32>
    %215 = tpu.matmul %210, %15, %cst_111 {dimension_numbers = #tpu.dot_dimension_numbers<[1], [0], [0], [1], [0, 0, 1, 1], [], []>} : vector<7x7xf32>, vector<7x14xf32>, vector<7x14xf32> -> vector<7x14xf32>
    %216 = arith.addf %214, %215 : vector<7x14xf32>
    %cst_112 = arith.constant dense<0.000000e+00> : vector<14x14xf32>
    %217 = tpu.matmul %23, %213, %cst_112 {dimension_numbers = #tpu.dot_dimension_numbers<[1], [0], [0], [1], [0, 0, 1, 1], [], []>} : vector<14x7xf32>, vector<7x14xf32>, vector<14x14xf32> -> vector<14x14xf32>
    %cst_113 = arith.constant dense<0.000000e+00> : vector<14x14xf32>
    %218 = tpu.matmul %31, %216, %cst_113 {dimension_numbers = #tpu.dot_dimension_numbers<[1], [0], [0], [1], [0, 0, 1, 1], [], []>} : vector<14x7xf32>, vector<7x14xf32>, vector<14x14xf32> -> vector<14x14xf32>
    %219 = arith.addf %217, %218 : vector<14x14xf32>
    %c0_114 = arith.constant 0 : index
    %c4_115 = arith.constant 4 : index
    %c0_116 = arith.constant 0 : index
    %c0_117 = arith.constant 0 : index
    %220 = vector.load %arg3[%c0_114, %c4_115, %c0_116, %c0_117] : memref<1x8x8x8xf32, #tpu.memory_space<vmem>>, vector<1x1x8x8xf32>
    %221 = vector.shape_cast %220 : vector<1x1x8x8xf32> to vector<8x8xf32>
    %222 = vector.extract_strided_slice %221 {offsets = [1, 1], sizes = [7, 7], strides = [1, 1]} : vector<8x8xf32> to vector<7x7xf32>
    %223 = vector.extract_strided_slice %221 {offsets = [1, 0], sizes = [7, 7], strides = [1, 1]} : vector<8x8xf32> to vector<7x7xf32>
    %224 = vector.extract_strided_slice %221 {offsets = [0, 1], sizes = [7, 7], strides = [1, 1]} : vector<8x8xf32> to vector<7x7xf32>
    %225 = vector.extract_strided_slice %221 {offsets = [0, 0], sizes = [7, 7], strides = [1, 1]} : vector<8x8xf32> to vector<7x7xf32>
    %c4_118 = arith.constant 4 : index
    %c0_119 = arith.constant 0 : index
    %226 = memref.load %arg1[%c4_118, %c0_119] : memref<8x9xf32, #tpu.memory_space<smem>>
    %227 = vector.broadcast %226 : f32 to vector<7x7xf32>
    %228 = arith.mulf %222, %227 : vector<7x7xf32>
    %c4_120 = arith.constant 4 : index
    %c2_121 = arith.constant 2 : index
    %229 = memref.load %arg1[%c4_120, %c2_121] : memref<8x9xf32, #tpu.memory_space<smem>>
    %230 = vector.broadcast %229 : f32 to vector<7x7xf32>
    %231 = arith.mulf %223, %230 : vector<7x7xf32>
    %232 = arith.addf %228, %231 : vector<7x7xf32>
    %c4_122 = arith.constant 4 : index
    %c6_123 = arith.constant 6 : index
    %233 = memref.load %arg1[%c4_122, %c6_123] : memref<8x9xf32, #tpu.memory_space<smem>>
    %234 = vector.broadcast %233 : f32 to vector<7x7xf32>
    %235 = arith.mulf %224, %234 : vector<7x7xf32>
    %236 = arith.addf %232, %235 : vector<7x7xf32>
    %c4_124 = arith.constant 4 : index
    %c8_125 = arith.constant 8 : index
    %237 = memref.load %arg1[%c4_124, %c8_125] : memref<8x9xf32, #tpu.memory_space<smem>>
    %238 = vector.broadcast %237 : f32 to vector<7x7xf32>
    %239 = arith.mulf %225, %238 : vector<7x7xf32>
    %240 = arith.addf %236, %239 : vector<7x7xf32>
    %c4_126 = arith.constant 4 : index
    %c1_127 = arith.constant 1 : index
    %241 = memref.load %arg1[%c4_126, %c1_127] : memref<8x9xf32, #tpu.memory_space<smem>>
    %242 = vector.broadcast %241 : f32 to vector<7x7xf32>
    %243 = arith.mulf %222, %242 : vector<7x7xf32>
    %c4_128 = arith.constant 4 : index
    %c7_129 = arith.constant 7 : index
    %244 = memref.load %arg1[%c4_128, %c7_129] : memref<8x9xf32, #tpu.memory_space<smem>>
    %245 = vector.broadcast %244 : f32 to vector<7x7xf32>
    %246 = arith.mulf %224, %245 : vector<7x7xf32>
    %247 = arith.addf %243, %246 : vector<7x7xf32>
    %c4_130 = arith.constant 4 : index
    %c3_131 = arith.constant 3 : index
    %248 = memref.load %arg1[%c4_130, %c3_131] : memref<8x9xf32, #tpu.memory_space<smem>>
    %249 = vector.broadcast %248 : f32 to vector<7x7xf32>
    %250 = arith.mulf %222, %249 : vector<7x7xf32>
    %c4_132 = arith.constant 4 : index
    %c5_133 = arith.constant 5 : index
    %251 = memref.load %arg1[%c4_132, %c5_133] : memref<8x9xf32, #tpu.memory_space<smem>>
    %252 = vector.broadcast %251 : f32 to vector<7x7xf32>
    %253 = arith.mulf %223, %252 : vector<7x7xf32>
    %254 = arith.addf %250, %253 : vector<7x7xf32>
    %c4_134 = arith.constant 4 : index
    %c4_135 = arith.constant 4 : index
    %255 = memref.load %arg1[%c4_134, %c4_135] : memref<8x9xf32, #tpu.memory_space<smem>>
    %256 = vector.broadcast %255 : f32 to vector<7x7xf32>
    %257 = arith.mulf %222, %256 : vector<7x7xf32>
    %cst_136 = arith.constant dense<0.000000e+00> : vector<7x14xf32>
    %258 = tpu.matmul %240, %7, %cst_136 {dimension_numbers = #tpu.dot_dimension_numbers<[1], [0], [0], [1], [0, 0, 1, 1], [], []>} : vector<7x7xf32>, vector<7x14xf32>, vector<7x14xf32> -> vector<7x14xf32>
    %cst_137 = arith.constant dense<0.000000e+00> : vector<7x14xf32>
    %259 = tpu.matmul %247, %15, %cst_137 {dimension_numbers = #tpu.dot_dimension_numbers<[1], [0], [0], [1], [0, 0, 1, 1], [], []>} : vector<7x7xf32>, vector<7x14xf32>, vector<7x14xf32> -> vector<7x14xf32>
    %260 = arith.addf %258, %259 : vector<7x14xf32>
    %cst_138 = arith.constant dense<0.000000e+00> : vector<7x14xf32>
    %261 = tpu.matmul %254, %7, %cst_138 {dimension_numbers = #tpu.dot_dimension_numbers<[1], [0], [0], [1], [0, 0, 1, 1], [], []>} : vector<7x7xf32>, vector<7x14xf32>, vector<7x14xf32> -> vector<7x14xf32>
    %cst_139 = arith.constant dense<0.000000e+00> : vector<7x14xf32>
    %262 = tpu.matmul %257, %15, %cst_139 {dimension_numbers = #tpu.dot_dimension_numbers<[1], [0], [0], [1], [0, 0, 1, 1], [], []>} : vector<7x7xf32>, vector<7x14xf32>, vector<7x14xf32> -> vector<7x14xf32>
    %263 = arith.addf %261, %262 : vector<7x14xf32>
    %cst_140 = arith.constant dense<0.000000e+00> : vector<14x14xf32>
    %264 = tpu.matmul %23, %260, %cst_140 {dimension_numbers = #tpu.dot_dimension_numbers<[1], [0], [0], [1], [0, 0, 1, 1], [], []>} : vector<14x7xf32>, vector<7x14xf32>, vector<14x14xf32> -> vector<14x14xf32>
    %cst_141 = arith.constant dense<0.000000e+00> : vector<14x14xf32>
    %265 = tpu.matmul %31, %263, %cst_141 {dimension_numbers = #tpu.dot_dimension_numbers<[1], [0], [0], [1], [0, 0, 1, 1], [], []>} : vector<14x7xf32>, vector<7x14xf32>, vector<14x14xf32> -> vector<14x14xf32>
    %266 = arith.addf %264, %265 : vector<14x14xf32>
    %c0_142 = arith.constant 0 : index
    %c5_143 = arith.constant 5 : index
    %c0_144 = arith.constant 0 : index
    %c0_145 = arith.constant 0 : index
    %267 = vector.load %arg3[%c0_142, %c5_143, %c0_144, %c0_145] : memref<1x8x8x8xf32, #tpu.memory_space<vmem>>, vector<1x1x8x8xf32>
    %268 = vector.shape_cast %267 : vector<1x1x8x8xf32> to vector<8x8xf32>
    %269 = vector.extract_strided_slice %268 {offsets = [1, 1], sizes = [7, 7], strides = [1, 1]} : vector<8x8xf32> to vector<7x7xf32>
    %270 = vector.extract_strided_slice %268 {offsets = [1, 0], sizes = [7, 7], strides = [1, 1]} : vector<8x8xf32> to vector<7x7xf32>
    %271 = vector.extract_strided_slice %268 {offsets = [0, 1], sizes = [7, 7], strides = [1, 1]} : vector<8x8xf32> to vector<7x7xf32>
    %272 = vector.extract_strided_slice %268 {offsets = [0, 0], sizes = [7, 7], strides = [1, 1]} : vector<8x8xf32> to vector<7x7xf32>
    %c5_146 = arith.constant 5 : index
    %c0_147 = arith.constant 0 : index
    %273 = memref.load %arg1[%c5_146, %c0_147] : memref<8x9xf32, #tpu.memory_space<smem>>
    %274 = vector.broadcast %273 : f32 to vector<7x7xf32>
    %275 = arith.mulf %269, %274 : vector<7x7xf32>
    %c5_148 = arith.constant 5 : index
    %c2_149 = arith.constant 2 : index
    %276 = memref.load %arg1[%c5_148, %c2_149] : memref<8x9xf32, #tpu.memory_space<smem>>
    %277 = vector.broadcast %276 : f32 to vector<7x7xf32>
    %278 = arith.mulf %270, %277 : vector<7x7xf32>
    %279 = arith.addf %275, %278 : vector<7x7xf32>
    %c5_150 = arith.constant 5 : index
    %c6_151 = arith.constant 6 : index
    %280 = memref.load %arg1[%c5_150, %c6_151] : memref<8x9xf32, #tpu.memory_space<smem>>
    %281 = vector.broadcast %280 : f32 to vector<7x7xf32>
    %282 = arith.mulf %271, %281 : vector<7x7xf32>
    %283 = arith.addf %279, %282 : vector<7x7xf32>
    %c5_152 = arith.constant 5 : index
    %c8_153 = arith.constant 8 : index
    %284 = memref.load %arg1[%c5_152, %c8_153] : memref<8x9xf32, #tpu.memory_space<smem>>
    %285 = vector.broadcast %284 : f32 to vector<7x7xf32>
    %286 = arith.mulf %272, %285 : vector<7x7xf32>
    %287 = arith.addf %283, %286 : vector<7x7xf32>
    %c5_154 = arith.constant 5 : index
    %c1_155 = arith.constant 1 : index
    %288 = memref.load %arg1[%c5_154, %c1_155] : memref<8x9xf32, #tpu.memory_space<smem>>
    %289 = vector.broadcast %288 : f32 to vector<7x7xf32>
    %290 = arith.mulf %269, %289 : vector<7x7xf32>
    %c5_156 = arith.constant 5 : index
    %c7_157 = arith.constant 7 : index
    %291 = memref.load %arg1[%c5_156, %c7_157] : memref<8x9xf32, #tpu.memory_space<smem>>
    %292 = vector.broadcast %291 : f32 to vector<7x7xf32>
    %293 = arith.mulf %271, %292 : vector<7x7xf32>
    %294 = arith.addf %290, %293 : vector<7x7xf32>
    %c5_158 = arith.constant 5 : index
    %c3_159 = arith.constant 3 : index
    %295 = memref.load %arg1[%c5_158, %c3_159] : memref<8x9xf32, #tpu.memory_space<smem>>
    %296 = vector.broadcast %295 : f32 to vector<7x7xf32>
    %297 = arith.mulf %269, %296 : vector<7x7xf32>
    %c5_160 = arith.constant 5 : index
    %c5_161 = arith.constant 5 : index
    %298 = memref.load %arg1[%c5_160, %c5_161] : memref<8x9xf32, #tpu.memory_space<smem>>
    %299 = vector.broadcast %298 : f32 to vector<7x7xf32>
    %300 = arith.mulf %270, %299 : vector<7x7xf32>
    %301 = arith.addf %297, %300 : vector<7x7xf32>
    %c5_162 = arith.constant 5 : index
    %c4_163 = arith.constant 4 : index
    %302 = memref.load %arg1[%c5_162, %c4_163] : memref<8x9xf32, #tpu.memory_space<smem>>
    %303 = vector.broadcast %302 : f32 to vector<7x7xf32>
    %304 = arith.mulf %269, %303 : vector<7x7xf32>
    %cst_164 = arith.constant dense<0.000000e+00> : vector<7x14xf32>
    %305 = tpu.matmul %287, %7, %cst_164 {dimension_numbers = #tpu.dot_dimension_numbers<[1], [0], [0], [1], [0, 0, 1, 1], [], []>} : vector<7x7xf32>, vector<7x14xf32>, vector<7x14xf32> -> vector<7x14xf32>
    %cst_165 = arith.constant dense<0.000000e+00> : vector<7x14xf32>
    %306 = tpu.matmul %294, %15, %cst_165 {dimension_numbers = #tpu.dot_dimension_numbers<[1], [0], [0], [1], [0, 0, 1, 1], [], []>} : vector<7x7xf32>, vector<7x14xf32>, vector<7x14xf32> -> vector<7x14xf32>
    %307 = arith.addf %305, %306 : vector<7x14xf32>
    %cst_166 = arith.constant dense<0.000000e+00> : vector<7x14xf32>
    %308 = tpu.matmul %301, %7, %cst_166 {dimension_numbers = #tpu.dot_dimension_numbers<[1], [0], [0], [1], [0, 0, 1, 1], [], []>} : vector<7x7xf32>, vector<7x14xf32>, vector<7x14xf32> -> vector<7x14xf32>
    %cst_167 = arith.constant dense<0.000000e+00> : vector<7x14xf32>
    %309 = tpu.matmul %304, %15, %cst_167 {dimension_numbers = #tpu.dot_dimension_numbers<[1], [0], [0], [1], [0, 0, 1, 1], [], []>} : vector<7x7xf32>, vector<7x14xf32>, vector<7x14xf32> -> vector<7x14xf32>
    %310 = arith.addf %308, %309 : vector<7x14xf32>
    %cst_168 = arith.constant dense<0.000000e+00> : vector<14x14xf32>
    %311 = tpu.matmul %23, %307, %cst_168 {dimension_numbers = #tpu.dot_dimension_numbers<[1], [0], [0], [1], [0, 0, 1, 1], [], []>} : vector<14x7xf32>, vector<7x14xf32>, vector<14x14xf32> -> vector<14x14xf32>
    %cst_169 = arith.constant dense<0.000000e+00> : vector<14x14xf32>
    %312 = tpu.matmul %31, %310, %cst_169 {dimension_numbers = #tpu.dot_dimension_numbers<[1], [0], [0], [1], [0, 0, 1, 1], [], []>} : vector<14x7xf32>, vector<7x14xf32>, vector<14x14xf32> -> vector<14x14xf32>
    %313 = arith.addf %311, %312 : vector<14x14xf32>
    %c0_170 = arith.constant 0 : index
    %c6_171 = arith.constant 6 : index
    %c0_172 = arith.constant 0 : index
    %c0_173 = arith.constant 0 : index
    %314 = vector.load %arg3[%c0_170, %c6_171, %c0_172, %c0_173] : memref<1x8x8x8xf32, #tpu.memory_space<vmem>>, vector<1x1x8x8xf32>
    %315 = vector.shape_cast %314 : vector<1x1x8x8xf32> to vector<8x8xf32>
    %316 = vector.extract_strided_slice %315 {offsets = [1, 1], sizes = [7, 7], strides = [1, 1]} : vector<8x8xf32> to vector<7x7xf32>
    %317 = vector.extract_strided_slice %315 {offsets = [1, 0], sizes = [7, 7], strides = [1, 1]} : vector<8x8xf32> to vector<7x7xf32>
    %318 = vector.extract_strided_slice %315 {offsets = [0, 1], sizes = [7, 7], strides = [1, 1]} : vector<8x8xf32> to vector<7x7xf32>
    %319 = vector.extract_strided_slice %315 {offsets = [0, 0], sizes = [7, 7], strides = [1, 1]} : vector<8x8xf32> to vector<7x7xf32>
    %c6_174 = arith.constant 6 : index
    %c0_175 = arith.constant 0 : index
    %320 = memref.load %arg1[%c6_174, %c0_175] : memref<8x9xf32, #tpu.memory_space<smem>>
    %321 = vector.broadcast %320 : f32 to vector<7x7xf32>
    %322 = arith.mulf %316, %321 : vector<7x7xf32>
    %c6_176 = arith.constant 6 : index
    %c2_177 = arith.constant 2 : index
    %323 = memref.load %arg1[%c6_176, %c2_177] : memref<8x9xf32, #tpu.memory_space<smem>>
    %324 = vector.broadcast %323 : f32 to vector<7x7xf32>
    %325 = arith.mulf %317, %324 : vector<7x7xf32>
    %326 = arith.addf %322, %325 : vector<7x7xf32>
    %c6_178 = arith.constant 6 : index
    %c6_179 = arith.constant 6 : index
    %327 = memref.load %arg1[%c6_178, %c6_179] : memref<8x9xf32, #tpu.memory_space<smem>>
    %328 = vector.broadcast %327 : f32 to vector<7x7xf32>
    %329 = arith.mulf %318, %328 : vector<7x7xf32>
    %330 = arith.addf %326, %329 : vector<7x7xf32>
    %c6_180 = arith.constant 6 : index
    %c8_181 = arith.constant 8 : index
    %331 = memref.load %arg1[%c6_180, %c8_181] : memref<8x9xf32, #tpu.memory_space<smem>>
    %332 = vector.broadcast %331 : f32 to vector<7x7xf32>
    %333 = arith.mulf %319, %332 : vector<7x7xf32>
    %334 = arith.addf %330, %333 : vector<7x7xf32>
    %c6_182 = arith.constant 6 : index
    %c1_183 = arith.constant 1 : index
    %335 = memref.load %arg1[%c6_182, %c1_183] : memref<8x9xf32, #tpu.memory_space<smem>>
    %336 = vector.broadcast %335 : f32 to vector<7x7xf32>
    %337 = arith.mulf %316, %336 : vector<7x7xf32>
    %c6_184 = arith.constant 6 : index
    %c7_185 = arith.constant 7 : index
    %338 = memref.load %arg1[%c6_184, %c7_185] : memref<8x9xf32, #tpu.memory_space<smem>>
    %339 = vector.broadcast %338 : f32 to vector<7x7xf32>
    %340 = arith.mulf %318, %339 : vector<7x7xf32>
    %341 = arith.addf %337, %340 : vector<7x7xf32>
    %c6_186 = arith.constant 6 : index
    %c3_187 = arith.constant 3 : index
    %342 = memref.load %arg1[%c6_186, %c3_187] : memref<8x9xf32, #tpu.memory_space<smem>>
    %343 = vector.broadcast %342 : f32 to vector<7x7xf32>
    %344 = arith.mulf %316, %343 : vector<7x7xf32>
    %c6_188 = arith.constant 6 : index
    %c5_189 = arith.constant 5 : index
    %345 = memref.load %arg1[%c6_188, %c5_189] : memref<8x9xf32, #tpu.memory_space<smem>>
    %346 = vector.broadcast %345 : f32 to vector<7x7xf32>
    %347 = arith.mulf %317, %346 : vector<7x7xf32>
    %348 = arith.addf %344, %347 : vector<7x7xf32>
    %c6_190 = arith.constant 6 : index
    %c4_191 = arith.constant 4 : index
    %349 = memref.load %arg1[%c6_190, %c4_191] : memref<8x9xf32, #tpu.memory_space<smem>>
    %350 = vector.broadcast %349 : f32 to vector<7x7xf32>
    %351 = arith.mulf %316, %350 : vector<7x7xf32>
    %cst_192 = arith.constant dense<0.000000e+00> : vector<7x14xf32>
    %352 = tpu.matmul %334, %7, %cst_192 {dimension_numbers = #tpu.dot_dimension_numbers<[1], [0], [0], [1], [0, 0, 1, 1], [], []>} : vector<7x7xf32>, vector<7x14xf32>, vector<7x14xf32> -> vector<7x14xf32>
    %cst_193 = arith.constant dense<0.000000e+00> : vector<7x14xf32>
    %353 = tpu.matmul %341, %15, %cst_193 {dimension_numbers = #tpu.dot_dimension_numbers<[1], [0], [0], [1], [0, 0, 1, 1], [], []>} : vector<7x7xf32>, vector<7x14xf32>, vector<7x14xf32> -> vector<7x14xf32>
    %354 = arith.addf %352, %353 : vector<7x14xf32>
    %cst_194 = arith.constant dense<0.000000e+00> : vector<7x14xf32>
    %355 = tpu.matmul %348, %7, %cst_194 {dimension_numbers = #tpu.dot_dimension_numbers<[1], [0], [0], [1], [0, 0, 1, 1], [], []>} : vector<7x7xf32>, vector<7x14xf32>, vector<7x14xf32> -> vector<7x14xf32>
    %cst_195 = arith.constant dense<0.000000e+00> : vector<7x14xf32>
    %356 = tpu.matmul %351, %15, %cst_195 {dimension_numbers = #tpu.dot_dimension_numbers<[1], [0], [0], [1], [0, 0, 1, 1], [], []>} : vector<7x7xf32>, vector<7x14xf32>, vector<7x14xf32> -> vector<7x14xf32>
    %357 = arith.addf %355, %356 : vector<7x14xf32>
    %cst_196 = arith.constant dense<0.000000e+00> : vector<14x14xf32>
    %358 = tpu.matmul %23, %354, %cst_196 {dimension_numbers = #tpu.dot_dimension_numbers<[1], [0], [0], [1], [0, 0, 1, 1], [], []>} : vector<14x7xf32>, vector<7x14xf32>, vector<14x14xf32> -> vector<14x14xf32>
    %cst_197 = arith.constant dense<0.000000e+00> : vector<14x14xf32>
    %359 = tpu.matmul %31, %357, %cst_197 {dimension_numbers = #tpu.dot_dimension_numbers<[1], [0], [0], [1], [0, 0, 1, 1], [], []>} : vector<14x7xf32>, vector<7x14xf32>, vector<14x14xf32> -> vector<14x14xf32>
    %360 = arith.addf %358, %359 : vector<14x14xf32>
    %c0_198 = arith.constant 0 : index
    %c7_199 = arith.constant 7 : index
    %c0_200 = arith.constant 0 : index
    %c0_201 = arith.constant 0 : index
    %361 = vector.load %arg3[%c0_198, %c7_199, %c0_200, %c0_201] : memref<1x8x8x8xf32, #tpu.memory_space<vmem>>, vector<1x1x8x8xf32>
    %362 = vector.shape_cast %361 : vector<1x1x8x8xf32> to vector<8x8xf32>
    %363 = vector.extract_strided_slice %362 {offsets = [1, 1], sizes = [7, 7], strides = [1, 1]} : vector<8x8xf32> to vector<7x7xf32>
    %364 = vector.extract_strided_slice %362 {offsets = [1, 0], sizes = [7, 7], strides = [1, 1]} : vector<8x8xf32> to vector<7x7xf32>
    %365 = vector.extract_strided_slice %362 {offsets = [0, 1], sizes = [7, 7], strides = [1, 1]} : vector<8x8xf32> to vector<7x7xf32>
    %366 = vector.extract_strided_slice %362 {offsets = [0, 0], sizes = [7, 7], strides = [1, 1]} : vector<8x8xf32> to vector<7x7xf32>
    %c7_202 = arith.constant 7 : index
    %c0_203 = arith.constant 0 : index
    %367 = memref.load %arg1[%c7_202, %c0_203] : memref<8x9xf32, #tpu.memory_space<smem>>
    %368 = vector.broadcast %367 : f32 to vector<7x7xf32>
    %369 = arith.mulf %363, %368 : vector<7x7xf32>
    %c7_204 = arith.constant 7 : index
    %c2_205 = arith.constant 2 : index
    %370 = memref.load %arg1[%c7_204, %c2_205] : memref<8x9xf32, #tpu.memory_space<smem>>
    %371 = vector.broadcast %370 : f32 to vector<7x7xf32>
    %372 = arith.mulf %364, %371 : vector<7x7xf32>
    %373 = arith.addf %369, %372 : vector<7x7xf32>
    %c7_206 = arith.constant 7 : index
    %c6_207 = arith.constant 6 : index
    %374 = memref.load %arg1[%c7_206, %c6_207] : memref<8x9xf32, #tpu.memory_space<smem>>
    %375 = vector.broadcast %374 : f32 to vector<7x7xf32>
    %376 = arith.mulf %365, %375 : vector<7x7xf32>
    %377 = arith.addf %373, %376 : vector<7x7xf32>
    %c7_208 = arith.constant 7 : index
    %c8_209 = arith.constant 8 : index
    %378 = memref.load %arg1[%c7_208, %c8_209] : memref<8x9xf32, #tpu.memory_space<smem>>
    %379 = vector.broadcast %378 : f32 to vector<7x7xf32>
    %380 = arith.mulf %366, %379 : vector<7x7xf32>
    %381 = arith.addf %377, %380 : vector<7x7xf32>
    %c7_210 = arith.constant 7 : index
    %c1_211 = arith.constant 1 : index
    %382 = memref.load %arg1[%c7_210, %c1_211] : memref<8x9xf32, #tpu.memory_space<smem>>
    %383 = vector.broadcast %382 : f32 to vector<7x7xf32>
    %384 = arith.mulf %363, %383 : vector<7x7xf32>
    %c7_212 = arith.constant 7 : index
    %c7_213 = arith.constant 7 : index
    %385 = memref.load %arg1[%c7_212, %c7_213] : memref<8x9xf32, #tpu.memory_space<smem>>
    %386 = vector.broadcast %385 : f32 to vector<7x7xf32>
    %387 = arith.mulf %365, %386 : vector<7x7xf32>
    %388 = arith.addf %384, %387 : vector<7x7xf32>
    %c7_214 = arith.constant 7 : index
    %c3_215 = arith.constant 3 : index
    %389 = memref.load %arg1[%c7_214, %c3_215] : memref<8x9xf32, #tpu.memory_space<smem>>
    %390 = vector.broadcast %389 : f32 to vector<7x7xf32>
    %391 = arith.mulf %363, %390 : vector<7x7xf32>
    %c7_216 = arith.constant 7 : index
    %c5_217 = arith.constant 5 : index
    %392 = memref.load %arg1[%c7_216, %c5_217] : memref<8x9xf32, #tpu.memory_space<smem>>
    %393 = vector.broadcast %392 : f32 to vector<7x7xf32>
    %394 = arith.mulf %364, %393 : vector<7x7xf32>
    %395 = arith.addf %391, %394 : vector<7x7xf32>
    %c7_218 = arith.constant 7 : index
    %c4_219 = arith.constant 4 : index
    %396 = memref.load %arg1[%c7_218, %c4_219] : memref<8x9xf32, #tpu.memory_space<smem>>
    %397 = vector.broadcast %396 : f32 to vector<7x7xf32>
    %398 = arith.mulf %363, %397 : vector<7x7xf32>
    %cst_220 = arith.constant dense<0.000000e+00> : vector<7x14xf32>
    %399 = tpu.matmul %381, %7, %cst_220 {dimension_numbers = #tpu.dot_dimension_numbers<[1], [0], [0], [1], [0, 0, 1, 1], [], []>} : vector<7x7xf32>, vector<7x14xf32>, vector<7x14xf32> -> vector<7x14xf32>
    %cst_221 = arith.constant dense<0.000000e+00> : vector<7x14xf32>
    %400 = tpu.matmul %388, %15, %cst_221 {dimension_numbers = #tpu.dot_dimension_numbers<[1], [0], [0], [1], [0, 0, 1, 1], [], []>} : vector<7x7xf32>, vector<7x14xf32>, vector<7x14xf32> -> vector<7x14xf32>
    %401 = arith.addf %399, %400 : vector<7x14xf32>
    %cst_222 = arith.constant dense<0.000000e+00> : vector<7x14xf32>
    %402 = tpu.matmul %395, %7, %cst_222 {dimension_numbers = #tpu.dot_dimension_numbers<[1], [0], [0], [1], [0, 0, 1, 1], [], []>} : vector<7x7xf32>, vector<7x14xf32>, vector<7x14xf32> -> vector<7x14xf32>
    %cst_223 = arith.constant dense<0.000000e+00> : vector<7x14xf32>
    %403 = tpu.matmul %398, %15, %cst_223 {dimension_numbers = #tpu.dot_dimension_numbers<[1], [0], [0], [1], [0, 0, 1, 1], [], []>} : vector<7x7xf32>, vector<7x14xf32>, vector<7x14xf32> -> vector<7x14xf32>
    %404 = arith.addf %402, %403 : vector<7x14xf32>
    %cst_224 = arith.constant dense<0.000000e+00> : vector<14x14xf32>
    %405 = tpu.matmul %23, %401, %cst_224 {dimension_numbers = #tpu.dot_dimension_numbers<[1], [0], [0], [1], [0, 0, 1, 1], [], []>} : vector<14x7xf32>, vector<7x14xf32>, vector<14x14xf32> -> vector<14x14xf32>
    %cst_225 = arith.constant dense<0.000000e+00> : vector<14x14xf32>
    %406 = tpu.matmul %31, %404, %cst_225 {dimension_numbers = #tpu.dot_dimension_numbers<[1], [0], [0], [1], [0, 0, 1, 1], [], []>} : vector<14x7xf32>, vector<7x14xf32>, vector<14x14xf32> -> vector<14x14xf32>
    %407 = arith.addf %405, %406 : vector<14x14xf32>
    %c0_226 = arith.constant 0 : index
    %c0_227 = arith.constant 0 : index
    %408 = memref.load %arg2[%c0_226, %c0_227] : memref<8x16xf32, #tpu.memory_space<smem>>
    %409 = vector.broadcast %408 : f32 to vector<14x14xf32>
    %410 = arith.mulf %78, %409 : vector<14x14xf32>
    %c1_228 = arith.constant 1 : index
    %c0_229 = arith.constant 0 : index
    %411 = memref.load %arg2[%c1_228, %c0_229] : memref<8x16xf32, #tpu.memory_space<smem>>
    %412 = vector.broadcast %411 : f32 to vector<14x14xf32>
    %413 = arith.mulf %125, %412 : vector<14x14xf32>
    %414 = arith.addf %410, %413 : vector<14x14xf32>
    %c2_230 = arith.constant 2 : index
    %c0_231 = arith.constant 0 : index
    %415 = memref.load %arg2[%c2_230, %c0_231] : memref<8x16xf32, #tpu.memory_space<smem>>
    %416 = vector.broadcast %415 : f32 to vector<14x14xf32>
    %417 = arith.mulf %172, %416 : vector<14x14xf32>
    %418 = arith.addf %414, %417 : vector<14x14xf32>
    %c3_232 = arith.constant 3 : index
    %c0_233 = arith.constant 0 : index
    %419 = memref.load %arg2[%c3_232, %c0_233] : memref<8x16xf32, #tpu.memory_space<smem>>
    %420 = vector.broadcast %419 : f32 to vector<14x14xf32>
    %421 = arith.mulf %219, %420 : vector<14x14xf32>
    %422 = arith.addf %418, %421 : vector<14x14xf32>
    %c4_234 = arith.constant 4 : index
    %c0_235 = arith.constant 0 : index
    %423 = memref.load %arg2[%c4_234, %c0_235] : memref<8x16xf32, #tpu.memory_space<smem>>
    %424 = vector.broadcast %423 : f32 to vector<14x14xf32>
    %425 = arith.mulf %266, %424 : vector<14x14xf32>
    %426 = arith.addf %422, %425 : vector<14x14xf32>
    %c5_236 = arith.constant 5 : index
    %c0_237 = arith.constant 0 : index
    %427 = memref.load %arg2[%c5_236, %c0_237] : memref<8x16xf32, #tpu.memory_space<smem>>
    %428 = vector.broadcast %427 : f32 to vector<14x14xf32>
    %429 = arith.mulf %313, %428 : vector<14x14xf32>
    %430 = arith.addf %426, %429 : vector<14x14xf32>
    %c6_238 = arith.constant 6 : index
    %c0_239 = arith.constant 0 : index
    %431 = memref.load %arg2[%c6_238, %c0_239] : memref<8x16xf32, #tpu.memory_space<smem>>
    %432 = vector.broadcast %431 : f32 to vector<14x14xf32>
    %433 = arith.mulf %360, %432 : vector<14x14xf32>
    %434 = arith.addf %430, %433 : vector<14x14xf32>
    %c7_240 = arith.constant 7 : index
    %c0_241 = arith.constant 0 : index
    %435 = memref.load %arg2[%c7_240, %c0_241] : memref<8x16xf32, #tpu.memory_space<smem>>
    %436 = vector.broadcast %435 : f32 to vector<14x14xf32>
    %437 = arith.mulf %407, %436 : vector<14x14xf32>
    %438 = arith.addf %434, %437 : vector<14x14xf32>
    %c0_242 = arith.constant 0 : index
    %c0_243 = arith.constant 0 : index
    %c0_244 = arith.constant 0 : index
    %c0_245 = arith.constant 0 : index
    %439 = vector.load %arg4[%c0_242, %c0_243, %c0_244, %c0_245] : memref<1x16x14x14xf32, #tpu.memory_space<vmem>>, vector<1x1x14x14xf32>
    %440 = vector.shape_cast %439 : vector<1x1x14x14xf32> to vector<14x14xf32>
    %441 = vector.shape_cast %438 : vector<14x14xf32> to vector<1x1x14x14xf32>
    tpu.vector_store %arg4[%c0_242, %c0_243, %c0_244, %c0_245], %441 {strides = array<i32>} : memref<1x16x14x14xf32, #tpu.memory_space<vmem>>, vector<1x1x14x14xf32>,
    %c0_246 = arith.constant 0 : index
    %c1_247 = arith.constant 1 : index
    %442 = memref.load %arg2[%c0_246, %c1_247] : memref<8x16xf32, #tpu.memory_space<smem>>
    %443 = vector.broadcast %442 : f32 to vector<14x14xf32>
    %444 = arith.mulf %78, %443 : vector<14x14xf32>
    %c1_248 = arith.constant 1 : index
    %c1_249 = arith.constant 1 : index
    %445 = memref.load %arg2[%c1_248, %c1_249] : memref<8x16xf32, #tpu.memory_space<smem>>
    %446 = vector.broadcast %445 : f32 to vector<14x14xf32>
    %447 = arith.mulf %125, %446 : vector<14x14xf32>
    %448 = arith.addf %444, %447 : vector<14x14xf32>
    %c2_250 = arith.constant 2 : index
    %c1_251 = arith.constant 1 : index
    %449 = memref.load %arg2[%c2_250, %c1_251] : memref<8x16xf32, #tpu.memory_space<smem>>
    %450 = vector.broadcast %449 : f32 to vector<14x14xf32>
    %451 = arith.mulf %172, %450 : vector<14x14xf32>
    %452 = arith.addf %448, %451 : vector<14x14xf32>
    %c3_252 = arith.constant 3 : index
    %c1_253 = arith.constant 1 : index
    %453 = memref.load %arg2[%c3_252, %c1_253] : memref<8x16xf32, #tpu.memory_space<smem>>
    %454 = vector.broadcast %453 : f32 to vector<14x14xf32>
    %455 = arith.mulf %219, %454 : vector<14x14xf32>
    %456 = arith.addf %452, %455 : vector<14x14xf32>
    %c4_254 = arith.constant 4 : index
    %c1_255 = arith.constant 1 : index
    %457 = memref.load %arg2[%c4_254, %c1_255] : memref<8x16xf32, #tpu.memory_space<smem>>
    %458 = vector.broadcast %457 : f32 to vector<14x14xf32>
    %459 = arith.mulf %266, %458 : vector<14x14xf32>
    %460 = arith.addf %456, %459 : vector<14x14xf32>
    %c5_256 = arith.constant 5 : index
    %c1_257 = arith.constant 1 : index
    %461 = memref.load %arg2[%c5_256, %c1_257] : memref<8x16xf32, #tpu.memory_space<smem>>
    %462 = vector.broadcast %461 : f32 to vector<14x14xf32>
    %463 = arith.mulf %313, %462 : vector<14x14xf32>
    %464 = arith.addf %460, %463 : vector<14x14xf32>
    %c6_258 = arith.constant 6 : index
    %c1_259 = arith.constant 1 : index
    %465 = memref.load %arg2[%c6_258, %c1_259] : memref<8x16xf32, #tpu.memory_space<smem>>
    %466 = vector.broadcast %465 : f32 to vector<14x14xf32>
    %467 = arith.mulf %360, %466 : vector<14x14xf32>
    %468 = arith.addf %464, %467 : vector<14x14xf32>
    %c7_260 = arith.constant 7 : index
    %c1_261 = arith.constant 1 : index
    %469 = memref.load %arg2[%c7_260, %c1_261] : memref<8x16xf32, #tpu.memory_space<smem>>
    %470 = vector.broadcast %469 : f32 to vector<14x14xf32>
    %471 = arith.mulf %407, %470 : vector<14x14xf32>
    %472 = arith.addf %468, %471 : vector<14x14xf32>
    %c0_262 = arith.constant 0 : index
    %c1_263 = arith.constant 1 : index
    %c0_264 = arith.constant 0 : index
    %c0_265 = arith.constant 0 : index
    %473 = vector.load %arg4[%c0_262, %c1_263, %c0_264, %c0_265] : memref<1x16x14x14xf32, #tpu.memory_space<vmem>>, vector<1x1x14x14xf32>
    %474 = vector.shape_cast %473 : vector<1x1x14x14xf32> to vector<14x14xf32>
    %475 = vector.shape_cast %472 : vector<14x14xf32> to vector<1x1x14x14xf32>
    tpu.vector_store %arg4[%c0_262, %c1_263, %c0_264, %c0_265], %475 {strides = array<i32>} : memref<1x16x14x14xf32, #tpu.memory_space<vmem>>, vector<1x1x14x14xf32>,
    %c0_266 = arith.constant 0 : index
    %c2_267 = arith.constant 2 : index
    %476 = memref.load %arg2[%c0_266, %c2_267] : memref<8x16xf32, #tpu.memory_space<smem>>
    %477 = vector.broadcast %476 : f32 to vector<14x14xf32>
    %478 = arith.mulf %78, %477 : vector<14x14xf32>
    %c1_268 = arith.constant 1 : index
    %c2_269 = arith.constant 2 : index
    %479 = memref.load %arg2[%c1_268, %c2_269] : memref<8x16xf32, #tpu.memory_space<smem>>
    %480 = vector.broadcast %479 : f32 to vector<14x14xf32>
    %481 = arith.mulf %125, %480 : vector<14x14xf32>
    %482 = arith.addf %478, %481 : vector<14x14xf32>
    %c2_270 = arith.constant 2 : index
    %c2_271 = arith.constant 2 : index
    %483 = memref.load %arg2[%c2_270, %c2_271] : memref<8x16xf32, #tpu.memory_space<smem>>
    %484 = vector.broadcast %483 : f32 to vector<14x14xf32>
    %485 = arith.mulf %172, %484 : vector<14x14xf32>
    %486 = arith.addf %482, %485 : vector<14x14xf32>
    %c3_272 = arith.constant 3 : index
    %c2_273 = arith.constant 2 : index
    %487 = memref.load %arg2[%c3_272, %c2_273] : memref<8x16xf32, #tpu.memory_space<smem>>
    %488 = vector.broadcast %487 : f32 to vector<14x14xf32>
    %489 = arith.mulf %219, %488 : vector<14x14xf32>
    %490 = arith.addf %486, %489 : vector<14x14xf32>
    %c4_274 = arith.constant 4 : index
    %c2_275 = arith.constant 2 : index
    %491 = memref.load %arg2[%c4_274, %c2_275] : memref<8x16xf32, #tpu.memory_space<smem>>
    %492 = vector.broadcast %491 : f32 to vector<14x14xf32>
    %493 = arith.mulf %266, %492 : vector<14x14xf32>
    %494 = arith.addf %490, %493 : vector<14x14xf32>
    %c5_276 = arith.constant 5 : index
    %c2_277 = arith.constant 2 : index
    %495 = memref.load %arg2[%c5_276, %c2_277] : memref<8x16xf32, #tpu.memory_space<smem>>
    %496 = vector.broadcast %495 : f32 to vector<14x14xf32>
    %497 = arith.mulf %313, %496 : vector<14x14xf32>
    %498 = arith.addf %494, %497 : vector<14x14xf32>
    %c6_278 = arith.constant 6 : index
    %c2_279 = arith.constant 2 : index
    %499 = memref.load %arg2[%c6_278, %c2_279] : memref<8x16xf32, #tpu.memory_space<smem>>
    %500 = vector.broadcast %499 : f32 to vector<14x14xf32>
    %501 = arith.mulf %360, %500 : vector<14x14xf32>
    %502 = arith.addf %498, %501 : vector<14x14xf32>
    %c7_280 = arith.constant 7 : index
    %c2_281 = arith.constant 2 : index
    %503 = memref.load %arg2[%c7_280, %c2_281] : memref<8x16xf32, #tpu.memory_space<smem>>
    %504 = vector.broadcast %503 : f32 to vector<14x14xf32>
    %505 = arith.mulf %407, %504 : vector<14x14xf32>
    %506 = arith.addf %502, %505 : vector<14x14xf32>
    %c0_282 = arith.constant 0 : index
    %c2_283 = arith.constant 2 : index
    %c0_284 = arith.constant 0 : index
    %c0_285 = arith.constant 0 : index
    %507 = vector.load %arg4[%c0_282, %c2_283, %c0_284, %c0_285] : memref<1x16x14x14xf32, #tpu.memory_space<vmem>>, vector<1x1x14x14xf32>
    %508 = vector.shape_cast %507 : vector<1x1x14x14xf32> to vector<14x14xf32>
    %509 = vector.shape_cast %506 : vector<14x14xf32> to vector<1x1x14x14xf32>
    tpu.vector_store %arg4[%c0_282, %c2_283, %c0_284, %c0_285], %509 {strides = array<i32>} : memref<1x16x14x14xf32, #tpu.memory_space<vmem>>, vector<1x1x14x14xf32>,
    %c0_286 = arith.constant 0 : index
    %c3_287 = arith.constant 3 : index
    %510 = memref.load %arg2[%c0_286, %c3_287] : memref<8x16xf32, #tpu.memory_space<smem>>
    %511 = vector.broadcast %510 : f32 to vector<14x14xf32>
    %512 = arith.mulf %78, %511 : vector<14x14xf32>
    %c1_288 = arith.constant 1 : index
    %c3_289 = arith.constant 3 : index
    %513 = memref.load %arg2[%c1_288, %c3_289] : memref<8x16xf32, #tpu.memory_space<smem>>
    %514 = vector.broadcast %513 : f32 to vector<14x14xf32>
    %515 = arith.mulf %125, %514 : vector<14x14xf32>
    %516 = arith.addf %512, %515 : vector<14x14xf32>
    %c2_290 = arith.constant 2 : index
    %c3_291 = arith.constant 3 : index
    %517 = memref.load %arg2[%c2_290, %c3_291] : memref<8x16xf32, #tpu.memory_space<smem>>
    %518 = vector.broadcast %517 : f32 to vector<14x14xf32>
    %519 = arith.mulf %172, %518 : vector<14x14xf32>
    %520 = arith.addf %516, %519 : vector<14x14xf32>
    %c3_292 = arith.constant 3 : index
    %c3_293 = arith.constant 3 : index
    %521 = memref.load %arg2[%c3_292, %c3_293] : memref<8x16xf32, #tpu.memory_space<smem>>
    %522 = vector.broadcast %521 : f32 to vector<14x14xf32>
    %523 = arith.mulf %219, %522 : vector<14x14xf32>
    %524 = arith.addf %520, %523 : vector<14x14xf32>
    %c4_294 = arith.constant 4 : index
    %c3_295 = arith.constant 3 : index
    %525 = memref.load %arg2[%c4_294, %c3_295] : memref<8x16xf32, #tpu.memory_space<smem>>
    %526 = vector.broadcast %525 : f32 to vector<14x14xf32>
    %527 = arith.mulf %266, %526 : vector<14x14xf32>
    %528 = arith.addf %524, %527 : vector<14x14xf32>
    %c5_296 = arith.constant 5 : index
    %c3_297 = arith.constant 3 : index
    %529 = memref.load %arg2[%c5_296, %c3_297] : memref<8x16xf32, #tpu.memory_space<smem>>
    %530 = vector.broadcast %529 : f32 to vector<14x14xf32>
    %531 = arith.mulf %313, %530 : vector<14x14xf32>
    %532 = arith.addf %528, %531 : vector<14x14xf32>
    %c6_298 = arith.constant 6 : index
    %c3_299 = arith.constant 3 : index
    %533 = memref.load %arg2[%c6_298, %c3_299] : memref<8x16xf32, #tpu.memory_space<smem>>
    %534 = vector.broadcast %533 : f32 to vector<14x14xf32>
    %535 = arith.mulf %360, %534 : vector<14x14xf32>
    %536 = arith.addf %532, %535 : vector<14x14xf32>
    %c7_300 = arith.constant 7 : index
    %c3_301 = arith.constant 3 : index
    %537 = memref.load %arg2[%c7_300, %c3_301] : memref<8x16xf32, #tpu.memory_space<smem>>
    %538 = vector.broadcast %537 : f32 to vector<14x14xf32>
    %539 = arith.mulf %407, %538 : vector<14x14xf32>
    %540 = arith.addf %536, %539 : vector<14x14xf32>
    %c0_302 = arith.constant 0 : index
    %c3_303 = arith.constant 3 : index
    %c0_304 = arith.constant 0 : index
    %c0_305 = arith.constant 0 : index
    %541 = vector.load %arg4[%c0_302, %c3_303, %c0_304, %c0_305] : memref<1x16x14x14xf32, #tpu.memory_space<vmem>>, vector<1x1x14x14xf32>
    %542 = vector.shape_cast %541 : vector<1x1x14x14xf32> to vector<14x14xf32>
    %543 = vector.shape_cast %540 : vector<14x14xf32> to vector<1x1x14x14xf32>
    tpu.vector_store %arg4[%c0_302, %c3_303, %c0_304, %c0_305], %543 {strides = array<i32>} : memref<1x16x14x14xf32, #tpu.memory_space<vmem>>, vector<1x1x14x14xf32>,
    %c0_306 = arith.constant 0 : index
    %c4_307 = arith.constant 4 : index
    %544 = memref.load %arg2[%c0_306, %c4_307] : memref<8x16xf32, #tpu.memory_space<smem>>
    %545 = vector.broadcast %544 : f32 to vector<14x14xf32>
    %546 = arith.mulf %78, %545 : vector<14x14xf32>
    %c1_308 = arith.constant 1 : index
    %c4_309 = arith.constant 4 : index
    %547 = memref.load %arg2[%c1_308, %c4_309] : memref<8x16xf32, #tpu.memory_space<smem>>
    %548 = vector.broadcast %547 : f32 to vector<14x14xf32>
    %549 = arith.mulf %125, %548 : vector<14x14xf32>
    %550 = arith.addf %546, %549 : vector<14x14xf32>
    %c2_310 = arith.constant 2 : index
    %c4_311 = arith.constant 4 : index
    %551 = memref.load %arg2[%c2_310, %c4_311] : memref<8x16xf32, #tpu.memory_space<smem>>
    %552 = vector.broadcast %551 : f32 to vector<14x14xf32>
    %553 = arith.mulf %172, %552 : vector<14x14xf32>
    %554 = arith.addf %550, %553 : vector<14x14xf32>
    %c3_312 = arith.constant 3 : index
    %c4_313 = arith.constant 4 : index
    %555 = memref.load %arg2[%c3_312, %c4_313] : memref<8x16xf32, #tpu.memory_space<smem>>
    %556 = vector.broadcast %555 : f32 to vector<14x14xf32>
    %557 = arith.mulf %219, %556 : vector<14x14xf32>
    %558 = arith.addf %554, %557 : vector<14x14xf32>
    %c4_314 = arith.constant 4 : index
    %c4_315 = arith.constant 4 : index
    %559 = memref.load %arg2[%c4_314, %c4_315] : memref<8x16xf32, #tpu.memory_space<smem>>
    %560 = vector.broadcast %559 : f32 to vector<14x14xf32>
    %561 = arith.mulf %266, %560 : vector<14x14xf32>
    %562 = arith.addf %558, %561 : vector<14x14xf32>
    %c5_316 = arith.constant 5 : index
    %c4_317 = arith.constant 4 : index
    %563 = memref.load %arg2[%c5_316, %c4_317] : memref<8x16xf32, #tpu.memory_space<smem>>
    %564 = vector.broadcast %563 : f32 to vector<14x14xf32>
    %565 = arith.mulf %313, %564 : vector<14x14xf32>
    %566 = arith.addf %562, %565 : vector<14x14xf32>
    %c6_318 = arith.constant 6 : index
    %c4_319 = arith.constant 4 : index
    %567 = memref.load %arg2[%c6_318, %c4_319] : memref<8x16xf32, #tpu.memory_space<smem>>
    %568 = vector.broadcast %567 : f32 to vector<14x14xf32>
    %569 = arith.mulf %360, %568 : vector<14x14xf32>
    %570 = arith.addf %566, %569 : vector<14x14xf32>
    %c7_320 = arith.constant 7 : index
    %c4_321 = arith.constant 4 : index
    %571 = memref.load %arg2[%c7_320, %c4_321] : memref<8x16xf32, #tpu.memory_space<smem>>
    %572 = vector.broadcast %571 : f32 to vector<14x14xf32>
    %573 = arith.mulf %407, %572 : vector<14x14xf32>
    %574 = arith.addf %570, %573 : vector<14x14xf32>
    %c0_322 = arith.constant 0 : index
    %c4_323 = arith.constant 4 : index
    %c0_324 = arith.constant 0 : index
    %c0_325 = arith.constant 0 : index
    %575 = vector.load %arg4[%c0_322, %c4_323, %c0_324, %c0_325] : memref<1x16x14x14xf32, #tpu.memory_space<vmem>>, vector<1x1x14x14xf32>
    %576 = vector.shape_cast %575 : vector<1x1x14x14xf32> to vector<14x14xf32>
    %577 = vector.shape_cast %574 : vector<14x14xf32> to vector<1x1x14x14xf32>
    tpu.vector_store %arg4[%c0_322, %c4_323, %c0_324, %c0_325], %577 {strides = array<i32>} : memref<1x16x14x14xf32, #tpu.memory_space<vmem>>, vector<1x1x14x14xf32>,
    %c0_326 = arith.constant 0 : index
    %c5_327 = arith.constant 5 : index
    %578 = memref.load %arg2[%c0_326, %c5_327] : memref<8x16xf32, #tpu.memory_space<smem>>
    %579 = vector.broadcast %578 : f32 to vector<14x14xf32>
    %580 = arith.mulf %78, %579 : vector<14x14xf32>
    %c1_328 = arith.constant 1 : index
    %c5_329 = arith.constant 5 : index
    %581 = memref.load %arg2[%c1_328, %c5_329] : memref<8x16xf32, #tpu.memory_space<smem>>
    %582 = vector.broadcast %581 : f32 to vector<14x14xf32>
    %583 = arith.mulf %125, %582 : vector<14x14xf32>
    %584 = arith.addf %580, %583 : vector<14x14xf32>
    %c2_330 = arith.constant 2 : index
    %c5_331 = arith.constant 5 : index
    %585 = memref.load %arg2[%c2_330, %c5_331] : memref<8x16xf32, #tpu.memory_space<smem>>
    %586 = vector.broadcast %585 : f32 to vector<14x14xf32>
    %587 = arith.mulf %172, %586 : vector<14x14xf32>
    %588 = arith.addf %584, %587 : vector<14x14xf32>
    %c3_332 = arith.constant 3 : index
    %c5_333 = arith.constant 5 : index
    %589 = memref.load %arg2[%c3_332, %c5_333] : memref<8x16xf32, #tpu.memory_space<smem>>
    %590 = vector.broadcast %589 : f32 to vector<14x14xf32>
    %591 = arith.mulf %219, %590 : vector<14x14xf32>
    %592 = arith.addf %588, %591 : vector<14x14xf32>
    %c4_334 = arith.constant 4 : index
    %c5_335 = arith.constant 5 : index
    %593 = memref.load %arg2[%c4_334, %c5_335] : memref<8x16xf32, #tpu.memory_space<smem>>
    %594 = vector.broadcast %593 : f32 to vector<14x14xf32>
    %595 = arith.mulf %266, %594 : vector<14x14xf32>
    %596 = arith.addf %592, %595 : vector<14x14xf32>
    %c5_336 = arith.constant 5 : index
    %c5_337 = arith.constant 5 : index
    %597 = memref.load %arg2[%c5_336, %c5_337] : memref<8x16xf32, #tpu.memory_space<smem>>
    %598 = vector.broadcast %597 : f32 to vector<14x14xf32>
    %599 = arith.mulf %313, %598 : vector<14x14xf32>
    %600 = arith.addf %596, %599 : vector<14x14xf32>
    %c6_338 = arith.constant 6 : index
    %c5_339 = arith.constant 5 : index
    %601 = memref.load %arg2[%c6_338, %c5_339] : memref<8x16xf32, #tpu.memory_space<smem>>
    %602 = vector.broadcast %601 : f32 to vector<14x14xf32>
    %603 = arith.mulf %360, %602 : vector<14x14xf32>
    %604 = arith.addf %600, %603 : vector<14x14xf32>
    %c7_340 = arith.constant 7 : index
    %c5_341 = arith.constant 5 : index
    %605 = memref.load %arg2[%c7_340, %c5_341] : memref<8x16xf32, #tpu.memory_space<smem>>
    %606 = vector.broadcast %605 : f32 to vector<14x14xf32>
    %607 = arith.mulf %407, %606 : vector<14x14xf32>
    %608 = arith.addf %604, %607 : vector<14x14xf32>
    %c0_342 = arith.constant 0 : index
    %c5_343 = arith.constant 5 : index
    %c0_344 = arith.constant 0 : index
    %c0_345 = arith.constant 0 : index
    %609 = vector.load %arg4[%c0_342, %c5_343, %c0_344, %c0_345] : memref<1x16x14x14xf32, #tpu.memory_space<vmem>>, vector<1x1x14x14xf32>
    %610 = vector.shape_cast %609 : vector<1x1x14x14xf32> to vector<14x14xf32>
    %611 = vector.shape_cast %608 : vector<14x14xf32> to vector<1x1x14x14xf32>
    tpu.vector_store %arg4[%c0_342, %c5_343, %c0_344, %c0_345], %611 {strides = array<i32>} : memref<1x16x14x14xf32, #tpu.memory_space<vmem>>, vector<1x1x14x14xf32>,
    %c0_346 = arith.constant 0 : index
    %c6_347 = arith.constant 6 : index
    %612 = memref.load %arg2[%c0_346, %c6_347] : memref<8x16xf32, #tpu.memory_space<smem>>
    %613 = vector.broadcast %612 : f32 to vector<14x14xf32>
    %614 = arith.mulf %78, %613 : vector<14x14xf32>
    %c1_348 = arith.constant 1 : index
    %c6_349 = arith.constant 6 : index
    %615 = memref.load %arg2[%c1_348, %c6_349] : memref<8x16xf32, #tpu.memory_space<smem>>
    %616 = vector.broadcast %615 : f32 to vector<14x14xf32>
    %617 = arith.mulf %125, %616 : vector<14x14xf32>
    %618 = arith.addf %614, %617 : vector<14x14xf32>
    %c2_350 = arith.constant 2 : index
    %c6_351 = arith.constant 6 : index
    %619 = memref.load %arg2[%c2_350, %c6_351] : memref<8x16xf32, #tpu.memory_space<smem>>
    %620 = vector.broadcast %619 : f32 to vector<14x14xf32>
    %621 = arith.mulf %172, %620 : vector<14x14xf32>
    %622 = arith.addf %618, %621 : vector<14x14xf32>
    %c3_352 = arith.constant 3 : index
    %c6_353 = arith.constant 6 : index
    %623 = memref.load %arg2[%c3_352, %c6_353] : memref<8x16xf32, #tpu.memory_space<smem>>
    %624 = vector.broadcast %623 : f32 to vector<14x14xf32>
    %625 = arith.mulf %219, %624 : vector<14x14xf32>
    %626 = arith.addf %622, %625 : vector<14x14xf32>
    %c4_354 = arith.constant 4 : index
    %c6_355 = arith.constant 6 : index
    %627 = memref.load %arg2[%c4_354, %c6_355] : memref<8x16xf32, #tpu.memory_space<smem>>
    %628 = vector.broadcast %627 : f32 to vector<14x14xf32>
    %629 = arith.mulf %266, %628 : vector<14x14xf32>
    %630 = arith.addf %626, %629 : vector<14x14xf32>
    %c5_356 = arith.constant 5 : index
    %c6_357 = arith.constant 6 : index
    %631 = memref.load %arg2[%c5_356, %c6_357] : memref<8x16xf32, #tpu.memory_space<smem>>
    %632 = vector.broadcast %631 : f32 to vector<14x14xf32>
    %633 = arith.mulf %313, %632 : vector<14x14xf32>
    %634 = arith.addf %630, %633 : vector<14x14xf32>
    %c6_358 = arith.constant 6 : index
    %c6_359 = arith.constant 6 : index
    %635 = memref.load %arg2[%c6_358, %c6_359] : memref<8x16xf32, #tpu.memory_space<smem>>
    %636 = vector.broadcast %635 : f32 to vector<14x14xf32>
    %637 = arith.mulf %360, %636 : vector<14x14xf32>
    %638 = arith.addf %634, %637 : vector<14x14xf32>
    %c7_360 = arith.constant 7 : index
    %c6_361 = arith.constant 6 : index
    %639 = memref.load %arg2[%c7_360, %c6_361] : memref<8x16xf32, #tpu.memory_space<smem>>
    %640 = vector.broadcast %639 : f32 to vector<14x14xf32>
    %641 = arith.mulf %407, %640 : vector<14x14xf32>
    %642 = arith.addf %638, %641 : vector<14x14xf32>
    %c0_362 = arith.constant 0 : index
    %c6_363 = arith.constant 6 : index
    %c0_364 = arith.constant 0 : index
    %c0_365 = arith.constant 0 : index
    %643 = vector.load %arg4[%c0_362, %c6_363, %c0_364, %c0_365] : memref<1x16x14x14xf32, #tpu.memory_space<vmem>>, vector<1x1x14x14xf32>
    %644 = vector.shape_cast %643 : vector<1x1x14x14xf32> to vector<14x14xf32>
    %645 = vector.shape_cast %642 : vector<14x14xf32> to vector<1x1x14x14xf32>
    tpu.vector_store %arg4[%c0_362, %c6_363, %c0_364, %c0_365], %645 {strides = array<i32>} : memref<1x16x14x14xf32, #tpu.memory_space<vmem>>, vector<1x1x14x14xf32>,
    %c0_366 = arith.constant 0 : index
    %c7_367 = arith.constant 7 : index
    %646 = memref.load %arg2[%c0_366, %c7_367] : memref<8x16xf32, #tpu.memory_space<smem>>
    %647 = vector.broadcast %646 : f32 to vector<14x14xf32>
    %648 = arith.mulf %78, %647 : vector<14x14xf32>
    %c1_368 = arith.constant 1 : index
    %c7_369 = arith.constant 7 : index
    %649 = memref.load %arg2[%c1_368, %c7_369] : memref<8x16xf32, #tpu.memory_space<smem>>
    %650 = vector.broadcast %649 : f32 to vector<14x14xf32>
    %651 = arith.mulf %125, %650 : vector<14x14xf32>
    %652 = arith.addf %648, %651 : vector<14x14xf32>
    %c2_370 = arith.constant 2 : index
    %c7_371 = arith.constant 7 : index
    %653 = memref.load %arg2[%c2_370, %c7_371] : memref<8x16xf32, #tpu.memory_space<smem>>
    %654 = vector.broadcast %653 : f32 to vector<14x14xf32>
    %655 = arith.mulf %172, %654 : vector<14x14xf32>
    %656 = arith.addf %652, %655 : vector<14x14xf32>
    %c3_372 = arith.constant 3 : index
    %c7_373 = arith.constant 7 : index
    %657 = memref.load %arg2[%c3_372, %c7_373] : memref<8x16xf32, #tpu.memory_space<smem>>
    %658 = vector.broadcast %657 : f32 to vector<14x14xf32>
    %659 = arith.mulf %219, %658 : vector<14x14xf32>
    %660 = arith.addf %656, %659 : vector<14x14xf32>
    %c4_374 = arith.constant 4 : index
    %c7_375 = arith.constant 7 : index
    %661 = memref.load %arg2[%c4_374, %c7_375] : memref<8x16xf32, #tpu.memory_space<smem>>
    %662 = vector.broadcast %661 : f32 to vector<14x14xf32>
    %663 = arith.mulf %266, %662 : vector<14x14xf32>
    %664 = arith.addf %660, %663 : vector<14x14xf32>
    %c5_376 = arith.constant 5 : index
    %c7_377 = arith.constant 7 : index
    %665 = memref.load %arg2[%c5_376, %c7_377] : memref<8x16xf32, #tpu.memory_space<smem>>
    %666 = vector.broadcast %665 : f32 to vector<14x14xf32>
    %667 = arith.mulf %313, %666 : vector<14x14xf32>
    %668 = arith.addf %664, %667 : vector<14x14xf32>
    %c6_378 = arith.constant 6 : index
    %c7_379 = arith.constant 7 : index
    %669 = memref.load %arg2[%c6_378, %c7_379] : memref<8x16xf32, #tpu.memory_space<smem>>
    %670 = vector.broadcast %669 : f32 to vector<14x14xf32>
    %671 = arith.mulf %360, %670 : vector<14x14xf32>
    %672 = arith.addf %668, %671 : vector<14x14xf32>
    %c7_380 = arith.constant 7 : index
    %c7_381 = arith.constant 7 : index
    %673 = memref.load %arg2[%c7_380, %c7_381] : memref<8x16xf32, #tpu.memory_space<smem>>
    %674 = vector.broadcast %673 : f32 to vector<14x14xf32>
    %675 = arith.mulf %407, %674 : vector<14x14xf32>
    %676 = arith.addf %672, %675 : vector<14x14xf32>
    %c0_382 = arith.constant 0 : index
    %c7_383 = arith.constant 7 : index
    %c0_384 = arith.constant 0 : index
    %c0_385 = arith.constant 0 : index
    %677 = vector.load %arg4[%c0_382, %c7_383, %c0_384, %c0_385] : memref<1x16x14x14xf32, #tpu.memory_space<vmem>>, vector<1x1x14x14xf32>
    %678 = vector.shape_cast %677 : vector<1x1x14x14xf32> to vector<14x14xf32>
    %679 = vector.shape_cast %676 : vector<14x14xf32> to vector<1x1x14x14xf32>
    tpu.vector_store %arg4[%c0_382, %c7_383, %c0_384, %c0_385], %679 {strides = array<i32>} : memref<1x16x14x14xf32, #tpu.memory_space<vmem>>, vector<1x1x14x14xf32>,
    %c0_386 = arith.constant 0 : index
    %c8_387 = arith.constant 8 : index
    %680 = memref.load %arg2[%c0_386, %c8_387] : memref<8x16xf32, #tpu.memory_space<smem>>
    %681 = vector.broadcast %680 : f32 to vector<14x14xf32>
    %682 = arith.mulf %78, %681 : vector<14x14xf32>
    %c1_388 = arith.constant 1 : index
    %c8_389 = arith.constant 8 : index
    %683 = memref.load %arg2[%c1_388, %c8_389] : memref<8x16xf32, #tpu.memory_space<smem>>
    %684 = vector.broadcast %683 : f32 to vector<14x14xf32>
    %685 = arith.mulf %125, %684 : vector<14x14xf32>
    %686 = arith.addf %682, %685 : vector<14x14xf32>
    %c2_390 = arith.constant 2 : index
    %c8_391 = arith.constant 8 : index
    %687 = memref.load %arg2[%c2_390, %c8_391] : memref<8x16xf32, #tpu.memory_space<smem>>
    %688 = vector.broadcast %687 : f32 to vector<14x14xf32>
    %689 = arith.mulf %172, %688 : vector<14x14xf32>
    %690 = arith.addf %686, %689 : vector<14x14xf32>
    %c3_392 = arith.constant 3 : index
    %c8_393 = arith.constant 8 : index
    %691 = memref.load %arg2[%c3_392, %c8_393] : memref<8x16xf32, #tpu.memory_space<smem>>
    %692 = vector.broadcast %691 : f32 to vector<14x14xf32>
    %693 = arith.mulf %219, %692 : vector<14x14xf32>
    %694 = arith.addf %690, %693 : vector<14x14xf32>
    %c4_394 = arith.constant 4 : index
    %c8_395 = arith.constant 8 : index
    %695 = memref.load %arg2[%c4_394, %c8_395] : memref<8x16xf32, #tpu.memory_space<smem>>
    %696 = vector.broadcast %695 : f32 to vector<14x14xf32>
    %697 = arith.mulf %266, %696 : vector<14x14xf32>
    %698 = arith.addf %694, %697 : vector<14x14xf32>
    %c5_396 = arith.constant 5 : index
    %c8_397 = arith.constant 8 : index
    %699 = memref.load %arg2[%c5_396, %c8_397] : memref<8x16xf32, #tpu.memory_space<smem>>
    %700 = vector.broadcast %699 : f32 to vector<14x14xf32>
    %701 = arith.mulf %313, %700 : vector<14x14xf32>
    %702 = arith.addf %698, %701 : vector<14x14xf32>
    %c6_398 = arith.constant 6 : index
    %c8_399 = arith.constant 8 : index
    %703 = memref.load %arg2[%c6_398, %c8_399] : memref<8x16xf32, #tpu.memory_space<smem>>
    %704 = vector.broadcast %703 : f32 to vector<14x14xf32>
    %705 = arith.mulf %360, %704 : vector<14x14xf32>
    %706 = arith.addf %702, %705 : vector<14x14xf32>
    %c7_400 = arith.constant 7 : index
    %c8_401 = arith.constant 8 : index
    %707 = memref.load %arg2[%c7_400, %c8_401] : memref<8x16xf32, #tpu.memory_space<smem>>
    %708 = vector.broadcast %707 : f32 to vector<14x14xf32>
    %709 = arith.mulf %407, %708 : vector<14x14xf32>
    %710 = arith.addf %706, %709 : vector<14x14xf32>
    %c0_402 = arith.constant 0 : index
    %c8_403 = arith.constant 8 : index
    %c0_404 = arith.constant 0 : index
    %c0_405 = arith.constant 0 : index
    %711 = vector.load %arg4[%c0_402, %c8_403, %c0_404, %c0_405] : memref<1x16x14x14xf32, #tpu.memory_space<vmem>>, vector<1x1x14x14xf32>
    %712 = vector.shape_cast %711 : vector<1x1x14x14xf32> to vector<14x14xf32>
    %713 = vector.shape_cast %710 : vector<14x14xf32> to vector<1x1x14x14xf32>
    tpu.vector_store %arg4[%c0_402, %c8_403, %c0_404, %c0_405], %713 {strides = array<i32>} : memref<1x16x14x14xf32, #tpu.memory_space<vmem>>, vector<1x1x14x14xf32>,
    %c0_406 = arith.constant 0 : index
    %c9 = arith.constant 9 : index
    %714 = memref.load %arg2[%c0_406, %c9] : memref<8x16xf32, #tpu.memory_space<smem>>
    %715 = vector.broadcast %714 : f32 to vector<14x14xf32>
    %716 = arith.mulf %78, %715 : vector<14x14xf32>
    %c1_407 = arith.constant 1 : index
    %c9_408 = arith.constant 9 : index
    %717 = memref.load %arg2[%c1_407, %c9_408] : memref<8x16xf32, #tpu.memory_space<smem>>
    %718 = vector.broadcast %717 : f32 to vector<14x14xf32>
    %719 = arith.mulf %125, %718 : vector<14x14xf32>
    %720 = arith.addf %716, %719 : vector<14x14xf32>
    %c2_409 = arith.constant 2 : index
    %c9_410 = arith.constant 9 : index
    %721 = memref.load %arg2[%c2_409, %c9_410] : memref<8x16xf32, #tpu.memory_space<smem>>
    %722 = vector.broadcast %721 : f32 to vector<14x14xf32>
    %723 = arith.mulf %172, %722 : vector<14x14xf32>
    %724 = arith.addf %720, %723 : vector<14x14xf32>
    %c3_411 = arith.constant 3 : index
    %c9_412 = arith.constant 9 : index
    %725 = memref.load %arg2[%c3_411, %c9_412] : memref<8x16xf32, #tpu.memory_space<smem>>
    %726 = vector.broadcast %725 : f32 to vector<14x14xf32>
    %727 = arith.mulf %219, %726 : vector<14x14xf32>
    %728 = arith.addf %724, %727 : vector<14x14xf32>
    %c4_413 = arith.constant 4 : index
    %c9_414 = arith.constant 9 : index
    %729 = memref.load %arg2[%c4_413, %c9_414] : memref<8x16xf32, #tpu.memory_space<smem>>
    %730 = vector.broadcast %729 : f32 to vector<14x14xf32>
    %731 = arith.mulf %266, %730 : vector<14x14xf32>
    %732 = arith.addf %728, %731 : vector<14x14xf32>
    %c5_415 = arith.constant 5 : index
    %c9_416 = arith.constant 9 : index
    %733 = memref.load %arg2[%c5_415, %c9_416] : memref<8x16xf32, #tpu.memory_space<smem>>
    %734 = vector.broadcast %733 : f32 to vector<14x14xf32>
    %735 = arith.mulf %313, %734 : vector<14x14xf32>
    %736 = arith.addf %732, %735 : vector<14x14xf32>
    %c6_417 = arith.constant 6 : index
    %c9_418 = arith.constant 9 : index
    %737 = memref.load %arg2[%c6_417, %c9_418] : memref<8x16xf32, #tpu.memory_space<smem>>
    %738 = vector.broadcast %737 : f32 to vector<14x14xf32>
    %739 = arith.mulf %360, %738 : vector<14x14xf32>
    %740 = arith.addf %736, %739 : vector<14x14xf32>
    %c7_419 = arith.constant 7 : index
    %c9_420 = arith.constant 9 : index
    %741 = memref.load %arg2[%c7_419, %c9_420] : memref<8x16xf32, #tpu.memory_space<smem>>
    %742 = vector.broadcast %741 : f32 to vector<14x14xf32>
    %743 = arith.mulf %407, %742 : vector<14x14xf32>
    %744 = arith.addf %740, %743 : vector<14x14xf32>
    %c0_421 = arith.constant 0 : index
    %c9_422 = arith.constant 9 : index
    %c0_423 = arith.constant 0 : index
    %c0_424 = arith.constant 0 : index
    %745 = vector.load %arg4[%c0_421, %c9_422, %c0_423, %c0_424] : memref<1x16x14x14xf32, #tpu.memory_space<vmem>>, vector<1x1x14x14xf32>
    %746 = vector.shape_cast %745 : vector<1x1x14x14xf32> to vector<14x14xf32>
    %747 = vector.shape_cast %744 : vector<14x14xf32> to vector<1x1x14x14xf32>
    tpu.vector_store %arg4[%c0_421, %c9_422, %c0_423, %c0_424], %747 {strides = array<i32>} : memref<1x16x14x14xf32, #tpu.memory_space<vmem>>, vector<1x1x14x14xf32>,
    %c0_425 = arith.constant 0 : index
    %c10 = arith.constant 10 : index
    %748 = memref.load %arg2[%c0_425, %c10] : memref<8x16xf32, #tpu.memory_space<smem>>
    %749 = vector.broadcast %748 : f32 to vector<14x14xf32>
    %750 = arith.mulf %78, %749 : vector<14x14xf32>
    %c1_426 = arith.constant 1 : index
    %c10_427 = arith.constant 10 : index
    %751 = memref.load %arg2[%c1_426, %c10_427] : memref<8x16xf32, #tpu.memory_space<smem>>
    %752 = vector.broadcast %751 : f32 to vector<14x14xf32>
    %753 = arith.mulf %125, %752 : vector<14x14xf32>
    %754 = arith.addf %750, %753 : vector<14x14xf32>
    %c2_428 = arith.constant 2 : index
    %c10_429 = arith.constant 10 : index
    %755 = memref.load %arg2[%c2_428, %c10_429] : memref<8x16xf32, #tpu.memory_space<smem>>
    %756 = vector.broadcast %755 : f32 to vector<14x14xf32>
    %757 = arith.mulf %172, %756 : vector<14x14xf32>
    %758 = arith.addf %754, %757 : vector<14x14xf32>
    %c3_430 = arith.constant 3 : index
    %c10_431 = arith.constant 10 : index
    %759 = memref.load %arg2[%c3_430, %c10_431] : memref<8x16xf32, #tpu.memory_space<smem>>
    %760 = vector.broadcast %759 : f32 to vector<14x14xf32>
    %761 = arith.mulf %219, %760 : vector<14x14xf32>
    %762 = arith.addf %758, %761 : vector<14x14xf32>
    %c4_432 = arith.constant 4 : index
    %c10_433 = arith.constant 10 : index
    %763 = memref.load %arg2[%c4_432, %c10_433] : memref<8x16xf32, #tpu.memory_space<smem>>
    %764 = vector.broadcast %763 : f32 to vector<14x14xf32>
    %765 = arith.mulf %266, %764 : vector<14x14xf32>
    %766 = arith.addf %762, %765 : vector<14x14xf32>
    %c5_434 = arith.constant 5 : index
    %c10_435 = arith.constant 10 : index
    %767 = memref.load %arg2[%c5_434, %c10_435] : memref<8x16xf32, #tpu.memory_space<smem>>
    %768 = vector.broadcast %767 : f32 to vector<14x14xf32>
    %769 = arith.mulf %313, %768 : vector<14x14xf32>
    %770 = arith.addf %766, %769 : vector<14x14xf32>
    %c6_436 = arith.constant 6 : index
    %c10_437 = arith.constant 10 : index
    %771 = memref.load %arg2[%c6_436, %c10_437] : memref<8x16xf32, #tpu.memory_space<smem>>
    %772 = vector.broadcast %771 : f32 to vector<14x14xf32>
    %773 = arith.mulf %360, %772 : vector<14x14xf32>
    %774 = arith.addf %770, %773 : vector<14x14xf32>
    %c7_438 = arith.constant 7 : index
    %c10_439 = arith.constant 10 : index
    %775 = memref.load %arg2[%c7_438, %c10_439] : memref<8x16xf32, #tpu.memory_space<smem>>
    %776 = vector.broadcast %775 : f32 to vector<14x14xf32>
    %777 = arith.mulf %407, %776 : vector<14x14xf32>
    %778 = arith.addf %774, %777 : vector<14x14xf32>
    %c0_440 = arith.constant 0 : index
    %c10_441 = arith.constant 10 : index
    %c0_442 = arith.constant 0 : index
    %c0_443 = arith.constant 0 : index
    %779 = vector.load %arg4[%c0_440, %c10_441, %c0_442, %c0_443] : memref<1x16x14x14xf32, #tpu.memory_space<vmem>>, vector<1x1x14x14xf32>
    %780 = vector.shape_cast %779 : vector<1x1x14x14xf32> to vector<14x14xf32>
    %781 = vector.shape_cast %778 : vector<14x14xf32> to vector<1x1x14x14xf32>
    tpu.vector_store %arg4[%c0_440, %c10_441, %c0_442, %c0_443], %781 {strides = array<i32>} : memref<1x16x14x14xf32, #tpu.memory_space<vmem>>, vector<1x1x14x14xf32>,
    %c0_444 = arith.constant 0 : index
    %c11 = arith.constant 11 : index
    %782 = memref.load %arg2[%c0_444, %c11] : memref<8x16xf32, #tpu.memory_space<smem>>
    %783 = vector.broadcast %782 : f32 to vector<14x14xf32>
    %784 = arith.mulf %78, %783 : vector<14x14xf32>
    %c1_445 = arith.constant 1 : index
    %c11_446 = arith.constant 11 : index
    %785 = memref.load %arg2[%c1_445, %c11_446] : memref<8x16xf32, #tpu.memory_space<smem>>
    %786 = vector.broadcast %785 : f32 to vector<14x14xf32>
    %787 = arith.mulf %125, %786 : vector<14x14xf32>
    %788 = arith.addf %784, %787 : vector<14x14xf32>
    %c2_447 = arith.constant 2 : index
    %c11_448 = arith.constant 11 : index
    %789 = memref.load %arg2[%c2_447, %c11_448] : memref<8x16xf32, #tpu.memory_space<smem>>
    %790 = vector.broadcast %789 : f32 to vector<14x14xf32>
    %791 = arith.mulf %172, %790 : vector<14x14xf32>
    %792 = arith.addf %788, %791 : vector<14x14xf32>
    %c3_449 = arith.constant 3 : index
    %c11_450 = arith.constant 11 : index
    %793 = memref.load %arg2[%c3_449, %c11_450] : memref<8x16xf32, #tpu.memory_space<smem>>
    %794 = vector.broadcast %793 : f32 to vector<14x14xf32>
    %795 = arith.mulf %219, %794 : vector<14x14xf32>
    %796 = arith.addf %792, %795 : vector<14x14xf32>
    %c4_451 = arith.constant 4 : index
    %c11_452 = arith.constant 11 : index
    %797 = memref.load %arg2[%c4_451, %c11_452] : memref<8x16xf32, #tpu.memory_space<smem>>
    %798 = vector.broadcast %797 : f32 to vector<14x14xf32>
    %799 = arith.mulf %266, %798 : vector<14x14xf32>
    %800 = arith.addf %796, %799 : vector<14x14xf32>
    %c5_453 = arith.constant 5 : index
    %c11_454 = arith.constant 11 : index
    %801 = memref.load %arg2[%c5_453, %c11_454] : memref<8x16xf32, #tpu.memory_space<smem>>
    %802 = vector.broadcast %801 : f32 to vector<14x14xf32>
    %803 = arith.mulf %313, %802 : vector<14x14xf32>
    %804 = arith.addf %800, %803 : vector<14x14xf32>
    %c6_455 = arith.constant 6 : index
    %c11_456 = arith.constant 11 : index
    %805 = memref.load %arg2[%c6_455, %c11_456] : memref<8x16xf32, #tpu.memory_space<smem>>
    %806 = vector.broadcast %805 : f32 to vector<14x14xf32>
    %807 = arith.mulf %360, %806 : vector<14x14xf32>
    %808 = arith.addf %804, %807 : vector<14x14xf32>
    %c7_457 = arith.constant 7 : index
    %c11_458 = arith.constant 11 : index
    %809 = memref.load %arg2[%c7_457, %c11_458] : memref<8x16xf32, #tpu.memory_space<smem>>
    %810 = vector.broadcast %809 : f32 to vector<14x14xf32>
    %811 = arith.mulf %407, %810 : vector<14x14xf32>
    %812 = arith.addf %808, %811 : vector<14x14xf32>
    %c0_459 = arith.constant 0 : index
    %c11_460 = arith.constant 11 : index
    %c0_461 = arith.constant 0 : index
    %c0_462 = arith.constant 0 : index
    %813 = vector.load %arg4[%c0_459, %c11_460, %c0_461, %c0_462] : memref<1x16x14x14xf32, #tpu.memory_space<vmem>>, vector<1x1x14x14xf32>
    %814 = vector.shape_cast %813 : vector<1x1x14x14xf32> to vector<14x14xf32>
    %815 = vector.shape_cast %812 : vector<14x14xf32> to vector<1x1x14x14xf32>
    tpu.vector_store %arg4[%c0_459, %c11_460, %c0_461, %c0_462], %815 {strides = array<i32>} : memref<1x16x14x14xf32, #tpu.memory_space<vmem>>, vector<1x1x14x14xf32>,
    %c0_463 = arith.constant 0 : index
    %c12 = arith.constant 12 : index
    %816 = memref.load %arg2[%c0_463, %c12] : memref<8x16xf32, #tpu.memory_space<smem>>
    %817 = vector.broadcast %816 : f32 to vector<14x14xf32>
    %818 = arith.mulf %78, %817 : vector<14x14xf32>
    %c1_464 = arith.constant 1 : index
    %c12_465 = arith.constant 12 : index
    %819 = memref.load %arg2[%c1_464, %c12_465] : memref<8x16xf32, #tpu.memory_space<smem>>
    %820 = vector.broadcast %819 : f32 to vector<14x14xf32>
    %821 = arith.mulf %125, %820 : vector<14x14xf32>
    %822 = arith.addf %818, %821 : vector<14x14xf32>
    %c2_466 = arith.constant 2 : index
    %c12_467 = arith.constant 12 : index
    %823 = memref.load %arg2[%c2_466, %c12_467] : memref<8x16xf32, #tpu.memory_space<smem>>
    %824 = vector.broadcast %823 : f32 to vector<14x14xf32>
    %825 = arith.mulf %172, %824 : vector<14x14xf32>
    %826 = arith.addf %822, %825 : vector<14x14xf32>
    %c3_468 = arith.constant 3 : index
    %c12_469 = arith.constant 12 : index
    %827 = memref.load %arg2[%c3_468, %c12_469] : memref<8x16xf32, #tpu.memory_space<smem>>
    %828 = vector.broadcast %827 : f32 to vector<14x14xf32>
    %829 = arith.mulf %219, %828 : vector<14x14xf32>
    %830 = arith.addf %826, %829 : vector<14x14xf32>
    %c4_470 = arith.constant 4 : index
    %c12_471 = arith.constant 12 : index
    %831 = memref.load %arg2[%c4_470, %c12_471] : memref<8x16xf32, #tpu.memory_space<smem>>
    %832 = vector.broadcast %831 : f32 to vector<14x14xf32>
    %833 = arith.mulf %266, %832 : vector<14x14xf32>
    %834 = arith.addf %830, %833 : vector<14x14xf32>
    %c5_472 = arith.constant 5 : index
    %c12_473 = arith.constant 12 : index
    %835 = memref.load %arg2[%c5_472, %c12_473] : memref<8x16xf32, #tpu.memory_space<smem>>
    %836 = vector.broadcast %835 : f32 to vector<14x14xf32>
    %837 = arith.mulf %313, %836 : vector<14x14xf32>
    %838 = arith.addf %834, %837 : vector<14x14xf32>
    %c6_474 = arith.constant 6 : index
    %c12_475 = arith.constant 12 : index
    %839 = memref.load %arg2[%c6_474, %c12_475] : memref<8x16xf32, #tpu.memory_space<smem>>
    %840 = vector.broadcast %839 : f32 to vector<14x14xf32>
    %841 = arith.mulf %360, %840 : vector<14x14xf32>
    %842 = arith.addf %838, %841 : vector<14x14xf32>
    %c7_476 = arith.constant 7 : index
    %c12_477 = arith.constant 12 : index
    %843 = memref.load %arg2[%c7_476, %c12_477] : memref<8x16xf32, #tpu.memory_space<smem>>
    %844 = vector.broadcast %843 : f32 to vector<14x14xf32>
    %845 = arith.mulf %407, %844 : vector<14x14xf32>
    %846 = arith.addf %842, %845 : vector<14x14xf32>
    %c0_478 = arith.constant 0 : index
    %c12_479 = arith.constant 12 : index
    %c0_480 = arith.constant 0 : index
    %c0_481 = arith.constant 0 : index
    %847 = vector.load %arg4[%c0_478, %c12_479, %c0_480, %c0_481] : memref<1x16x14x14xf32, #tpu.memory_space<vmem>>, vector<1x1x14x14xf32>
    %848 = vector.shape_cast %847 : vector<1x1x14x14xf32> to vector<14x14xf32>
    %849 = vector.shape_cast %846 : vector<14x14xf32> to vector<1x1x14x14xf32>
    tpu.vector_store %arg4[%c0_478, %c12_479, %c0_480, %c0_481], %849 {strides = array<i32>} : memref<1x16x14x14xf32, #tpu.memory_space<vmem>>, vector<1x1x14x14xf32>,
    %c0_482 = arith.constant 0 : index
    %c13 = arith.constant 13 : index
    %850 = memref.load %arg2[%c0_482, %c13] : memref<8x16xf32, #tpu.memory_space<smem>>
    %851 = vector.broadcast %850 : f32 to vector<14x14xf32>
    %852 = arith.mulf %78, %851 : vector<14x14xf32>
    %c1_483 = arith.constant 1 : index
    %c13_484 = arith.constant 13 : index
    %853 = memref.load %arg2[%c1_483, %c13_484] : memref<8x16xf32, #tpu.memory_space<smem>>
    %854 = vector.broadcast %853 : f32 to vector<14x14xf32>
    %855 = arith.mulf %125, %854 : vector<14x14xf32>
    %856 = arith.addf %852, %855 : vector<14x14xf32>
    %c2_485 = arith.constant 2 : index
    %c13_486 = arith.constant 13 : index
    %857 = memref.load %arg2[%c2_485, %c13_486] : memref<8x16xf32, #tpu.memory_space<smem>>
    %858 = vector.broadcast %857 : f32 to vector<14x14xf32>
    %859 = arith.mulf %172, %858 : vector<14x14xf32>
    %860 = arith.addf %856, %859 : vector<14x14xf32>
    %c3_487 = arith.constant 3 : index
    %c13_488 = arith.constant 13 : index
    %861 = memref.load %arg2[%c3_487, %c13_488] : memref<8x16xf32, #tpu.memory_space<smem>>
    %862 = vector.broadcast %861 : f32 to vector<14x14xf32>
    %863 = arith.mulf %219, %862 : vector<14x14xf32>
    %864 = arith.addf %860, %863 : vector<14x14xf32>
    %c4_489 = arith.constant 4 : index
    %c13_490 = arith.constant 13 : index
    %865 = memref.load %arg2[%c4_489, %c13_490] : memref<8x16xf32, #tpu.memory_space<smem>>
    %866 = vector.broadcast %865 : f32 to vector<14x14xf32>
    %867 = arith.mulf %266, %866 : vector<14x14xf32>
    %868 = arith.addf %864, %867 : vector<14x14xf32>
    %c5_491 = arith.constant 5 : index
    %c13_492 = arith.constant 13 : index
    %869 = memref.load %arg2[%c5_491, %c13_492] : memref<8x16xf32, #tpu.memory_space<smem>>
    %870 = vector.broadcast %869 : f32 to vector<14x14xf32>
    %871 = arith.mulf %313, %870 : vector<14x14xf32>
    %872 = arith.addf %868, %871 : vector<14x14xf32>
    %c6_493 = arith.constant 6 : index
    %c13_494 = arith.constant 13 : index
    %873 = memref.load %arg2[%c6_493, %c13_494] : memref<8x16xf32, #tpu.memory_space<smem>>
    %874 = vector.broadcast %873 : f32 to vector<14x14xf32>
    %875 = arith.mulf %360, %874 : vector<14x14xf32>
    %876 = arith.addf %872, %875 : vector<14x14xf32>
    %c7_495 = arith.constant 7 : index
    %c13_496 = arith.constant 13 : index
    %877 = memref.load %arg2[%c7_495, %c13_496] : memref<8x16xf32, #tpu.memory_space<smem>>
    %878 = vector.broadcast %877 : f32 to vector<14x14xf32>
    %879 = arith.mulf %407, %878 : vector<14x14xf32>
    %880 = arith.addf %876, %879 : vector<14x14xf32>
    %c0_497 = arith.constant 0 : index
    %c13_498 = arith.constant 13 : index
    %c0_499 = arith.constant 0 : index
    %c0_500 = arith.constant 0 : index
    %881 = vector.load %arg4[%c0_497, %c13_498, %c0_499, %c0_500] : memref<1x16x14x14xf32, #tpu.memory_space<vmem>>, vector<1x1x14x14xf32>
    %882 = vector.shape_cast %881 : vector<1x1x14x14xf32> to vector<14x14xf32>
    %883 = vector.shape_cast %880 : vector<14x14xf32> to vector<1x1x14x14xf32>
    tpu.vector_store %arg4[%c0_497, %c13_498, %c0_499, %c0_500], %883 {strides = array<i32>} : memref<1x16x14x14xf32, #tpu.memory_space<vmem>>, vector<1x1x14x14xf32>,
    %c0_501 = arith.constant 0 : index
    %c14 = arith.constant 14 : index
    %884 = memref.load %arg2[%c0_501, %c14] : memref<8x16xf32, #tpu.memory_space<smem>>
    %885 = vector.broadcast %884 : f32 to vector<14x14xf32>
    %886 = arith.mulf %78, %885 : vector<14x14xf32>
    %c1_502 = arith.constant 1 : index
    %c14_503 = arith.constant 14 : index
    %887 = memref.load %arg2[%c1_502, %c14_503] : memref<8x16xf32, #tpu.memory_space<smem>>
    %888 = vector.broadcast %887 : f32 to vector<14x14xf32>
    %889 = arith.mulf %125, %888 : vector<14x14xf32>
    %890 = arith.addf %886, %889 : vector<14x14xf32>
    %c2_504 = arith.constant 2 : index
    %c14_505 = arith.constant 14 : index
    %891 = memref.load %arg2[%c2_504, %c14_505] : memref<8x16xf32, #tpu.memory_space<smem>>
    %892 = vector.broadcast %891 : f32 to vector<14x14xf32>
    %893 = arith.mulf %172, %892 : vector<14x14xf32>
    %894 = arith.addf %890, %893 : vector<14x14xf32>
    %c3_506 = arith.constant 3 : index
    %c14_507 = arith.constant 14 : index
    %895 = memref.load %arg2[%c3_506, %c14_507] : memref<8x16xf32, #tpu.memory_space<smem>>
    %896 = vector.broadcast %895 : f32 to vector<14x14xf32>
    %897 = arith.mulf %219, %896 : vector<14x14xf32>
    %898 = arith.addf %894, %897 : vector<14x14xf32>
    %c4_508 = arith.constant 4 : index
    %c14_509 = arith.constant 14 : index
    %899 = memref.load %arg2[%c4_508, %c14_509] : memref<8x16xf32, #tpu.memory_space<smem>>
    %900 = vector.broadcast %899 : f32 to vector<14x14xf32>
    %901 = arith.mulf %266, %900 : vector<14x14xf32>
    %902 = arith.addf %898, %901 : vector<14x14xf32>
    %c5_510 = arith.constant 5 : index
    %c14_511 = arith.constant 14 : index
    %903 = memref.load %arg2[%c5_510, %c14_511] : memref<8x16xf32, #tpu.memory_space<smem>>
    %904 = vector.broadcast %903 : f32 to vector<14x14xf32>
    %905 = arith.mulf %313, %904 : vector<14x14xf32>
    %906 = arith.addf %902, %905 : vector<14x14xf32>
    %c6_512 = arith.constant 6 : index
    %c14_513 = arith.constant 14 : index
    %907 = memref.load %arg2[%c6_512, %c14_513] : memref<8x16xf32, #tpu.memory_space<smem>>
    %908 = vector.broadcast %907 : f32 to vector<14x14xf32>
    %909 = arith.mulf %360, %908 : vector<14x14xf32>
    %910 = arith.addf %906, %909 : vector<14x14xf32>
    %c7_514 = arith.constant 7 : index
    %c14_515 = arith.constant 14 : index
    %911 = memref.load %arg2[%c7_514, %c14_515] : memref<8x16xf32, #tpu.memory_space<smem>>
    %912 = vector.broadcast %911 : f32 to vector<14x14xf32>
    %913 = arith.mulf %407, %912 : vector<14x14xf32>
    %914 = arith.addf %910, %913 : vector<14x14xf32>
    %c0_516 = arith.constant 0 : index
    %c14_517 = arith.constant 14 : index
    %c0_518 = arith.constant 0 : index
    %c0_519 = arith.constant 0 : index
    %915 = vector.load %arg4[%c0_516, %c14_517, %c0_518, %c0_519] : memref<1x16x14x14xf32, #tpu.memory_space<vmem>>, vector<1x1x14x14xf32>
    %916 = vector.shape_cast %915 : vector<1x1x14x14xf32> to vector<14x14xf32>
    %917 = vector.shape_cast %914 : vector<14x14xf32> to vector<1x1x14x14xf32>
    tpu.vector_store %arg4[%c0_516, %c14_517, %c0_518, %c0_519], %917 {strides = array<i32>} : memref<1x16x14x14xf32, #tpu.memory_space<vmem>>, vector<1x1x14x14xf32>,
    %c0_520 = arith.constant 0 : index
    %c15 = arith.constant 15 : index
    %918 = memref.load %arg2[%c0_520, %c15] : memref<8x16xf32, #tpu.memory_space<smem>>
    %919 = vector.broadcast %918 : f32 to vector<14x14xf32>
    %920 = arith.mulf %78, %919 : vector<14x14xf32>
    %c1_521 = arith.constant 1 : index
    %c15_522 = arith.constant 15 : index
    %921 = memref.load %arg2[%c1_521, %c15_522] : memref<8x16xf32, #tpu.memory_space<smem>>
    %922 = vector.broadcast %921 : f32 to vector<14x14xf32>
    %923 = arith.mulf %125, %922 : vector<14x14xf32>
    %924 = arith.addf %920, %923 : vector<14x14xf32>
    %c2_523 = arith.constant 2 : index
    %c15_524 = arith.constant 15 : index
    %925 = memref.load %arg2[%c2_523, %c15_524] : memref<8x16xf32, #tpu.memory_space<smem>>
    %926 = vector.broadcast %925 : f32 to vector<14x14xf32>
    %927 = arith.mulf %172, %926 : vector<14x14xf32>
    %928 = arith.addf %924, %927 : vector<14x14xf32>
    %c3_525 = arith.constant 3 : index
    %c15_526 = arith.constant 15 : index
    %929 = memref.load %arg2[%c3_525, %c15_526] : memref<8x16xf32, #tpu.memory_space<smem>>
    %930 = vector.broadcast %929 : f32 to vector<14x14xf32>
    %931 = arith.mulf %219, %930 : vector<14x14xf32>
    %932 = arith.addf %928, %931 : vector<14x14xf32>
    %c4_527 = arith.constant 4 : index
    %c15_528 = arith.constant 15 : index
    %933 = memref.load %arg2[%c4_527, %c15_528] : memref<8x16xf32, #tpu.memory_space<smem>>
    %934 = vector.broadcast %933 : f32 to vector<14x14xf32>
    %935 = arith.mulf %266, %934 : vector<14x14xf32>
    %936 = arith.addf %932, %935 : vector<14x14xf32>
    %c5_529 = arith.constant 5 : index
    %c15_530 = arith.constant 15 : index
    %937 = memref.load %arg2[%c5_529, %c15_530] : memref<8x16xf32, #tpu.memory_space<smem>>
    %938 = vector.broadcast %937 : f32 to vector<14x14xf32>
    %939 = arith.mulf %313, %938 : vector<14x14xf32>
    %940 = arith.addf %936, %939 : vector<14x14xf32>
    %c6_531 = arith.constant 6 : index
    %c15_532 = arith.constant 15 : index
    %941 = memref.load %arg2[%c6_531, %c15_532] : memref<8x16xf32, #tpu.memory_space<smem>>
    %942 = vector.broadcast %941 : f32 to vector<14x14xf32>
    %943 = arith.mulf %360, %942 : vector<14x14xf32>
    %944 = arith.addf %940, %943 : vector<14x14xf32>
    %c7_533 = arith.constant 7 : index
    %c15_534 = arith.constant 15 : index
    %945 = memref.load %arg2[%c7_533, %c15_534] : memref<8x16xf32, #tpu.memory_space<smem>>
    %946 = vector.broadcast %945 : f32 to vector<14x14xf32>
    %947 = arith.mulf %407, %946 : vector<14x14xf32>
    %948 = arith.addf %944, %947 : vector<14x14xf32>
    %c0_535 = arith.constant 0 : index
    %c15_536 = arith.constant 15 : index
    %c0_537 = arith.constant 0 : index
    %c0_538 = arith.constant 0 : index
    %949 = vector.load %arg4[%c0_535, %c15_536, %c0_537, %c0_538] : memref<1x16x14x14xf32, #tpu.memory_space<vmem>>, vector<1x1x14x14xf32>
    %950 = vector.shape_cast %949 : vector<1x1x14x14xf32> to vector<14x14xf32>
    %951 = vector.shape_cast %948 : vector<14x14xf32> to vector<1x1x14x14xf32>
    tpu.vector_store %arg4[%c0_535, %c15_536, %c0_537, %c0_538], %951 {strides = array<i32>} : memref<1x16x14x14xf32, #tpu.memory_space<vmem>>, vector<1x1x14x14xf32>,
    return
  }
  func.func @transform_0(%arg0: i32, %arg1: memref<8x9xf32, #tpu.memory_space<smem>>, %arg2: memref<8x16xf32, #tpu.memory_space<smem>>) -> (i32, i32, i32, i32) {
    %c0_i32 = arith.constant 0 : i32
    %c0_i32_0 = arith.constant 0 : i32
    %c0_i32_1 = arith.constant 0 : i32
    %c0_i32_2 = arith.constant 0 : i32
    return %arg0, %c0_i32, %c0_i32_0, %c0_i32_1 : i32, i32, i32, i32
  }
  func.func @transform_1(%arg0: i32, %arg1: memref<8x9xf32, #tpu.memory_space<smem>>, %arg2: memref<8x16xf32, #tpu.memory_space<smem>>) -> (i32, i32, i32, i32) {
    %c0_i32 = arith.constant 0 : i32
    %c0_i32_0 = arith.constant 0 : i32
    %c0_i32_1 = arith.constant 0 : i32
    %c0_i32_2 = arith.constant 0 : i32
    return %arg0, %c0_i32, %c0_i32_0, %c0_i32_1 : i32, i32, i32, i32
  }
}

</mosaic_0001>

<llo_original>
// kernel: tpu_custom_call.1
$region0: #{tpu_custom_call.1}
  #allocation0 [shape = 'u32[]', space=smem, size = 0x4, offset = 0x4, fixed_abs, tag = 'smem constant byte address 0x4 - core index']
  #allocation1 [shape = 'u32[144,128]{1,0:T(1,128)}', space=vmem, size = 0x12000, scoped, tag = 'internal scratch']
  #allocation2 [shape = 's32[1]{0}', space=sflag, size = 0x4, scoped, tag = 'scoped memory for tpu_custom_call.1']
  #allocation3 [shape = 'u8[4096]{0}', space=smem, size = 0x1000, scoped, tag = 'prefetched SMEM operand 0']
  #allocation4 [shape = 'u8[4096]{0}', space=smem, size = 0x1000, scoped, tag = 'prefetched SMEM operand 1']
  %s0 = inlined_call_operand.hbm [shape: f32[8,9], index: 0, kind: input, shape index: {}]
  %s1 = inlined_call_operand.hbm [shape: f32[8,16], index: 1, kind: input, shape index: {}]
  %s2 = inlined_call_operand.hbm [shape: f32[2,8,8,8], index: 2, kind: input, shape index: {}]
  %s3 = inlined_call_operand.vmem [shape: f32[2,16,14,14], index: 3, kind: output, shape index: {}]
  %s4 = sld [smem:[#allocation0]]
  $region41: #{tpu_custom_call.1} parent=0
    _
  %s6 = ssub.s32 1, %s4
  %s7 = scalar_select 0, %s6, %s4
  %9 = dma.hbm_to_smem %s0, 128, [#allocation3], [#allocation2]
  %11 = dma.hbm_to_smem %s1, 128, [#allocation4], [#allocation2]
  %12 = dma.done [#allocation2], 256
  %13 = sfence
  $region1: #{tpu_custom_call.1} parent=0
    #allocation5 [shape = 'u8[65536]{0}', space=vmem, size = 0x10000, scoped, tag = 'input window, operand 2']
    #allocation6 [shape = 's32[2]{0}', space=sflag, size = 0x8, scoped, tag = 'scoped memory for tpu_custom_call.1']
    %14 = vsyncpa [#allocation6], 0
    %s15 = scalar_lea.sflag [#allocation6], 1
    %16 = vsyncpa %s15, 0
    loop: start=0, step=1, limit=4
    $region2: #{tpu_custom_call.1} parent=1 // loop_pre_header
      _
    $region3: #{tpu_custom_call.1} parent=1 // loop_header
      %s18 = sphi 0, %s22
      %p19 = scmp.ge.s32.totalorder %s18, 4
      %s28 = sphi 0, %s30
      %s31 = sphi 0, %s28
      %s32 = sphi 0, %s31
      %s48 = sphi 0, %s32
      %s54 = sphi 0, %s56
      %s57 = sphi 0, %s54
      %s58 = sphi 0, %s57
      %s74 = sphi 0, %s58
    $region4: #{tpu_custom_call.1} parent=1 // loop_header_branch
      %21 = sbr.rel (%p19) target = $region8
    $region5: #{tpu_custom_call.1} parent=1 // loop_body
      %s23 = ssub.s32 %s18, 1
      %s24 = ssub.s32 %s18, 2
      %s25 = sadd.s32 %s18, 1
      %s26 = ssub.s32 %s18, %s25
      %p27 = scmp.eq.s32.totalorder %s26, 0
      %s29 = sadd.s32 %s28, 1
      %s30 = scalar_select %p27, %s28, %s29
      %p33 = pneg %p27
      %p34 = scmp.eq.s32.totalorder %s18, 1
      %p35 = por %p33, %p34
      %p36 = scmp.ne.s32.totalorder %s28, %s31
      %p37 = scmp.eq.s32.totalorder %s18, 0
      %p38 = por %p36, %p37
      %p39 = scmp.ne.s32.totalorder %s28, %s31
      %p40 = scmp.eq.s32.totalorder %s23, 1
      %p41 = por %p39, %p40
      %p42 = scmp.ne.s32.totalorder %s31, %s32
      %p43 = scmp.eq.s32.totalorder %s23, 0
      %p44 = por %p42, %p43
      %p45 = scmp.ne.s32.totalorder %s31, %s32
      %p46 = scmp.eq.s32.totalorder %s24, 1
      %p47 = por %p45, %p46
      %p49 = scmp.ne.s32.totalorder %s32, %s48
      %p50 = scmp.eq.s32.totalorder %s24, 0
      %p51 = por %p49, %p50
      %s52 = ssub.s32 %s18, %s25
      %p53 = scmp.eq.s32.totalorder %s52, 0
      %s55 = sadd.s32 %s54, 1
      %s56 = scalar_select %p53, %s54, %s55
      %p59 = pneg %p53
      %p60 = scmp.eq.s32.totalorder %s18, 1
      %p61 = por %p59, %p60
      %p62 = scmp.ne.s32.totalorder %s54, %s57
      %p63 = scmp.eq.s32.totalorder %s18, 0
      %p64 = por %p62, %p63
      %p65 = scmp.ne.s32.totalorder %s54, %s57
      %p66 = scmp.eq.s32.totalorder %s23, 1
      %p67 = por %p65, %p66
      %p68 = scmp.ne.s32.totalorder %s57, %s58
      %p69 = scmp.eq.s32.totalorder %s23, 0
      %p70 = por %p68, %p69
      %p71 = scmp.ne.s32.totalorder %s57, %s58
      %p72 = scmp.eq.s32.totalorder %s24, 1
      %p73 = por %p71, %p72
      %p75 = scmp.ne.s32.totalorder %s58, %s74
      %p76 = scmp.eq.s32.totalorder %s24, 0
      %p77 = por %p75, %p76
      %p78 = scmp.le.s32.totalorder 1, %s18
      %p79 = scmp.lt.s32.totalorder %s18, 3
      %p80 = pnand %p78, %p79
      %p81 = pneg %p80
      // Predicated region
      $region9: #{tpu_custom_call.1} parent=5 // pred_check
        _
      $region10: #{tpu_custom_call.1} parent=5 // pred_check_branch
        %83 = sbr.rel (%p80) target = $region12
      $region11: #{tpu_custom_call.1} parent=5 // pred_region
        %s84 = ssub.s32 %s18, 1
      $region12: #{tpu_custom_call.1} parent=5 // pred_fallthru
        _
      %p85 = scmp.lt.s32.totalorder %s18, 2
      // Predicated region
      $region13: #{tpu_custom_call.1} parent=5 // pred_check
        %p86 = pneg %p85
      $region14: #{tpu_custom_call.1} parent=5 // pred_check_branch
        %88 = sbr.rel (%p86) target = $region16
      $region15: #{tpu_custom_call.1} parent=5 // pred_region
        // Predicated region
        $region17: #{tpu_custom_call.1} parent=15 // pred_check
          %p89 = pneg %p38
        $region18: #{tpu_custom_call.1} parent=15 // pred_check_branch
          %91 = sbr.rel (%p89) target = $region20
        $region19: #{tpu_custom_call.1} parent=15 // pred_region
          %s92 = sand.u32 %s28, 1
          %s93 = scalar_lea.sflag [#allocation6], %s92
          %s94 = sand.u32 %s28, 1
          %s95 = smul.addr %s94, 64
          %s96 = scalar_lea.vmem [#allocation5], %s95
          %s98 = ssub.s32 1024, 1024
          %99 = vsyncadd %s93, %s98
          %s100 = smul.addr %s18, 8
          %s101 = smul.addr %s100, 128
          %s102 = scalar_lea.hbm %s2, %s101
          %s103 = sshll.u32 %s96, 4
          %s104 = int_to_ptr.vmem [resolvable:$true] %s103
          %109 = dma.hbm_to_vmem [thread:$0]  %s102, 1024, %s104, %s93, 128, 128, 8
        $region20: #{tpu_custom_call.1} parent=15 // pred_fallthru
          _
      $region16: #{tpu_custom_call.1} parent=5 // pred_fallthru
        _
      %p110 = scmp.le.s32.totalorder 1, %s18
      %p111 = scmp.lt.s32.totalorder %s18, 3
      %p112 = pnand %p110, %p111
      %p113 = pneg %p112
      // Predicated region
      $region21: #{tpu_custom_call.1} parent=5 // pred_check
        _
      $region22: #{tpu_custom_call.1} parent=5 // pred_check_branch
        %115 = sbr.rel (%p112) target = $region24
      $region23: #{tpu_custom_call.1} parent=5 // pred_region
        %s116 = ssub.s32 %s18, 1
        %s117 = sand.u32 %s31, 1
        %s118 = scalar_lea.sflag [#allocation6], %s117
        %s119 = sand.u32 %s31, 1
        %s120 = smul.addr %s119, 64
        %s121 = scalar_lea.vmem [#allocation5], %s120
        // Predicated region
        $region25: #{tpu_custom_call.1} parent=23 // pred_check
          %p122 = pneg %p44
        $region26: #{tpu_custom_call.1} parent=23 // pred_check_branch
          %124 = sbr.rel (%p122) target = $region28
        $region27: #{tpu_custom_call.1} parent=23 // pred_region
          %125 = dma.done %s118, 1024
        $region28: #{tpu_custom_call.1} parent=23 // pred_fallthru
          _
        %s126 = sand.u32 %s31, 1
        %s127 = scalar_lea.sflag [#allocation6], %s126
        %s128 = sand.u32 %s31, 1
        %s129 = smul.addr %s128, 64
        %s130 = scalar_lea.vmem [#allocation5], %s129
        %p131 = pneg %p44
        %p132 = pneg %p41
        %p133 = pneg %p70
        %p134 = pneg %p67
        %p135 = scmp.lt.s32.totalorder %s23, 1
        %s136 = scalar_select %p135, %s23, 1
        %s137 = smul.addr %s136, 32
        %s138 = smul.addr %s137, 8
        %s139 = scalar_lea.vmem %s3, %s138
        %p140 = scmp.lt.s32.totalorder %s23, 1
        %s141 = scalar_select %p140, %s23, 1
        %s142 = smul.addr %s141, 32
        %s143 = smul.addr %s142, 8
        %s144 = scalar_lea.vmem %s3, %s143
        %v145 = vlaneseq
        %v146 = vshrl.u32 %v145, 7
        %v147 = vlaneseq
        %v148 = vand.u32 %v147, 127
        %v149 = vmul.u32 %v146, 2
        %vm150 = vcmp.eq.s32.totalorder %v148, %v149
        %v151 = vsel %vm150, 1.0, 0.0
        %v152 = vadd.s32 %v149, 1
        %vm153 = vcmp.eq.s32.totalorder %v148, %v152
        %v154 = vsel %vm153, 1.0, 0.0
        %v155 = vadd.s32 %v146, 8
        %v156 = vmul.u32 %v148, 2
        %vm157 = vcmp.eq.s32.totalorder %v146, %v156
        %vm158 = vcmp.eq.s32.totalorder %v155, %v156
        %v159 = vsel %vm157, 1.0, 0.0
        %v160 = vsel %vm158, 1.0, 0.0
        %v161 = vadd.s32 %v156, 1
        %vm162 = vcmp.eq.s32.totalorder %v146, %v161
        %vm163 = vcmp.eq.s32.totalorder %v155, %v161
        %v164 = vsel %vm162, 1.0, 0.0
        %v165 = vsel %vm163, 1.0, 0.0
        %v166 = vld [vmem:[%s121] sm:$0xff]
        %s167 = sld [smem:[#allocation3]]
        %v168 = vstv %s167
        %v169 = vmul.f32 %v166, %v168
        %s170 = sld [smem:[#allocation3 + $0x2]]
        %v171 = vstv %s170
        %v172 = vmul.f32 %v166, %v171
        %174 = vrot.lane.b32.xlu0 %v172, 1
        %v175 = vpop.permute.xlu0 %174
        %v177 = vadd.f32 %v169, %v175
        %s178 = sld [smem:[#allocation3 + $0x6]]
        %v179 = vstv %s178
        %v180 = vmul.f32 %v166, %v179
        %v182 = vrot.slane %v180, 7
        %v184 = vadd.f32 %v177, %v182
        %s185 = sld [smem:[#allocation3 + $0x8]]
        %v186 = vstv %s185
        %v187 = vmul.f32 %v166, %v186
        %v189 = vrot.slane %v187, 7
        %190 = vrot.lane.b32.xlu0 %v189, 1
        %v191 = vpop.permute.xlu0 %190
        %v193 = vadd.f32 %v184, %v191
        %s194 = sld [smem:[#allocation3 + $0x1]]
        %v195 = vstv %s194
        %v196 = vmul.f32 %v166, %v195
        %s197 = sld [smem:[#allocation3 + $0x7]]
        %v198 = vstv %s197
        %v199 = vmul.f32 %v166, %v198
        %v201 = vrot.slane %v199, 7
        %v203 = vadd.f32 %v196, %v201
        %s204 = sld [smem:[#allocation3 + $0x3]]
        %v205 = vstv %s204
        %v206 = vmul.f32 %v166, %v205
        %s207 = sld [smem:[#allocation3 + $0x5]]
        %v208 = vstv %s207
        %v209 = vmul.f32 %v166, %v208
        %211 = vrot.lane.b32.xlu0 %v209, 1
        %v212 = vpop.permute.xlu0 %211
        %v214 = vadd.f32 %v206, %v212
        %s215 = sld [smem:[#allocation3 + $0x4]]
        %v216 = vstv %s215
        %v217 = vmul.f32 %v166, %v216
        %v219 = vrot.slane %v203, 1
        %220 = vrot.lane.b32.xlu0 %v219, 127
        %v221 = vpop.permute.xlu0 %220
        %vm222 = vcmask 56320
        %v223 = vsel %vm222, %v221, 0
        %vm225 = vcmask 1046528
        %v227 = vsel %vm225, %v154, 0
        %229 = vmatprep.subr.mxu0 0.0
        %230 = vmatpush1.msra.mxu0 %v227
        %231 = vmatprep.subr.mxu0 0.0
        %232 = vmatpush1.msra.mxu0 0.0
        %233 = vmatprep.subr.mxu0 0.0
        %234 = vmatpush1.msra.mxu0 0.0
        %235 = vmatprep.subr.mxu0 0.0
        %236 = vmatpush1.msra.mxu0 0.0
        %237 = vmatprep.subr.mxu0 0.0
        %238 = vmatpush1.msra.mxu0 0.0
        %239 = vmatprep.subr.mxu0 0.0
        %240 = vmatpush1.msra.mxu0 0.0
        %241 = vmatprep.subr.mxu0 0.0
        %242 = vmatpush1.msra.mxu0 0.0
        %243 = vmatprep.subr.mxu0 0.0
        %244 = vmatpush1.msra.mxu0 0.0
        %245 = vmatprep.subr.mxu0 0.0
        %246 = vmatpush1.msra.mxu0 0.0
        %247 = vmatprep.subr.mxu0 0.0
        %248 = vmatpush1.msra.mxu0 0.0
        %249 = vmatprep.subr.mxu0 0.0
        %250 = vmatpush1.msra.mxu0 0.0
        %251 = vmatprep.subr.mxu0 0.0
        %252 = vmatpush1.msra.mxu0 0.0
        %253 = vmatprep.subr.mxu0 0.0
        %254 = vmatpush1.msra.mxu0 0.0
        %255 = vmatprep.subr.mxu0 0.0
        %256 = vmatpush1.msra.mxu0 0.0
        %257 = vmatprep.subr.mxu0 0.0
        %258 = vmatpush1.msra.mxu0 0.0
        %259 = vmatprep.subr.mxu0 0.0
        %260 = vmatpush1.msra.mxu0 0.0
        %261 = vmatprep.subr.mxu0 0.0
        %262 = vmatpush1.msra.mxu0 0.0
        %263 = vmatprep.subr.mxu0 0.0
        %264 = vmatpush1.msra.mxu0 0.0
        %265 = vmatprep.subr.mxu0 0.0
        %266 = vmatpush1.msra.mxu0 0.0
        %267 = vmatprep.subr.mxu0 0.0
        %268 = vmatpush1.msra.mxu0 0.0
        %269 = vmatprep.subr.mxu0 0.0
        %270 = vmatpush1.msra.mxu0 0.0
        %271 = vmatprep.subr.mxu0 0.0
        %272 = vmatpush1.msra.mxu0 0.0
        %273 = vmatprep.subr.mxu0 0.0
        %274 = vmatpush1.msra.mxu0 0.0
        %275 = vmatprep.subr.mxu0 0.0
        %276 = vmatpush1.msra.mxu0 0.0
        %277 = vmatprep.subr.mxu0 0.0
        %278 = vmatpush1.msra.mxu0 0.0
        %279 = vmatprep.subr.mxu0 0.0
        %280 = vmatpush1.msra.mxu0 0.0
        %281 = vmatprep.subr.mxu0 0.0
        %282 = vmatpush1.msra.mxu0 0.0
        %283 = vmatprep.subr.mxu0 0.0
        %284 = vmatpush1.msra.mxu0 0.0
        %285 = vmatprep.subr.mxu0 0.0
        %286 = vmatpush1.msra.mxu0 0.0
        %287 = vmatprep.subr.mxu0 0.0
        %288 = vmatpush1.msra.mxu0 0.0
        %289 = vmatprep.subr.mxu0 0.0
        %290 = vmatpush1.msra.mxu0 0.0
        %291 = vmatprep.subr.mxu0 0.0
        %292 = vmatpush1.msra.mxu0 0.0
        %293 = vmatprep.mubr.f32.mxu0 0.0
        %294 = vmatmul.mubr.f32.gmra.mrb[0].mxu0 %v223
        %v295 = vpop.f32.mrb[0].mxu0
        %v296 = vadd.f32 0.0, %v295
        %v297 = vpop.f32.mrb[0].mxu0
        %298 = vdwg.mxu0
        %v300 = vrot.slane %v193, 1
        %301 = vrot.lane.b32.xlu0 %v300, 127
        %v302 = vpop.permute.xlu0 %301
        %v303 = vsel %vm222, %v302, 0
        %v306 = vsel %vm225, %v151, 0
        %308 = vmatprep.subr.mxu0 0.0
        %309 = vmatpush1.msra.mxu0 %v306
        %310 = vmatprep.subr.mxu0 0.0
        %311 = vmatpush1.msra.mxu0 0.0
        %312 = vmatprep.subr.mxu0 0.0
        %313 = vmatpush1.msra.mxu0 0.0
        %314 = vmatprep.subr.mxu0 0.0
        %315 = vmatpush1.msra.mxu0 0.0
        %316 = vmatprep.subr.mxu0 0.0
        %317 = vmatpush1.msra.mxu0 0.0
        %318 = vmatprep.subr.mxu0 0.0
        %319 = vmatpush1.msra.mxu0 0.0
        %320 = vmatprep.subr.mxu0 0.0
        %321 = vmatpush1.msra.mxu0 0.0
        %322 = vmatprep.subr.mxu0 0.0
        %323 = vmatpush1.msra.mxu0 0.0
        %324 = vmatprep.subr.mxu0 0.0
        %325 = vmatpush1.msra.mxu0 0.0
        %326 = vmatprep.subr.mxu0 0.0
        %327 = vmatpush1.msra.mxu0 0.0
        %328 = vmatprep.subr.mxu0 0.0
        %329 = vmatpush1.msra.mxu0 0.0
        %330 = vmatprep.subr.mxu0 0.0
        %331 = vmatpush1.msra.mxu0 0.0
        %332 = vmatprep.subr.mxu0 0.0
        %333 = vmatpush1.msra.mxu0 0.0
        %334 = vmatprep.subr.mxu0 0.0
        %335 = vmatpush1.msra.mxu0 0.0
        %336 = vmatprep.subr.mxu0 0.0
        %337 = vmatpush1.msra.mxu0 0.0
        %338 = vmatprep.subr.mxu0 0.0
        %339 = vmatpush1.msra.mxu0 0.0
        %340 = vmatprep.subr.mxu0 0.0
        %341 = vmatpush1.msra.mxu0 0.0
        %342 = vmatprep.subr.mxu0 0.0
        %343 = vmatpush1.msra.mxu0 0.0
        %344 = vmatprep.subr.mxu0 0.0
        %345 = vmatpush1.msra.mxu0 0.0
        %346 = vmatprep.subr.mxu0 0.0
        %347 = vmatpush1.msra.mxu0 0.0
        %348 = vmatprep.subr.mxu0 0.0
        %349 = vmatpush1.msra.mxu0 0.0
        %350 = vmatprep.subr.mxu0 0.0
        %351 = vmatpush1.msra.mxu0 0.0
        %352 = vmatprep.subr.mxu0 0.0
        %353 = vmatpush1.msra.mxu0 0.0
        %354 = vmatprep.subr.mxu0 0.0
        %355 = vmatpush1.msra.mxu0 0.0
        %356 = vmatprep.subr.mxu0 0.0
        %357 = vmatpush1.msra.mxu0 0.0
        %358 = vmatprep.subr.mxu0 0.0
        %359 = vmatpush1.msra.mxu0 0.0
        %360 = vmatprep.subr.mxu0 0.0
        %361 = vmatpush1.msra.mxu0 0.0
        %362 = vmatprep.subr.mxu0 0.0
        %363 = vmatpush1.msra.mxu0 0.0
        %364 = vmatprep.subr.mxu0 0.0
        %365 = vmatpush1.msra.mxu0 0.0
        %366 = vmatprep.subr.mxu0 0.0
        %367 = vmatpush1.msra.mxu0 0.0
        %368 = vmatprep.subr.mxu0 0.0
        %369 = vmatpush1.msra.mxu0 0.0
        %370 = vmatprep.subr.mxu0 0.0
        %371 = vmatpush1.msra.mxu0 0.0
        %372 = vmatprep.mubr.f32.mxu0 0.0
        %373 = vmatmul.mubr.f32.gmra.mrb[0].mxu0 %v303
        %v374 = vpop.f32.mrb[0].mxu0
        %v375 = vadd.f32 %v296, %v374
        %v376 = vpop.f32.mrb[0].mxu0
        %377 = vdwg.mxu0
        %v379 = vrot.slane %v217, 1
        %380 = vrot.lane.b32.xlu0 %v379, 127
        %v381 = vpop.permute.xlu0 %380
        %v382 = vsel %vm222, %v381, 0
        %384 = vmatprep.subr.mxu0 0.0
        %385 = vmatpush1.msra.mxu0 %v227
        %386 = vmatprep.subr.mxu0 0.0
        %387 = vmatpush1.msra.mxu0 0.0
        %388 = vmatprep.subr.mxu0 0.0
        %389 = vmatpush1.msra.mxu0 0.0
        %390 = vmatprep.subr.mxu0 0.0
        %391 = vmatpush1.msra.mxu0 0.0
        %392 = vmatprep.subr.mxu0 0.0
        %393 = vmatpush1.msra.mxu0 0.0
        %394 = vmatprep.subr.mxu0 0.0
        %395 = vmatpush1.msra.mxu0 0.0
        %396 = vmatprep.subr.mxu0 0.0
        %397 = vmatpush1.msra.mxu0 0.0
        %398 = vmatprep.subr.mxu0 0.0
        %399 = vmatpush1.msra.mxu0 0.0
        %400 = vmatprep.subr.mxu0 0.0
        %401 = vmatpush1.msra.mxu0 0.0
        %402 = vmatprep.subr.mxu0 0.0
        %403 = vmatpush1.msra.mxu0 0.0
        %404 = vmatprep.subr.mxu0 0.0
        %405 = vmatpush1.msra.mxu0 0.0
        %406 = vmatprep.subr.mxu0 0.0
        %407 = vmatpush1.msra.mxu0 0.0
        %408 = vmatprep.subr.mxu0 0.0
        %409 = vmatpush1.msra.mxu0 0.0
        %410 = vmatprep.subr.mxu0 0.0
        %411 = vmatpush1.msra.mxu0 0.0
        %412 = vmatprep.subr.mxu0 0.0
        %413 = vmatpush1.msra.mxu0 0.0
        %414 = vmatprep.subr.mxu0 0.0
        %415 = vmatpush1.msra.mxu0 0.0
        %416 = vmatprep.subr.mxu0 0.0
        %417 = vmatpush1.msra.mxu0 0.0
        %418 = vmatprep.subr.mxu0 0.0
        %419 = vmatpush1.msra.mxu0 0.0
        %420 = vmatprep.subr.mxu0 0.0
        %421 = vmatpush1.msra.mxu0 0.0
        %422 = vmatprep.subr.mxu0 0.0
        %423 = vmatpush1.msra.mxu0 0.0
        %424 = vmatprep.subr.mxu0 0.0
        %425 = vmatpush1.msra.mxu0 0.0
        %426 = vmatprep.subr.mxu0 0.0
        %427 = vmatpush1.msra.mxu0 0.0
        %428 = vmatprep.subr.mxu0 0.0
        %429 = vmatpush1.msra.mxu0 0.0
        %430 = vmatprep.subr.mxu0 0.0
        %431 = vmatpush1.msra.mxu0 0.0
        %432 = vmatprep.subr.mxu0 0.0
        %433 = vmatpush1.msra.mxu0 0.0
        %434 = vmatprep.subr.mxu0 0.0
        %435 = vmatpush1.msra.mxu0 0.0
        %436 = vmatprep.subr.mxu0 0.0
        %437 = vmatpush1.msra.mxu0 0.0
        %438 = vmatprep.subr.mxu0 0.0
        %439 = vmatpush1.msra.mxu0 0.0
        %440 = vmatprep.subr.mxu0 0.0
        %441 = vmatpush1.msra.mxu0 0.0
        %442 = vmatprep.subr.mxu0 0.0
        %443 = vmatpush1.msra.mxu0 0.0
        %444 = vmatprep.subr.mxu0 0.0
        %445 = vmatpush1.msra.mxu0 0.0
        %446 = vmatprep.subr.mxu0 0.0
        %447 = vmatpush1.msra.mxu0 0.0
        %448 = vmatprep.mubr.f32.mxu0 0.0
        %449 = vmatmul.mubr.f32.gmra.mrb[0].mxu0 %v382
        %v450 = vpop.f32.mrb[0].mxu0
        %v451 = vadd.f32 0.0, %v450
        %v452 = vpop.f32.mrb[0].mxu0
        %453 = vdwg.mxu0
        %v455 = vrot.slane %v214, 1
        %456 = vrot.lane.b32.xlu0 %v455, 127
        %v457 = vpop.permute.xlu0 %456
        %v458 = vsel %vm222, %v457, 0
        %460 = vmatprep.subr.mxu0 0.0
        %461 = vmatpush1.msra.mxu0 %v306
        %462 = vmatprep.subr.mxu0 0.0
        %463 = vmatpush1.msra.mxu0 0.0
        %464 = vmatprep.subr.mxu0 0.0
        %465 = vmatpush1.msra.mxu0 0.0
        %466 = vmatprep.subr.mxu0 0.0
        %467 = vmatpush1.msra.mxu0 0.0
        %468 = vmatprep.subr.mxu0 0.0
        %469 = vmatpush1.msra.mxu0 0.0
        %470 = vmatprep.subr.mxu0 0.0
        %471 = vmatpush1.msra.mxu0 0.0
        %472 = vmatprep.subr.mxu0 0.0
        %473 = vmatpush1.msra.mxu0 0.0
        %474 = vmatprep.subr.mxu0 0.0
        %475 = vmatpush1.msra.mxu0 0.0
        %476 = vmatprep.subr.mxu0 0.0
        %477 = vmatpush1.msra.mxu0 0.0
        %478 = vmatprep.subr.mxu0 0.0
        %479 = vmatpush1.msra.mxu0 0.0
        %480 = vmatprep.subr.mxu0 0.0
        %481 = vmatpush1.msra.mxu0 0.0
        %482 = vmatprep.subr.mxu0 0.0
        %483 = vmatpush1.msra.mxu0 0.0
        %484 = vmatprep.subr.mxu0 0.0
        %485 = vmatpush1.msra.mxu0 0.0
        %486 = vmatprep.subr.mxu0 0.0
        %487 = vmatpush1.msra.mxu0 0.0
        %488 = vmatprep.subr.mxu0 0.0
        %489 = vmatpush1.msra.mxu0 0.0
        %490 = vmatprep.subr.mxu0 0.0
        %491 = vmatpush1.msra.mxu0 0.0
        %492 = vmatprep.subr.mxu0 0.0
        %493 = vmatpush1.msra.mxu0 0.0
        %494 = vmatprep.subr.mxu0 0.0
        %495 = vmatpush1.msra.mxu0 0.0
        %496 = vmatprep.subr.mxu0 0.0
        %497 = vmatpush1.msra.mxu0 0.0
        %498 = vmatprep.subr.mxu0 0.0
        %499 = vmatpush1.msra.mxu0 0.0
        %500 = vmatprep.subr.mxu0 0.0
        %501 = vmatpush1.msra.mxu0 0.0
        %502 = vmatprep.subr.mxu0 0.0
        %503 = vmatpush1.msra.mxu0 0.0
        %504 = vmatprep.subr.mxu0 0.0
        %505 = vmatpush1.msra.mxu0 0.0
        %506 = vmatprep.subr.mxu0 0.0
        %507 = vmatpush1.msra.mxu0 0.0
        %508 = vmatprep.subr.mxu0 0.0
        %509 = vmatpush1.msra.mxu0 0.0
        %510 = vmatprep.subr.mxu0 0.0
        %511 = vmatpush1.msra.mxu0 0.0
        %512 = vmatprep.subr.mxu0 0.0
        %513 = vmatpush1.msra.mxu0 0.0
        %514 = vmatprep.subr.mxu0 0.0
        %515 = vmatpush1.msra.mxu0 0.0
        %516 = vmatprep.subr.mxu0 0.0
        %517 = vmatpush1.msra.mxu0 0.0
        %518 = vmatprep.subr.mxu0 0.0
        %519 = vmatpush1.msra.mxu0 0.0
        %520 = vmatprep.subr.mxu0 0.0
        %521 = vmatpush1.msra.mxu0 0.0
        %522 = vmatprep.subr.mxu0 0.0
        %523 = vmatpush1.msra.mxu0 0.0
        %524 = vmatprep.mubr.f32.mxu0 0.0
        %525 = vmatmul.mubr.f32.gmra.mrb[0].mxu0 %v458
        %v526 = vpop.f32.mrb[0].mxu0
        %v527 = vadd.f32 %v451, %v526
        %v528 = vpop.f32.mrb[0].mxu0
        %529 = vdwg.mxu0
        %v531 = vsel %vm222, %v164, 0
        %v534 = vsel %vm222, %v165, 0
        %v537 = vsel %vm225, %v527, 0
        %539 = vmatprep.subr.mxu0 0.0
        %540 = vmatpush1.msra.mxu0 %v537
        %541 = vmatprep.subr.mxu0 0.0
        %542 = vmatpush1.msra.mxu0 0.0
        %543 = vmatprep.subr.mxu0 0.0
        %544 = vmatpush1.msra.mxu0 0.0
        %545 = vmatprep.subr.mxu0 0.0
        %546 = vmatpush1.msra.mxu0 0.0
        %547 = vmatprep.subr.mxu0 0.0
        %548 = vmatpush1.msra.mxu0 0.0
        %549 = vmatprep.subr.mxu0 0.0
        %550 = vmatpush1.msra.mxu0 0.0
        %551 = vmatprep.subr.mxu0 0.0
        %552 = vmatpush1.msra.mxu0 0.0
        %553 = vmatprep.subr.mxu0 0.0
        %554 = vmatpush1.msra.mxu0 0.0
        %555 = vmatprep.subr.mxu0 0.0
        %556 = vmatpush1.msra.mxu0 0.0
        %557 = vmatprep.subr.mxu0 0.0
        %558 = vmatpush1.msra.mxu0 0.0
        %559 = vmatprep.subr.mxu0 0.0
        %560 = vmatpush1.msra.mxu0 0.0
        %561 = vmatprep.subr.mxu0 0.0
        %562 = vmatpush1.msra.mxu0 0.0
        %563 = vmatprep.subr.mxu0 0.0
        %564 = vmatpush1.msra.mxu0 0.0
        %565 = vmatprep.subr.mxu0 0.0
        %566 = vmatpush1.msra.mxu0 0.0
        %567 = vmatprep.subr.mxu0 0.0
        %568 = vmatpush1.msra.mxu0 0.0
        %569 = vmatprep.subr.mxu0 0.0
        %570 = vmatpush1.msra.mxu0 0.0
        %571 = vmatprep.subr.mxu0 0.0
        %572 = vmatpush1.msra.mxu0 0.0
        %573 = vmatprep.subr.mxu0 0.0
        %574 = vmatpush1.msra.mxu0 0.0
        %575 = vmatprep.subr.mxu0 0.0
        %576 = vmatpush1.msra.mxu0 0.0
        %577 = vmatprep.subr.mxu0 0.0
        %578 = vmatpush1.msra.mxu0 0.0
        %579 = vmatprep.subr.mxu0 0.0
        %580 = vmatpush1.msra.mxu0 0.0
        %581 = vmatprep.subr.mxu0 0.0
        %582 = vmatpush1.msra.mxu0 0.0
        %583 = vmatprep.subr.mxu0 0.0
        %584 = vmatpush1.msra.mxu0 0.0
        %585 = vmatprep.subr.mxu0 0.0
        %586 = vmatpush1.msra.mxu0 0.0
        %587 = vmatprep.subr.mxu0 0.0
        %588 = vmatpush1.msra.mxu0 0.0
        %589 = vmatprep.subr.mxu0 0.0
        %590 = vmatpush1.msra.mxu0 0.0
        %591 = vmatprep.subr.mxu0 0.0
        %592 = vmatpush1.msra.mxu0 0.0
        %593 = vmatprep.subr.mxu0 0.0
        %594 = vmatpush1.msra.mxu0 0.0
        %595 = vmatprep.subr.mxu0 0.0
        %596 = vmatpush1.msra.mxu0 0.0
        %597 = vmatprep.subr.mxu0 0.0
        %598 = vmatpush1.msra.mxu0 0.0
        %599 = vmatprep.subr.mxu0 0.0
        %600 = vmatpush1.msra.mxu0 0.0
        %601 = vmatprep.subr.mxu0 0.0
        %602 = vmatpush1.msra.mxu0 0.0
        %603 = vmatprep.mubr.f32.mxu0 0.0
        %604 = vmatmul.mubr.f32.gmra.mrb[0].mxu0 %v531
        %v605 = vpop.f32.mrb[0].mxu0
        %v606 = vadd.f32 0.0, %v605
        %v607 = vpop.f32.mrb[0].mxu0
        %608 = vmatprep.mubr.f32.mxu0 0.0
        %609 = vmatmul.mubr.f32.gmra.mrb[0].mxu0 %v534
        %v610 = vpop.f32.mrb[0].mxu0
        %v611 = vadd.f32 0.0, %v610
        %v612 = vpop.f32.mrb[0].mxu0
        %613 = vdwg.mxu0
        %v615 = vsel %vm222, %v159, 0
        %v618 = vsel %vm222, %v160, 0
        %v621 = vsel %vm225, %v375, 0
        %623 = vmatprep.subr.mxu0 0.0
        %624 = vmatpush1.msra.mxu0 %v621
        %625 = vmatprep.subr.mxu0 0.0
        %626 = vmatpush1.msra.mxu0 0.0
        %627 = vmatprep.subr.mxu0 0.0
        %628 = vmatpush1.msra.mxu0 0.0
        %629 = vmatprep.subr.mxu0 0.0
        %630 = vmatpush1.msra.mxu0 0.0
        %631 = vmatprep.subr.mxu0 0.0
        %632 = vmatpush1.msra.mxu0 0.0
        %633 = vmatprep.subr.mxu0 0.0
        %634 = vmatpush1.msra.mxu0 0.0
        %635 = vmatprep.subr.mxu0 0.0
        %636 = vmatpush1.msra.mxu0 0.0
        %637 = vmatprep.subr.mxu0 0.0
        %638 = vmatpush1.msra.mxu0 0.0
        %639 = vmatprep.subr.mxu0 0.0
        %640 = vmatpush1.msra.mxu0 0.0
        %641 = vmatprep.subr.mxu0 0.0
        %642 = vmatpush1.msra.mxu0 0.0
        %643 = vmatprep.subr.mxu0 0.0
        %644 = vmatpush1.msra.mxu0 0.0
        %645 = vmatprep.subr.mxu0 0.0
        %646 = vmatpush1.msra.mxu0 0.0
        %647 = vmatprep.subr.mxu0 0.0
        %648 = vmatpush1.msra.mxu0 0.0
        %649 = vmatprep.subr.mxu0 0.0
        %650 = vmatpush1.msra.mxu0 0.0
        %651 = vmatprep.subr.mxu0 0.0
        %652 = vmatpush1.msra.mxu0 0.0
        %653 = vmatprep.subr.mxu0 0.0
        %654 = vmatpush1.msra.mxu0 0.0
        %655 = vmatprep.subr.mxu0 0.0
        %656 = vmatpush1.msra.mxu0 0.0
        %657 = vmatprep.subr.mxu0 0.0
        %658 = vmatpush1.msra.mxu0 0.0
        %659 = vmatprep.subr.mxu0 0.0
        %660 = vmatpush1.msra.mxu0 0.0
        %661 = vmatprep.subr.mxu0 0.0
        %662 = vmatpush1.msra.mxu0 0.0
        %663 = vmatprep.subr.mxu0 0.0
        %664 = vmatpush1.msra.mxu0 0.0
        %665 = vmatprep.subr.mxu0 0.0
        %666 = vmatpush1.msra.mxu0 0.0
        %667 = vmatprep.subr.mxu0 0.0
        %668 = vmatpush1.msra.mxu0 0.0
        %669 = vmatprep.subr.mxu0 0.0
        %670 = vmatpush1.msra.mxu0 0.0
        %671 = vmatprep.subr.mxu0 0.0
        %672 = vmatpush1.msra.mxu0 0.0
        %673 = vmatprep.subr.mxu0 0.0
        %674 = vmatpush1.msra.mxu0 0.0
        %675 = vmatprep.subr.mxu0 0.0
        %676 = vmatpush1.msra.mxu0 0.0
        %677 = vmatprep.subr.mxu0 0.0
        %678 = vmatpush1.msra.mxu0 0.0
        %679 = vmatprep.subr.mxu0 0.0
        %680 = vmatpush1.msra.mxu0 0.0
        %681 = vmatprep.subr.mxu0 0.0
        %682 = vmatpush1.msra.mxu0 0.0
        %683 = vmatprep.subr.mxu0 0.0
        %684 = vmatpush1.msra.mxu0 0.0
        %685 = vmatprep.subr.mxu0 0.0
        %686 = vmatpush1.msra.mxu0 0.0
        %687 = vmatprep.mubr.f32.mxu0 0.0
        %688 = vmatmul.mubr.f32.gmra.mrb[0].mxu0 %v615
        %v689 = vpop.f32.mrb[0].mxu0
        %v690 = vadd.f32 %v606, %v689
        %v691 = vpop.f32.mrb[0].mxu0
        %692 = vmatprep.mubr.f32.mxu0 0.0
        %693 = vmatmul.mubr.f32.gmra.mrb[0].mxu0 %v618
        %v694 = vpop.f32.mrb[0].mxu0
        %v695 = vadd.f32 %v611, %v694
        %v696 = vpop.f32.mrb[0].mxu0
        %697 = vdwg.mxu0
        %s698 = scalar_lea.vmem %s121, 8 [#allocation5]
        %v699 = vld [vmem:[%s698] sm:$0xff]
        %s700 = sld [smem:[#allocation3 + $0x80]]
        %v701 = vstv %s700
        %v702 = vmul.f32 %v699, %v701
        %s703 = sld [smem:[#allocation3 + $0x82]]
        %v704 = vstv %s703
        %v705 = vmul.f32 %v699, %v704
        %707 = vrot.lane.b32.xlu0 %v705, 1
        %v708 = vpop.permute.xlu0 %707
        %v710 = vadd.f32 %v702, %v708
        %s711 = sld [smem:[#allocation3 + $0x86]]
        %v712 = vstv %s711
        %v713 = vmul.f32 %v699, %v712
        %v715 = vrot.slane %v713, 7
        %v717 = vadd.f32 %v710, %v715
        %s718 = sld [smem:[#allocation3 + $0x88]]
        %v719 = vstv %s718
        %v720 = vmul.f32 %v699, %v719
        %v722 = vrot.slane %v720, 7
        %723 = vrot.lane.b32.xlu0 %v722, 1
        %v724 = vpop.permute.xlu0 %723
        %v726 = vadd.f32 %v717, %v724
        %s727 = sld [smem:[#allocation3 + $0x81]]
        %v728 = vstv %s727
        %v729 = vmul.f32 %v699, %v728
        %s730 = sld [smem:[#allocation3 + $0x87]]
        %v731 = vstv %s730
        %v732 = vmul.f32 %v699, %v731
        %v734 = vrot.slane %v732, 7
        %v736 = vadd.f32 %v729, %v734
        %s737 = sld [smem:[#allocation3 + $0x83]]
        %v738 = vstv %s737
        %v739 = vmul.f32 %v699, %v738
        %s740 = sld [smem:[#allocation3 + $0x85]]
        %v741 = vstv %s740
        %v742 = vmul.f32 %v699, %v741
        %744 = vrot.lane.b32.xlu0 %v742, 1
        %v745 = vpop.permute.xlu0 %744
        %v747 = vadd.f32 %v739, %v745
        %s748 = sld [smem:[#allocation3 + $0x84]]
        %v749 = vstv %s748
        %v750 = vmul.f32 %v699, %v749
        %v752 = vrot.slane %v736, 1
        %753 = vrot.lane.b32.xlu0 %v752, 127
        %v754 = vpop.permute.xlu0 %753
        %v755 = vsel %vm222, %v754, 0
        %757 = vmatprep.subr.mxu0 0.0
        %758 = vmatpush1.msra.mxu0 %v227
        %759 = vmatprep.subr.mxu0 0.0
        %760 = vmatpush1.msra.mxu0 0.0
        %761 = vmatprep.subr.mxu0 0.0
        %762 = vmatpush1.msra.mxu0 0.0
        %763 = vmatprep.subr.mxu0 0.0
        %764 = vmatpush1.msra.mxu0 0.0
        %765 = vmatprep.subr.mxu0 0.0
        %766 = vmatpush1.msra.mxu0 0.0
        %767 = vmatprep.subr.mxu0 0.0
        %768 = vmatpush1.msra.mxu0 0.0
        %769 = vmatprep.subr.mxu0 0.0
        %770 = vmatpush1.msra.mxu0 0.0
        %771 = vmatprep.subr.mxu0 0.0
        %772 = vmatpush1.msra.mxu0 0.0
        %773 = vmatprep.subr.mxu0 0.0
        %774 = vmatpush1.msra.mxu0 0.0
        %775 = vmatprep.subr.mxu0 0.0
        %776 = vmatpush1.msra.mxu0 0.0
        %777 = vmatprep.subr.mxu0 0.0
        %778 = vmatpush1.msra.mxu0 0.0
        %779 = vmatprep.subr.mxu0 0.0
        %780 = vmatpush1.msra.mxu0 0.0
        %781 = vmatprep.subr.mxu0 0.0
        %782 = vmatpush1.msra.mxu0 0.0
        %783 = vmatprep.subr.mxu0 0.0
        %784 = vmatpush1.msra.mxu0 0.0
        %785 = vmatprep.subr.mxu0 0.0
        %786 = vmatpush1.msra.mxu0 0.0
        %787 = vmatprep.subr.mxu0 0.0
        %788 = vmatpush1.msra.mxu0 0.0
        %789 = vmatprep.subr.mxu0 0.0
        %790 = vmatpush1.msra.mxu0 0.0
        %791 = vmatprep.subr.mxu0 0.0
        %792 = vmatpush1.msra.mxu0 0.0
        %793 = vmatprep.subr.mxu0 0.0
        %794 = vmatpush1.msra.mxu0 0.0
        %795 = vmatprep.subr.mxu0 0.0
        %796 = vmatpush1.msra.mxu0 0.0
        %797 = vmatprep.subr.mxu0 0.0
        %798 = vmatpush1.msra.mxu0 0.0
        %799 = vmatprep.subr.mxu0 0.0
        %800 = vmatpush1.msra.mxu0 0.0
        %801 = vmatprep.subr.mxu0 0.0
        %802 = vmatpush1.msra.mxu0 0.0
        %803 = vmatprep.subr.mxu0 0.0
        %804 = vmatpush1.msra.mxu0 0.0
        %805 = vmatprep.subr.mxu0 0.0
        %806 = vmatpush1.msra.mxu0 0.0
        %807 = vmatprep.subr.mxu0 0.0
        %808 = vmatpush1.msra.mxu0 0.0
        %809 = vmatprep.subr.mxu0 0.0
        %810 = vmatpush1.msra.mxu0 0.0
        %811 = vmatprep.subr.mxu0 0.0
        %812 = vmatpush1.msra.mxu0 0.0
        %813 = vmatprep.subr.mxu0 0.0
        %814 = vmatpush1.msra.mxu0 0.0
        %815 = vmatprep.subr.mxu0 0.0
        %816 = vmatpush1.msra.mxu0 0.0
        %817 = vmatprep.subr.mxu0 0.0
        %818 = vmatpush1.msra.mxu0 0.0
        %819 = vmatprep.subr.mxu0 0.0
        %820 = vmatpush1.msra.mxu0 0.0
        %821 = vmatprep.mubr.f32.mxu0 0.0
        %822 = vmatmul.mubr.f32.gmra.mrb[0].mxu0 %v755
        %v823 = vpop.f32.mrb[0].mxu0
        %v824 = vadd.f32 0.0, %v823
        %v825 = vpop.f32.mrb[0].mxu0
        %826 = vdwg.mxu0
        %v828 = vrot.slane %v726, 1
        %829 = vrot.lane.b32.xlu0 %v828, 127
        %v830 = vpop.permute.xlu0 %829
        %v831 = vsel %vm222, %v830, 0
        %833 = vmatprep.subr.mxu0 0.0
        %834 = vmatpush1.msra.mxu0 %v306
        %835 = vmatprep.subr.mxu0 0.0
        %836 = vmatpush1.msra.mxu0 0.0
        %837 = vmatprep.subr.mxu0 0.0
        %838 = vmatpush1.msra.mxu0 0.0
        %839 = vmatprep.subr.mxu0 0.0
        %840 = vmatpush1.msra.mxu0 0.0
        %841 = vmatprep.subr.mxu0 0.0
        %842 = vmatpush1.msra.mxu0 0.0
        %843 = vmatprep.subr.mxu0 0.0
        %844 = vmatpush1.msra.mxu0 0.0
        %845 = vmatprep.subr.mxu0 0.0
        %846 = vmatpush1.msra.mxu0 0.0
        %847 = vmatprep.subr.mxu0 0.0
        %848 = vmatpush1.msra.mxu0 0.0
        %849 = vmatprep.subr.mxu0 0.0
        %850 = vmatpush1.msra.mxu0 0.0
        %851 = vmatprep.subr.mxu0 0.0
        %852 = vmatpush1.msra.mxu0 0.0
        %853 = vmatprep.subr.mxu0 0.0
        %854 = vmatpush1.msra.mxu0 0.0
        %855 = vmatprep.subr.mxu0 0.0
        %856 = vmatpush1.msra.mxu0 0.0
        %857 = vmatprep.subr.mxu0 0.0
        %858 = vmatpush1.msra.mxu0 0.0
        %859 = vmatprep.subr.mxu0 0.0
        %860 = vmatpush1.msra.mxu0 0.0
        %861 = vmatprep.subr.mxu0 0.0
        %862 = vmatpush1.msra.mxu0 0.0
        %863 = vmatprep.subr.mxu0 0.0
        %864 = vmatpush1.msra.mxu0 0.0
        %865 = vmatprep.subr.mxu0 0.0
        %866 = vmatpush1.msra.mxu0 0.0
        %867 = vmatprep.subr.mxu0 0.0
        %868 = vmatpush1.msra.mxu0 0.0
        %869 = vmatprep.subr.mxu0 0.0
        %870 = vmatpush1.msra.mxu0 0.0
        %871 = vmatprep.subr.mxu0 0.0
        %872 = vmatpush1.msra.mxu0 0.0
        %873 = vmatprep.subr.mxu0 0.0
        %874 = vmatpush1.msra.mxu0 0.0
        %875 = vmatprep.subr.mxu0 0.0
        %876 = vmatpush1.msra.mxu0 0.0
        %877 = vmatprep.subr.mxu0 0.0
        %878 = vmatpush1.msra.mxu0 0.0
        %879 = vmatprep.subr.mxu0 0.0
        %880 = vmatpush1.msra.mxu0 0.0
        %881 = vmatprep.subr.mxu0 0.0
        %882 = vmatpush1.msra.mxu0 0.0
        %883 = vmatprep.subr.mxu0 0.0
        %884 = vmatpush1.msra.mxu0 0.0
        %885 = vmatprep.subr.mxu0 0.0
        %886 = vmatpush1.msra.mxu0 0.0
        %887 = vmatprep.subr.mxu0 0.0
        %888 = vmatpush1.msra.mxu0 0.0
        %889 = vmatprep.subr.mxu0 0.0
        %890 = vmatpush1.msra.mxu0 0.0
        %891 = vmatprep.subr.mxu0 0.0
        %892 = vmatpush1.msra.mxu0 0.0
        %893 = vmatprep.subr.mxu0 0.0
        %894 = vmatpush1.msra.mxu0 0.0
        %895 = vmatprep.subr.mxu0 0.0
        %896 = vmatpush1.msra.mxu0 0.0
        %897 = vmatprep.mubr.f32.mxu0 0.0
        %898 = vmatmul.mubr.f32.gmra.mrb[0].mxu0 %v831
        %v899 = vpop.f32.mrb[0].mxu0
        %v900 = vadd.f32 %v824, %v899
        %v901 = vpop.f32.mrb[0].mxu0
        %902 = vdwg.mxu0
        %v904 = vrot.slane %v750, 1
        %905 = vrot.lane.b32.xlu0 %v904, 127
        %v906 = vpop.permute.xlu0 %905
        %v907 = vsel %vm222, %v906, 0
        %909 = vmatprep.subr.mxu0 0.0
        %910 = vmatpush1.msra.mxu0 %v227
        %911 = vmatprep.subr.mxu0 0.0
        %912 = vmatpush1.msra.mxu0 0.0
        %913 = vmatprep.subr.mxu0 0.0
        %914 = vmatpush1.msra.mxu0 0.0
        %915 = vmatprep.subr.mxu0 0.0
        %916 = vmatpush1.msra.mxu0 0.0
        %917 = vmatprep.subr.mxu0 0.0
        %918 = vmatpush1.msra.mxu0 0.0
        %919 = vmatprep.subr.mxu0 0.0
        %920 = vmatpush1.msra.mxu0 0.0
        %921 = vmatprep.subr.mxu0 0.0
        %922 = vmatpush1.msra.mxu0 0.0
        %923 = vmatprep.subr.mxu0 0.0
        %924 = vmatpush1.msra.mxu0 0.0
        %925 = vmatprep.subr.mxu0 0.0
        %926 = vmatpush1.msra.mxu0 0.0
        %927 = vmatprep.subr.mxu0 0.0
        %928 = vmatpush1.msra.mxu0 0.0
        %929 = vmatprep.subr.mxu0 0.0
        %930 = vmatpush1.msra.mxu0 0.0
        %931 = vmatprep.subr.mxu0 0.0
        %932 = vmatpush1.msra.mxu0 0.0
        %933 = vmatprep.subr.mxu0 0.0
        %934 = vmatpush1.msra.mxu0 0.0
        %935 = vmatprep.subr.mxu0 0.0
        %936 = vmatpush1.msra.mxu0 0.0
        %937 = vmatprep.subr.mxu0 0.0
        %938 = vmatpush1.msra.mxu0 0.0
        %939 = vmatprep.subr.mxu0 0.0
        %940 = vmatpush1.msra.mxu0 0.0
        %941 = vmatprep.subr.mxu0 0.0
        %942 = vmatpush1.msra.mxu0 0.0
        %943 = vmatprep.subr.mxu0 0.0
        %944 = vmatpush1.msra.mxu0 0.0
        %945 = vmatprep.subr.mxu0 0.0
        %946 = vmatpush1.msra.mxu0 0.0
        %947 = vmatprep.subr.mxu0 0.0
        %948 = vmatpush1.msra.mxu0 0.0
        %949 = vmatprep.subr.mxu0 0.0
        %950 = vmatpush1.msra.mxu0 0.0
        %951 = vmatprep.subr.mxu0 0.0
        %952 = vmatpush1.msra.mxu0 0.0
        %953 = vmatprep.subr.mxu0 0.0
        %954 = vmatpush1.msra.mxu0 0.0
        %955 = vmatprep.subr.mxu0 0.0
        %956 = vmatpush1.msra.mxu0 0.0
        %957 = vmatprep.subr.mxu0 0.0
        %958 = vmatpush1.msra.mxu0 0.0
        %959 = vmatprep.subr.mxu0 0.0
        %960 = vmatpush1.msra.mxu0 0.0
        %961 = vmatprep.subr.mxu0 0.0
        %962 = vmatpush1.msra.mxu0 0.0
        %963 = vmatprep.subr.mxu0 0.0
        %964 = vmatpush1.msra.mxu0 0.0
        %965 = vmatprep.subr.mxu0 0.0
        %966 = vmatpush1.msra.mxu0 0.0
        %967 = vmatprep.subr.mxu0 0.0
        %968 = vmatpush1.msra.mxu0 0.0
        %969 = vmatprep.subr.mxu0 0.0
        %970 = vmatpush1.msra.mxu0 0.0
        %971 = vmatprep.subr.mxu0 0.0
        %972 = vmatpush1.msra.mxu0 0.0
        %973 = vmatprep.mubr.f32.mxu0 0.0
        %974 = vmatmul.mubr.f32.gmra.mrb[0].mxu0 %v907
        %v975 = vpop.f32.mrb[0].mxu0
        %v976 = vadd.f32 0.0, %v975
        %v977 = vpop.f32.mrb[0].mxu0
        %978 = vdwg.mxu0
        %v980 = vrot.slane %v747, 1
        %981 = vrot.lane.b32.xlu0 %v980, 127
        %v982 = vpop.permute.xlu0 %981
        %v983 = vsel %vm222, %v982, 0
        %985 = vmatprep.subr.mxu0 0.0
        %986 = vmatpush1.msra.mxu0 %v306
        %987 = vmatprep.subr.mxu0 0.0
        %988 = vmatpush1.msra.mxu0 0.0
        %989 = vmatprep.subr.mxu0 0.0
        %990 = vmatpush1.msra.mxu0 0.0
        %991 = vmatprep.subr.mxu0 0.0
        %992 = vmatpush1.msra.mxu0 0.0
        %993 = vmatprep.subr.mxu0 0.0
        %994 = vmatpush1.msra.mxu0 0.0
        %995 = vmatprep.subr.mxu0 0.0
        %996 = vmatpush1.msra.mxu0 0.0
        %997 = vmatprep.subr.mxu0 0.0
        %998 = vmatpush1.msra.mxu0 0.0
        %999 = vmatprep.subr.mxu0 0.0
        %1000 = vmatpush1.msra.mxu0 0.0
        %1001 = vmatprep.subr.mxu0 0.0
        %1002 = vmatpush1.msra.mxu0 0.0
        %1003 = vmatprep.subr.mxu0 0.0
        %1004 = vmatpush1.msra.mxu0 0.0
        %1005 = vmatprep.subr.mxu0 0.0
        %1006 = vmatpush1.msra.mxu0 0.0
        %1007 = vmatprep.subr.mxu0 0.0
        %1008 = vmatpush1.msra.mxu0 0.0
        %1009 = vmatprep.subr.mxu0 0.0
        %1010 = vmatpush1.msra.mxu0 0.0
        %1011 = vmatprep.subr.mxu0 0.0
        %1012 = vmatpush1.msra.mxu0 0.0
        %1013 = vmatprep.subr.mxu0 0.0
        %1014 = vmatpush1.msra.mxu0 0.0
        %1015 = vmatprep.subr.mxu0 0.0
        %1016 = vmatpush1.msra.mxu0 0.0
        %1017 = vmatprep.subr.mxu0 0.0
        %1018 = vmatpush1.msra.mxu0 0.0
        %1019 = vmatprep.subr.mxu0 0.0
        %1020 = vmatpush1.msra.mxu0 0.0
        %1021 = vmatprep.subr.mxu0 0.0
        %1022 = vmatpush1.msra.mxu0 0.0
        %1023 = vmatprep.subr.mxu0 0.0
        %1024 = vmatpush1.msra.mxu0 0.0
        %1025 = vmatprep.subr.mxu0 0.0
        %1026 = vmatpush1.msra.mxu0 0.0
        %1027 = vmatprep.subr.mxu0 0.0
        %1028 = vmatpush1.msra.mxu0 0.0
        %1029 = vmatprep.subr.mxu0 0.0
        %1030 = vmatpush1.msra.mxu0 0.0
        %1031 = vmatprep.subr.mxu0 0.0
        %1032 = vmatpush1.msra.mxu0 0.0
        %1033 = vmatprep.subr.mxu0 0.0
        %1034 = vmatpush1.msra.mxu0 0.0
        %1035 = vmatprep.subr.mxu0 0.0
        %1036 = vmatpush1.msra.mxu0 0.0
        %1037 = vmatprep.subr.mxu0 0.0
        %1038 = vmatpush1.msra.mxu0 0.0
        %1039 = vmatprep.subr.mxu0 0.0
        %1040 = vmatpush1.msra.mxu0 0.0
        %1041 = vmatprep.subr.mxu0 0.0
        %1042 = vmatpush1.msra.mxu0 0.0
        %1043 = vmatprep.subr.mxu0 0.0
        %1044 = vmatpush1.msra.mxu0 0.0
        %1045 = vmatprep.subr.mxu0 0.0
        %1046 = vmatpush1.msra.mxu0 0.0
        %1047 = vmatprep.subr.mxu0 0.0
        %1048 = vmatpush1.msra.mxu0 0.0
        %1049 = vmatprep.mubr.f32.mxu0 0.0
        %1050 = vmatmul.mubr.f32.gmra.mrb[0].mxu0 %v983
        %v1051 = vpop.f32.mrb[0].mxu0
        %v1052 = vadd.f32 %v976, %v1051
        %v1053 = vpop.f32.mrb[0].mxu0
        %1054 = vdwg.mxu0
        %v1056 = vsel %vm225, %v1052, 0
        %1058 = vmatprep.subr.mxu0 0.0
        %1059 = vmatpush1.msra.mxu0 %v1056
        %1060 = vmatprep.subr.mxu0 0.0
        %1061 = vmatpush1.msra.mxu0 0.0
        %1062 = vmatprep.subr.mxu0 0.0
        %1063 = vmatpush1.msra.mxu0 0.0
        %1064 = vmatprep.subr.mxu0 0.0
        %1065 = vmatpush1.msra.mxu0 0.0
        %1066 = vmatprep.subr.mxu0 0.0
        %1067 = vmatpush1.msra.mxu0 0.0
        %1068 = vmatprep.subr.mxu0 0.0
        %1069 = vmatpush1.msra.mxu0 0.0
        %1070 = vmatprep.subr.mxu0 0.0
        %1071 = vmatpush1.msra.mxu0 0.0
        %1072 = vmatprep.subr.mxu0 0.0
        %1073 = vmatpush1.msra.mxu0 0.0
        %1074 = vmatprep.subr.mxu0 0.0
        %1075 = vmatpush1.msra.mxu0 0.0
        %1076 = vmatprep.subr.mxu0 0.0
        %1077 = vmatpush1.msra.mxu0 0.0
        %1078 = vmatprep.subr.mxu0 0.0
        %1079 = vmatpush1.msra.mxu0 0.0
        %1080 = vmatprep.subr.mxu0 0.0
        %1081 = vmatpush1.msra.mxu0 0.0
        %1082 = vmatprep.subr.mxu0 0.0
        %1083 = vmatpush1.msra.mxu0 0.0
        %1084 = vmatprep.subr.mxu0 0.0
        %1085 = vmatpush1.msra.mxu0 0.0
        %1086 = vmatprep.subr.mxu0 0.0
        %1087 = vmatpush1.msra.mxu0 0.0
        %1088 = vmatprep.subr.mxu0 0.0
        %1089 = vmatpush1.msra.mxu0 0.0
        %1090 = vmatprep.subr.mxu0 0.0
        %1091 = vmatpush1.msra.mxu0 0.0
        %1092 = vmatprep.subr.mxu0 0.0
        %1093 = vmatpush1.msra.mxu0 0.0
        %1094 = vmatprep.subr.mxu0 0.0
        %1095 = vmatpush1.msra.mxu0 0.0
        %1096 = vmatprep.subr.mxu0 0.0
        %1097 = vmatpush1.msra.mxu0 0.0
        %1098 = vmatprep.subr.mxu0 0.0
        %1099 = vmatpush1.msra.mxu0 0.0
        %1100 = vmatprep.subr.mxu0 0.0
        %1101 = vmatpush1.msra.mxu0 0.0
        %1102 = vmatprep.subr.mxu0 0.0
        %1103 = vmatpush1.msra.mxu0 0.0
        %1104 = vmatprep.subr.mxu0 0.0
        %1105 = vmatpush1.msra.mxu0 0.0
        %1106 = vmatprep.subr.mxu0 0.0
        %1107 = vmatpush1.msra.mxu0 0.0
        %1108 = vmatprep.subr.mxu0 0.0
        %1109 = vmatpush1.msra.mxu0 0.0
        %1110 = vmatprep.subr.mxu0 0.0
        %1111 = vmatpush1.msra.mxu0 0.0
        %1112 = vmatprep.subr.mxu0 0.0
        %1113 = vmatpush1.msra.mxu0 0.0
        %1114 = vmatprep.subr.mxu0 0.0
        %1115 = vmatpush1.msra.mxu0 0.0
        %1116 = vmatprep.subr.mxu0 0.0
        %1117 = vmatpush1.msra.mxu0 0.0
        %1118 = vmatprep.subr.mxu0 0.0
        %1119 = vmatpush1.msra.mxu0 0.0
        %1120 = vmatprep.subr.mxu0 0.0
        %1121 = vmatpush1.msra.mxu0 0.0
        %1122 = vmatprep.mubr.f32.mxu0 0.0
        %1123 = vmatmul.mubr.f32.gmra.mrb[0].mxu0 %v531
        %v1124 = vpop.f32.mrb[0].mxu0
        %v1125 = vadd.f32 0.0, %v1124
        %v1126 = vpop.f32.mrb[0].mxu0
        %1127 = vmatprep.mubr.f32.mxu0 0.0
        %1128 = vmatmul.mubr.f32.gmra.mrb[0].mxu0 %v534
        %v1129 = vpop.f32.mrb[0].mxu0
        %v1130 = vadd.f32 0.0, %v1129
        %v1131 = vpop.f32.mrb[0].mxu0
        %1132 = vdwg.mxu0
        %v1134 = vsel %vm225, %v900, 0
        %1136 = vmatprep.subr.mxu0 0.0
        %1137 = vmatpush1.msra.mxu0 %v1134
        %1138 = vmatprep.subr.mxu0 0.0
        %1139 = vmatpush1.msra.mxu0 0.0
        %1140 = vmatprep.subr.mxu0 0.0
        %1141 = vmatpush1.msra.mxu0 0.0
        %1142 = vmatprep.subr.mxu0 0.0
        %1143 = vmatpush1.msra.mxu0 0.0
        %1144 = vmatprep.subr.mxu0 0.0
        %1145 = vmatpush1.msra.mxu0 0.0
        %1146 = vmatprep.subr.mxu0 0.0
        %1147 = vmatpush1.msra.mxu0 0.0
        %1148 = vmatprep.subr.mxu0 0.0
        %1149 = vmatpush1.msra.mxu0 0.0
        %1150 = vmatprep.subr.mxu0 0.0
        %1151 = vmatpush1.msra.mxu0 0.0
        %1152 = vmatprep.subr.mxu0 0.0
        %1153 = vmatpush1.msra.mxu0 0.0
        %1154 = vmatprep.subr.mxu0 0.0
        %1155 = vmatpush1.msra.mxu0 0.0
        %1156 = vmatprep.subr.mxu0 0.0
        %1157 = vmatpush1.msra.mxu0 0.0
        %1158 = vmatprep.subr.mxu0 0.0
        %1159 = vmatpush1.msra.mxu0 0.0
        %1160 = vmatprep.subr.mxu0 0.0
        %1161 = vmatpush1.msra.mxu0 0.0
        %1162 = vmatprep.subr.mxu0 0.0
        %1163 = vmatpush1.msra.mxu0 0.0
        %1164 = vmatprep.subr.mxu0 0.0
        %1165 = vmatpush1.msra.mxu0 0.0
        %1166 = vmatprep.subr.mxu0 0.0
        %1167 = vmatpush1.msra.mxu0 0.0
        %1168 = vmatprep.subr.mxu0 0.0
        %1169 = vmatpush1.msra.mxu0 0.0
        %1170 = vmatprep.subr.mxu0 0.0
        %1171 = vmatpush1.msra.mxu0 0.0
        %1172 = vmatprep.subr.mxu0 0.0
        %1173 = vmatpush1.msra.mxu0 0.0
        %1174 = vmatprep.subr.mxu0 0.0
        %1175 = vmatpush1.msra.mxu0 0.0
        %1176 = vmatprep.subr.mxu0 0.0
        %1177 = vmatpush1.msra.mxu0 0.0
        %1178 = vmatprep.subr.mxu0 0.0
        %1179 = vmatpush1.msra.mxu0 0.0
        %1180 = vmatprep.subr.mxu0 0.0
        %1181 = vmatpush1.msra.mxu0 0.0
        %1182 = vmatprep.subr.mxu0 0.0
        %1183 = vmatpush1.msra.mxu0 0.0
        %1184 = vmatprep.subr.mxu0 0.0
        %1185 = vmatpush1.msra.mxu0 0.0
        %1186 = vmatprep.subr.mxu0 0.0
        %1187 = vmatpush1.msra.mxu0 0.0
        %1188 = vmatprep.subr.mxu0 0.0
        %1189 = vmatpush1.msra.mxu0 0.0
        %1190 = vmatprep.subr.mxu0 0.0
        %1191 = vmatpush1.msra.mxu0 0.0
        %1192 = vmatprep.subr.mxu0 0.0
        %1193 = vmatpush1.msra.mxu0 0.0
        %1194 = vmatprep.subr.mxu0 0.0
        %1195 = vmatpush1.msra.mxu0 0.0
        %1196 = vmatprep.subr.mxu0 0.0
        %1197 = vmatpush1.msra.mxu0 0.0
        %1198 = vmatprep.subr.mxu0 0.0
        %1199 = vmatpush1.msra.mxu0 0.0
        %1200 = vmatprep.mubr.f32.mxu0 0.0
        %1201 = vmatmul.mubr.f32.gmra.mrb[0].mxu0 %v615
        %v1202 = vpop.f32.mrb[0].mxu0
        %v1203 = vadd.f32 %v1125, %v1202
        %v1204 = vpop.f32.mrb[0].mxu0
        %1205 = vmatprep.mubr.f32.mxu0 0.0
        %1206 = vmatmul.mubr.f32.gmra.mrb[0].mxu0 %v618
        %v1207 = vpop.f32.mrb[0].mxu0
        %v1208 = vadd.f32 %v1130, %v1207
        %v1209 = vpop.f32.mrb[0].mxu0
        %1210 = vdwg.mxu0
        %s1211 = scalar_lea.vmem %s121, 16 [#allocation5]
        %v1212 = vld [vmem:[%s1211] sm:$0xff]
        %s1213 = sld [smem:[#allocation3 + $0x100]]
        %v1214 = vstv %s1213
        %v1215 = vmul.f32 %v1212, %v1214
        %s1216 = sld [smem:[#allocation3 + $0x102]]
        %v1217 = vstv %s1216
        %v1218 = vmul.f32 %v1212, %v1217
        %1220 = vrot.lane.b32.xlu0 %v1218, 1
        %v1221 = vpop.permute.xlu0 %1220
        %v1223 = vadd.f32 %v1215, %v1221
        %s1224 = sld [smem:[#allocation3 + $0x106]]
        %v1225 = vstv %s1224
        %v1226 = vmul.f32 %v1212, %v1225
        %v1228 = vrot.slane %v1226, 7
        %v1230 = vadd.f32 %v1223, %v1228
        %s1231 = sld [smem:[#allocation3 + $0x108]]
        %v1232 = vstv %s1231
        %v1233 = vmul.f32 %v1212, %v1232
        %v1235 = vrot.slane %v1233, 7
        %1236 = vrot.lane.b32.xlu0 %v1235, 1
        %v1237 = vpop.permute.xlu0 %1236
        %v1239 = vadd.f32 %v1230, %v1237
        %s1240 = sld [smem:[#allocation3 + $0x101]]
        %v1241 = vstv %s1240
        %v1242 = vmul.f32 %v1212, %v1241
        %s1243 = sld [smem:[#allocation3 + $0x107]]
        %v1244 = vstv %s1243
        %v1245 = vmul.f32 %v1212, %v1244
        %v1247 = vrot.slane %v1245, 7
        %v1249 = vadd.f32 %v1242, %v1247
        %s1250 = sld [smem:[#allocation3 + $0x103]]
        %v1251 = vstv %s1250
        %v1252 = vmul.f32 %v1212, %v1251
        %s1253 = sld [smem:[#allocation3 + $0x105]]
        %v1254 = vstv %s1253
        %v1255 = vmul.f32 %v1212, %v1254
        %1257 = vrot.lane.b32.xlu0 %v1255, 1
        %v1258 = vpop.permute.xlu0 %1257
        %v1260 = vadd.f32 %v1252, %v1258
        %s1261 = sld [smem:[#allocation3 + $0x104]]
        %v1262 = vstv %s1261
        %v1263 = vmul.f32 %v1212, %v1262
        %v1265 = vrot.slane %v1249, 1
        %1266 = vrot.lane.b32.xlu0 %v1265, 127
        %v1267 = vpop.permute.xlu0 %1266
        %v1268 = vsel %vm222, %v1267, 0
        %1270 = vmatprep.subr.mxu0 0.0
        %1271 = vmatpush1.msra.mxu0 %v227
        %1272 = vmatprep.subr.mxu0 0.0
        %1273 = vmatpush1.msra.mxu0 0.0
        %1274 = vmatprep.subr.mxu0 0.0
        %1275 = vmatpush1.msra.mxu0 0.0
        %1276 = vmatprep.subr.mxu0 0.0
        %1277 = vmatpush1.msra.mxu0 0.0
        %1278 = vmatprep.subr.mxu0 0.0
        %1279 = vmatpush1.msra.mxu0 0.0
        %1280 = vmatprep.subr.mxu0 0.0
        %1281 = vmatpush1.msra.mxu0 0.0
        %1282 = vmatprep.subr.mxu0 0.0
        %1283 = vmatpush1.msra.mxu0 0.0
        %1284 = vmatprep.subr.mxu0 0.0
        %1285 = vmatpush1.msra.mxu0 0.0
        %1286 = vmatprep.subr.mxu0 0.0
        %1287 = vmatpush1.msra.mxu0 0.0
        %1288 = vmatprep.subr.mxu0 0.0
        %1289 = vmatpush1.msra.mxu0 0.0
        %1290 = vmatprep.subr.mxu0 0.0
        %1291 = vmatpush1.msra.mxu0 0.0
        %1292 = vmatprep.subr.mxu0 0.0
        %1293 = vmatpush1.msra.mxu0 0.0
        %1294 = vmatprep.subr.mxu0 0.0
        %1295 = vmatpush1.msra.mxu0 0.0
        %1296 = vmatprep.subr.mxu0 0.0
        %1297 = vmatpush1.msra.mxu0 0.0
        %1298 = vmatprep.subr.mxu0 0.0
        %1299 = vmatpush1.msra.mxu0 0.0
        %1300 = vmatprep.subr.mxu0 0.0
        %1301 = vmatpush1.msra.mxu0 0.0
        %1302 = vmatprep.subr.mxu0 0.0
        %1303 = vmatpush1.msra.mxu0 0.0
        %1304 = vmatprep.subr.mxu0 0.0
        %1305 = vmatpush1.msra.mxu0 0.0
        %1306 = vmatprep.subr.mxu0 0.0
        %1307 = vmatpush1.msra.mxu0 0.0
        %1308 = vmatprep.subr.mxu0 0.0
        %1309 = vmatpush1.msra.mxu0 0.0
        %1310 = vmatprep.subr.mxu0 0.0
        %1311 = vmatpush1.msra.mxu0 0.0
        %1312 = vmatprep.subr.mxu0 0.0
        %1313 = vmatpush1.msra.mxu0 0.0
        %1314 = vmatprep.subr.mxu0 0.0
        %1315 = vmatpush1.msra.mxu0 0.0
        %1316 = vmatprep.subr.mxu0 0.0
        %1317 = vmatpush1.msra.mxu0 0.0
        %1318 = vmatprep.subr.mxu0 0.0
        %1319 = vmatpush1.msra.mxu0 0.0
        %1320 = vmatprep.subr.mxu0 0.0
        %1321 = vmatpush1.msra.mxu0 0.0
        %1322 = vmatprep.subr.mxu0 0.0
        %1323 = vmatpush1.msra.mxu0 0.0
        %1324 = vmatprep.subr.mxu0 0.0
        %1325 = vmatpush1.msra.mxu0 0.0
        %1326 = vmatprep.subr.mxu0 0.0
        %1327 = vmatpush1.msra.mxu0 0.0
        %1328 = vmatprep.subr.mxu0 0.0
        %1329 = vmatpush1.msra.mxu0 0.0
        %1330 = vmatprep.subr.mxu0 0.0
        %1331 = vmatpush1.msra.mxu0 0.0
        %1332 = vmatprep.subr.mxu0 0.0
        %1333 = vmatpush1.msra.mxu0 0.0
        %1334 = vmatprep.mubr.f32.mxu0 0.0
        %1335 = vmatmul.mubr.f32.gmra.mrb[0].mxu0 %v1268
        %v1336 = vpop.f32.mrb[0].mxu0
        %v1337 = vadd.f32 0.0, %v1336
        %v1338 = vpop.f32.mrb[0].mxu0
        %1339 = vdwg.mxu0
        %v1341 = vrot.slane %v1239, 1
        %1342 = vrot.lane.b32.xlu0 %v1341, 127
        %v1343 = vpop.permute.xlu0 %1342
        %v1344 = vsel %vm222, %v1343, 0
        %1346 = vmatprep.subr.mxu0 0.0
        %1347 = vmatpush1.msra.mxu0 %v306
        %1348 = vmatprep.subr.mxu0 0.0
        %1349 = vmatpush1.msra.mxu0 0.0
        %1350 = vmatprep.subr.mxu0 0.0
        %1351 = vmatpush1.msra.mxu0 0.0
        %1352 = vmatprep.subr.mxu0 0.0
        %1353 = vmatpush1.msra.mxu0 0.0
        %1354 = vmatprep.subr.mxu0 0.0
        %1355 = vmatpush1.msra.mxu0 0.0
        %1356 = vmatprep.subr.mxu0 0.0
        %1357 = vmatpush1.msra.mxu0 0.0
        %1358 = vmatprep.subr.mxu0 0.0
        %1359 = vmatpush1.msra.mxu0 0.0
        %1360 = vmatprep.subr.mxu0 0.0
        %1361 = vmatpush1.msra.mxu0 0.0
        %1362 = vmatprep.subr.mxu0 0.0
        %1363 = vmatpush1.msra.mxu0 0.0
        %1364 = vmatprep.subr.mxu0 0.0
        %1365 = vmatpush1.msra.mxu0 0.0
        %1366 = vmatprep.subr.mxu0 0.0
        %1367 = vmatpush1.msra.mxu0 0.0
        %1368 = vmatprep.subr.mxu0 0.0
        %1369 = vmatpush1.msra.mxu0 0.0
        %1370 = vmatprep.subr.mxu0 0.0
        %1371 = vmatpush1.msra.mxu0 0.0
        %1372 = vmatprep.subr.mxu0 0.0
        %1373 = vmatpush1.msra.mxu0 0.0
        %1374 = vmatprep.subr.mxu0 0.0
        %1375 = vmatpush1.msra.mxu0 0.0
        %1376 = vmatprep.subr.mxu0 0.0
        %1377 = vmatpush1.msra.mxu0 0.0
        %1378 = vmatprep.subr.mxu0 0.0
        %1379 = vmatpush1.msra.mxu0 0.0
        %1380 = vmatprep.subr.mxu0 0.0
        %1381 = vmatpush1.msra.mxu0 0.0
        %1382 = vmatprep.subr.mxu0 0.0
        %1383 = vmatpush1.msra.mxu0 0.0
        %1384 = vmatprep.subr.mxu0 0.0
        %1385 = vmatpush1.msra.mxu0 0.0
        %1386 = vmatprep.subr.mxu0 0.0
        %1387 = vmatpush1.msra.mxu0 0.0
        %1388 = vmatprep.subr.mxu0 0.0
        %1389 = vmatpush1.msra.mxu0 0.0
        %1390 = vmatprep.subr.mxu0 0.0
        %1391 = vmatpush1.msra.mxu0 0.0
        %1392 = vmatprep.subr.mxu0 0.0
        %1393 = vmatpush1.msra.mxu0 0.0
        %1394 = vmatprep.subr.mxu0 0.0
        %1395 = vmatpush1.msra.mxu0 0.0
        %1396 = vmatprep.subr.mxu0 0.0
        %1397 = vmatpush1.msra.mxu0 0.0
        %1398 = vmatprep.subr.mxu0 0.0
        %1399 = vmatpush1.msra.mxu0 0.0
        %1400 = vmatprep.subr.mxu0 0.0
        %1401 = vmatpush1.msra.mxu0 0.0
        %1402 = vmatprep.subr.mxu0 0.0
        %1403 = vmatpush1.msra.mxu0 0.0
        %1404 = vmatprep.subr.mxu0 0.0
        %1405 = vmatpush1.msra.mxu0 0.0
        %1406 = vmatprep.subr.mxu0 0.0
        %1407 = vmatpush1.msra.mxu0 0.0
        %1408 = vmatprep.subr.mxu0 0.0
        %1409 = vmatpush1.msra.mxu0 0.0
        %1410 = vmatprep.mubr.f32.mxu0 0.0
        %1411 = vmatmul.mubr.f32.gmra.mrb[0].mxu0 %v1344
        %v1412 = vpop.f32.mrb[0].mxu0
        %v1413 = vadd.f32 %v1337, %v1412
        %v1414 = vpop.f32.mrb[0].mxu0
        %1415 = vdwg.mxu0
        %v1417 = vrot.slane %v1263, 1
        %1418 = vrot.lane.b32.xlu0 %v1417, 127
        %v1419 = vpop.permute.xlu0 %1418
        %v1420 = vsel %vm222, %v1419, 0
        %1422 = vmatprep.subr.mxu0 0.0
        %1423 = vmatpush1.msra.mxu0 %v227
        %1424 = vmatprep.subr.mxu0 0.0
        %1425 = vmatpush1.msra.mxu0 0.0
        %1426 = vmatprep.subr.mxu0 0.0
        %1427 = vmatpush1.msra.mxu0 0.0
        %1428 = vmatprep.subr.mxu0 0.0
        %1429 = vmatpush1.msra.mxu0 0.0
        %1430 = vmatprep.subr.mxu0 0.0
        %1431 = vmatpush1.msra.mxu0 0.0
        %1432 = vmatprep.subr.mxu0 0.0
        %1433 = vmatpush1.msra.mxu0 0.0
        %1434 = vmatprep.subr.mxu0 0.0
        %1435 = vmatpush1.msra.mxu0 0.0
        %1436 = vmatprep.subr.mxu0 0.0
        %1437 = vmatpush1.msra.mxu0 0.0
        %1438 = vmatprep.subr.mxu0 0.0
        %1439 = vmatpush1.msra.mxu0 0.0
        %1440 = vmatprep.subr.mxu0 0.0
        %1441 = vmatpush1.msra.mxu0 0.0
        %1442 = vmatprep.subr.mxu0 0.0
        %1443 = vmatpush1.msra.mxu0 0.0
        %1444 = vmatprep.subr.mxu0 0.0
        %1445 = vmatpush1.msra.mxu0 0.0
        %1446 = vmatprep.subr.mxu0 0.0
        %1447 = vmatpush1.msra.mxu0 0.0
        %1448 = vmatprep.subr.mxu0 0.0
        %1449 = vmatpush1.msra.mxu0 0.0
        %1450 = vmatprep.subr.mxu0 0.0
        %1451 = vmatpush1.msra.mxu0 0.0
        %1452 = vmatprep.subr.mxu0 0.0
        %1453 = vmatpush1.msra.mxu0 0.0
        %1454 = vmatprep.subr.mxu0 0.0
        %1455 = vmatpush1.msra.mxu0 0.0
        %1456 = vmatprep.subr.mxu0 0.0
        %1457 = vmatpush1.msra.mxu0 0.0
        %1458 = vmatprep.subr.mxu0 0.0
        %1459 = vmatpush1.msra.mxu0 0.0
        %1460 = vmatprep.subr.mxu0 0.0
        %1461 = vmatpush1.msra.mxu0 0.0
        %1462 = vmatprep.subr.mxu0 0.0
        %1463 = vmatpush1.msra.mxu0 0.0
        %1464 = vmatprep.subr.mxu0 0.0
        %1465 = vmatpush1.msra.mxu0 0.0
        %1466 = vmatprep.subr.mxu0 0.0
        %1467 = vmatpush1.msra.mxu0 0.0
        %1468 = vmatprep.subr.mxu0 0.0
        %1469 = vmatpush1.msra.mxu0 0.0
        %1470 = vmatprep.subr.mxu0 0.0
        %1471 = vmatpush1.msra.mxu0 0.0
        %1472 = vmatprep.subr.mxu0 0.0
        %1473 = vmatpush1.msra.mxu0 0.0
        %1474 = vmatprep.subr.mxu0 0.0
        %1475 = vmatpush1.msra.mxu0 0.0
        %1476 = vmatprep.subr.mxu0 0.0
        %1477 = vmatpush1.msra.mxu0 0.0
        %1478 = vmatprep.subr.mxu0 0.0
        %1479 = vmatpush1.msra.mxu0 0.0
        %1480 = vmatprep.subr.mxu0 0.0
        %1481 = vmatpush1.msra.mxu0 0.0
        %1482 = vmatprep.subr.mxu0 0.0
        %1483 = vmatpush1.msra.mxu0 0.0
        %1484 = vmatprep.subr.mxu0 0.0
        %1485 = vmatpush1.msra.mxu0 0.0
        %1486 = vmatprep.mubr.f32.mxu0 0.0
        %1487 = vmatmul.mubr.f32.gmra.mrb[0].mxu0 %v1420
        %v1488 = vpop.f32.mrb[0].mxu0
        %v1489 = vadd.f32 0.0, %v1488
        %v1490 = vpop.f32.mrb[0].mxu0
        %1491 = vdwg.mxu0
        %v1493 = vrot.slane %v1260, 1
        %1494 = vrot.lane.b32.xlu0 %v1493, 127
        %v1495 = vpop.permute.xlu0 %1494
        %v1496 = vsel %vm222, %v1495, 0
        %1498 = vmatprep.subr.mxu0 0.0
        %1499 = vmatpush1.msra.mxu0 %v306
        %1500 = vmatprep.subr.mxu0 0.0
        %1501 = vmatpush1.msra.mxu0 0.0
        %1502 = vmatprep.subr.mxu0 0.0
        %1503 = vmatpush1.msra.mxu0 0.0
        %1504 = vmatprep.subr.mxu0 0.0
        %1505 = vmatpush1.msra.mxu0 0.0
        %1506 = vmatprep.subr.mxu0 0.0
        %1507 = vmatpush1.msra.mxu0 0.0
        %1508 = vmatprep.subr.mxu0 0.0
        %1509 = vmatpush1.msra.mxu0 0.0
        %1510 = vmatprep.subr.mxu0 0.0
        %1511 = vmatpush1.msra.mxu0 0.0
        %1512 = vmatprep.subr.mxu0 0.0
        %1513 = vmatpush1.msra.mxu0 0.0
        %1514 = vmatprep.subr.mxu0 0.0
        %1515 = vmatpush1.msra.mxu0 0.0
        %1516 = vmatprep.subr.mxu0 0.0
        %1517 = vmatpush1.msra.mxu0 0.0
        %1518 = vmatprep.subr.mxu0 0.0
        %1519 = vmatpush1.msra.mxu0 0.0
        %1520 = vmatprep.subr.mxu0 0.0
        %1521 = vmatpush1.msra.mxu0 0.0
        %1522 = vmatprep.subr.mxu0 0.0
        %1523 = vmatpush1.msra.mxu0 0.0
        %1524 = vmatprep.subr.mxu0 0.0
        %1525 = vmatpush1.msra.mxu0 0.0
        %1526 = vmatprep.subr.mxu0 0.0
        %1527 = vmatpush1.msra.mxu0 0.0
        %1528 = vmatprep.subr.mxu0 0.0
        %1529 = vmatpush1.msra.mxu0 0.0
        %1530 = vmatprep.subr.mxu0 0.0
        %1531 = vmatpush1.msra.mxu0 0.0
        %1532 = vmatprep.subr.mxu0 0.0
        %1533 = vmatpush1.msra.mxu0 0.0
        %1534 = vmatprep.subr.mxu0 0.0
        %1535 = vmatpush1.msra.mxu0 0.0
        %1536 = vmatprep.subr.mxu0 0.0
        %1537 = vmatpush1.msra.mxu0 0.0
        %1538 = vmatprep.subr.mxu0 0.0
        %1539 = vmatpush1.msra.mxu0 0.0
        %1540 = vmatprep.subr.mxu0 0.0
        %1541 = vmatpush1.msra.mxu0 0.0
        %1542 = vmatprep.subr.mxu0 0.0
        %1543 = vmatpush1.msra.mxu0 0.0
        %1544 = vmatprep.subr.mxu0 0.0
        %1545 = vmatpush1.msra.mxu0 0.0
        %1546 = vmatprep.subr.mxu0 0.0
        %1547 = vmatpush1.msra.mxu0 0.0
        %1548 = vmatprep.subr.mxu0 0.0
        %1549 = vmatpush1.msra.mxu0 0.0
        %1550 = vmatprep.subr.mxu0 0.0
        %1551 = vmatpush1.msra.mxu0 0.0
        %1552 = vmatprep.subr.mxu0 0.0
        %1553 = vmatpush1.msra.mxu0 0.0
        %1554 = vmatprep.subr.mxu0 0.0
        %1555 = vmatpush1.msra.mxu0 0.0
        %1556 = vmatprep.subr.mxu0 0.0
        %1557 = vmatpush1.msra.mxu0 0.0
        %1558 = vmatprep.subr.mxu0 0.0
        %1559 = vmatpush1.msra.mxu0 0.0
        %1560 = vmatprep.subr.mxu0 0.0
        %1561 = vmatpush1.msra.mxu0 0.0
        %1562 = vmatprep.mubr.f32.mxu0 0.0
        %1563 = vmatmul.mubr.f32.gmra.mrb[0].mxu0 %v1496
        %v1564 = vpop.f32.mrb[0].mxu0
        %v1565 = vadd.f32 %v1489, %v1564
        %v1566 = vpop.f32.mrb[0].mxu0
        %1567 = vdwg.mxu0
        %v1569 = vsel %vm225, %v1565, 0
        %1571 = vmatprep.subr.mxu0 0.0
        %1572 = vmatpush1.msra.mxu0 %v1569
        %1573 = vmatprep.subr.mxu0 0.0
        %1574 = vmatpush1.msra.mxu0 0.0
        %1575 = vmatprep.subr.mxu0 0.0
        %1576 = vmatpush1.msra.mxu0 0.0
        %1577 = vmatprep.subr.mxu0 0.0
        %1578 = vmatpush1.msra.mxu0 0.0
        %1579 = vmatprep.subr.mxu0 0.0
        %1580 = vmatpush1.msra.mxu0 0.0
        %1581 = vmatprep.subr.mxu0 0.0
        %1582 = vmatpush1.msra.mxu0 0.0
        %1583 = vmatprep.subr.mxu0 0.0
        %1584 = vmatpush1.msra.mxu0 0.0
        %1585 = vmatprep.subr.mxu0 0.0
        %1586 = vmatpush1.msra.mxu0 0.0
        %1587 = vmatprep.subr.mxu0 0.0
        %1588 = vmatpush1.msra.mxu0 0.0
        %1589 = vmatprep.subr.mxu0 0.0
        %1590 = vmatpush1.msra.mxu0 0.0
        %1591 = vmatprep.subr.mxu0 0.0
        %1592 = vmatpush1.msra.mxu0 0.0
        %1593 = vmatprep.subr.mxu0 0.0
        %1594 = vmatpush1.msra.mxu0 0.0
        %1595 = vmatprep.subr.mxu0 0.0
        %1596 = vmatpush1.msra.mxu0 0.0
        %1597 = vmatprep.subr.mxu0 0.0
        %1598 = vmatpush1.msra.mxu0 0.0
        %1599 = vmatprep.subr.mxu0 0.0
        %1600 = vmatpush1.msra.mxu0 0.0
        %1601 = vmatprep.subr.mxu0 0.0
        %1602 = vmatpush1.msra.mxu0 0.0
        %1603 = vmatprep.subr.mxu0 0.0
        %1604 = vmatpush1.msra.mxu0 0.0
        %1605 = vmatprep.subr.mxu0 0.0
        %1606 = vmatpush1.msra.mxu0 0.0
        %1607 = vmatprep.subr.mxu0 0.0
        %1608 = vmatpush1.msra.mxu0 0.0
        %1609 = vmatprep.subr.mxu0 0.0
        %1610 = vmatpush1.msra.mxu0 0.0
        %1611 = vmatprep.subr.mxu0 0.0
        %1612 = vmatpush1.msra.mxu0 0.0
        %1613 = vmatprep.subr.mxu0 0.0
        %1614 = vmatpush1.msra.mxu0 0.0
        %1615 = vmatprep.subr.mxu0 0.0
        %1616 = vmatpush1.msra.mxu0 0.0
        %1617 = vmatprep.subr.mxu0 0.0
        %1618 = vmatpush1.msra.mxu0 0.0
        %1619 = vmatprep.subr.mxu0 0.0
        %1620 = vmatpush1.msra.mxu0 0.0
        %1621 = vmatprep.subr.mxu0 0.0
        %1622 = vmatpush1.msra.mxu0 0.0
        %1623 = vmatprep.subr.mxu0 0.0
        %1624 = vmatpush1.msra.mxu0 0.0
        %1625 = vmatprep.subr.mxu0 0.0
        %1626 = vmatpush1.msra.mxu0 0.0
        %1627 = vmatprep.subr.mxu0 0.0
        %1628 = vmatpush1.msra.mxu0 0.0
        %1629 = vmatprep.subr.mxu0 0.0
        %1630 = vmatpush1.msra.mxu0 0.0
        %1631 = vmatprep.subr.mxu0 0.0
        %1632 = vmatpush1.msra.mxu0 0.0
        %1633 = vmatprep.subr.mxu0 0.0
        %1634 = vmatpush1.msra.mxu0 0.0
        %1635 = vmatprep.mubr.f32.mxu0 0.0
        %1636 = vmatmul.mubr.f32.gmra.mrb[0].mxu0 %v531
        %v1637 = vpop.f32.mrb[0].mxu0
        %v1638 = vadd.f32 0.0, %v1637
        %v1639 = vpop.f32.mrb[0].mxu0
        %1640 = vmatprep.mubr.f32.mxu0 0.0
        %1641 = vmatmul.mubr.f32.gmra.mrb[0].mxu0 %v534
        %v1642 = vpop.f32.mrb[0].mxu0
        %v1643 = vadd.f32 0.0, %v1642
        %v1644 = vpop.f32.mrb[0].mxu0
        %1645 = vdwg.mxu0
        %v1647 = vsel %vm225, %v1413, 0
        %1649 = vmatprep.subr.mxu0 0.0
        %1650 = vmatpush1.msra.mxu0 %v1647
        %1651 = vmatprep.subr.mxu0 0.0
        %1652 = vmatpush1.msra.mxu0 0.0
        %1653 = vmatprep.subr.mxu0 0.0
        %1654 = vmatpush1.msra.mxu0 0.0
        %1655 = vmatprep.subr.mxu0 0.0
        %1656 = vmatpush1.msra.mxu0 0.0
        %1657 = vmatprep.subr.mxu0 0.0
        %1658 = vmatpush1.msra.mxu0 0.0
        %1659 = vmatprep.subr.mxu0 0.0
        %1660 = vmatpush1.msra.mxu0 0.0
        %1661 = vmatprep.subr.mxu0 0.0
        %1662 = vmatpush1.msra.mxu0 0.0
        %1663 = vmatprep.subr.mxu0 0.0
        %1664 = vmatpush1.msra.mxu0 0.0
        %1665 = vmatprep.subr.mxu0 0.0
        %1666 = vmatpush1.msra.mxu0 0.0
        %1667 = vmatprep.subr.mxu0 0.0
        %1668 = vmatpush1.msra.mxu0 0.0
        %1669 = vmatprep.subr.mxu0 0.0
        %1670 = vmatpush1.msra.mxu0 0.0
        %1671 = vmatprep.subr.mxu0 0.0
        %1672 = vmatpush1.msra.mxu0 0.0
        %1673 = vmatprep.subr.mxu0 0.0
        %1674 = vmatpush1.msra.mxu0 0.0
        %1675 = vmatprep.subr.mxu0 0.0
        %1676 = vmatpush1.msra.mxu0 0.0
        %1677 = vmatprep.subr.mxu0 0.0
        %1678 = vmatpush1.msra.mxu0 0.0
        %1679 = vmatprep.subr.mxu0 0.0
        %1680 = vmatpush1.msra.mxu0 0.0
        %1681 = vmatprep.subr.mxu0 0.0
        %1682 = vmatpush1.msra.mxu0 0.0
        %1683 = vmatprep.subr.mxu0 0.0
        %1684 = vmatpush1.msra.mxu0 0.0
        %1685 = vmatprep.subr.mxu0 0.0
        %1686 = vmatpush1.msra.mxu0 0.0
        %1687 = vmatprep.subr.mxu0 0.0
        %1688 = vmatpush1.msra.mxu0 0.0
        %1689 = vmatprep.subr.mxu0 0.0
        %1690 = vmatpush1.msra.mxu0 0.0
        %1691 = vmatprep.subr.mxu0 0.0
        %1692 = vmatpush1.msra.mxu0 0.0
        %1693 = vmatprep.subr.mxu0 0.0
        %1694 = vmatpush1.msra.mxu0 0.0
        %1695 = vmatprep.subr.mxu0 0.0
        %1696 = vmatpush1.msra.mxu0 0.0
        %1697 = vmatprep.subr.mxu0 0.0
        %1698 = vmatpush1.msra.mxu0 0.0
        %1699 = vmatprep.subr.mxu0 0.0
        %1700 = vmatpush1.msra.mxu0 0.0
        %1701 = vmatprep.subr.mxu0 0.0
        %1702 = vmatpush1.msra.mxu0 0.0
        %1703 = vmatprep.subr.mxu0 0.0
        %1704 = vmatpush1.msra.mxu0 0.0
        %1705 = vmatprep.subr.mxu0 0.0
        %1706 = vmatpush1.msra.mxu0 0.0
        %1707 = vmatprep.subr.mxu0 0.0
        %1708 = vmatpush1.msra.mxu0 0.0
        %1709 = vmatprep.subr.mxu0 0.0
        %1710 = vmatpush1.msra.mxu0 0.0
        %1711 = vmatprep.subr.mxu0 0.0
        %1712 = vmatpush1.msra.mxu0 0.0
        %1713 = vmatprep.mubr.f32.mxu0 0.0
        %1714 = vmatmul.mubr.f32.gmra.mrb[0].mxu0 %v615
        %v1715 = vpop.f32.mrb[0].mxu0
        %v1716 = vadd.f32 %v1638, %v1715
        %v1717 = vpop.f32.mrb[0].mxu0
        %1718 = vmatprep.mubr.f32.mxu0 0.0
        %1719 = vmatmul.mubr.f32.gmra.mrb[0].mxu0 %v618
        %v1720 = vpop.f32.mrb[0].mxu0
        %v1721 = vadd.f32 %v1643, %v1720
        %v1722 = vpop.f32.mrb[0].mxu0
        %1723 = vdwg.mxu0
        %s1724 = scalar_lea.vmem %s121, 24 [#allocation5]
        %v1725 = vld [vmem:[%s1724] sm:$0xff]
        %s1726 = sld [smem:[#allocation3 + $0x180]]
        %v1727 = vstv %s1726
        %v1728 = vmul.f32 %v1725, %v1727
        %s1729 = sld [smem:[#allocation3 + $0x182]]
        %v1730 = vstv %s1729
        %v1731 = vmul.f32 %v1725, %v1730
        %1733 = vrot.lane.b32.xlu0 %v1731, 1
        %v1734 = vpop.permute.xlu0 %1733
        %v1736 = vadd.f32 %v1728, %v1734
        %s1737 = sld [smem:[#allocation3 + $0x186]]
        %v1738 = vstv %s1737
        %v1739 = vmul.f32 %v1725, %v1738
        %v1741 = vrot.slane %v1739, 7
        %v1743 = vadd.f32 %v1736, %v1741
        %s1744 = sld [smem:[#allocation3 + $0x188]]
        %v1745 = vstv %s1744
        %v1746 = vmul.f32 %v1725, %v1745
        %v1748 = vrot.slane %v1746, 7
        %1749 = vrot.lane.b32.xlu0 %v1748, 1
        %v1750 = vpop.permute.xlu0 %1749
        %v1752 = vadd.f32 %v1743, %v1750
        %s1753 = sld [smem:[#allocation3 + $0x181]]
        %v1754 = vstv %s1753
        %v1755 = vmul.f32 %v1725, %v1754
        %s1756 = sld [smem:[#allocation3 + $0x187]]
        %v1757 = vstv %s1756
        %v1758 = vmul.f32 %v1725, %v1757
        %v1760 = vrot.slane %v1758, 7
        %v1762 = vadd.f32 %v1755, %v1760
        %s1763 = sld [smem:[#allocation3 + $0x183]]
        %v1764 = vstv %s1763
        %v1765 = vmul.f32 %v1725, %v1764
        %s1766 = sld [smem:[#allocation3 + $0x185]]
        %v1767 = vstv %s1766
        %v1768 = vmul.f32 %v1725, %v1767
        %1770 = vrot.lane.b32.xlu0 %v1768, 1
        %v1771 = vpop.permute.xlu0 %1770
        %v1773 = vadd.f32 %v1765, %v1771
        %s1774 = sld [smem:[#allocation3 + $0x184]]
        %v1775 = vstv %s1774
        %v1776 = vmul.f32 %v1725, %v1775
        %v1778 = vrot.slane %v1762, 1
        %1779 = vrot.lane.b32.xlu0 %v1778, 127
        %v1780 = vpop.permute.xlu0 %1779
        %v1781 = vsel %vm222, %v1780, 0
        %1783 = vmatprep.subr.mxu0 0.0
        %1784 = vmatpush1.msra.mxu0 %v227
        %1785 = vmatprep.subr.mxu0 0.0
        %1786 = vmatpush1.msra.mxu0 0.0
        %1787 = vmatprep.subr.mxu0 0.0
        %1788 = vmatpush1.msra.mxu0 0.0
        %1789 = vmatprep.subr.mxu0 0.0
        %1790 = vmatpush1.msra.mxu0 0.0
        %1791 = vmatprep.subr.mxu0 0.0
        %1792 = vmatpush1.msra.mxu0 0.0
        %1793 = vmatprep.subr.mxu0 0.0
        %1794 = vmatpush1.msra.mxu0 0.0
        %1795 = vmatprep.subr.mxu0 0.0
        %1796 = vmatpush1.msra.mxu0 0.0
        %1797 = vmatprep.subr.mxu0 0.0
        %1798 = vmatpush1.msra.mxu0 0.0
        %1799 = vmatprep.subr.mxu0 0.0
        %1800 = vmatpush1.msra.mxu0 0.0
        %1801 = vmatprep.subr.mxu0 0.0
        %1802 = vmatpush1.msra.mxu0 0.0
        %1803 = vmatprep.subr.mxu0 0.0
        %1804 = vmatpush1.msra.mxu0 0.0
        %1805 = vmatprep.subr.mxu0 0.0
        %1806 = vmatpush1.msra.mxu0 0.0
        %1807 = vmatprep.subr.mxu0 0.0
        %1808 = vmatpush1.msra.mxu0 0.0
        %1809 = vmatprep.subr.mxu0 0.0
        %1810 = vmatpush1.msra.mxu0 0.0
        %1811 = vmatprep.subr.mxu0 0.0
        %1812 = vmatpush1.msra.mxu0 0.0
        %1813 = vmatprep.subr.mxu0 0.0
        %1814 = vmatpush1.msra.mxu0 0.0
        %1815 = vmatprep.subr.mxu0 0.0
        %1816 = vmatpush1.msra.mxu0 0.0
        %1817 = vmatprep.subr.mxu0 0.0
        %1818 = vmatpush1.msra.mxu0 0.0
        %1819 = vmatprep.subr.mxu0 0.0
        %1820 = vmatpush1.msra.mxu0 0.0
        %1821 = vmatprep.subr.mxu0 0.0
        %1822 = vmatpush1.msra.mxu0 0.0
        %1823 = vmatprep.subr.mxu0 0.0
        %1824 = vmatpush1.msra.mxu0 0.0
        %1825 = vmatprep.subr.mxu0 0.0
        %1826 = vmatpush1.msra.mxu0 0.0
        %1827 = vmatprep.subr.mxu0 0.0
        %1828 = vmatpush1.msra.mxu0 0.0
        %1829 = vmatprep.subr.mxu0 0.0
        %1830 = vmatpush1.msra.mxu0 0.0
        %1831 = vmatprep.subr.mxu0 0.0
        %1832 = vmatpush1.msra.mxu0 0.0
        %1833 = vmatprep.subr.mxu0 0.0
        %1834 = vmatpush1.msra.mxu0 0.0
        %1835 = vmatprep.subr.mxu0 0.0
        %1836 = vmatpush1.msra.mxu0 0.0
        %1837 = vmatprep.subr.mxu0 0.0
        %1838 = vmatpush1.msra.mxu0 0.0
        %1839 = vmatprep.subr.mxu0 0.0
        %1840 = vmatpush1.msra.mxu0 0.0
        %1841 = vmatprep.subr.mxu0 0.0
        %1842 = vmatpush1.msra.mxu0 0.0
        %1843 = vmatprep.subr.mxu0 0.0
        %1844 = vmatpush1.msra.mxu0 0.0
        %1845 = vmatprep.subr.mxu0 0.0
        %1846 = vmatpush1.msra.mxu0 0.0
        %1847 = vmatprep.mubr.f32.mxu0 0.0
        %1848 = vmatmul.mubr.f32.gmra.mrb[0].mxu0 %v1781
        %v1849 = vpop.f32.mrb[0].mxu0
        %v1850 = vadd.f32 0.0, %v1849
        %v1851 = vpop.f32.mrb[0].mxu0
        %1852 = vdwg.mxu0
        %v1854 = vrot.slane %v1752, 1
        %1855 = vrot.lane.b32.xlu0 %v1854, 127
        %v1856 = vpop.permute.xlu0 %1855
        %v1857 = vsel %vm222, %v1856, 0
        %1859 = vmatprep.subr.mxu0 0.0
        %1860 = vmatpush1.msra.mxu0 %v306
        %1861 = vmatprep.subr.mxu0 0.0
        %1862 = vmatpush1.msra.mxu0 0.0
        %1863 = vmatprep.subr.mxu0 0.0
        %1864 = vmatpush1.msra.mxu0 0.0
        %1865 = vmatprep.subr.mxu0 0.0
        %1866 = vmatpush1.msra.mxu0 0.0
        %1867 = vmatprep.subr.mxu0 0.0
        %1868 = vmatpush1.msra.mxu0 0.0
        %1869 = vmatprep.subr.mxu0 0.0
        %1870 = vmatpush1.msra.mxu0 0.0
        %1871 = vmatprep.subr.mxu0 0.0
        %1872 = vmatpush1.msra.mxu0 0.0
        %1873 = vmatprep.subr.mxu0 0.0
        %1874 = vmatpush1.msra.mxu0 0.0
        %1875 = vmatprep.subr.mxu0 0.0
        %1876 = vmatpush1.msra.mxu0 0.0
        %1877 = vmatprep.subr.mxu0 0.0
        %1878 = vmatpush1.msra.mxu0 0.0
        %1879 = vmatprep.subr.mxu0 0.0
        %1880 = vmatpush1.msra.mxu0 0.0
        %1881 = vmatprep.subr.mxu0 0.0
        %1882 = vmatpush1.msra.mxu0 0.0
        %1883 = vmatprep.subr.mxu0 0.0
        %1884 = vmatpush1.msra.mxu0 0.0
        %1885 = vmatprep.subr.mxu0 0.0
        %1886 = vmatpush1.msra.mxu0 0.0
        %1887 = vmatprep.subr.mxu0 0.0
        %1888 = vmatpush1.msra.mxu0 0.0
        %1889 = vmatprep.subr.mxu0 0.0
        %1890 = vmatpush1.msra.mxu0 0.0
        %1891 = vmatprep.subr.mxu0 0.0
        %1892 = vmatpush1.msra.mxu0 0.0
        %1893 = vmatprep.subr.mxu0 0.0
        %1894 = vmatpush1.msra.mxu0 0.0
        %1895 = vmatprep.subr.mxu0 0.0
        %1896 = vmatpush1.msra.mxu0 0.0
        %1897 = vmatprep.subr.mxu0 0.0
        %1898 = vmatpush1.msra.mxu0 0.0
        %1899 = vmatprep.subr.mxu0 0.0
        %1900 = vmatpush1.msra.mxu0 0.0
        %1901 = vmatprep.subr.mxu0 0.0
        %1902 = vmatpush1.msra.mxu0 0.0
        %1903 = vmatprep.subr.mxu0 0.0
        %1904 = vmatpush1.msra.mxu0 0.0
        %1905 = vmatprep.subr.mxu0 0.0
        %1906 = vmatpush1.msra.mxu0 0.0
        %1907 = vmatprep.subr.mxu0 0.0
        %1908 = vmatpush1.msra.mxu0 0.0
        %1909 = vmatprep.subr.mxu0 0.0
        %1910 = vmatpush1.msra.mxu0 0.0
        %1911 = vmatprep.subr.mxu0 0.0
        %1912 = vmatpush1.msra.mxu0 0.0
        %1913 = vmatprep.subr.mxu0 0.0
        %1914 = vmatpush1.msra.mxu0 0.0
        %1915 = vmatprep.subr.mxu0 0.0
        %1916 = vmatpush1.msra.mxu0 0.0
        %1917 = vmatprep.subr.mxu0 0.0
        %1918 = vmatpush1.msra.mxu0 0.0
        %1919 = vmatprep.subr.mxu0 0.0
        %1920 = vmatpush1.msra.mxu0 0.0
        %1921 = vmatprep.subr.mxu0 0.0
        %1922 = vmatpush1.msra.mxu0 0.0
        %1923 = vmatprep.mubr.f32.mxu0 0.0
        %1924 = vmatmul.mubr.f32.gmra.mrb[0].mxu0 %v1857
        %v1925 = vpop.f32.mrb[0].mxu0
        %v1926 = vadd.f32 %v1850, %v1925
        %v1927 = vpop.f32.mrb[0].mxu0
        %1928 = vdwg.mxu0
        %v1930 = vrot.slane %v1776, 1
        %1931 = vrot.lane.b32.xlu0 %v1930, 127
        %v1932 = vpop.permute.xlu0 %1931
        %v1933 = vsel %vm222, %v1932, 0
        %1935 = vmatprep.subr.mxu0 0.0
        %1936 = vmatpush1.msra.mxu0 %v227
        %1937 = vmatprep.subr.mxu0 0.0
        %1938 = vmatpush1.msra.mxu0 0.0
        %1939 = vmatprep.subr.mxu0 0.0
        %1940 = vmatpush1.msra.mxu0 0.0
        %1941 = vmatprep.subr.mxu0 0.0
        %1942 = vmatpush1.msra.mxu0 0.0
        %1943 = vmatprep.subr.mxu0 0.0
        %1944 = vmatpush1.msra.mxu0 0.0
        %1945 = vmatprep.subr.mxu0 0.0
        %1946 = vmatpush1.msra.mxu0 0.0
        %1947 = vmatprep.subr.mxu0 0.0
        %1948 = vmatpush1.msra.mxu0 0.0
        %1949 = vmatprep.subr.mxu0 0.0
        %1950 = vmatpush1.msra.mxu0 0.0
        %1951 = vmatprep.subr.mxu0 0.0
        %1952 = vmatpush1.msra.mxu0 0.0
        %1953 = vmatprep.subr.mxu0 0.0
        %1954 = vmatpush1.msra.mxu0 0.0
        %1955 = vmatprep.subr.mxu0 0.0
        %1956 = vmatpush1.msra.mxu0 0.0
        %1957 = vmatprep.subr.mxu0 0.0
        %1958 = vmatpush1.msra.mxu0 0.0
        %1959 = vmatprep.subr.mxu0 0.0
        %1960 = vmatpush1.msra.mxu0 0.0
        %1961 = vmatprep.subr.mxu0 0.0
        %1962 = vmatpush1.msra.mxu0 0.0
        %1963 = vmatprep.subr.mxu0 0.0
        %1964 = vmatpush1.msra.mxu0 0.0
        %1965 = vmatprep.subr.mxu0 0.0
        %1966 = vmatpush1.msra.mxu0 0.0
        %1967 = vmatprep.subr.mxu0 0.0
        %1968 = vmatpush1.msra.mxu0 0.0
        %1969 = vmatprep.subr.mxu0 0.0
        %1970 = vmatpush1.msra.mxu0 0.0
        %1971 = vmatprep.subr.mxu0 0.0
        %1972 = vmatpush1.msra.mxu0 0.0
        %1973 = vmatprep.subr.mxu0 0.0
        %1974 = vmatpush1.msra.mxu0 0.0
        %1975 = vmatprep.subr.mxu0 0.0
        %1976 = vmatpush1.msra.mxu0 0.0
        %1977 = vmatprep.subr.mxu0 0.0
        %1978 = vmatpush1.msra.mxu0 0.0
        %1979 = vmatprep.subr.mxu0 0.0
        %1980 = vmatpush1.msra.mxu0 0.0
        %1981 = vmatprep.subr.mxu0 0.0
        %1982 = vmatpush1.msra.mxu0 0.0
        %1983 = vmatprep.subr.mxu0 0.0
        %1984 = vmatpush1.msra.mxu0 0.0
        %1985 = vmatprep.subr.mxu0 0.0
        %1986 = vmatpush1.msra.mxu0 0.0
        %1987 = vmatprep.subr.mxu0 0.0
        %1988 = vmatpush1.msra.mxu0 0.0
        %1989 = vmatprep.subr.mxu0 0.0
        %1990 = vmatpush1.msra.mxu0 0.0
        %1991 = vmatprep.subr.mxu0 0.0
        %1992 = vmatpush1.msra.mxu0 0.0
        %1993 = vmatprep.subr.mxu0 0.0
        %1994 = vmatpush1.msra.mxu0 0.0
        %1995 = vmatprep.subr.mxu0 0.0
        %1996 = vmatpush1.msra.mxu0 0.0
        %1997 = vmatprep.subr.mxu0 0.0
        %1998 = vmatpush1.msra.mxu0 0.0
        %1999 = vmatprep.mubr.f32.mxu0 0.0
        %2000 = vmatmul.mubr.f32.gmra.mrb[0].mxu0 %v1933
        %v2001 = vpop.f32.mrb[0].mxu0
        %v2002 = vadd.f32 0.0, %v2001
        %v2003 = vpop.f32.mrb[0].mxu0
        %2004 = vdwg.mxu0
        %v2006 = vrot.slane %v1773, 1
        %2007 = vrot.lane.b32.xlu0 %v2006, 127
        %v2008 = vpop.permute.xlu0 %2007
        %v2009 = vsel %vm222, %v2008, 0
        %2011 = vmatprep.subr.mxu0 0.0
        %2012 = vmatpush1.msra.mxu0 %v306
        %2013 = vmatprep.subr.mxu0 0.0
        %2014 = vmatpush1.msra.mxu0 0.0
        %2015 = vmatprep.subr.mxu0 0.0
        %2016 = vmatpush1.msra.mxu0 0.0
        %2017 = vmatprep.subr.mxu0 0.0
        %2018 = vmatpush1.msra.mxu0 0.0
        %2019 = vmatprep.subr.mxu0 0.0
        %2020 = vmatpush1.msra.mxu0 0.0
        %2021 = vmatprep.subr.mxu0 0.0
        %2022 = vmatpush1.msra.mxu0 0.0
        %2023 = vmatprep.subr.mxu0 0.0
        %2024 = vmatpush1.msra.mxu0 0.0
        %2025 = vmatprep.subr.mxu0 0.0
        %2026 = vmatpush1.msra.mxu0 0.0
        %2027 = vmatprep.subr.mxu0 0.0
        %2028 = vmatpush1.msra.mxu0 0.0
        %2029 = vmatprep.subr.mxu0 0.0
        %2030 = vmatpush1.msra.mxu0 0.0
        %2031 = vmatprep.subr.mxu0 0.0
        %2032 = vmatpush1.msra.mxu0 0.0
        %2033 = vmatprep.subr.mxu0 0.0
        %2034 = vmatpush1.msra.mxu0 0.0
        %2035 = vmatprep.subr.mxu0 0.0
        %2036 = vmatpush1.msra.mxu0 0.0
        %2037 = vmatprep.subr.mxu0 0.0
        %2038 = vmatpush1.msra.mxu0 0.0
        %2039 = vmatprep.subr.mxu0 0.0
        %2040 = vmatpush1.msra.mxu0 0.0
        %2041 = vmatprep.subr.mxu0 0.0
        %2042 = vmatpush1.msra.mxu0 0.0
        %2043 = vmatprep.subr.mxu0 0.0
        %2044 = vmatpush1.msra.mxu0 0.0
        %2045 = vmatprep.subr.mxu0 0.0
        %2046 = vmatpush1.msra.mxu0 0.0
        %2047 = vmatprep.subr.mxu0 0.0
        %2048 = vmatpush1.msra.mxu0 0.0
        %2049 = vmatprep.subr.mxu0 0.0
        %2050 = vmatpush1.msra.mxu0 0.0
        %2051 = vmatprep.subr.mxu0 0.0
        %2052 = vmatpush1.msra.mxu0 0.0
        %2053 = vmatprep.subr.mxu0 0.0
        %2054 = vmatpush1.msra.mxu0 0.0
        %2055 = vmatprep.subr.mxu0 0.0
        %2056 = vmatpush1.msra.mxu0 0.0
        %2057 = vmatprep.subr.mxu0 0.0
        %2058 = vmatpush1.msra.mxu0 0.0
        %2059 = vmatprep.subr.mxu0 0.0
        %2060 = vmatpush1.msra.mxu0 0.0
        %2061 = vmatprep.subr.mxu0 0.0
        %2062 = vmatpush1.msra.mxu0 0.0
        %2063 = vmatprep.subr.mxu0 0.0
        %2064 = vmatpush1.msra.mxu0 0.0
        %2065 = vmatprep.subr.mxu0 0.0
        %2066 = vmatpush1.msra.mxu0 0.0
        %2067 = vmatprep.subr.mxu0 0.0
        %2068 = vmatpush1.msra.mxu0 0.0
        %2069 = vmatprep.subr.mxu0 0.0
        %2070 = vmatpush1.msra.mxu0 0.0
        %2071 = vmatprep.subr.mxu0 0.0
        %2072 = vmatpush1.msra.mxu0 0.0
        %2073 = vmatprep.subr.mxu0 0.0
        %2074 = vmatpush1.msra.mxu0 0.0
        %2075 = vmatprep.mubr.f32.mxu0 0.0
        %2076 = vmatmul.mubr.f32.gmra.mrb[0].mxu0 %v2009
        %v2077 = vpop.f32.mrb[0].mxu0
        %v2078 = vadd.f32 %v2002, %v2077
        %v2079 = vpop.f32.mrb[0].mxu0
        %2080 = vdwg.mxu0
        %v2082 = vsel %vm225, %v2078, 0
        %2084 = vmatprep.subr.mxu0 0.0
        %2085 = vmatpush1.msra.mxu0 %v2082
        %2086 = vmatprep.subr.mxu0 0.0
        %2087 = vmatpush1.msra.mxu0 0.0
        %2088 = vmatprep.subr.mxu0 0.0
        %2089 = vmatpush1.msra.mxu0 0.0
        %2090 = vmatprep.subr.mxu0 0.0
        %2091 = vmatpush1.msra.mxu0 0.0
        %2092 = vmatprep.subr.mxu0 0.0
        %2093 = vmatpush1.msra.mxu0 0.0
        %2094 = vmatprep.subr.mxu0 0.0
        %2095 = vmatpush1.msra.mxu0 0.0
        %2096 = vmatprep.subr.mxu0 0.0
        %2097 = vmatpush1.msra.mxu0 0.0
        %2098 = vmatprep.subr.mxu0 0.0
        %2099 = vmatpush1.msra.mxu0 0.0
        %2100 = vmatprep.subr.mxu0 0.0
        %2101 = vmatpush1.msra.mxu0 0.0
        %2102 = vmatprep.subr.mxu0 0.0
        %2103 = vmatpush1.msra.mxu0 0.0
        %2104 = vmatprep.subr.mxu0 0.0
        %2105 = vmatpush1.msra.mxu0 0.0
        %2106 = vmatprep.subr.mxu0 0.0
        %2107 = vmatpush1.msra.mxu0 0.0
        %2108 = vmatprep.subr.mxu0 0.0
        %2109 = vmatpush1.msra.mxu0 0.0
        %2110 = vmatprep.subr.mxu0 0.0
        %2111 = vmatpush1.msra.mxu0 0.0
        %2112 = vmatprep.subr.mxu0 0.0
        %2113 = vmatpush1.msra.mxu0 0.0
        %2114 = vmatprep.subr.mxu0 0.0
        %2115 = vmatpush1.msra.mxu0 0.0
        %2116 = vmatprep.subr.mxu0 0.0
        %2117 = vmatpush1.msra.mxu0 0.0
        %2118 = vmatprep.subr.mxu0 0.0
        %2119 = vmatpush1.msra.mxu0 0.0
        %2120 = vmatprep.subr.mxu0 0.0
        %2121 = vmatpush1.msra.mxu0 0.0
        %2122 = vmatprep.subr.mxu0 0.0
        %2123 = vmatpush1.msra.mxu0 0.0
        %2124 = vmatprep.subr.mxu0 0.0
        %2125 = vmatpush1.msra.mxu0 0.0
        %2126 = vmatprep.subr.mxu0 0.0
        %2127 = vmatpush1.msra.mxu0 0.0
        %2128 = vmatprep.subr.mxu0 0.0
        %2129 = vmatpush1.msra.mxu0 0.0
        %2130 = vmatprep.subr.mxu0 0.0
        %2131 = vmatpush1.msra.mxu0 0.0
        %2132 = vmatprep.subr.mxu0 0.0
        %2133 = vmatpush1.msra.mxu0 0.0
        %2134 = vmatprep.subr.mxu0 0.0
        %2135 = vmatpush1.msra.mxu0 0.0
        %2136 = vmatprep.subr.mxu0 0.0
        %2137 = vmatpush1.msra.mxu0 0.0
        %2138 = vmatprep.subr.mxu0 0.0
        %2139 = vmatpush1.msra.mxu0 0.0
        %2140 = vmatprep.subr.mxu0 0.0
        %2141 = vmatpush1.msra.mxu0 0.0
        %2142 = vmatprep.subr.mxu0 0.0
        %2143 = vmatpush1.msra.mxu0 0.0
        %2144 = vmatprep.subr.mxu0 0.0
        %2145 = vmatpush1.msra.mxu0 0.0
        %2146 = vmatprep.subr.mxu0 0.0
        %2147 = vmatpush1.msra.mxu0 0.0
        %2148 = vmatprep.mubr.f32.mxu0 0.0
        %2149 = vmatmul.mubr.f32.gmra.mrb[0].mxu0 %v531
        %v2150 = vpop.f32.mrb[0].mxu0
        %v2151 = vadd.f32 0.0, %v2150
        %v2152 = vpop.f32.mrb[0].mxu0
        %2153 = vmatprep.mubr.f32.mxu0 0.0
        %2154 = vmatmul.mubr.f32.gmra.mrb[0].mxu0 %v534
        %v2155 = vpop.f32.mrb[0].mxu0
        %v2156 = vadd.f32 0.0, %v2155
        %v2157 = vpop.f32.mrb[0].mxu0
        %2158 = vdwg.mxu0
        %v2160 = vsel %vm225, %v1926, 0
        %2162 = vmatprep.subr.mxu0 0.0
        %2163 = vmatpush1.msra.mxu0 %v2160
        %2164 = vmatprep.subr.mxu0 0.0
        %2165 = vmatpush1.msra.mxu0 0.0
        %2166 = vmatprep.subr.mxu0 0.0
        %2167 = vmatpush1.msra.mxu0 0.0
        %2168 = vmatprep.subr.mxu0 0.0
        %2169 = vmatpush1.msra.mxu0 0.0
        %2170 = vmatprep.subr.mxu0 0.0
        %2171 = vmatpush1.msra.mxu0 0.0
        %2172 = vmatprep.subr.mxu0 0.0
        %2173 = vmatpush1.msra.mxu0 0.0
        %2174 = vmatprep.subr.mxu0 0.0
        %2175 = vmatpush1.msra.mxu0 0.0
        %2176 = vmatprep.subr.mxu0 0.0
        %2177 = vmatpush1.msra.mxu0 0.0
        %2178 = vmatprep.subr.mxu0 0.0
        %2179 = vmatpush1.msra.mxu0 0.0
        %2180 = vmatprep.subr.mxu0 0.0
        %2181 = vmatpush1.msra.mxu0 0.0
        %2182 = vmatprep.subr.mxu0 0.0
        %2183 = vmatpush1.msra.mxu0 0.0
        %2184 = vmatprep.subr.mxu0 0.0
        %2185 = vmatpush1.msra.mxu0 0.0
        %2186 = vmatprep.subr.mxu0 0.0
        %2187 = vmatpush1.msra.mxu0 0.0
        %2188 = vmatprep.subr.mxu0 0.0
        %2189 = vmatpush1.msra.mxu0 0.0
        %2190 = vmatprep.subr.mxu0 0.0
        %2191 = vmatpush1.msra.mxu0 0.0
        %2192 = vmatprep.subr.mxu0 0.0
        %2193 = vmatpush1.msra.mxu0 0.0
        %2194 = vmatprep.subr.mxu0 0.0
        %2195 = vmatpush1.msra.mxu0 0.0
        %2196 = vmatprep.subr.mxu0 0.0
        %2197 = vmatpush1.msra.mxu0 0.0
        %2198 = vmatprep.subr.mxu0 0.0
        %2199 = vmatpush1.msra.mxu0 0.0
        %2200 = vmatprep.subr.mxu0 0.0
        %2201 = vmatpush1.msra.mxu0 0.0
        %2202 = vmatprep.subr.mxu0 0.0
        %2203 = vmatpush1.msra.mxu0 0.0
        %2204 = vmatprep.subr.mxu0 0.0
        %2205 = vmatpush1.msra.mxu0 0.0
        %2206 = vmatprep.subr.mxu0 0.0
        %2207 = vmatpush1.msra.mxu0 0.0
        %2208 = vmatprep.subr.mxu0 0.0
        %2209 = vmatpush1.msra.mxu0 0.0
        %2210 = vmatprep.subr.mxu0 0.0
        %2211 = vmatpush1.msra.mxu0 0.0
        %2212 = vmatprep.subr.mxu0 0.0
        %2213 = vmatpush1.msra.mxu0 0.0
        %2214 = vmatprep.subr.mxu0 0.0
        %2215 = vmatpush1.msra.mxu0 0.0
        %2216 = vmatprep.subr.mxu0 0.0
        %2217 = vmatpush1.msra.mxu0 0.0
        %2218 = vmatprep.subr.mxu0 0.0
        %2219 = vmatpush1.msra.mxu0 0.0
        %2220 = vmatprep.subr.mxu0 0.0
        %2221 = vmatpush1.msra.mxu0 0.0
        %2222 = vmatprep.subr.mxu0 0.0
        %2223 = vmatpush1.msra.mxu0 0.0
        %2224 = vmatprep.subr.mxu0 0.0
        %2225 = vmatpush1.msra.mxu0 0.0
        %2226 = vmatprep.mubr.f32.mxu0 0.0
        %2227 = vmatmul.mubr.f32.gmra.mrb[0].mxu0 %v615
        %v2228 = vpop.f32.mrb[0].mxu0
        %v2229 = vadd.f32 %v2151, %v2228
        %v2230 = vpop.f32.mrb[0].mxu0
        %2231 = vmatprep.mubr.f32.mxu0 0.0
        %2232 = vmatmul.mubr.f32.gmra.mrb[0].mxu0 %v618
        %v2233 = vpop.f32.mrb[0].mxu0
        %v2234 = vadd.f32 %v2156, %v2233
        %v2235 = vpop.f32.mrb[0].mxu0
        %2236 = vdwg.mxu0
        %s2237 = scalar_lea.vmem %s121, 32 [#allocation5]
        %v2238 = vld [vmem:[%s2237] sm:$0xff]
        %s2239 = sld [smem:[#allocation3 + $0x200]]
        %v2240 = vstv %s2239
        %v2241 = vmul.f32 %v2238, %v2240
        %s2242 = sld [smem:[#allocation3 + $0x202]]
        %v2243 = vstv %s2242
        %v2244 = vmul.f32 %v2238, %v2243
        %2246 = vrot.lane.b32.xlu0 %v2244, 1
        %v2247 = vpop.permute.xlu0 %2246
        %v2249 = vadd.f32 %v2241, %v2247
        %s2250 = sld [smem:[#allocation3 + $0x206]]
        %v2251 = vstv %s2250
        %v2252 = vmul.f32 %v2238, %v2251
        %v2254 = vrot.slane %v2252, 7
        %v2256 = vadd.f32 %v2249, %v2254
        %s2257 = sld [smem:[#allocation3 + $0x208]]
        %v2258 = vstv %s2257
        %v2259 = vmul.f32 %v2238, %v2258
        %v2261 = vrot.slane %v2259, 7
        %2262 = vrot.lane.b32.xlu0 %v2261, 1
        %v2263 = vpop.permute.xlu0 %2262
        %v2265 = vadd.f32 %v2256, %v2263
        %s2266 = sld [smem:[#allocation3 + $0x201]]
        %v2267 = vstv %s2266
        %v2268 = vmul.f32 %v2238, %v2267
        %s2269 = sld [smem:[#allocation3 + $0x207]]
        %v2270 = vstv %s2269
        %v2271 = vmul.f32 %v2238, %v2270
        %v2273 = vrot.slane %v2271, 7
        %v2275 = vadd.f32 %v2268, %v2273
        %s2276 = sld [smem:[#allocation3 + $0x203]]
        %v2277 = vstv %s2276
        %v2278 = vmul.f32 %v2238, %v2277
        %s2279 = sld [smem:[#allocation3 + $0x205]]
        %v2280 = vstv %s2279
        %v2281 = vmul.f32 %v2238, %v2280
        %2283 = vrot.lane.b32.xlu0 %v2281, 1
        %v2284 = vpop.permute.xlu0 %2283
        %v2286 = vadd.f32 %v2278, %v2284
        %s2287 = sld [smem:[#allocation3 + $0x204]]
        %v2288 = vstv %s2287
        %v2289 = vmul.f32 %v2238, %v2288
        %v2291 = vrot.slane %v2275, 1
        %2292 = vrot.lane.b32.xlu0 %v2291, 127
        %v2293 = vpop.permute.xlu0 %2292
        %v2294 = vsel %vm222, %v2293, 0
        %2296 = vmatprep.subr.mxu0 0.0
        %2297 = vmatpush1.msra.mxu0 %v227
        %2298 = vmatprep.subr.mxu0 0.0
        %2299 = vmatpush1.msra.mxu0 0.0
        %2300 = vmatprep.subr.mxu0 0.0
        %2301 = vmatpush1.msra.mxu0 0.0
        %2302 = vmatprep.subr.mxu0 0.0
        %2303 = vmatpush1.msra.mxu0 0.0
        %2304 = vmatprep.subr.mxu0 0.0
        %2305 = vmatpush1.msra.mxu0 0.0
        %2306 = vmatprep.subr.mxu0 0.0
        %2307 = vmatpush1.msra.mxu0 0.0
        %2308 = vmatprep.subr.mxu0 0.0
        %2309 = vmatpush1.msra.mxu0 0.0
        %2310 = vmatprep.subr.mxu0 0.0
        %2311 = vmatpush1.msra.mxu0 0.0
        %2312 = vmatprep.subr.mxu0 0.0
        %2313 = vmatpush1.msra.mxu0 0.0
        %2314 = vmatprep.subr.mxu0 0.0
        %2315 = vmatpush1.msra.mxu0 0.0
        %2316 = vmatprep.subr.mxu0 0.0
        %2317 = vmatpush1.msra.mxu0 0.0
        %2318 = vmatprep.subr.mxu0 0.0
        %2319 = vmatpush1.msra.mxu0 0.0
        %2320 = vmatprep.subr.mxu0 0.0
        %2321 = vmatpush1.msra.mxu0 0.0
        %2322 = vmatprep.subr.mxu0 0.0
        %2323 = vmatpush1.msra.mxu0 0.0
        %2324 = vmatprep.subr.mxu0 0.0
        %2325 = vmatpush1.msra.mxu0 0.0
        %2326 = vmatprep.subr.mxu0 0.0
        %2327 = vmatpush1.msra.mxu0 0.0
        %2328 = vmatprep.subr.mxu0 0.0
        %2329 = vmatpush1.msra.mxu0 0.0
        %2330 = vmatprep.subr.mxu0 0.0
        %2331 = vmatpush1.msra.mxu0 0.0
        %2332 = vmatprep.subr.mxu0 0.0
        %2333 = vmatpush1.msra.mxu0 0.0
        %2334 = vmatprep.subr.mxu0 0.0
        %2335 = vmatpush1.msra.mxu0 0.0
        %2336 = vmatprep.subr.mxu0 0.0
        %2337 = vmatpush1.msra.mxu0 0.0
        %2338 = vmatprep.subr.mxu0 0.0
        %2339 = vmatpush1.msra.mxu0 0.0
        %2340 = vmatprep.subr.mxu0 0.0
        %2341 = vmatpush1.msra.mxu0 0.0
        %2342 = vmatprep.subr.mxu0 0.0
        %2343 = vmatpush1.msra.mxu0 0.0
        %2344 = vmatprep.subr.mxu0 0.0
        %2345 = vmatpush1.msra.mxu0 0.0
        %2346 = vmatprep.subr.mxu0 0.0
        %2347 = vmatpush1.msra.mxu0 0.0
        %2348 = vmatprep.subr.mxu0 0.0
        %2349 = vmatpush1.msra.mxu0 0.0
        %2350 = vmatprep.subr.mxu0 0.0
        %2351 = vmatpush1.msra.mxu0 0.0
        %2352 = vmatprep.subr.mxu0 0.0
        %2353 = vmatpush1.msra.mxu0 0.0
        %2354 = vmatprep.subr.mxu0 0.0
        %2355 = vmatpush1.msra.mxu0 0.0
        %2356 = vmatprep.subr.mxu0 0.0
        %2357 = vmatpush1.msra.mxu0 0.0
        %2358 = vmatprep.subr.mxu0 0.0
        %2359 = vmatpush1.msra.mxu0 0.0
        %2360 = vmatprep.mubr.f32.mxu0 0.0
        %2361 = vmatmul.mubr.f32.gmra.mrb[0].mxu0 %v2294
        %v2362 = vpop.f32.mrb[0].mxu0
        %v2363 = vadd.f32 0.0, %v2362
        %v2364 = vpop.f32.mrb[0].mxu0
        %2365 = vdwg.mxu0
        %v2367 = vrot.slane %v2265, 1
        %2368 = vrot.lane.b32.xlu0 %v2367, 127
        %v2369 = vpop.permute.xlu0 %2368
        %v2370 = vsel %vm222, %v2369, 0
        %2372 = vmatprep.subr.mxu0 0.0
        %2373 = vmatpush1.msra.mxu0 %v306
        %2374 = vmatprep.subr.mxu0 0.0
        %2375 = vmatpush1.msra.mxu0 0.0
        %2376 = vmatprep.subr.mxu0 0.0
        %2377 = vmatpush1.msra.mxu0 0.0
        %2378 = vmatprep.subr.mxu0 0.0
        %2379 = vmatpush1.msra.mxu0 0.0
        %2380 = vmatprep.subr.mxu0 0.0
        %2381 = vmatpush1.msra.mxu0 0.0
        %2382 = vmatprep.subr.mxu0 0.0
        %2383 = vmatpush1.msra.mxu0 0.0
        %2384 = vmatprep.subr.mxu0 0.0
        %2385 = vmatpush1.msra.mxu0 0.0
        %2386 = vmatprep.subr.mxu0 0.0
        %2387 = vmatpush1.msra.mxu0 0.0
        %2388 = vmatprep.subr.mxu0 0.0
        %2389 = vmatpush1.msra.mxu0 0.0
        %2390 = vmatprep.subr.mxu0 0.0
        %2391 = vmatpush1.msra.mxu0 0.0
        %2392 = vmatprep.subr.mxu0 0.0
        %2393 = vmatpush1.msra.mxu0 0.0
        %2394 = vmatprep.subr.mxu0 0.0
        %2395 = vmatpush1.msra.mxu0 0.0
        %2396 = vmatprep.subr.mxu0 0.0
        %2397 = vmatpush1.msra.mxu0 0.0
        %2398 = vmatprep.subr.mxu0 0.0
        %2399 = vmatpush1.msra.mxu0 0.0
        %2400 = vmatprep.subr.mxu0 0.0
        %2401 = vmatpush1.msra.mxu0 0.0
        %2402 = vmatprep.subr.mxu0 0.0
        %2403 = vmatpush1.msra.mxu0 0.0
        %2404 = vmatprep.subr.mxu0 0.0
        %2405 = vmatpush1.msra.mxu0 0.0
        %2406 = vmatprep.subr.mxu0 0.0
        %2407 = vmatpush1.msra.mxu0 0.0
        %2408 = vmatprep.subr.mxu0 0.0
        %2409 = vmatpush1.msra.mxu0 0.0
        %2410 = vmatprep.subr.mxu0 0.0
        %2411 = vmatpush1.msra.mxu0 0.0
        %2412 = vmatprep.subr.mxu0 0.0
        %2413 = vmatpush1.msra.mxu0 0.0
        %2414 = vmatprep.subr.mxu0 0.0
        %2415 = vmatpush1.msra.mxu0 0.0
        %2416 = vmatprep.subr.mxu0 0.0
        %2417 = vmatpush1.msra.mxu0 0.0
        %2418 = vmatprep.subr.mxu0 0.0
        %2419 = vmatpush1.msra.mxu0 0.0
        %2420 = vmatprep.subr.mxu0 0.0
        %2421 = vmatpush1.msra.mxu0 0.0
        %2422 = vmatprep.subr.mxu0 0.0
        %2423 = vmatpush1.msra.mxu0 0.0
        %2424 = vmatprep.subr.mxu0 0.0
        %2425 = vmatpush1.msra.mxu0 0.0
        %2426 = vmatprep.subr.mxu0 0.0
        %2427 = vmatpush1.msra.mxu0 0.0
        %2428 = vmatprep.subr.mxu0 0.0
        %2429 = vmatpush1.msra.mxu0 0.0
        %2430 = vmatprep.subr.mxu0 0.0
        %2431 = vmatpush1.msra.mxu0 0.0
        %2432 = vmatprep.subr.mxu0 0.0
        %2433 = vmatpush1.msra.mxu0 0.0
        %2434 = vmatprep.subr.mxu0 0.0
        %2435 = vmatpush1.msra.mxu0 0.0
        %2436 = vmatprep.mubr.f32.mxu0 0.0
        %2437 = vmatmul.mubr.f32.gmra.mrb[0].mxu0 %v2370
        %v2438 = vpop.f32.mrb[0].mxu0
        %v2439 = vadd.f32 %v2363, %v2438
        %v2440 = vpop.f32.mrb[0].mxu0
        %2441 = vdwg.mxu0
        %v2443 = vrot.slane %v2289, 1
        %2444 = vrot.lane.b32.xlu0 %v2443, 127
        %v2445 = vpop.permute.xlu0 %2444
        %v2446 = vsel %vm222, %v2445, 0
        %2448 = vmatprep.subr.mxu0 0.0
        %2449 = vmatpush1.msra.mxu0 %v227
        %2450 = vmatprep.subr.mxu0 0.0
        %2451 = vmatpush1.msra.mxu0 0.0
        %2452 = vmatprep.subr.mxu0 0.0
        %2453 = vmatpush1.msra.mxu0 0.0
        %2454 = vmatprep.subr.mxu0 0.0
        %2455 = vmatpush1.msra.mxu0 0.0
        %2456 = vmatprep.subr.mxu0 0.0
        %2457 = vmatpush1.msra.mxu0 0.0
        %2458 = vmatprep.subr.mxu0 0.0
        %2459 = vmatpush1.msra.mxu0 0.0
        %2460 = vmatprep.subr.mxu0 0.0
        %2461 = vmatpush1.msra.mxu0 0.0
        %2462 = vmatprep.subr.mxu0 0.0
        %2463 = vmatpush1.msra.mxu0 0.0
        %2464 = vmatprep.subr.mxu0 0.0
        %2465 = vmatpush1.msra.mxu0 0.0
        %2466 = vmatprep.subr.mxu0 0.0
        %2467 = vmatpush1.msra.mxu0 0.0
        %2468 = vmatprep.subr.mxu0 0.0
        %2469 = vmatpush1.msra.mxu0 0.0
        %2470 = vmatprep.subr.mxu0 0.0
        %2471 = vmatpush1.msra.mxu0 0.0
        %2472 = vmatprep.subr.mxu0 0.0
        %2473 = vmatpush1.msra.mxu0 0.0
        %2474 = vmatprep.subr.mxu0 0.0
        %2475 = vmatpush1.msra.mxu0 0.0
        %2476 = vmatprep.subr.mxu0 0.0
        %2477 = vmatpush1.msra.mxu0 0.0
        %2478 = vmatprep.subr.mxu0 0.0
        %2479 = vmatpush1.msra.mxu0 0.0
        %2480 = vmatprep.subr.mxu0 0.0
        %2481 = vmatpush1.msra.mxu0 0.0
        %2482 = vmatprep.subr.mxu0 0.0
        %2483 = vmatpush1.msra.mxu0 0.0
        %2484 = vmatprep.subr.mxu0 0.0
        %2485 = vmatpush1.msra.mxu0 0.0
        %2486 = vmatprep.subr.mxu0 0.0
        %2487 = vmatpush1.msra.mxu0 0.0
        %2488 = vmatprep.subr.mxu0 0.0
        %2489 = vmatpush1.msra.mxu0 0.0
        %2490 = vmatprep.subr.mxu0 0.0
        %2491 = vmatpush1.msra.mxu0 0.0
        %2492 = vmatprep.subr.mxu0 0.0
        %2493 = vmatpush1.msra.mxu0 0.0
        %2494 = vmatprep.subr.mxu0 0.0
        %2495 = vmatpush1.msra.mxu0 0.0
        %2496 = vmatprep.subr.mxu0 0.0
        %2497 = vmatpush1.msra.mxu0 0.0
        %2498 = vmatprep.subr.mxu0 0.0
        %2499 = vmatpush1.msra.mxu0 0.0
        %2500 = vmatprep.subr.mxu0 0.0
        %2501 = vmatpush1.msra.mxu0 0.0
        %2502 = vmatprep.subr.mxu0 0.0
        %2503 = vmatpush1.msra.mxu0 0.0
        %2504 = vmatprep.subr.mxu0 0.0
        %2505 = vmatpush1.msra.mxu0 0.0
        %2506 = vmatprep.subr.mxu0 0.0
        %2507 = vmatpush1.msra.mxu0 0.0
        %2508 = vmatprep.subr.mxu0 0.0
        %2509 = vmatpush1.msra.mxu0 0.0
        %2510 = vmatprep.subr.mxu0 0.0
        %2511 = vmatpush1.msra.mxu0 0.0
        %2512 = vmatprep.mubr.f32.mxu0 0.0
        %2513 = vmatmul.mubr.f32.gmra.mrb[0].mxu0 %v2446
        %v2514 = vpop.f32.mrb[0].mxu0
        %v2515 = vadd.f32 0.0, %v2514
        %v2516 = vpop.f32.mrb[0].mxu0
        %2517 = vdwg.mxu0
        %v2519 = vrot.slane %v2286, 1
        %2520 = vrot.lane.b32.xlu0 %v2519, 127
        %v2521 = vpop.permute.xlu0 %2520
        %v2522 = vsel %vm222, %v2521, 0
        %2524 = vmatprep.subr.mxu0 0.0
        %2525 = vmatpush1.msra.mxu0 %v306
        %2526 = vmatprep.subr.mxu0 0.0
        %2527 = vmatpush1.msra.mxu0 0.0
        %2528 = vmatprep.subr.mxu0 0.0
        %2529 = vmatpush1.msra.mxu0 0.0
        %2530 = vmatprep.subr.mxu0 0.0
        %2531 = vmatpush1.msra.mxu0 0.0
        %2532 = vmatprep.subr.mxu0 0.0
        %2533 = vmatpush1.msra.mxu0 0.0
        %2534 = vmatprep.subr.mxu0 0.0
        %2535 = vmatpush1.msra.mxu0 0.0
        %2536 = vmatprep.subr.mxu0 0.0
        %2537 = vmatpush1.msra.mxu0 0.0
        %2538 = vmatprep.subr.mxu0 0.0
        %2539 = vmatpush1.msra.mxu0 0.0
        %2540 = vmatprep.subr.mxu0 0.0
        %2541 = vmatpush1.msra.mxu0 0.0
        %2542 = vmatprep.subr.mxu0 0.0
        %2543 = vmatpush1.msra.mxu0 0.0
        %2544 = vmatprep.subr.mxu0 0.0
        %2545 = vmatpush1.msra.mxu0 0.0
        %2546 = vmatprep.subr.mxu0 0.0
        %2547 = vmatpush1.msra.mxu0 0.0
        %2548 = vmatprep.subr.mxu0 0.0
        %2549 = vmatpush1.msra.mxu0 0.0
        %2550 = vmatprep.subr.mxu0 0.0
        %2551 = vmatpush1.msra.mxu0 0.0
        %2552 = vmatprep.subr.mxu0 0.0
        %2553 = vmatpush1.msra.mxu0 0.0
        %2554 = vmatprep.subr.mxu0 0.0
        %2555 = vmatpush1.msra.mxu0 0.0
        %2556 = vmatprep.subr.mxu0 0.0
        %2557 = vmatpush1.msra.mxu0 0.0
        %2558 = vmatprep.subr.mxu0 0.0
        %2559 = vmatpush1.msra.mxu0 0.0
        %2560 = vmatprep.subr.mxu0 0.0
        %2561 = vmatpush1.msra.mxu0 0.0
        %2562 = vmatprep.subr.mxu0 0.0
        %2563 = vmatpush1.msra.mxu0 0.0
        %2564 = vmatprep.subr.mxu0 0.0
        %2565 = vmatpush1.msra.mxu0 0.0
        %2566 = vmatprep.subr.mxu0 0.0
        %2567 = vmatpush1.msra.mxu0 0.0
        %2568 = vmatprep.subr.mxu0 0.0
        %2569 = vmatpush1.msra.mxu0 0.0
        %2570 = vmatprep.subr.mxu0 0.0
        %2571 = vmatpush1.msra.mxu0 0.0
        %2572 = vmatprep.subr.mxu0 0.0
        %2573 = vmatpush1.msra.mxu0 0.0
        %2574 = vmatprep.subr.mxu0 0.0
        %2575 = vmatpush1.msra.mxu0 0.0
        %2576 = vmatprep.subr.mxu0 0.0
        %2577 = vmatpush1.msra.mxu0 0.0
        %2578 = vmatprep.subr.mxu0 0.0
        %2579 = vmatpush1.msra.mxu0 0.0
        %2580 = vmatprep.subr.mxu0 0.0
        %2581 = vmatpush1.msra.mxu0 0.0
        %2582 = vmatprep.subr.mxu0 0.0
        %2583 = vmatpush1.msra.mxu0 0.0
        %2584 = vmatprep.subr.mxu0 0.0
        %2585 = vmatpush1.msra.mxu0 0.0
        %2586 = vmatprep.subr.mxu0 0.0
        %2587 = vmatpush1.msra.mxu0 0.0
        %2588 = vmatprep.mubr.f32.mxu0 0.0
        %2589 = vmatmul.mubr.f32.gmra.mrb[0].mxu0 %v2522
        %v2590 = vpop.f32.mrb[0].mxu0
        %v2591 = vadd.f32 %v2515, %v2590
        %v2592 = vpop.f32.mrb[0].mxu0
        %2593 = vdwg.mxu0
        %v2595 = vsel %vm225, %v2591, 0
        %2597 = vmatprep.subr.mxu0 0.0
        %2598 = vmatpush1.msra.mxu0 %v2595
        %2599 = vmatprep.subr.mxu0 0.0
        %2600 = vmatpush1.msra.mxu0 0.0
        %2601 = vmatprep.subr.mxu0 0.0
        %2602 = vmatpush1.msra.mxu0 0.0
        %2603 = vmatprep.subr.mxu0 0.0
        %2604 = vmatpush1.msra.mxu0 0.0
        %2605 = vmatprep.subr.mxu0 0.0
        %2606 = vmatpush1.msra.mxu0 0.0
        %2607 = vmatprep.subr.mxu0 0.0
        %2608 = vmatpush1.msra.mxu0 0.0
        %2609 = vmatprep.subr.mxu0 0.0
        %2610 = vmatpush1.msra.mxu0 0.0
        %2611 = vmatprep.subr.mxu0 0.0
        %2612 = vmatpush1.msra.mxu0 0.0
        %2613 = vmatprep.subr.mxu0 0.0
        %2614 = vmatpush1.msra.mxu0 0.0
        %2615 = vmatprep.subr.mxu0 0.0
        %2616 = vmatpush1.msra.mxu0 0.0
        %2617 = vmatprep.subr.mxu0 0.0
        %2618 = vmatpush1.msra.mxu0 0.0
        %2619 = vmatprep.subr.mxu0 0.0
        %2620 = vmatpush1.msra.mxu0 0.0
        %2621 = vmatprep.subr.mxu0 0.0
        %2622 = vmatpush1.msra.mxu0 0.0
        %2623 = vmatprep.subr.mxu0 0.0
        %2624 = vmatpush1.msra.mxu0 0.0
        %2625 = vmatprep.subr.mxu0 0.0
        %2626 = vmatpush1.msra.mxu0 0.0
        %2627 = vmatprep.subr.mxu0 0.0
        %2628 = vmatpush1.msra.mxu0 0.0
        %2629 = vmatprep.subr.mxu0 0.0
        %2630 = vmatpush1.msra.mxu0 0.0
        %2631 = vmatprep.subr.mxu0 0.0
        %2632 = vmatpush1.msra.mxu0 0.0
        %2633 = vmatprep.subr.mxu0 0.0
        %2634 = vmatpush1.msra.mxu0 0.0
        %2635 = vmatprep.subr.mxu0 0.0
        %2636 = vmatpush1.msra.mxu0 0.0
        %2637 = vmatprep.subr.mxu0 0.0
        %2638 = vmatpush1.msra.mxu0 0.0
        %2639 = vmatprep.subr.mxu0 0.0
        %2640 = vmatpush1.msra.mxu0 0.0
        %2641 = vmatprep.subr.mxu0 0.0
        %2642 = vmatpush1.msra.mxu0 0.0
        %2643 = vmatprep.subr.mxu0 0.0
        %2644 = vmatpush1.msra.mxu0 0.0
        %2645 = vmatprep.subr.mxu0 0.0
        %2646 = vmatpush1.msra.mxu0 0.0
        %2647 = vmatprep.subr.mxu0 0.0
        %2648 = vmatpush1.msra.mxu0 0.0
        %2649 = vmatprep.subr.mxu0 0.0
        %2650 = vmatpush1.msra.mxu0 0.0
        %2651 = vmatprep.subr.mxu0 0.0
        %2652 = vmatpush1.msra.mxu0 0.0
        %2653 = vmatprep.subr.mxu0 0.0
        %2654 = vmatpush1.msra.mxu0 0.0
        %2655 = vmatprep.subr.mxu0 0.0
        %2656 = vmatpush1.msra.mxu0 0.0
        %2657 = vmatprep.subr.mxu0 0.0
        %2658 = vmatpush1.msra.mxu0 0.0
        %2659 = vmatprep.subr.mxu0 0.0
        %2660 = vmatpush1.msra.mxu0 0.0
        %2661 = vmatprep.mubr.f32.mxu0 0.0
        %2662 = vmatmul.mubr.f32.gmra.mrb[0].mxu0 %v531
        %v2663 = vpop.f32.mrb[0].mxu0
        %v2664 = vadd.f32 0.0, %v2663
        %v2665 = vpop.f32.mrb[0].mxu0
        %2666 = vmatprep.mubr.f32.mxu0 0.0
        %2667 = vmatmul.mubr.f32.gmra.mrb[0].mxu0 %v534
        %v2668 = vpop.f32.mrb[0].mxu0
        %v2669 = vadd.f32 0.0, %v2668
        %v2670 = vpop.f32.mrb[0].mxu0
        %2671 = vdwg.mxu0
        %v2673 = vsel %vm225, %v2439, 0
        %2675 = vmatprep.subr.mxu0 0.0
        %2676 = vmatpush1.msra.mxu0 %v2673
        %2677 = vmatprep.subr.mxu0 0.0
        %2678 = vmatpush1.msra.mxu0 0.0
        %2679 = vmatprep.subr.mxu0 0.0
        %2680 = vmatpush1.msra.mxu0 0.0
        %2681 = vmatprep.subr.mxu0 0.0
        %2682 = vmatpush1.msra.mxu0 0.0
        %2683 = vmatprep.subr.mxu0 0.0
        %2684 = vmatpush1.msra.mxu0 0.0
        %2685 = vmatprep.subr.mxu0 0.0
        %2686 = vmatpush1.msra.mxu0 0.0
        %2687 = vmatprep.subr.mxu0 0.0
        %2688 = vmatpush1.msra.mxu0 0.0
        %2689 = vmatprep.subr.mxu0 0.0
        %2690 = vmatpush1.msra.mxu0 0.0
        %2691 = vmatprep.subr.mxu0 0.0
        %2692 = vmatpush1.msra.mxu0 0.0
        %2693 = vmatprep.subr.mxu0 0.0
        %2694 = vmatpush1.msra.mxu0 0.0
        %2695 = vmatprep.subr.mxu0 0.0
        %2696 = vmatpush1.msra.mxu0 0.0
        %2697 = vmatprep.subr.mxu0 0.0
        %2698 = vmatpush1.msra.mxu0 0.0
        %2699 = vmatprep.subr.mxu0 0.0
        %2700 = vmatpush1.msra.mxu0 0.0
        %2701 = vmatprep.subr.mxu0 0.0
        %2702 = vmatpush1.msra.mxu0 0.0
        %2703 = vmatprep.subr.mxu0 0.0
        %2704 = vmatpush1.msra.mxu0 0.0
        %2705 = vmatprep.subr.mxu0 0.0
        %2706 = vmatpush1.msra.mxu0 0.0
        %2707 = vmatprep.subr.mxu0 0.0
        %2708 = vmatpush1.msra.mxu0 0.0
        %2709 = vmatprep.subr.mxu0 0.0
        %2710 = vmatpush1.msra.mxu0 0.0
        %2711 = vmatprep.subr.mxu0 0.0
        %2712 = vmatpush1.msra.mxu0 0.0
        %2713 = vmatprep.subr.mxu0 0.0
        %2714 = vmatpush1.msra.mxu0 0.0
        %2715 = vmatprep.subr.mxu0 0.0
        %2716 = vmatpush1.msra.mxu0 0.0
        %2717 = vmatprep.subr.mxu0 0.0
        %2718 = vmatpush1.msra.mxu0 0.0
        %2719 = vmatprep.subr.mxu0 0.0
        %2720 = vmatpush1.msra.mxu0 0.0
        %2721 = vmatprep.subr.mxu0 0.0
        %2722 = vmatpush1.msra.mxu0 0.0
        %2723 = vmatprep.subr.mxu0 0.0
        %2724 = vmatpush1.msra.mxu0 0.0
        %2725 = vmatprep.subr.mxu0 0.0
        %2726 = vmatpush1.msra.mxu0 0.0
        %2727 = vmatprep.subr.mxu0 0.0
        %2728 = vmatpush1.msra.mxu0 0.0
        %2729 = vmatprep.subr.mxu0 0.0
        %2730 = vmatpush1.msra.mxu0 0.0
        %2731 = vmatprep.subr.mxu0 0.0
        %2732 = vmatpush1.msra.mxu0 0.0
        %2733 = vmatprep.subr.mxu0 0.0
        %2734 = vmatpush1.msra.mxu0 0.0
        %2735 = vmatprep.subr.mxu0 0.0
        %2736 = vmatpush1.msra.mxu0 0.0
        %2737 = vmatprep.subr.mxu0 0.0
        %2738 = vmatpush1.msra.mxu0 0.0
        %2739 = vmatprep.mubr.f32.mxu0 0.0
        %2740 = vmatmul.mubr.f32.gmra.mrb[0].mxu0 %v615
        %v2741 = vpop.f32.mrb[0].mxu0
        %v2742 = vadd.f32 %v2664, %v2741
        %v2743 = vpop.f32.mrb[0].mxu0
        %2744 = vmatprep.mubr.f32.mxu0 0.0
        %2745 = vmatmul.mubr.f32.gmra.mrb[0].mxu0 %v618
        %v2746 = vpop.f32.mrb[0].mxu0
        %v2747 = vadd.f32 %v2669, %v2746
        %v2748 = vpop.f32.mrb[0].mxu0
        %2749 = vdwg.mxu0
        %s2750 = scalar_lea.vmem %s121, 40 [#allocation5]
        %v2751 = vld [vmem:[%s2750] sm:$0xff]
        %s2752 = sld [smem:[#allocation3 + $0x280]]
        %v2753 = vstv %s2752
        %v2754 = vmul.f32 %v2751, %v2753
        %s2755 = sld [smem:[#allocation3 + $0x282]]
        %v2756 = vstv %s2755
        %v2757 = vmul.f32 %v2751, %v2756
        %2759 = vrot.lane.b32.xlu0 %v2757, 1
        %v2760 = vpop.permute.xlu0 %2759
        %v2762 = vadd.f32 %v2754, %v2760
        %s2763 = sld [smem:[#allocation3 + $0x286]]
        %v2764 = vstv %s2763
        %v2765 = vmul.f32 %v2751, %v2764
        %v2767 = vrot.slane %v2765, 7
        %v2769 = vadd.f32 %v2762, %v2767
        %s2770 = sld [smem:[#allocation3 + $0x288]]
        %v2771 = vstv %s2770
        %v2772 = vmul.f32 %v2751, %v2771
        %v2774 = vrot.slane %v2772, 7
        %2775 = vrot.lane.b32.xlu0 %v2774, 1
        %v2776 = vpop.permute.xlu0 %2775
        %v2778 = vadd.f32 %v2769, %v2776
        %s2779 = sld [smem:[#allocation3 + $0x281]]
        %v2780 = vstv %s2779
        %v2781 = vmul.f32 %v2751, %v2780
        %s2782 = sld [smem:[#allocation3 + $0x287]]
        %v2783 = vstv %s2782
        %v2784 = vmul.f32 %v2751, %v2783
        %v2786 = vrot.slane %v2784, 7
        %v2788 = vadd.f32 %v2781, %v2786
        %s2789 = sld [smem:[#allocation3 + $0x283]]
        %v2790 = vstv %s2789
        %v2791 = vmul.f32 %v2751, %v2790
        %s2792 = sld [smem:[#allocation3 + $0x285]]
        %v2793 = vstv %s2792
        %v2794 = vmul.f32 %v2751, %v2793
        %2796 = vrot.lane.b32.xlu0 %v2794, 1
        %v2797 = vpop.permute.xlu0 %2796
        %v2799 = vadd.f32 %v2791, %v2797
        %s2800 = sld [smem:[#allocation3 + $0x284]]
        %v2801 = vstv %s2800
        %v2802 = vmul.f32 %v2751, %v2801
        %v2804 = vrot.slane %v2788, 1
        %2805 = vrot.lane.b32.xlu0 %v2804, 127
        %v2806 = vpop.permute.xlu0 %2805
        %v2807 = vsel %vm222, %v2806, 0
        %2809 = vmatprep.subr.mxu0 0.0
        %2810 = vmatpush1.msra.mxu0 %v227
        %2811 = vmatprep.subr.mxu0 0.0
        %2812 = vmatpush1.msra.mxu0 0.0
        %2813 = vmatprep.subr.mxu0 0.0
        %2814 = vmatpush1.msra.mxu0 0.0
        %2815 = vmatprep.subr.mxu0 0.0
        %2816 = vmatpush1.msra.mxu0 0.0
        %2817 = vmatprep.subr.mxu0 0.0
        %2818 = vmatpush1.msra.mxu0 0.0
        %2819 = vmatprep.subr.mxu0 0.0
        %2820 = vmatpush1.msra.mxu0 0.0
        %2821 = vmatprep.subr.mxu0 0.0
        %2822 = vmatpush1.msra.mxu0 0.0
        %2823 = vmatprep.subr.mxu0 0.0
        %2824 = vmatpush1.msra.mxu0 0.0
        %2825 = vmatprep.subr.mxu0 0.0
        %2826 = vmatpush1.msra.mxu0 0.0
        %2827 = vmatprep.subr.mxu0 0.0
        %2828 = vmatpush1.msra.mxu0 0.0
        %2829 = vmatprep.subr.mxu0 0.0
        %2830 = vmatpush1.msra.mxu0 0.0
        %2831 = vmatprep.subr.mxu0 0.0
        %2832 = vmatpush1.msra.mxu0 0.0
        %2833 = vmatprep.subr.mxu0 0.0
        %2834 = vmatpush1.msra.mxu0 0.0
        %2835 = vmatprep.subr.mxu0 0.0
        %2836 = vmatpush1.msra.mxu0 0.0
        %2837 = vmatprep.subr.mxu0 0.0
        %2838 = vmatpush1.msra.mxu0 0.0
        %2839 = vmatprep.subr.mxu0 0.0
        %2840 = vmatpush1.msra.mxu0 0.0
        %2841 = vmatprep.subr.mxu0 0.0
        %2842 = vmatpush1.msra.mxu0 0.0
        %2843 = vmatprep.subr.mxu0 0.0
        %2844 = vmatpush1.msra.mxu0 0.0
        %2845 = vmatprep.subr.mxu0 0.0
        %2846 = vmatpush1.msra.mxu0 0.0
        %2847 = vmatprep.subr.mxu0 0.0
        %2848 = vmatpush1.msra.mxu0 0.0
        %2849 = vmatprep.subr.mxu0 0.0
        %2850 = vmatpush1.msra.mxu0 0.0
        %2851 = vmatprep.subr.mxu0 0.0
        %2852 = vmatpush1.msra.mxu0 0.0
        %2853 = vmatprep.subr.mxu0 0.0
        %2854 = vmatpush1.msra.mxu0 0.0
        %2855 = vmatprep.subr.mxu0 0.0
        %2856 = vmatpush1.msra.mxu0 0.0
        %2857 = vmatprep.subr.mxu0 0.0
        %2858 = vmatpush1.msra.mxu0 0.0
        %2859 = vmatprep.subr.mxu0 0.0
        %2860 = vmatpush1.msra.mxu0 0.0
        %2861 = vmatprep.subr.mxu0 0.0
        %2862 = vmatpush1.msra.mxu0 0.0
        %2863 = vmatprep.subr.mxu0 0.0
        %2864 = vmatpush1.msra.mxu0 0.0
        %2865 = vmatprep.subr.mxu0 0.0
        %2866 = vmatpush1.msra.mxu0 0.0
        %2867 = vmatprep.subr.mxu0 0.0
        %2868 = vmatpush1.msra.mxu0 0.0
        %2869 = vmatprep.subr.mxu0 0.0
        %2870 = vmatpush1.msra.mxu0 0.0
        %2871 = vmatprep.subr.mxu0 0.0
        %2872 = vmatpush1.msra.mxu0 0.0
        %2873 = vmatprep.mubr.f32.mxu0 0.0
        %2874 = vmatmul.mubr.f32.gmra.mrb[0].mxu0 %v2807
        %v2875 = vpop.f32.mrb[0].mxu0
        %v2876 = vadd.f32 0.0, %v2875
        %v2877 = vpop.f32.mrb[0].mxu0
        %2878 = vdwg.mxu0
        %v2880 = vrot.slane %v2778, 1
        %2881 = vrot.lane.b32.xlu0 %v2880, 127
        %v2882 = vpop.permute.xlu0 %2881
        %v2883 = vsel %vm222, %v2882, 0
        %2885 = vmatprep.subr.mxu0 0.0
        %2886 = vmatpush1.msra.mxu0 %v306
        %2887 = vmatprep.subr.mxu0 0.0
        %2888 = vmatpush1.msra.mxu0 0.0
        %2889 = vmatprep.subr.mxu0 0.0
        %2890 = vmatpush1.msra.mxu0 0.0
        %2891 = vmatprep.subr.mxu0 0.0
        %2892 = vmatpush1.msra.mxu0 0.0
        %2893 = vmatprep.subr.mxu0 0.0
        %2894 = vmatpush1.msra.mxu0 0.0
        %2895 = vmatprep.subr.mxu0 0.0
        %2896 = vmatpush1.msra.mxu0 0.0
        %2897 = vmatprep.subr.mxu0 0.0
        %2898 = vmatpush1.msra.mxu0 0.0
        %2899 = vmatprep.subr.mxu0 0.0
        %2900 = vmatpush1.msra.mxu0 0.0
        %2901 = vmatprep.subr.mxu0 0.0
        %2902 = vmatpush1.msra.mxu0 0.0
        %2903 = vmatprep.subr.mxu0 0.0
        %2904 = vmatpush1.msra.mxu0 0.0
        %2905 = vmatprep.subr.mxu0 0.0
        %2906 = vmatpush1.msra.mxu0 0.0
        %2907 = vmatprep.subr.mxu0 0.0
        %2908 = vmatpush1.msra.mxu0 0.0
        %2909 = vmatprep.subr.mxu0 0.0
        %2910 = vmatpush1.msra.mxu0 0.0
        %2911 = vmatprep.subr.mxu0 0.0
        %2912 = vmatpush1.msra.mxu0 0.0
        %2913 = vmatprep.subr.mxu0 0.0
        %2914 = vmatpush1.msra.mxu0 0.0
        %2915 = vmatprep.subr.mxu0 0.0
        %2916 = vmatpush1.msra.mxu0 0.0
        %2917 = vmatprep.subr.mxu0 0.0
        %2918 = vmatpush1.msra.mxu0 0.0
        %2919 = vmatprep.subr.mxu0 0.0
        %2920 = vmatpush1.msra.mxu0 0.0
        %2921 = vmatprep.subr.mxu0 0.0
        %2922 = vmatpush1.msra.mxu0 0.0
        %2923 = vmatprep.subr.mxu0 0.0
        %2924 = vmatpush1.msra.mxu0 0.0
        %2925 = vmatprep.subr.mxu0 0.0
        %2926 = vmatpush1.msra.mxu0 0.0
        %2927 = vmatprep.subr.mxu0 0.0
        %2928 = vmatpush1.msra.mxu0 0.0
        %2929 = vmatprep.subr.mxu0 0.0
        %2930 = vmatpush1.msra.mxu0 0.0
        %2931 = vmatprep.subr.mxu0 0.0
        %2932 = vmatpush1.msra.mxu0 0.0
        %2933 = vmatprep.subr.mxu0 0.0
        %2934 = vmatpush1.msra.mxu0 0.0
        %2935 = vmatprep.subr.mxu0 0.0
        %2936 = vmatpush1.msra.mxu0 0.0
        %2937 = vmatprep.subr.mxu0 0.0
        %2938 = vmatpush1.msra.mxu0 0.0
        %2939 = vmatprep.subr.mxu0 0.0
        %2940 = vmatpush1.msra.mxu0 0.0
        %2941 = vmatprep.subr.mxu0 0.0
        %2942 = vmatpush1.msra.mxu0 0.0
        %2943 = vmatprep.subr.mxu0 0.0
        %2944 = vmatpush1.msra.mxu0 0.0
        %2945 = vmatprep.subr.mxu0 0.0
        %2946 = vmatpush1.msra.mxu0 0.0
        %2947 = vmatprep.subr.mxu0 0.0
        %2948 = vmatpush1.msra.mxu0 0.0
        %2949 = vmatprep.mubr.f32.mxu0 0.0
        %2950 = vmatmul.mubr.f32.gmra.mrb[0].mxu0 %v2883
        %v2951 = vpop.f32.mrb[0].mxu0
        %v2952 = vadd.f32 %v2876, %v2951
        %v2953 = vpop.f32.mrb[0].mxu0
        %2954 = vdwg.mxu0
        %v2956 = vrot.slane %v2802, 1
        %2957 = vrot.lane.b32.xlu0 %v2956, 127
        %v2958 = vpop.permute.xlu0 %2957
        %v2959 = vsel %vm222, %v2958, 0
        %2961 = vmatprep.subr.mxu0 0.0
        %2962 = vmatpush1.msra.mxu0 %v227
        %2963 = vmatprep.subr.mxu0 0.0
        %2964 = vmatpush1.msra.mxu0 0.0
        %2965 = vmatprep.subr.mxu0 0.0
        %2966 = vmatpush1.msra.mxu0 0.0
        %2967 = vmatprep.subr.mxu0 0.0
        %2968 = vmatpush1.msra.mxu0 0.0
        %2969 = vmatprep.subr.mxu0 0.0
        %2970 = vmatpush1.msra.mxu0 0.0
        %2971 = vmatprep.subr.mxu0 0.0
        %2972 = vmatpush1.msra.mxu0 0.0
        %2973 = vmatprep.subr.mxu0 0.0
        %2974 = vmatpush1.msra.mxu0 0.0
        %2975 = vmatprep.subr.mxu0 0.0
        %2976 = vmatpush1.msra.mxu0 0.0
        %2977 = vmatprep.subr.mxu0 0.0
        %2978 = vmatpush1.msra.mxu0 0.0
        %2979 = vmatprep.subr.mxu0 0.0
        %2980 = vmatpush1.msra.mxu0 0.0
        %2981 = vmatprep.subr.mxu0 0.0
        %2982 = vmatpush1.msra.mxu0 0.0
        %2983 = vmatprep.subr.mxu0 0.0
        %2984 = vmatpush1.msra.mxu0 0.0
        %2985 = vmatprep.subr.mxu0 0.0
        %2986 = vmatpush1.msra.mxu0 0.0
        %2987 = vmatprep.subr.mxu0 0.0
        %2988 = vmatpush1.msra.mxu0 0.0
        %2989 = vmatprep.subr.mxu0 0.0
        %2990 = vmatpush1.msra.mxu0 0.0
        %2991 = vmatprep.subr.mxu0 0.0
        %2992 = vmatpush1.msra.mxu0 0.0
        %2993 = vmatprep.subr.mxu0 0.0
        %2994 = vmatpush1.msra.mxu0 0.0
        %2995 = vmatprep.subr.mxu0 0.0
        %2996 = vmatpush1.msra.mxu0 0.0
        %2997 = vmatprep.subr.mxu0 0.0
        %2998 = vmatpush1.msra.mxu0 0.0
        %2999 = vmatprep.subr.mxu0 0.0
        %3000 = vmatpush1.msra.mxu0 0.0
        %3001 = vmatprep.subr.mxu0 0.0
        %3002 = vmatpush1.msra.mxu0 0.0
        %3003 = vmatprep.subr.mxu0 0.0
        %3004 = vmatpush1.msra.mxu0 0.0
        %3005 = vmatprep.subr.mxu0 0.0
        %3006 = vmatpush1.msra.mxu0 0.0
        %3007 = vmatprep.subr.mxu0 0.0
        %3008 = vmatpush1.msra.mxu0 0.0
        %3009 = vmatprep.subr.mxu0 0.0
        %3010 = vmatpush1.msra.mxu0 0.0
        %3011 = vmatprep.subr.mxu0 0.0
        %3012 = vmatpush1.msra.mxu0 0.0
        %3013 = vmatprep.subr.mxu0 0.0
        %3014 = vmatpush1.msra.mxu0 0.0
        %3015 = vmatprep.subr.mxu0 0.0
        %3016 = vmatpush1.msra.mxu0 0.0
        %3017 = vmatprep.subr.mxu0 0.0
        %3018 = vmatpush1.msra.mxu0 0.0
        %3019 = vmatprep.subr.mxu0 0.0
        %3020 = vmatpush1.msra.mxu0 0.0
        %3021 = vmatprep.subr.mxu0 0.0
        %3022 = vmatpush1.msra.mxu0 0.0
        %3023 = vmatprep.subr.mxu0 0.0
        %3024 = vmatpush1.msra.mxu0 0.0
        %3025 = vmatprep.mubr.f32.mxu0 0.0
        %3026 = vmatmul.mubr.f32.gmra.mrb[0].mxu0 %v2959
        %v3027 = vpop.f32.mrb[0].mxu0
        %v3028 = vadd.f32 0.0, %v3027
        %v3029 = vpop.f32.mrb[0].mxu0
        %3030 = vdwg.mxu0
        %v3032 = vrot.slane %v2799, 1
        %3033 = vrot.lane.b32.xlu0 %v3032, 127
        %v3034 = vpop.permute.xlu0 %3033
        %v3035 = vsel %vm222, %v3034, 0
        %3037 = vmatprep.subr.mxu0 0.0
        %3038 = vmatpush1.msra.mxu0 %v306
        %3039 = vmatprep.subr.mxu0 0.0
        %3040 = vmatpush1.msra.mxu0 0.0
        %3041 = vmatprep.subr.mxu0 0.0
        %3042 = vmatpush1.msra.mxu0 0.0
        %3043 = vmatprep.subr.mxu0 0.0
        %3044 = vmatpush1.msra.mxu0 0.0
        %3045 = vmatprep.subr.mxu0 0.0
        %3046 = vmatpush1.msra.mxu0 0.0
        %3047 = vmatprep.subr.mxu0 0.0
        %3048 = vmatpush1.msra.mxu0 0.0
        %3049 = vmatprep.subr.mxu0 0.0
        %3050 = vmatpush1.msra.mxu0 0.0
        %3051 = vmatprep.subr.mxu0 0.0
        %3052 = vmatpush1.msra.mxu0 0.0
        %3053 = vmatprep.subr.mxu0 0.0
        %3054 = vmatpush1.msra.mxu0 0.0
        %3055 = vmatprep.subr.mxu0 0.0
        %3056 = vmatpush1.msra.mxu0 0.0
        %3057 = vmatprep.subr.mxu0 0.0
        %3058 = vmatpush1.msra.mxu0 0.0
        %3059 = vmatprep.subr.mxu0 0.0
        %3060 = vmatpush1.msra.mxu0 0.0
        %3061 = vmatprep.subr.mxu0 0.0
        %3062 = vmatpush1.msra.mxu0 0.0
        %3063 = vmatprep.subr.mxu0 0.0
        %3064 = vmatpush1.msra.mxu0 0.0
        %3065 = vmatprep.subr.mxu0 0.0
        %3066 = vmatpush1.msra.mxu0 0.0
        %3067 = vmatprep.subr.mxu0 0.0
        %3068 = vmatpush1.msra.mxu0 0.0
        %3069 = vmatprep.subr.mxu0 0.0
        %3070 = vmatpush1.msra.mxu0 0.0
        %3071 = vmatprep.subr.mxu0 0.0
        %3072 = vmatpush1.msra.mxu0 0.0
        %3073 = vmatprep.subr.mxu0 0.0
        %3074 = vmatpush1.msra.mxu0 0.0
        %3075 = vmatprep.subr.mxu0 0.0
        %3076 = vmatpush1.msra.mxu0 0.0
        %3077 = vmatprep.subr.mxu0 0.0
        %3078 = vmatpush1.msra.mxu0 0.0
        %3079 = vmatprep.subr.mxu0 0.0
        %3080 = vmatpush1.msra.mxu0 0.0
        %3081 = vmatprep.subr.mxu0 0.0
        %3082 = vmatpush1.msra.mxu0 0.0
        %3083 = vmatprep.subr.mxu0 0.0
        %3084 = vmatpush1.msra.mxu0 0.0
        %3085 = vmatprep.subr.mxu0 0.0
        %3086 = vmatpush1.msra.mxu0 0.0
        %3087 = vmatprep.subr.mxu0 0.0
        %3088 = vmatpush1.msra.mxu0 0.0
        %3089 = vmatprep.subr.mxu0 0.0
        %3090 = vmatpush1.msra.mxu0 0.0
        %3091 = vmatprep.subr.mxu0 0.0
        %3092 = vmatpush1.msra.mxu0 0.0
        %3093 = vmatprep.subr.mxu0 0.0
        %3094 = vmatpush1.msra.mxu0 0.0
        %3095 = vmatprep.subr.mxu0 0.0
        %3096 = vmatpush1.msra.mxu0 0.0
        %3097 = vmatprep.subr.mxu0 0.0
        %3098 = vmatpush1.msra.mxu0 0.0
        %3099 = vmatprep.subr.mxu0 0.0
        %3100 = vmatpush1.msra.mxu0 0.0
        %3101 = vmatprep.mubr.f32.mxu0 0.0
        %3102 = vmatmul.mubr.f32.gmra.mrb[0].mxu0 %v3035
        %v3103 = vpop.f32.mrb[0].mxu0
        %v3104 = vadd.f32 %v3028, %v3103
        %v3105 = vpop.f32.mrb[0].mxu0
        %3106 = vdwg.mxu0
        %v3108 = vsel %vm225, %v3104, 0
        %3110 = vmatprep.subr.mxu0 0.0
        %3111 = vmatpush1.msra.mxu0 %v3108
        %3112 = vmatprep.subr.mxu0 0.0
        %3113 = vmatpush1.msra.mxu0 0.0
        %3114 = vmatprep.subr.mxu0 0.0
        %3115 = vmatpush1.msra.mxu0 0.0
        %3116 = vmatprep.subr.mxu0 0.0
        %3117 = vmatpush1.msra.mxu0 0.0
        %3118 = vmatprep.subr.mxu0 0.0
        %3119 = vmatpush1.msra.mxu0 0.0
        %3120 = vmatprep.subr.mxu0 0.0
        %3121 = vmatpush1.msra.mxu0 0.0
        %3122 = vmatprep.subr.mxu0 0.0
        %3123 = vmatpush1.msra.mxu0 0.0
        %3124 = vmatprep.subr.mxu0 0.0
        %3125 = vmatpush1.msra.mxu0 0.0
        %3126 = vmatprep.subr.mxu0 0.0
        %3127 = vmatpush1.msra.mxu0 0.0
        %3128 = vmatprep.subr.mxu0 0.0
        %3129 = vmatpush1.msra.mxu0 0.0
        %3130 = vmatprep.subr.mxu0 0.0
        %3131 = vmatpush1.msra.mxu0 0.0
        %3132 = vmatprep.subr.mxu0 0.0
        %3133 = vmatpush1.msra.mxu0 0.0
        %3134 = vmatprep.subr.mxu0 0.0
        %3135 = vmatpush1.msra.mxu0 0.0
        %3136 = vmatprep.subr.mxu0 0.0
        %3137 = vmatpush1.msra.mxu0 0.0
        %3138 = vmatprep.subr.mxu0 0.0
        %3139 = vmatpush1.msra.mxu0 0.0
        %3140 = vmatprep.subr.mxu0 0.0
        %3141 = vmatpush1.msra.mxu0 0.0
        %3142 = vmatprep.subr.mxu0 0.0
        %3143 = vmatpush1.msra.mxu0 0.0
        %3144 = vmatprep.subr.mxu0 0.0
        %3145 = vmatpush1.msra.mxu0 0.0
        %3146 = vmatprep.subr.mxu0 0.0
        %3147 = vmatpush1.msra.mxu0 0.0
        %3148 = vmatprep.subr.mxu0 0.0
        %3149 = vmatpush1.msra.mxu0 0.0
        %3150 = vmatprep.subr.mxu0 0.0
        %3151 = vmatpush1.msra.mxu0 0.0
        %3152 = vmatprep.subr.mxu0 0.0
        %3153 = vmatpush1.msra.mxu0 0.0
        %3154 = vmatprep.subr.mxu0 0.0
        %3155 = vmatpush1.msra.mxu0 0.0
        %3156 = vmatprep.subr.mxu0 0.0
        %3157 = vmatpush1.msra.mxu0 0.0
        %3158 = vmatprep.subr.mxu0 0.0
        %3159 = vmatpush1.msra.mxu0 0.0
        %3160 = vmatprep.subr.mxu0 0.0
        %3161 = vmatpush1.msra.mxu0 0.0
        %3162 = vmatprep.subr.mxu0 0.0
        %3163 = vmatpush1.msra.mxu0 0.0
        %3164 = vmatprep.subr.mxu0 0.0
        %3165 = vmatpush1.msra.mxu0 0.0
        %3166 = vmatprep.subr.mxu0 0.0
        %3167 = vmatpush1.msra.mxu0 0.0
        %3168 = vmatprep.subr.mxu0 0.0
        %3169 = vmatpush1.msra.mxu0 0.0
        %3170 = vmatprep.subr.mxu0 0.0
        %3171 = vmatpush1.msra.mxu0 0.0
        %3172 = vmatprep.subr.mxu0 0.0
        %3173 = vmatpush1.msra.mxu0 0.0
        %3174 = vmatprep.mubr.f32.mxu0 0.0
        %3175 = vmatmul.mubr.f32.gmra.mrb[0].mxu0 %v531
        %v3176 = vpop.f32.mrb[0].mxu0
        %v3177 = vadd.f32 0.0, %v3176
        %v3178 = vpop.f32.mrb[0].mxu0
        %3179 = vmatprep.mubr.f32.mxu0 0.0
        %3180 = vmatmul.mubr.f32.gmra.mrb[0].mxu0 %v534
        %v3181 = vpop.f32.mrb[0].mxu0
        %v3182 = vadd.f32 0.0, %v3181
        %v3183 = vpop.f32.mrb[0].mxu0
        %3184 = vdwg.mxu0
        %v3186 = vsel %vm225, %v2952, 0
        %3188 = vmatprep.subr.mxu0 0.0
        %3189 = vmatpush1.msra.mxu0 %v3186
        %3190 = vmatprep.subr.mxu0 0.0
        %3191 = vmatpush1.msra.mxu0 0.0
        %3192 = vmatprep.subr.mxu0 0.0
        %3193 = vmatpush1.msra.mxu0 0.0
        %3194 = vmatprep.subr.mxu0 0.0
        %3195 = vmatpush1.msra.mxu0 0.0
        %3196 = vmatprep.subr.mxu0 0.0
        %3197 = vmatpush1.msra.mxu0 0.0
        %3198 = vmatprep.subr.mxu0 0.0
        %3199 = vmatpush1.msra.mxu0 0.0
        %3200 = vmatprep.subr.mxu0 0.0
        %3201 = vmatpush1.msra.mxu0 0.0
        %3202 = vmatprep.subr.mxu0 0.0
        %3203 = vmatpush1.msra.mxu0 0.0
        %3204 = vmatprep.subr.mxu0 0.0
        %3205 = vmatpush1.msra.mxu0 0.0
        %3206 = vmatprep.subr.mxu0 0.0
        %3207 = vmatpush1.msra.mxu0 0.0
        %3208 = vmatprep.subr.mxu0 0.0
        %3209 = vmatpush1.msra.mxu0 0.0
        %3210 = vmatprep.subr.mxu0 0.0
        %3211 = vmatpush1.msra.mxu0 0.0
        %3212 = vmatprep.subr.mxu0 0.0
        %3213 = vmatpush1.msra.mxu0 0.0
        %3214 = vmatprep.subr.mxu0 0.0
        %3215 = vmatpush1.msra.mxu0 0.0
        %3216 = vmatprep.subr.mxu0 0.0
        %3217 = vmatpush1.msra.mxu0 0.0
        %3218 = vmatprep.subr.mxu0 0.0
        %3219 = vmatpush1.msra.mxu0 0.0
        %3220 = vmatprep.subr.mxu0 0.0
        %3221 = vmatpush1.msra.mxu0 0.0
        %3222 = vmatprep.subr.mxu0 0.0
        %3223 = vmatpush1.msra.mxu0 0.0
        %3224 = vmatprep.subr.mxu0 0.0
        %3225 = vmatpush1.msra.mxu0 0.0
        %3226 = vmatprep.subr.mxu0 0.0
        %3227 = vmatpush1.msra.mxu0 0.0
        %3228 = vmatprep.subr.mxu0 0.0
        %3229 = vmatpush1.msra.mxu0 0.0
        %3230 = vmatprep.subr.mxu0 0.0
        %3231 = vmatpush1.msra.mxu0 0.0
        %3232 = vmatprep.subr.mxu0 0.0
        %3233 = vmatpush1.msra.mxu0 0.0
        %3234 = vmatprep.subr.mxu0 0.0
        %3235 = vmatpush1.msra.mxu0 0.0
        %3236 = vmatprep.subr.mxu0 0.0
        %3237 = vmatpush1.msra.mxu0 0.0
        %3238 = vmatprep.subr.mxu0 0.0
        %3239 = vmatpush1.msra.mxu0 0.0
        %3240 = vmatprep.subr.mxu0 0.0
        %3241 = vmatpush1.msra.mxu0 0.0
        %3242 = vmatprep.subr.mxu0 0.0
        %3243 = vmatpush1.msra.mxu0 0.0
        %3244 = vmatprep.subr.mxu0 0.0
        %3245 = vmatpush1.msra.mxu0 0.0
        %3246 = vmatprep.subr.mxu0 0.0
        %3247 = vmatpush1.msra.mxu0 0.0
        %3248 = vmatprep.subr.mxu0 0.0
        %3249 = vmatpush1.msra.mxu0 0.0
        %3250 = vmatprep.subr.mxu0 0.0
        %3251 = vmatpush1.msra.mxu0 0.0
        %3252 = vmatprep.mubr.f32.mxu0 0.0
        %3253 = vmatmul.mubr.f32.gmra.mrb[0].mxu0 %v615
        %v3254 = vpop.f32.mrb[0].mxu0
        %v3255 = vadd.f32 %v3177, %v3254
        %v3256 = vpop.f32.mrb[0].mxu0
        %3257 = vmatprep.mubr.f32.mxu0 0.0
        %3258 = vmatmul.mubr.f32.gmra.mrb[0].mxu0 %v618
        %v3259 = vpop.f32.mrb[0].mxu0
        %v3260 = vadd.f32 %v3182, %v3259
        %v3261 = vpop.f32.mrb[0].mxu0
        %3262 = vdwg.mxu0
        %s3263 = scalar_lea.vmem %s121, 48 [#allocation5]
        %v3264 = vld [vmem:[%s3263] sm:$0xff]
        %s3265 = sld [smem:[#allocation3 + $0x300]]
        %v3266 = vstv %s3265
        %v3267 = vmul.f32 %v3264, %v3266
        %s3268 = sld [smem:[#allocation3 + $0x302]]
        %v3269 = vstv %s3268
        %v3270 = vmul.f32 %v3264, %v3269
        %3272 = vrot.lane.b32.xlu0 %v3270, 1
        %v3273 = vpop.permute.xlu0 %3272
        %v3275 = vadd.f32 %v3267, %v3273
        %s3276 = sld [smem:[#allocation3 + $0x306]]
        %v3277 = vstv %s3276
        %v3278 = vmul.f32 %v3264, %v3277
        %v3280 = vrot.slane %v3278, 7
        %v3282 = vadd.f32 %v3275, %v3280
        %s3283 = sld [smem:[#allocation3 + $0x308]]
        %v3284 = vstv %s3283
        %v3285 = vmul.f32 %v3264, %v3284
        %v3287 = vrot.slane %v3285, 7
        %3288 = vrot.lane.b32.xlu0 %v3287, 1
        %v3289 = vpop.permute.xlu0 %3288
        %v3291 = vadd.f32 %v3282, %v3289
        %s3292 = sld [smem:[#allocation3 + $0x301]]
        %v3293 = vstv %s3292
        %v3294 = vmul.f32 %v3264, %v3293
        %s3295 = sld [smem:[#allocation3 + $0x307]]
        %v3296 = vstv %s3295
        %v3297 = vmul.f32 %v3264, %v3296
        %v3299 = vrot.slane %v3297, 7
        %v3301 = vadd.f32 %v3294, %v3299
        %s3302 = sld [smem:[#allocation3 + $0x303]]
        %v3303 = vstv %s3302
        %v3304 = vmul.f32 %v3264, %v3303
        %s3305 = sld [smem:[#allocation3 + $0x305]]
        %v3306 = vstv %s3305
        %v3307 = vmul.f32 %v3264, %v3306
        %3309 = vrot.lane.b32.xlu0 %v3307, 1
        %v3310 = vpop.permute.xlu0 %3309
        %v3312 = vadd.f32 %v3304, %v3310
        %s3313 = sld [smem:[#allocation3 + $0x304]]
        %v3314 = vstv %s3313
        %v3315 = vmul.f32 %v3264, %v3314
        %v3317 = vrot.slane %v3301, 1
        %3318 = vrot.lane.b32.xlu0 %v3317, 127
        %v3319 = vpop.permute.xlu0 %3318
        %v3320 = vsel %vm222, %v3319, 0
        %3322 = vmatprep.subr.mxu0 0.0
        %3323 = vmatpush1.msra.mxu0 %v227
        %3324 = vmatprep.subr.mxu0 0.0
        %3325 = vmatpush1.msra.mxu0 0.0
        %3326 = vmatprep.subr.mxu0 0.0
        %3327 = vmatpush1.msra.mxu0 0.0
        %3328 = vmatprep.subr.mxu0 0.0
        %3329 = vmatpush1.msra.mxu0 0.0
        %3330 = vmatprep.subr.mxu0 0.0
        %3331 = vmatpush1.msra.mxu0 0.0
        %3332 = vmatprep.subr.mxu0 0.0
        %3333 = vmatpush1.msra.mxu0 0.0
        %3334 = vmatprep.subr.mxu0 0.0
        %3335 = vmatpush1.msra.mxu0 0.0
        %3336 = vmatprep.subr.mxu0 0.0
        %3337 = vmatpush1.msra.mxu0 0.0
        %3338 = vmatprep.subr.mxu0 0.0
        %3339 = vmatpush1.msra.mxu0 0.0
        %3340 = vmatprep.subr.mxu0 0.0
        %3341 = vmatpush1.msra.mxu0 0.0
        %3342 = vmatprep.subr.mxu0 0.0
        %3343 = vmatpush1.msra.mxu0 0.0
        %3344 = vmatprep.subr.mxu0 0.0
        %3345 = vmatpush1.msra.mxu0 0.0
        %3346 = vmatprep.subr.mxu0 0.0
        %3347 = vmatpush1.msra.mxu0 0.0
        %3348 = vmatprep.subr.mxu0 0.0
        %3349 = vmatpush1.msra.mxu0 0.0
        %3350 = vmatprep.subr.mxu0 0.0
        %3351 = vmatpush1.msra.mxu0 0.0
        %3352 = vmatprep.subr.mxu0 0.0
        %3353 = vmatpush1.msra.mxu0 0.0
        %3354 = vmatprep.subr.mxu0 0.0
        %3355 = vmatpush1.msra.mxu0 0.0
        %3356 = vmatprep.subr.mxu0 0.0
        %3357 = vmatpush1.msra.mxu0 0.0
        %3358 = vmatprep.subr.mxu0 0.0
        %3359 = vmatpush1.msra.mxu0 0.0
        %3360 = vmatprep.subr.mxu0 0.0
        %3361 = vmatpush1.msra.mxu0 0.0
        %3362 = vmatprep.subr.mxu0 0.0
        %3363 = vmatpush1.msra.mxu0 0.0
        %3364 = vmatprep.subr.mxu0 0.0
        %3365 = vmatpush1.msra.mxu0 0.0
        %3366 = vmatprep.subr.mxu0 0.0
        %3367 = vmatpush1.msra.mxu0 0.0
        %3368 = vmatprep.subr.mxu0 0.0
        %3369 = vmatpush1.msra.mxu0 0.0
        %3370 = vmatprep.subr.mxu0 0.0
        %3371 = vmatpush1.msra.mxu0 0.0
        %3372 = vmatprep.subr.mxu0 0.0
        %3373 = vmatpush1.msra.mxu0 0.0
        %3374 = vmatprep.subr.mxu0 0.0
        %3375 = vmatpush1.msra.mxu0 0.0
        %3376 = vmatprep.subr.mxu0 0.0
        %3377 = vmatpush1.msra.mxu0 0.0
        %3378 = vmatprep.subr.mxu0 0.0
        %3379 = vmatpush1.msra.mxu0 0.0
        %3380 = vmatprep.subr.mxu0 0.0
        %3381 = vmatpush1.msra.mxu0 0.0
        %3382 = vmatprep.subr.mxu0 0.0
        %3383 = vmatpush1.msra.mxu0 0.0
        %3384 = vmatprep.subr.mxu0 0.0
        %3385 = vmatpush1.msra.mxu0 0.0
        %3386 = vmatprep.mubr.f32.mxu0 0.0
        %3387 = vmatmul.mubr.f32.gmra.mrb[0].mxu0 %v3320
        %v3388 = vpop.f32.mrb[0].mxu0
        %v3389 = vadd.f32 0.0, %v3388
        %v3390 = vpop.f32.mrb[0].mxu0
        %3391 = vdwg.mxu0
        %v3393 = vrot.slane %v3291, 1
        %3394 = vrot.lane.b32.xlu0 %v3393, 127
        %v3395 = vpop.permute.xlu0 %3394
        %v3396 = vsel %vm222, %v3395, 0
        %3398 = vmatprep.subr.mxu0 0.0
        %3399 = vmatpush1.msra.mxu0 %v306
        %3400 = vmatprep.subr.mxu0 0.0
        %3401 = vmatpush1.msra.mxu0 0.0
        %3402 = vmatprep.subr.mxu0 0.0
        %3403 = vmatpush1.msra.mxu0 0.0
        %3404 = vmatprep.subr.mxu0 0.0
        %3405 = vmatpush1.msra.mxu0 0.0
        %3406 = vmatprep.subr.mxu0 0.0
        %3407 = vmatpush1.msra.mxu0 0.0
        %3408 = vmatprep.subr.mxu0 0.0
        %3409 = vmatpush1.msra.mxu0 0.0
        %3410 = vmatprep.subr.mxu0 0.0
        %3411 = vmatpush1.msra.mxu0 0.0
        %3412 = vmatprep.subr.mxu0 0.0
        %3413 = vmatpush1.msra.mxu0 0.0
        %3414 = vmatprep.subr.mxu0 0.0
        %3415 = vmatpush1.msra.mxu0 0.0
        %3416 = vmatprep.subr.mxu0 0.0
        %3417 = vmatpush1.msra.mxu0 0.0
        %3418 = vmatprep.subr.mxu0 0.0
        %3419 = vmatpush1.msra.mxu0 0.0
        %3420 = vmatprep.subr.mxu0 0.0
        %3421 = vmatpush1.msra.mxu0 0.0
        %3422 = vmatprep.subr.mxu0 0.0
        %3423 = vmatpush1.msra.mxu0 0.0
        %3424 = vmatprep.subr.mxu0 0.0
        %3425 = vmatpush1.msra.mxu0 0.0
        %3426 = vmatprep.subr.mxu0 0.0
        %3427 = vmatpush1.msra.mxu0 0.0
        %3428 = vmatprep.subr.mxu0 0.0
        %3429 = vmatpush1.msra.mxu0 0.0
        %3430 = vmatprep.subr.mxu0 0.0
        %3431 = vmatpush1.msra.mxu0 0.0
        %3432 = vmatprep.subr.mxu0 0.0
        %3433 = vmatpush1.msra.mxu0 0.0
        %3434 = vmatprep.subr.mxu0 0.0
        %3435 = vmatpush1.msra.mxu0 0.0
        %3436 = vmatprep.subr.mxu0 0.0
        %3437 = vmatpush1.msra.mxu0 0.0
        %3438 = vmatprep.subr.mxu0 0.0
        %3439 = vmatpush1.msra.mxu0 0.0
        %3440 = vmatprep.subr.mxu0 0.0
        %3441 = vmatpush1.msra.mxu0 0.0
        %3442 = vmatprep.subr.mxu0 0.0
        %3443 = vmatpush1.msra.mxu0 0.0
        %3444 = vmatprep.subr.mxu0 0.0
        %3445 = vmatpush1.msra.mxu0 0.0
        %3446 = vmatprep.subr.mxu0 0.0
        %3447 = vmatpush1.msra.mxu0 0.0
        %3448 = vmatprep.subr.mxu0 0.0
        %3449 = vmatpush1.msra.mxu0 0.0
        %3450 = vmatprep.subr.mxu0 0.0
        %3451 = vmatpush1.msra.mxu0 0.0
        %3452 = vmatprep.subr.mxu0 0.0
        %3453 = vmatpush1.msra.mxu0 0.0
        %3454 = vmatprep.subr.mxu0 0.0
        %3455 = vmatpush1.msra.mxu0 0.0
        %3456 = vmatprep.subr.mxu0 0.0
        %3457 = vmatpush1.msra.mxu0 0.0
        %3458 = vmatprep.subr.mxu0 0.0
        %3459 = vmatpush1.msra.mxu0 0.0
        %3460 = vmatprep.subr.mxu0 0.0
        %3461 = vmatpush1.msra.mxu0 0.0
        %3462 = vmatprep.mubr.f32.mxu0 0.0
        %3463 = vmatmul.mubr.f32.gmra.mrb[0].mxu0 %v3396
        %v3464 = vpop.f32.mrb[0].mxu0
        %v3465 = vadd.f32 %v3389, %v3464
        %v3466 = vpop.f32.mrb[0].mxu0
        %3467 = vdwg.mxu0
        %v3469 = vrot.slane %v3315, 1
        %3470 = vrot.lane.b32.xlu0 %v3469, 127
        %v3471 = vpop.permute.xlu0 %3470
        %v3472 = vsel %vm222, %v3471, 0
        %3474 = vmatprep.subr.mxu0 0.0
        %3475 = vmatpush1.msra.mxu0 %v227
        %3476 = vmatprep.subr.mxu0 0.0
        %3477 = vmatpush1.msra.mxu0 0.0
        %3478 = vmatprep.subr.mxu0 0.0
        %3479 = vmatpush1.msra.mxu0 0.0
        %3480 = vmatprep.subr.mxu0 0.0
        %3481 = vmatpush1.msra.mxu0 0.0
        %3482 = vmatprep.subr.mxu0 0.0
        %3483 = vmatpush1.msra.mxu0 0.0
        %3484 = vmatprep.subr.mxu0 0.0
        %3485 = vmatpush1.msra.mxu0 0.0
        %3486 = vmatprep.subr.mxu0 0.0
        %3487 = vmatpush1.msra.mxu0 0.0
        %3488 = vmatprep.subr.mxu0 0.0
        %3489 = vmatpush1.msra.mxu0 0.0
        %3490 = vmatprep.subr.mxu0 0.0
        %3491 = vmatpush1.msra.mxu0 0.0
        %3492 = vmatprep.subr.mxu0 0.0
        %3493 = vmatpush1.msra.mxu0 0.0
        %3494 = vmatprep.subr.mxu0 0.0
        %3495 = vmatpush1.msra.mxu0 0.0
        %3496 = vmatprep.subr.mxu0 0.0
        %3497 = vmatpush1.msra.mxu0 0.0
        %3498 = vmatprep.subr.mxu0 0.0
        %3499 = vmatpush1.msra.mxu0 0.0
        %3500 = vmatprep.subr.mxu0 0.0
        %3501 = vmatpush1.msra.mxu0 0.0
        %3502 = vmatprep.subr.mxu0 0.0
        %3503 = vmatpush1.msra.mxu0 0.0
        %3504 = vmatprep.subr.mxu0 0.0
        %3505 = vmatpush1.msra.mxu0 0.0
        %3506 = vmatprep.subr.mxu0 0.0
        %3507 = vmatpush1.msra.mxu0 0.0
        %3508 = vmatprep.subr.mxu0 0.0
        %3509 = vmatpush1.msra.mxu0 0.0
        %3510 = vmatprep.subr.mxu0 0.0
        %3511 = vmatpush1.msra.mxu0 0.0
        %3512 = vmatprep.subr.mxu0 0.0
        %3513 = vmatpush1.msra.mxu0 0.0
        %3514 = vmatprep.subr.mxu0 0.0
        %3515 = vmatpush1.msra.mxu0 0.0
        %3516 = vmatprep.subr.mxu0 0.0
        %3517 = vmatpush1.msra.mxu0 0.0
        %3518 = vmatprep.subr.mxu0 0.0
        %3519 = vmatpush1.msra.mxu0 0.0
        %3520 = vmatprep.subr.mxu0 0.0
        %3521 = vmatpush1.msra.mxu0 0.0
        %3522 = vmatprep.subr.mxu0 0.0
        %3523 = vmatpush1.msra.mxu0 0.0
        %3524 = vmatprep.subr.mxu0 0.0
        %3525 = vmatpush1.msra.mxu0 0.0
        %3526 = vmatprep.subr.mxu0 0.0
        %3527 = vmatpush1.msra.mxu0 0.0
        %3528 = vmatprep.subr.mxu0 0.0
        %3529 = vmatpush1.msra.mxu0 0.0
        %3530 = vmatprep.subr.mxu0 0.0
        %3531 = vmatpush1.msra.mxu0 0.0
        %3532 = vmatprep.subr.mxu0 0.0
        %3533 = vmatpush1.msra.mxu0 0.0
        %3534 = vmatprep.subr.mxu0 0.0
        %3535 = vmatpush1.msra.mxu0 0.0
        %3536 = vmatprep.subr.mxu0 0.0
        %3537 = vmatpush1.msra.mxu0 0.0
        %3538 = vmatprep.mubr.f32.mxu0 0.0
        %3539 = vmatmul.mubr.f32.gmra.mrb[0].mxu0 %v3472
        %v3540 = vpop.f32.mrb[0].mxu0
        %v3541 = vadd.f32 0.0, %v3540
        %v3542 = vpop.f32.mrb[0].mxu0
        %3543 = vdwg.mxu0
        %v3545 = vrot.slane %v3312, 1
        %3546 = vrot.lane.b32.xlu0 %v3545, 127
        %v3547 = vpop.permute.xlu0 %3546
        %v3548 = vsel %vm222, %v3547, 0
        %3550 = vmatprep.subr.mxu0 0.0
        %3551 = vmatpush1.msra.mxu0 %v306
        %3552 = vmatprep.subr.mxu0 0.0
        %3553 = vmatpush1.msra.mxu0 0.0
        %3554 = vmatprep.subr.mxu0 0.0
        %3555 = vmatpush1.msra.mxu0 0.0
        %3556 = vmatprep.subr.mxu0 0.0
        %3557 = vmatpush1.msra.mxu0 0.0
        %3558 = vmatprep.subr.mxu0 0.0
        %3559 = vmatpush1.msra.mxu0 0.0
        %3560 = vmatprep.subr.mxu0 0.0
        %3561 = vmatpush1.msra.mxu0 0.0
        %3562 = vmatprep.subr.mxu0 0.0
        %3563 = vmatpush1.msra.mxu0 0.0
        %3564 = vmatprep.subr.mxu0 0.0
        %3565 = vmatpush1.msra.mxu0 0.0
        %3566 = vmatprep.subr.mxu0 0.0
        %3567 = vmatpush1.msra.mxu0 0.0
        %3568 = vmatprep.subr.mxu0 0.0
        %3569 = vmatpush1.msra.mxu0 0.0
        %3570 = vmatprep.subr.mxu0 0.0
        %3571 = vmatpush1.msra.mxu0 0.0
        %3572 = vmatprep.subr.mxu0 0.0
        %3573 = vmatpush1.msra.mxu0 0.0
        %3574 = vmatprep.subr.mxu0 0.0
        %3575 = vmatpush1.msra.mxu0 0.0
        %3576 = vmatprep.subr.mxu0 0.0
        %3577 = vmatpush1.msra.mxu0 0.0
        %3578 = vmatprep.subr.mxu0 0.0
        %3579 = vmatpush1.msra.mxu0 0.0
        %3580 = vmatprep.subr.mxu0 0.0
        %3581 = vmatpush1.msra.mxu0 0.0
        %3582 = vmatprep.subr.mxu0 0.0
        %3583 = vmatpush1.msra.mxu0 0.0
        %3584 = vmatprep.subr.mxu0 0.0
        %3585 = vmatpush1.msra.mxu0 0.0
        %3586 = vmatprep.subr.mxu0 0.0
        %3587 = vmatpush1.msra.mxu0 0.0
        %3588 = vmatprep.subr.mxu0 0.0
        %3589 = vmatpush1.msra.mxu0 0.0
        %3590 = vmatprep.subr.mxu0 0.0
        %3591 = vmatpush1.msra.mxu0 0.0
        %3592 = vmatprep.subr.mxu0 0.0
        %3593 = vmatpush1.msra.mxu0 0.0
        %3594 = vmatprep.subr.mxu0 0.0
        %3595 = vmatpush1.msra.mxu0 0.0
        %3596 = vmatprep.subr.mxu0 0.0
        %3597 = vmatpush1.msra.mxu0 0.0
        %3598 = vmatprep.subr.mxu0 0.0
        %3599 = vmatpush1.msra.mxu0 0.0
        %3600 = vmatprep.subr.mxu0 0.0
        %3601 = vmatpush1.msra.mxu0 0.0
        %3602 = vmatprep.subr.mxu0 0.0
        %3603 = vmatpush1.msra.mxu0 0.0
        %3604 = vmatprep.subr.mxu0 0.0
        %3605 = vmatpush1.msra.mxu0 0.0
        %3606 = vmatprep.subr.mxu0 0.0
        %3607 = vmatpush1.msra.mxu0 0.0
        %3608 = vmatprep.subr.mxu0 0.0
        %3609 = vmatpush1.msra.mxu0 0.0
        %3610 = vmatprep.subr.mxu0 0.0
        %3611 = vmatpush1.msra.mxu0 0.0
        %3612 = vmatprep.subr.mxu0 0.0
        %3613 = vmatpush1.msra.mxu0 0.0
        %3614 = vmatprep.mubr.f32.mxu0 0.0
        %3615 = vmatmul.mubr.f32.gmra.mrb[0].mxu0 %v3548
        %v3616 = vpop.f32.mrb[0].mxu0
        %v3617 = vadd.f32 %v3541, %v3616
        %v3618 = vpop.f32.mrb[0].mxu0
        %3619 = vdwg.mxu0
        %v3621 = vsel %vm225, %v3617, 0
        %3623 = vmatprep.subr.mxu0 0.0
        %3624 = vmatpush1.msra.mxu0 %v3621
        %3625 = vmatprep.subr.mxu0 0.0
        %3626 = vmatpush1.msra.mxu0 0.0
        %3627 = vmatprep.subr.mxu0 0.0
        %3628 = vmatpush1.msra.mxu0 0.0
        %3629 = vmatprep.subr.mxu0 0.0
        %3630 = vmatpush1.msra.mxu0 0.0
        %3631 = vmatprep.subr.mxu0 0.0
        %3632 = vmatpush1.msra.mxu0 0.0
        %3633 = vmatprep.subr.mxu0 0.0
        %3634 = vmatpush1.msra.mxu0 0.0
        %3635 = vmatprep.subr.mxu0 0.0
        %3636 = vmatpush1.msra.mxu0 0.0
        %3637 = vmatprep.subr.mxu0 0.0
        %3638 = vmatpush1.msra.mxu0 0.0
        %3639 = vmatprep.subr.mxu0 0.0
        %3640 = vmatpush1.msra.mxu0 0.0
        %3641 = vmatprep.subr.mxu0 0.0
        %3642 = vmatpush1.msra.mxu0 0.0
        %3643 = vmatprep.subr.mxu0 0.0
        %3644 = vmatpush1.msra.mxu0 0.0
        %3645 = vmatprep.subr.mxu0 0.0
        %3646 = vmatpush1.msra.mxu0 0.0
        %3647 = vmatprep.subr.mxu0 0.0
        %3648 = vmatpush1.msra.mxu0 0.0
        %3649 = vmatprep.subr.mxu0 0.0
        %3650 = vmatpush1.msra.mxu0 0.0
        %3651 = vmatprep.subr.mxu0 0.0
        %3652 = vmatpush1.msra.mxu0 0.0
        %3653 = vmatprep.subr.mxu0 0.0
        %3654 = vmatpush1.msra.mxu0 0.0
        %3655 = vmatprep.subr.mxu0 0.0
        %3656 = vmatpush1.msra.mxu0 0.0
        %3657 = vmatprep.subr.mxu0 0.0
        %3658 = vmatpush1.msra.mxu0 0.0
        %3659 = vmatprep.subr.mxu0 0.0
        %3660 = vmatpush1.msra.mxu0 0.0
        %3661 = vmatprep.subr.mxu0 0.0
        %3662 = vmatpush1.msra.mxu0 0.0
        %3663 = vmatprep.subr.mxu0 0.0
        %3664 = vmatpush1.msra.mxu0 0.0
        %3665 = vmatprep.subr.mxu0 0.0
        %3666 = vmatpush1.msra.mxu0 0.0
        %3667 = vmatprep.subr.mxu0 0.0
        %3668 = vmatpush1.msra.mxu0 0.0
        %3669 = vmatprep.subr.mxu0 0.0
        %3670 = vmatpush1.msra.mxu0 0.0
        %3671 = vmatprep.subr.mxu0 0.0
        %3672 = vmatpush1.msra.mxu0 0.0
        %3673 = vmatprep.subr.mxu0 0.0
        %3674 = vmatpush1.msra.mxu0 0.0
        %3675 = vmatprep.subr.mxu0 0.0
        %3676 = vmatpush1.msra.mxu0 0.0
        %3677 = vmatprep.subr.mxu0 0.0
        %3678 = vmatpush1.msra.mxu0 0.0
        %3679 = vmatprep.subr.mxu0 0.0
        %3680 = vmatpush1.msra.mxu0 0.0
        %3681 = vmatprep.subr.mxu0 0.0
        %3682 = vmatpush1.msra.mxu0 0.0
        %3683 = vmatprep.subr.mxu0 0.0
        %3684 = vmatpush1.msra.mxu0 0.0
        %3685 = vmatprep.subr.mxu0 0.0
        %3686 = vmatpush1.msra.mxu0 0.0
        %3687 = vmatprep.mubr.f32.mxu0 0.0
        %3688 = vmatmul.mubr.f32.gmra.mrb[0].mxu0 %v531
        %v3689 = vpop.f32.mrb[0].mxu0
        %v3690 = vadd.f32 0.0, %v3689
        %v3691 = vpop.f32.mrb[0].mxu0
        %3692 = vmatprep.mubr.f32.mxu0 0.0
        %3693 = vmatmul.mubr.f32.gmra.mrb[0].mxu0 %v534
        %v3694 = vpop.f32.mrb[0].mxu0
        %v3695 = vadd.f32 0.0, %v3694
        %v3696 = vpop.f32.mrb[0].mxu0
        %3697 = vdwg.mxu0
        %v3699 = vsel %vm225, %v3465, 0
        %3701 = vmatprep.subr.mxu0 0.0
        %3702 = vmatpush1.msra.mxu0 %v3699
        %3703 = vmatprep.subr.mxu0 0.0
        %3704 = vmatpush1.msra.mxu0 0.0
        %3705 = vmatprep.subr.mxu0 0.0
        %3706 = vmatpush1.msra.mxu0 0.0
        %3707 = vmatprep.subr.mxu0 0.0
        %3708 = vmatpush1.msra.mxu0 0.0
        %3709 = vmatprep.subr.mxu0 0.0
        %3710 = vmatpush1.msra.mxu0 0.0
        %3711 = vmatprep.subr.mxu0 0.0
        %3712 = vmatpush1.msra.mxu0 0.0
        %3713 = vmatprep.subr.mxu0 0.0
        %3714 = vmatpush1.msra.mxu0 0.0
        %3715 = vmatprep.subr.mxu0 0.0
        %3716 = vmatpush1.msra.mxu0 0.0
        %3717 = vmatprep.subr.mxu0 0.0
        %3718 = vmatpush1.msra.mxu0 0.0
        %3719 = vmatprep.subr.mxu0 0.0
        %3720 = vmatpush1.msra.mxu0 0.0
        %3721 = vmatprep.subr.mxu0 0.0
        %3722 = vmatpush1.msra.mxu0 0.0
        %3723 = vmatprep.subr.mxu0 0.0
        %3724 = vmatpush1.msra.mxu0 0.0
        %3725 = vmatprep.subr.mxu0 0.0
        %3726 = vmatpush1.msra.mxu0 0.0
        %3727 = vmatprep.subr.mxu0 0.0
        %3728 = vmatpush1.msra.mxu0 0.0
        %3729 = vmatprep.subr.mxu0 0.0
        %3730 = vmatpush1.msra.mxu0 0.0
        %3731 = vmatprep.subr.mxu0 0.0
        %3732 = vmatpush1.msra.mxu0 0.0
        %3733 = vmatprep.subr.mxu0 0.0
        %3734 = vmatpush1.msra.mxu0 0.0
        %3735 = vmatprep.subr.mxu0 0.0
        %3736 = vmatpush1.msra.mxu0 0.0
        %3737 = vmatprep.subr.mxu0 0.0
        %3738 = vmatpush1.msra.mxu0 0.0
        %3739 = vmatprep.subr.mxu0 0.0
        %3740 = vmatpush1.msra.mxu0 0.0
        %3741 = vmatprep.subr.mxu0 0.0
        %3742 = vmatpush1.msra.mxu0 0.0
        %3743 = vmatprep.subr.mxu0 0.0
        %3744 = vmatpush1.msra.mxu0 0.0
        %3745 = vmatprep.subr.mxu0 0.0
        %3746 = vmatpush1.msra.mxu0 0.0
        %3747 = vmatprep.subr.mxu0 0.0
        %3748 = vmatpush1.msra.mxu0 0.0
        %3749 = vmatprep.subr.mxu0 0.0
        %3750 = vmatpush1.msra.mxu0 0.0
        %3751 = vmatprep.subr.mxu0 0.0
        %3752 = vmatpush1.msra.mxu0 0.0
        %3753 = vmatprep.subr.mxu0 0.0
        %3754 = vmatpush1.msra.mxu0 0.0
        %3755 = vmatprep.subr.mxu0 0.0
        %3756 = vmatpush1.msra.mxu0 0.0
        %3757 = vmatprep.subr.mxu0 0.0
        %3758 = vmatpush1.msra.mxu0 0.0
        %3759 = vmatprep.subr.mxu0 0.0
        %3760 = vmatpush1.msra.mxu0 0.0
        %3761 = vmatprep.subr.mxu0 0.0
        %3762 = vmatpush1.msra.mxu0 0.0
        %3763 = vmatprep.subr.mxu0 0.0
        %3764 = vmatpush1.msra.mxu0 0.0
        %3765 = vmatprep.mubr.f32.mxu0 0.0
        %3766 = vmatmul.mubr.f32.gmra.mrb[0].mxu0 %v615
        %v3767 = vpop.f32.mrb[0].mxu0
        %v3768 = vadd.f32 %v3690, %v3767
        %v3769 = vpop.f32.mrb[0].mxu0
        %3770 = vmatprep.mubr.f32.mxu0 0.0
        %3771 = vmatmul.mubr.f32.gmra.mrb[0].mxu0 %v618
        %v3772 = vpop.f32.mrb[0].mxu0
        %v3773 = vadd.f32 %v3695, %v3772
        %v3774 = vpop.f32.mrb[0].mxu0
        %3775 = vdwg.mxu0
        %s3776 = scalar_lea.vmem %s121, 56 [#allocation5]
        %v3777 = vld [vmem:[%s3776] sm:$0xff]
        %s3778 = sld [smem:[#allocation3 + $0x380]]
        %v3779 = vstv %s3778
        %v3780 = vmul.f32 %v3777, %v3779
        %s3781 = sld [smem:[#allocation3 + $0x382]]
        %v3782 = vstv %s3781
        %v3783 = vmul.f32 %v3777, %v3782
        %3785 = vrot.lane.b32.xlu0 %v3783, 1
        %v3786 = vpop.permute.xlu0 %3785
        %v3788 = vadd.f32 %v3780, %v3786
        %s3789 = sld [smem:[#allocation3 + $0x386]]
        %v3790 = vstv %s3789
        %v3791 = vmul.f32 %v3777, %v3790
        %v3793 = vrot.slane %v3791, 7
        %v3795 = vadd.f32 %v3788, %v3793
        %s3796 = sld [smem:[#allocation3 + $0x388]]
        %v3797 = vstv %s3796
        %v3798 = vmul.f32 %v3777, %v3797
        %v3800 = vrot.slane %v3798, 7
        %3801 = vrot.lane.b32.xlu0 %v3800, 1
        %v3802 = vpop.permute.xlu0 %3801
        %v3804 = vadd.f32 %v3795, %v3802
        %s3805 = sld [smem:[#allocation3 + $0x381]]
        %v3806 = vstv %s3805
        %v3807 = vmul.f32 %v3777, %v3806
        %s3808 = sld [smem:[#allocation3 + $0x387]]
        %v3809 = vstv %s3808
        %v3810 = vmul.f32 %v3777, %v3809
        %v3812 = vrot.slane %v3810, 7
        %v3814 = vadd.f32 %v3807, %v3812
        %s3815 = sld [smem:[#allocation3 + $0x383]]
        %v3816 = vstv %s3815
        %v3817 = vmul.f32 %v3777, %v3816
        %s3818 = sld [smem:[#allocation3 + $0x385]]
        %v3819 = vstv %s3818
        %v3820 = vmul.f32 %v3777, %v3819
        %3822 = vrot.lane.b32.xlu0 %v3820, 1
        %v3823 = vpop.permute.xlu0 %3822
        %v3825 = vadd.f32 %v3817, %v3823
        %s3826 = sld [smem:[#allocation3 + $0x384]]
        %v3827 = vstv %s3826
        %v3828 = vmul.f32 %v3777, %v3827
        %v3830 = vrot.slane %v3814, 1
        %3831 = vrot.lane.b32.xlu0 %v3830, 127
        %v3832 = vpop.permute.xlu0 %3831
        %v3833 = vsel %vm222, %v3832, 0
        %3835 = vmatprep.subr.mxu0 0.0
        %3836 = vmatpush1.msra.mxu0 %v227
        %3837 = vmatprep.subr.mxu0 0.0
        %3838 = vmatpush1.msra.mxu0 0.0
        %3839 = vmatprep.subr.mxu0 0.0
        %3840 = vmatpush1.msra.mxu0 0.0
        %3841 = vmatprep.subr.mxu0 0.0
        %3842 = vmatpush1.msra.mxu0 0.0
        %3843 = vmatprep.subr.mxu0 0.0
        %3844 = vmatpush1.msra.mxu0 0.0
        %3845 = vmatprep.subr.mxu0 0.0
        %3846 = vmatpush1.msra.mxu0 0.0
        %3847 = vmatprep.subr.mxu0 0.0
        %3848 = vmatpush1.msra.mxu0 0.0
        %3849 = vmatprep.subr.mxu0 0.0
        %3850 = vmatpush1.msra.mxu0 0.0
        %3851 = vmatprep.subr.mxu0 0.0
        %3852 = vmatpush1.msra.mxu0 0.0
        %3853 = vmatprep.subr.mxu0 0.0
        %3854 = vmatpush1.msra.mxu0 0.0
        %3855 = vmatprep.subr.mxu0 0.0
        %3856 = vmatpush1.msra.mxu0 0.0
        %3857 = vmatprep.subr.mxu0 0.0
        %3858 = vmatpush1.msra.mxu0 0.0
        %3859 = vmatprep.subr.mxu0 0.0
        %3860 = vmatpush1.msra.mxu0 0.0
        %3861 = vmatprep.subr.mxu0 0.0
        %3862 = vmatpush1.msra.mxu0 0.0
        %3863 = vmatprep.subr.mxu0 0.0
        %3864 = vmatpush1.msra.mxu0 0.0
        %3865 = vmatprep.subr.mxu0 0.0
        %3866 = vmatpush1.msra.mxu0 0.0
        %3867 = vmatprep.subr.mxu0 0.0
        %3868 = vmatpush1.msra.mxu0 0.0
        %3869 = vmatprep.subr.mxu0 0.0
        %3870 = vmatpush1.msra.mxu0 0.0
        %3871 = vmatprep.subr.mxu0 0.0
        %3872 = vmatpush1.msra.mxu0 0.0
        %3873 = vmatprep.subr.mxu0 0.0
        %3874 = vmatpush1.msra.mxu0 0.0
        %3875 = vmatprep.subr.mxu0 0.0
        %3876 = vmatpush1.msra.mxu0 0.0
        %3877 = vmatprep.subr.mxu0 0.0
        %3878 = vmatpush1.msra.mxu0 0.0
        %3879 = vmatprep.subr.mxu0 0.0
        %3880 = vmatpush1.msra.mxu0 0.0
        %3881 = vmatprep.subr.mxu0 0.0
        %3882 = vmatpush1.msra.mxu0 0.0
        %3883 = vmatprep.subr.mxu0 0.0
        %3884 = vmatpush1.msra.mxu0 0.0
        %3885 = vmatprep.subr.mxu0 0.0
        %3886 = vmatpush1.msra.mxu0 0.0
        %3887 = vmatprep.subr.mxu0 0.0
        %3888 = vmatpush1.msra.mxu0 0.0
        %3889 = vmatprep.subr.mxu0 0.0
        %3890 = vmatpush1.msra.mxu0 0.0
        %3891 = vmatprep.subr.mxu0 0.0
        %3892 = vmatpush1.msra.mxu0 0.0
        %3893 = vmatprep.subr.mxu0 0.0
        %3894 = vmatpush1.msra.mxu0 0.0
        %3895 = vmatprep.subr.mxu0 0.0
        %3896 = vmatpush1.msra.mxu0 0.0
        %3897 = vmatprep.subr.mxu0 0.0
        %3898 = vmatpush1.msra.mxu0 0.0
        %3899 = vmatprep.mubr.f32.mxu0 0.0
        %3900 = vmatmul.mubr.f32.gmra.mrb[0].mxu0 %v3833
        %v3901 = vpop.f32.mrb[0].mxu0
        %v3902 = vadd.f32 0.0, %v3901
        %v3903 = vpop.f32.mrb[0].mxu0
        %3904 = vdwg.mxu0
        %v3906 = vrot.slane %v3804, 1
        %3907 = vrot.lane.b32.xlu0 %v3906, 127
        %v3908 = vpop.permute.xlu0 %3907
        %v3909 = vsel %vm222, %v3908, 0
        %3911 = vmatprep.subr.mxu0 0.0
        %3912 = vmatpush1.msra.mxu0 %v306
        %3913 = vmatprep.subr.mxu0 0.0
        %3914 = vmatpush1.msra.mxu0 0.0
        %3915 = vmatprep.subr.mxu0 0.0
        %3916 = vmatpush1.msra.mxu0 0.0
        %3917 = vmatprep.subr.mxu0 0.0
        %3918 = vmatpush1.msra.mxu0 0.0
        %3919 = vmatprep.subr.mxu0 0.0
        %3920 = vmatpush1.msra.mxu0 0.0
        %3921 = vmatprep.subr.mxu0 0.0
        %3922 = vmatpush1.msra.mxu0 0.0
        %3923 = vmatprep.subr.mxu0 0.0
        %3924 = vmatpush1.msra.mxu0 0.0
        %3925 = vmatprep.subr.mxu0 0.0
        %3926 = vmatpush1.msra.mxu0 0.0
        %3927 = vmatprep.subr.mxu0 0.0
        %3928 = vmatpush1.msra.mxu0 0.0
        %3929 = vmatprep.subr.mxu0 0.0
        %3930 = vmatpush1.msra.mxu0 0.0
        %3931 = vmatprep.subr.mxu0 0.0
        %3932 = vmatpush1.msra.mxu0 0.0
        %3933 = vmatprep.subr.mxu0 0.0
        %3934 = vmatpush1.msra.mxu0 0.0
        %3935 = vmatprep.subr.mxu0 0.0
        %3936 = vmatpush1.msra.mxu0 0.0
        %3937 = vmatprep.subr.mxu0 0.0
        %3938 = vmatpush1.msra.mxu0 0.0
        %3939 = vmatprep.subr.mxu0 0.0
        %3940 = vmatpush1.msra.mxu0 0.0
        %3941 = vmatprep.subr.mxu0 0.0
        %3942 = vmatpush1.msra.mxu0 0.0
        %3943 = vmatprep.subr.mxu0 0.0
        %3944 = vmatpush1.msra.mxu0 0.0
        %3945 = vmatprep.subr.mxu0 0.0
        %3946 = vmatpush1.msra.mxu0 0.0
        %3947 = vmatprep.subr.mxu0 0.0
        %3948 = vmatpush1.msra.mxu0 0.0
        %3949 = vmatprep.subr.mxu0 0.0
        %3950 = vmatpush1.msra.mxu0 0.0
        %3951 = vmatprep.subr.mxu0 0.0
        %3952 = vmatpush1.msra.mxu0 0.0
        %3953 = vmatprep.subr.mxu0 0.0
        %3954 = vmatpush1.msra.mxu0 0.0
        %3955 = vmatprep.subr.mxu0 0.0
        %3956 = vmatpush1.msra.mxu0 0.0
        %3957 = vmatprep.subr.mxu0 0.0
        %3958 = vmatpush1.msra.mxu0 0.0
        %3959 = vmatprep.subr.mxu0 0.0
        %3960 = vmatpush1.msra.mxu0 0.0
        %3961 = vmatprep.subr.mxu0 0.0
        %3962 = vmatpush1.msra.mxu0 0.0
        %3963 = vmatprep.subr.mxu0 0.0
        %3964 = vmatpush1.msra.mxu0 0.0
        %3965 = vmatprep.subr.mxu0 0.0
        %3966 = vmatpush1.msra.mxu0 0.0
        %3967 = vmatprep.subr.mxu0 0.0
        %3968 = vmatpush1.msra.mxu0 0.0
        %3969 = vmatprep.subr.mxu0 0.0
        %3970 = vmatpush1.msra.mxu0 0.0
        %3971 = vmatprep.subr.mxu0 0.0
        %3972 = vmatpush1.msra.mxu0 0.0
        %3973 = vmatprep.subr.mxu0 0.0
        %3974 = vmatpush1.msra.mxu0 0.0
        %3975 = vmatprep.mubr.f32.mxu0 0.0
        %3976 = vmatmul.mubr.f32.gmra.mrb[0].mxu0 %v3909
        %v3977 = vpop.f32.mrb[0].mxu0
        %v3978 = vadd.f32 %v3902, %v3977
        %v3979 = vpop.f32.mrb[0].mxu0
        %3980 = vdwg.mxu0
        %v3982 = vrot.slane %v3828, 1
        %3983 = vrot.lane.b32.xlu0 %v3982, 127
        %v3984 = vpop.permute.xlu0 %3983
        %v3985 = vsel %vm222, %v3984, 0
        %3987 = vmatprep.subr.mxu0 0.0
        %3988 = vmatpush1.msra.mxu0 %v227
        %3989 = vmatprep.subr.mxu0 0.0
        %3990 = vmatpush1.msra.mxu0 0.0
        %3991 = vmatprep.subr.mxu0 0.0
        %3992 = vmatpush1.msra.mxu0 0.0
        %3993 = vmatprep.subr.mxu0 0.0
        %3994 = vmatpush1.msra.mxu0 0.0
        %3995 = vmatprep.subr.mxu0 0.0
        %3996 = vmatpush1.msra.mxu0 0.0
        %3997 = vmatprep.subr.mxu0 0.0
        %3998 = vmatpush1.msra.mxu0 0.0
        %3999 = vmatprep.subr.mxu0 0.0
        %4000 = vmatpush1.msra.mxu0 0.0
        %4001 = vmatprep.subr.mxu0 0.0
        %4002 = vmatpush1.msra.mxu0 0.0
        %4003 = vmatprep.subr.mxu0 0.0
        %4004 = vmatpush1.msra.mxu0 0.0
        %4005 = vmatprep.subr.mxu0 0.0
        %4006 = vmatpush1.msra.mxu0 0.0
        %4007 = vmatprep.subr.mxu0 0.0
        %4008 = vmatpush1.msra.mxu0 0.0
        %4009 = vmatprep.subr.mxu0 0.0
        %4010 = vmatpush1.msra.mxu0 0.0
        %4011 = vmatprep.subr.mxu0 0.0
        %4012 = vmatpush1.msra.mxu0 0.0
        %4013 = vmatprep.subr.mxu0 0.0
        %4014 = vmatpush1.msra.mxu0 0.0
        %4015 = vmatprep.subr.mxu0 0.0
        %4016 = vmatpush1.msra.mxu0 0.0
        %4017 = vmatprep.subr.mxu0 0.0
        %4018 = vmatpush1.msra.mxu0 0.0
        %4019 = vmatprep.subr.mxu0 0.0
        %4020 = vmatpush1.msra.mxu0 0.0
        %4021 = vmatprep.subr.mxu0 0.0
        %4022 = vmatpush1.msra.mxu0 0.0
        %4023 = vmatprep.subr.mxu0 0.0
        %4024 = vmatpush1.msra.mxu0 0.0
        %4025 = vmatprep.subr.mxu0 0.0
        %4026 = vmatpush1.msra.mxu0 0.0
        %4027 = vmatprep.subr.mxu0 0.0
        %4028 = vmatpush1.msra.mxu0 0.0
        %4029 = vmatprep.subr.mxu0 0.0
        %4030 = vmatpush1.msra.mxu0 0.0
        %4031 = vmatprep.subr.mxu0 0.0
        %4032 = vmatpush1.msra.mxu0 0.0
        %4033 = vmatprep.subr.mxu0 0.0
        %4034 = vmatpush1.msra.mxu0 0.0
        %4035 = vmatprep.subr.mxu0 0.0
        %4036 = vmatpush1.msra.mxu0 0.0
        %4037 = vmatprep.subr.mxu0 0.0
        %4038 = vmatpush1.msra.mxu0 0.0
        %4039 = vmatprep.subr.mxu0 0.0
        %4040 = vmatpush1.msra.mxu0 0.0
        %4041 = vmatprep.subr.mxu0 0.0
        %4042 = vmatpush1.msra.mxu0 0.0
        %4043 = vmatprep.subr.mxu0 0.0
        %4044 = vmatpush1.msra.mxu0 0.0
        %4045 = vmatprep.subr.mxu0 0.0
        %4046 = vmatpush1.msra.mxu0 0.0
        %4047 = vmatprep.subr.mxu0 0.0
        %4048 = vmatpush1.msra.mxu0 0.0
        %4049 = vmatprep.subr.mxu0 0.0
        %4050 = vmatpush1.msra.mxu0 0.0
        %4051 = vmatprep.mubr.f32.mxu0 0.0
        %4052 = vmatmul.mubr.f32.gmra.mrb[0].mxu0 %v3985
        %v4053 = vpop.f32.mrb[0].mxu0
        %v4054 = vadd.f32 0.0, %v4053
        %v4055 = vpop.f32.mrb[0].mxu0
        %4056 = vdwg.mxu0
        %v4058 = vrot.slane %v3825, 1
        %4059 = vrot.lane.b32.xlu0 %v4058, 127
        %v4060 = vpop.permute.xlu0 %4059
        %v4061 = vsel %vm222, %v4060, 0
        %4063 = vmatprep.subr.mxu0 0.0
        %4064 = vmatpush1.msra.mxu0 %v306
        %4065 = vmatprep.subr.mxu0 0.0
        %4066 = vmatpush1.msra.mxu0 0.0
        %4067 = vmatprep.subr.mxu0 0.0
        %4068 = vmatpush1.msra.mxu0 0.0
        %4069 = vmatprep.subr.mxu0 0.0
        %4070 = vmatpush1.msra.mxu0 0.0
        %4071 = vmatprep.subr.mxu0 0.0
        %4072 = vmatpush1.msra.mxu0 0.0
        %4073 = vmatprep.subr.mxu0 0.0
        %4074 = vmatpush1.msra.mxu0 0.0
        %4075 = vmatprep.subr.mxu0 0.0
        %4076 = vmatpush1.msra.mxu0 0.0
        %4077 = vmatprep.subr.mxu0 0.0
        %4078 = vmatpush1.msra.mxu0 0.0
        %4079 = vmatprep.subr.mxu0 0.0
        %4080 = vmatpush1.msra.mxu0 0.0
        %4081 = vmatprep.subr.mxu0 0.0
        %4082 = vmatpush1.msra.mxu0 0.0
        %4083 = vmatprep.subr.mxu0 0.0
        %4084 = vmatpush1.msra.mxu0 0.0
        %4085 = vmatprep.subr.mxu0 0.0
        %4086 = vmatpush1.msra.mxu0 0.0
        %4087 = vmatprep.subr.mxu0 0.0
        %4088 = vmatpush1.msra.mxu0 0.0
        %4089 = vmatprep.subr.mxu0 0.0
        %4090 = vmatpush1.msra.mxu0 0.0
        %4091 = vmatprep.subr.mxu0 0.0
        %4092 = vmatpush1.msra.mxu0 0.0
        %4093 = vmatprep.subr.mxu0 0.0
        %4094 = vmatpush1.msra.mxu0 0.0
        %4095 = vmatprep.subr.mxu0 0.0
        %4096 = vmatpush1.msra.mxu0 0.0
        %4097 = vmatprep.subr.mxu0 0.0
        %4098 = vmatpush1.msra.mxu0 0.0
        %4099 = vmatprep.subr.mxu0 0.0
        %4100 = vmatpush1.msra.mxu0 0.0
        %4101 = vmatprep.subr.mxu0 0.0
        %4102 = vmatpush1.msra.mxu0 0.0
        %4103 = vmatprep.subr.mxu0 0.0
        %4104 = vmatpush1.msra.mxu0 0.0
        %4105 = vmatprep.subr.mxu0 0.0
        %4106 = vmatpush1.msra.mxu0 0.0
        %4107 = vmatprep.subr.mxu0 0.0
        %4108 = vmatpush1.msra.mxu0 0.0
        %4109 = vmatprep.subr.mxu0 0.0
        %4110 = vmatpush1.msra.mxu0 0.0
        %4111 = vmatprep.subr.mxu0 0.0
        %4112 = vmatpush1.msra.mxu0 0.0
        %4113 = vmatprep.subr.mxu0 0.0
        %4114 = vmatpush1.msra.mxu0 0.0
        %4115 = vmatprep.subr.mxu0 0.0
        %4116 = vmatpush1.msra.mxu0 0.0
        %4117 = vmatprep.subr.mxu0 0.0
        %4118 = vmatpush1.msra.mxu0 0.0
        %4119 = vmatprep.subr.mxu0 0.0
        %4120 = vmatpush1.msra.mxu0 0.0
        %4121 = vmatprep.subr.mxu0 0.0
        %4122 = vmatpush1.msra.mxu0 0.0
        %4123 = vmatprep.subr.mxu0 0.0
        %4124 = vmatpush1.msra.mxu0 0.0
        %4125 = vmatprep.subr.mxu0 0.0
        %4126 = vmatpush1.msra.mxu0 0.0
        %4127 = vmatprep.mubr.f32.mxu0 0.0
        %4128 = vmatmul.mubr.f32.gmra.mrb[0].mxu0 %v4061
        %v4129 = vpop.f32.mrb[0].mxu0
        %v4130 = vadd.f32 %v4054, %v4129
        %v4131 = vpop.f32.mrb[0].mxu0
        %4132 = vdwg.mxu0
        %v4134 = vsel %vm225, %v4130, 0
        %4136 = vmatprep.subr.mxu0 0.0
        %4137 = vmatpush1.msra.mxu0 %v4134
        %4138 = vmatprep.subr.mxu0 0.0
        %4139 = vmatpush1.msra.mxu0 0.0
        %4140 = vmatprep.subr.mxu0 0.0
        %4141 = vmatpush1.msra.mxu0 0.0
        %4142 = vmatprep.subr.mxu0 0.0
        %4143 = vmatpush1.msra.mxu0 0.0
        %4144 = vmatprep.subr.mxu0 0.0
        %4145 = vmatpush1.msra.mxu0 0.0
        %4146 = vmatprep.subr.mxu0 0.0
        %4147 = vmatpush1.msra.mxu0 0.0
        %4148 = vmatprep.subr.mxu0 0.0
        %4149 = vmatpush1.msra.mxu0 0.0
        %4150 = vmatprep.subr.mxu0 0.0
        %4151 = vmatpush1.msra.mxu0 0.0
        %4152 = vmatprep.subr.mxu0 0.0
        %4153 = vmatpush1.msra.mxu0 0.0
        %4154 = vmatprep.subr.mxu0 0.0
        %4155 = vmatpush1.msra.mxu0 0.0
        %4156 = vmatprep.subr.mxu0 0.0
        %4157 = vmatpush1.msra.mxu0 0.0
        %4158 = vmatprep.subr.mxu0 0.0
        %4159 = vmatpush1.msra.mxu0 0.0
        %4160 = vmatprep.subr.mxu0 0.0
        %4161 = vmatpush1.msra.mxu0 0.0
        %4162 = vmatprep.subr.mxu0 0.0
        %4163 = vmatpush1.msra.mxu0 0.0
        %4164 = vmatprep.subr.mxu0 0.0
        %4165 = vmatpush1.msra.mxu0 0.0
        %4166 = vmatprep.subr.mxu0 0.0
        %4167 = vmatpush1.msra.mxu0 0.0
        %4168 = vmatprep.subr.mxu0 0.0
        %4169 = vmatpush1.msra.mxu0 0.0
        %4170 = vmatprep.subr.mxu0 0.0
        %4171 = vmatpush1.msra.mxu0 0.0
        %4172 = vmatprep.subr.mxu0 0.0
        %4173 = vmatpush1.msra.mxu0 0.0
        %4174 = vmatprep.subr.mxu0 0.0
        %4175 = vmatpush1.msra.mxu0 0.0
        %4176 = vmatprep.subr.mxu0 0.0
        %4177 = vmatpush1.msra.mxu0 0.0
        %4178 = vmatprep.subr.mxu0 0.0
        %4179 = vmatpush1.msra.mxu0 0.0
        %4180 = vmatprep.subr.mxu0 0.0
        %4181 = vmatpush1.msra.mxu0 0.0
        %4182 = vmatprep.subr.mxu0 0.0
        %4183 = vmatpush1.msra.mxu0 0.0
        %4184 = vmatprep.subr.mxu0 0.0
        %4185 = vmatpush1.msra.mxu0 0.0
        %4186 = vmatprep.subr.mxu0 0.0
        %4187 = vmatpush1.msra.mxu0 0.0
        %4188 = vmatprep.subr.mxu0 0.0
        %4189 = vmatpush1.msra.mxu0 0.0
        %4190 = vmatprep.subr.mxu0 0.0
        %4191 = vmatpush1.msra.mxu0 0.0
        %4192 = vmatprep.subr.mxu0 0.0
        %4193 = vmatpush1.msra.mxu0 0.0
        %4194 = vmatprep.subr.mxu0 0.0
        %4195 = vmatpush1.msra.mxu0 0.0
        %4196 = vmatprep.subr.mxu0 0.0
        %4197 = vmatpush1.msra.mxu0 0.0
        %4198 = vmatprep.subr.mxu0 0.0
        %4199 = vmatpush1.msra.mxu0 0.0
        %4200 = vmatprep.mubr.f32.mxu0 0.0
        %4201 = vmatmul.mubr.f32.gmra.mrb[0].mxu0 %v531
        %v4202 = vpop.f32.mrb[0].mxu0
        %v4203 = vadd.f32 0.0, %v4202
        %v4204 = vpop.f32.mrb[0].mxu0
        %4205 = vmatprep.mubr.f32.mxu0 0.0
        %4206 = vmatmul.mubr.f32.gmra.mrb[0].mxu0 %v534
        %v4207 = vpop.f32.mrb[0].mxu0
        %v4208 = vadd.f32 0.0, %v4207
        %v4209 = vpop.f32.mrb[0].mxu0
        %4210 = vdwg.mxu0
        %v4212 = vsel %vm225, %v3978, 0
        %4214 = vmatprep.subr.mxu0 0.0
        %4215 = vmatpush1.msra.mxu0 %v4212
        %4216 = vmatprep.subr.mxu0 0.0
        %4217 = vmatpush1.msra.mxu0 0.0
        %4218 = vmatprep.subr.mxu0 0.0
        %4219 = vmatpush1.msra.mxu0 0.0
        %4220 = vmatprep.subr.mxu0 0.0
        %4221 = vmatpush1.msra.mxu0 0.0
        %4222 = vmatprep.subr.mxu0 0.0
        %4223 = vmatpush1.msra.mxu0 0.0
        %4224 = vmatprep.subr.mxu0 0.0
        %4225 = vmatpush1.msra.mxu0 0.0
        %4226 = vmatprep.subr.mxu0 0.0
        %4227 = vmatpush1.msra.mxu0 0.0
        %4228 = vmatprep.subr.mxu0 0.0
        %4229 = vmatpush1.msra.mxu0 0.0
        %4230 = vmatprep.subr.mxu0 0.0
        %4231 = vmatpush1.msra.mxu0 0.0
        %4232 = vmatprep.subr.mxu0 0.0
        %4233 = vmatpush1.msra.mxu0 0.0
        %4234 = vmatprep.subr.mxu0 0.0
        %4235 = vmatpush1.msra.mxu0 0.0
        %4236 = vmatprep.subr.mxu0 0.0
        %4237 = vmatpush1.msra.mxu0 0.0
        %4238 = vmatprep.subr.mxu0 0.0
        %4239 = vmatpush1.msra.mxu0 0.0
        %4240 = vmatprep.subr.mxu0 0.0
        %4241 = vmatpush1.msra.mxu0 0.0
        %4242 = vmatprep.subr.mxu0 0.0
        %4243 = vmatpush1.msra.mxu0 0.0
        %4244 = vmatprep.subr.mxu0 0.0
        %4245 = vmatpush1.msra.mxu0 0.0
        %4246 = vmatprep.subr.mxu0 0.0
        %4247 = vmatpush1.msra.mxu0 0.0
        %4248 = vmatprep.subr.mxu0 0.0
        %4249 = vmatpush1.msra.mxu0 0.0
        %4250 = vmatprep.subr.mxu0 0.0
        %4251 = vmatpush1.msra.mxu0 0.0
        %4252 = vmatprep.subr.mxu0 0.0
        %4253 = vmatpush1.msra.mxu0 0.0
        %4254 = vmatprep.subr.mxu0 0.0
        %4255 = vmatpush1.msra.mxu0 0.0
        %4256 = vmatprep.subr.mxu0 0.0
        %4257 = vmatpush1.msra.mxu0 0.0
        %4258 = vmatprep.subr.mxu0 0.0
        %4259 = vmatpush1.msra.mxu0 0.0
        %4260 = vmatprep.subr.mxu0 0.0
        %4261 = vmatpush1.msra.mxu0 0.0
        %4262 = vmatprep.subr.mxu0 0.0
        %4263 = vmatpush1.msra.mxu0 0.0
        %4264 = vmatprep.subr.mxu0 0.0
        %4265 = vmatpush1.msra.mxu0 0.0
        %4266 = vmatprep.subr.mxu0 0.0
        %4267 = vmatpush1.msra.mxu0 0.0
        %4268 = vmatprep.subr.mxu0 0.0
        %4269 = vmatpush1.msra.mxu0 0.0
        %4270 = vmatprep.subr.mxu0 0.0
        %4271 = vmatpush1.msra.mxu0 0.0
        %4272 = vmatprep.subr.mxu0 0.0
        %4273 = vmatpush1.msra.mxu0 0.0
        %4274 = vmatprep.subr.mxu0 0.0
        %4275 = vmatpush1.msra.mxu0 0.0
        %4276 = vmatprep.subr.mxu0 0.0
        %4277 = vmatpush1.msra.mxu0 0.0
        %4278 = vmatprep.mubr.f32.mxu0 0.0
        %4279 = vmatmul.mubr.f32.gmra.mrb[0].mxu0 %v615
        %v4280 = vpop.f32.mrb[0].mxu0
        %v4281 = vadd.f32 %v4203, %v4280
        %v4282 = vpop.f32.mrb[0].mxu0
        %4283 = vmatprep.mubr.f32.mxu0 0.0
        %4284 = vmatmul.mubr.f32.gmra.mrb[0].mxu0 %v618
        %v4285 = vpop.f32.mrb[0].mxu0
        %v4286 = vadd.f32 %v4208, %v4285
        %v4287 = vpop.f32.mrb[0].mxu0
        %4288 = vdwg.mxu0
        %s4289 = sld [smem:[#allocation4]]
        %v4290 = vstv %s4289
        %v4291 = vmul.f32 %v690, %v4290
        %v4292 = vmul.f32 %v695, %v4290
        %s4293 = sld [smem:[#allocation4 + $0x80]]
        %v4294 = vstv %s4293
        %v4295 = vmul.f32 %v1203, %v4294
        %v4296 = vmul.f32 %v1208, %v4294
        %v4297 = vadd.f32 %v4291, %v4295
        %v4298 = vadd.f32 %v4292, %v4296
        %s4299 = sld [smem:[#allocation4 + $0x100]]
        %v4300 = vstv %s4299
        %v4301 = vmul.f32 %v1716, %v4300
        %v4302 = vmul.f32 %v1721, %v4300
        %v4303 = vadd.f32 %v4297, %v4301
        %v4304 = vadd.f32 %v4298, %v4302
        %s4305 = sld [smem:[#allocation4 + $0x180]]
        %v4306 = vstv %s4305
        %v4307 = vmul.f32 %v2229, %v4306
        %v4308 = vmul.f32 %v2234, %v4306
        %v4309 = vadd.f32 %v4303, %v4307
        %v4310 = vadd.f32 %v4304, %v4308
        %s4311 = sld [smem:[#allocation4 + $0x200]]
        %v4312 = vstv %s4311
        %v4313 = vmul.f32 %v2742, %v4312
        %v4314 = vmul.f32 %v2747, %v4312
        %v4315 = vadd.f32 %v4309, %v4313
        %v4316 = vadd.f32 %v4310, %v4314
        %s4317 = sld [smem:[#allocation4 + $0x280]]
        %v4318 = vstv %s4317
        %v4319 = vmul.f32 %v3255, %v4318
        %v4320 = vmul.f32 %v3260, %v4318
        %v4321 = vadd.f32 %v4315, %v4319
        %v4322 = vadd.f32 %v4316, %v4320
        %s4323 = sld [smem:[#allocation4 + $0x300]]
        %v4324 = vstv %s4323
        %v4325 = vmul.f32 %v3768, %v4324
        %v4326 = vmul.f32 %v3773, %v4324
        %v4327 = vadd.f32 %v4321, %v4325
        %v4328 = vadd.f32 %v4322, %v4326
        %s4329 = sld [smem:[#allocation4 + $0x380]]
        %v4330 = vstv %s4329
        %v4331 = vmul.f32 %v4281, %v4330
        %v4332 = vmul.f32 %v4286, %v4330
        %v4333 = vadd.f32 %v4327, %v4331
        %v4334 = vadd.f32 %v4328, %v4332
        %vm4335 = vcmask 113664
        %4336 = vst.msk [vmem:[%s144] sm:$0xff] %vm4335, %v4333
        %vm4337 = vcmask 111616
        %4338 = vst.msk [vmem:[%s144 + $0x8] sm:$0x3f] %vm4337, %v4334
        %s4339 = sld [smem:[#allocation4 + $0x1]]
        %v4340 = vstv %s4339
        %v4341 = vmul.f32 %v690, %v4340
        %v4342 = vmul.f32 %v695, %v4340
        %s4343 = sld [smem:[#allocation4 + $0x81]]
        %v4344 = vstv %s4343
        %v4345 = vmul.f32 %v1203, %v4344
        %v4346 = vmul.f32 %v1208, %v4344
        %v4347 = vadd.f32 %v4341, %v4345
        %v4348 = vadd.f32 %v4342, %v4346
        %s4349 = sld [smem:[#allocation4 + $0x101]]
        %v4350 = vstv %s4349
        %v4351 = vmul.f32 %v1716, %v4350
        %v4352 = vmul.f32 %v1721, %v4350
        %v4353 = vadd.f32 %v4347, %v4351
        %v4354 = vadd.f32 %v4348, %v4352
        %s4355 = sld [smem:[#allocation4 + $0x181]]
        %v4356 = vstv %s4355
        %v4357 = vmul.f32 %v2229, %v4356
        %v4358 = vmul.f32 %v2234, %v4356
        %v4359 = vadd.f32 %v4353, %v4357
        %v4360 = vadd.f32 %v4354, %v4358
        %s4361 = sld [smem:[#allocation4 + $0x201]]
        %v4362 = vstv %s4361
        %v4363 = vmul.f32 %v2742, %v4362
        %v4364 = vmul.f32 %v2747, %v4362
        %v4365 = vadd.f32 %v4359, %v4363
        %v4366 = vadd.f32 %v4360, %v4364
        %s4367 = sld [smem:[#allocation4 + $0x281]]
        %v4368 = vstv %s4367
        %v4369 = vmul.f32 %v3255, %v4368
        %v4370 = vmul.f32 %v3260, %v4368
        %v4371 = vadd.f32 %v4365, %v4369
        %v4372 = vadd.f32 %v4366, %v4370
        %s4373 = sld [smem:[#allocation4 + $0x301]]
        %v4374 = vstv %s4373
        %v4375 = vmul.f32 %v3768, %v4374
        %v4376 = vmul.f32 %v3773, %v4374
        %v4377 = vadd.f32 %v4371, %v4375
        %v4378 = vadd.f32 %v4372, %v4376
        %s4379 = sld [smem:[#allocation4 + $0x381]]
        %v4380 = vstv %s4379
        %v4381 = vmul.f32 %v4281, %v4380
        %v4382 = vmul.f32 %v4286, %v4380
        %v4383 = vadd.f32 %v4377, %v4381
        %v4384 = vadd.f32 %v4378, %v4382
        %s4385 = scalar_lea.vmem %s144, 16
        %4386 = vst.msk [vmem:[%s4385] sm:$0xff] %vm4335, %v4383
        %4387 = vst.msk [vmem:[%s4385 + $0x8] sm:$0x3f] %vm4337, %v4384
        %s4388 = sld [smem:[#allocation4 + $0x2]]
        %v4389 = vstv %s4388
        %v4390 = vmul.f32 %v690, %v4389
        %v4391 = vmul.f32 %v695, %v4389
        %s4392 = sld [smem:[#allocation4 + $0x82]]
        %v4393 = vstv %s4392
        %v4394 = vmul.f32 %v1203, %v4393
        %v4395 = vmul.f32 %v1208, %v4393
        %v4396 = vadd.f32 %v4390, %v4394
        %v4397 = vadd.f32 %v4391, %v4395
        %s4398 = sld [smem:[#allocation4 + $0x102]]
        %v4399 = vstv %s4398
        %v4400 = vmul.f32 %v1716, %v4399
        %v4401 = vmul.f32 %v1721, %v4399
        %v4402 = vadd.f32 %v4396, %v4400
        %v4403 = vadd.f32 %v4397, %v4401
        %s4404 = sld [smem:[#allocation4 + $0x182]]
        %v4405 = vstv %s4404
        %v4406 = vmul.f32 %v2229, %v4405
        %v4407 = vmul.f32 %v2234, %v4405
        %v4408 = vadd.f32 %v4402, %v4406
        %v4409 = vadd.f32 %v4403, %v4407
        %s4410 = sld [smem:[#allocation4 + $0x202]]
        %v4411 = vstv %s4410
        %v4412 = vmul.f32 %v2742, %v4411
        %v4413 = vmul.f32 %v2747, %v4411
        %v4414 = vadd.f32 %v4408, %v4412
        %v4415 = vadd.f32 %v4409, %v4413
        %s4416 = sld [smem:[#allocation4 + $0x282]]
        %v4417 = vstv %s4416
        %v4418 = vmul.f32 %v3255, %v4417
        %v4419 = vmul.f32 %v3260, %v4417
        %v4420 = vadd.f32 %v4414, %v4418
        %v4421 = vadd.f32 %v4415, %v4419
        %s4422 = sld [smem:[#allocation4 + $0x302]]
        %v4423 = vstv %s4422
        %v4424 = vmul.f32 %v3768, %v4423
        %v4425 = vmul.f32 %v3773, %v4423
        %v4426 = vadd.f32 %v4420, %v4424
        %v4427 = vadd.f32 %v4421, %v4425
        %s4428 = sld [smem:[#allocation4 + $0x382]]
        %v4429 = vstv %s4428
        %v4430 = vmul.f32 %v4281, %v4429
        %v4431 = vmul.f32 %v4286, %v4429
        %v4432 = vadd.f32 %v4426, %v4430
        %v4433 = vadd.f32 %v4427, %v4431
        %s4434 = scalar_lea.vmem %s144, 32
        %4435 = vst.msk [vmem:[%s4434] sm:$0xff] %vm4335, %v4432
        %4436 = vst.msk [vmem:[%s4434 + $0x8] sm:$0x3f] %vm4337, %v4433
        %s4437 = sld [smem:[#allocation4 + $0x3]]
        %v4438 = vstv %s4437
        %v4439 = vmul.f32 %v690, %v4438
        %v4440 = vmul.f32 %v695, %v4438
        %s4441 = sld [smem:[#allocation4 + $0x83]]
        %v4442 = vstv %s4441
        %v4443 = vmul.f32 %v1203, %v4442
        %v4444 = vmul.f32 %v1208, %v4442
        %v4445 = vadd.f32 %v4439, %v4443
        %v4446 = vadd.f32 %v4440, %v4444
        %s4447 = sld [smem:[#allocation4 + $0x103]]
        %v4448 = vstv %s4447
        %v4449 = vmul.f32 %v1716, %v4448
        %v4450 = vmul.f32 %v1721, %v4448
        %v4451 = vadd.f32 %v4445, %v4449
        %v4452 = vadd.f32 %v4446, %v4450
        %s4453 = sld [smem:[#allocation4 + $0x183]]
        %v4454 = vstv %s4453
        %v4455 = vmul.f32 %v2229, %v4454
        %v4456 = vmul.f32 %v2234, %v4454
        %v4457 = vadd.f32 %v4451, %v4455
        %v4458 = vadd.f32 %v4452, %v4456
        %s4459 = sld [smem:[#allocation4 + $0x203]]
        %v4460 = vstv %s4459
        %v4461 = vmul.f32 %v2742, %v4460
        %v4462 = vmul.f32 %v2747, %v4460
        %v4463 = vadd.f32 %v4457, %v4461
        %v4464 = vadd.f32 %v4458, %v4462
        %s4465 = sld [smem:[#allocation4 + $0x283]]
        %v4466 = vstv %s4465
        %v4467 = vmul.f32 %v3255, %v4466
        %v4468 = vmul.f32 %v3260, %v4466
        %v4469 = vadd.f32 %v4463, %v4467
        %v4470 = vadd.f32 %v4464, %v4468
        %s4471 = sld [smem:[#allocation4 + $0x303]]
        %v4472 = vstv %s4471
        %v4473 = vmul.f32 %v3768, %v4472
        %v4474 = vmul.f32 %v3773, %v4472
        %v4475 = vadd.f32 %v4469, %v4473
        %v4476 = vadd.f32 %v4470, %v4474
        %s4477 = sld [smem:[#allocation4 + $0x383]]
        %v4478 = vstv %s4477
        %v4479 = vmul.f32 %v4281, %v4478
        %v4480 = vmul.f32 %v4286, %v4478
        %v4481 = vadd.f32 %v4475, %v4479
        %v4482 = vadd.f32 %v4476, %v4480
        %s4483 = scalar_lea.vmem %s144, 48
        %4484 = vst.msk [vmem:[%s4483] sm:$0xff] %vm4335, %v4481
        %4485 = vst.msk [vmem:[%s4483 + $0x8] sm:$0x3f] %vm4337, %v4482
        %s4486 = sld [smem:[#allocation4 + $0x4]]
        %v4487 = vstv %s4486
        %v4488 = vmul.f32 %v690, %v4487
        %v4489 = vmul.f32 %v695, %v4487
        %s4490 = sld [smem:[#allocation4 + $0x84]]
        %v4491 = vstv %s4490
        %v4492 = vmul.f32 %v1203, %v4491
        %v4493 = vmul.f32 %v1208, %v4491
        %v4494 = vadd.f32 %v4488, %v4492
        %v4495 = vadd.f32 %v4489, %v4493
        %s4496 = sld [smem:[#allocation4 + $0x104]]
        %v4497 = vstv %s4496
        %v4498 = vmul.f32 %v1716, %v4497
        %v4499 = vmul.f32 %v1721, %v4497
        %v4500 = vadd.f32 %v4494, %v4498
        %v4501 = vadd.f32 %v4495, %v4499
        %s4502 = sld [smem:[#allocation4 + $0x184]]
        %v4503 = vstv %s4502
        %v4504 = vmul.f32 %v2229, %v4503
        %v4505 = vmul.f32 %v2234, %v4503
        %v4506 = vadd.f32 %v4500, %v4504
        %v4507 = vadd.f32 %v4501, %v4505
        %s4508 = sld [smem:[#allocation4 + $0x204]]
        %v4509 = vstv %s4508
        %v4510 = vmul.f32 %v2742, %v4509
        %v4511 = vmul.f32 %v2747, %v4509
        %v4512 = vadd.f32 %v4506, %v4510
        %v4513 = vadd.f32 %v4507, %v4511
        %s4514 = sld [smem:[#allocation4 + $0x284]]
        %v4515 = vstv %s4514
        %v4516 = vmul.f32 %v3255, %v4515
        %v4517 = vmul.f32 %v3260, %v4515
        %v4518 = vadd.f32 %v4512, %v4516
        %v4519 = vadd.f32 %v4513, %v4517
        %s4520 = sld [smem:[#allocation4 + $0x304]]
        %v4521 = vstv %s4520
        %v4522 = vmul.f32 %v3768, %v4521
        %v4523 = vmul.f32 %v3773, %v4521
        %v4524 = vadd.f32 %v4518, %v4522
        %v4525 = vadd.f32 %v4519, %v4523
        %s4526 = sld [smem:[#allocation4 + $0x384]]
        %v4527 = vstv %s4526
        %v4528 = vmul.f32 %v4281, %v4527
        %v4529 = vmul.f32 %v4286, %v4527
        %v4530 = vadd.f32 %v4524, %v4528
        %v4531 = vadd.f32 %v4525, %v4529
        %s4532 = scalar_lea.vmem %s144, 64
        %4533 = vst.msk [vmem:[%s4532] sm:$0xff] %vm4335, %v4530
        %4534 = vst.msk [vmem:[%s4532 + $0x8] sm:$0x3f] %vm4337, %v4531
        %s4535 = sld [smem:[#allocation4 + $0x5]]
        %v4536 = vstv %s4535
        %v4537 = vmul.f32 %v690, %v4536
        %v4538 = vmul.f32 %v695, %v4536
        %s4539 = sld [smem:[#allocation4 + $0x85]]
        %v4540 = vstv %s4539
        %v4541 = vmul.f32 %v1203, %v4540
        %v4542 = vmul.f32 %v1208, %v4540
        %v4543 = vadd.f32 %v4537, %v4541
        %v4544 = vadd.f32 %v4538, %v4542
        %s4545 = sld [smem:[#allocation4 + $0x105]]
        %v4546 = vstv %s4545
        %v4547 = vmul.f32 %v1716, %v4546
        %v4548 = vmul.f32 %v1721, %v4546
        %v4549 = vadd.f32 %v4543, %v4547
        %v4550 = vadd.f32 %v4544, %v4548
        %s4551 = sld [smem:[#allocation4 + $0x185]]
        %v4552 = vstv %s4551
        %v4553 = vmul.f32 %v2229, %v4552
        %v4554 = vmul.f32 %v2234, %v4552
        %v4555 = vadd.f32 %v4549, %v4553
        %v4556 = vadd.f32 %v4550, %v4554
        %s4557 = sld [smem:[#allocation4 + $0x205]]
        %v4558 = vstv %s4557
        %v4559 = vmul.f32 %v2742, %v4558
        %v4560 = vmul.f32 %v2747, %v4558
        %v4561 = vadd.f32 %v4555, %v4559
        %v4562 = vadd.f32 %v4556, %v4560
        %s4563 = sld [smem:[#allocation4 + $0x285]]
        %v4564 = vstv %s4563
        %v4565 = vmul.f32 %v3255, %v4564
        %v4566 = vmul.f32 %v3260, %v4564
        %v4567 = vadd.f32 %v4561, %v4565
        %v4568 = vadd.f32 %v4562, %v4566
        %s4569 = sld [smem:[#allocation4 + $0x305]]
        %v4570 = vstv %s4569
        %v4571 = vmul.f32 %v3768, %v4570
        %v4572 = vmul.f32 %v3773, %v4570
        %v4573 = vadd.f32 %v4567, %v4571
        %v4574 = vadd.f32 %v4568, %v4572
        %s4575 = sld [smem:[#allocation4 + $0x385]]
        %v4576 = vstv %s4575
        %v4577 = vmul.f32 %v4281, %v4576
        %v4578 = vmul.f32 %v4286, %v4576
        %v4579 = vadd.f32 %v4573, %v4577
        %v4580 = vadd.f32 %v4574, %v4578
        %s4581 = scalar_lea.vmem %s144, 80
        %4582 = vst.msk [vmem:[%s4581] sm:$0xff] %vm4335, %v4579
        %4583 = vst.msk [vmem:[%s4581 + $0x8] sm:$0x3f] %vm4337, %v4580
        %s4584 = sld [smem:[#allocation4 + $0x6]]
        %v4585 = vstv %s4584
        %v4586 = vmul.f32 %v690, %v4585
        %v4587 = vmul.f32 %v695, %v4585
        %s4588 = sld [smem:[#allocation4 + $0x86]]
        %v4589 = vstv %s4588
        %v4590 = vmul.f32 %v1203, %v4589
        %v4591 = vmul.f32 %v1208, %v4589
        %v4592 = vadd.f32 %v4586, %v4590
        %v4593 = vadd.f32 %v4587, %v4591
        %s4594 = sld [smem:[#allocation4 + $0x106]]
        %v4595 = vstv %s4594
        %v4596 = vmul.f32 %v1716, %v4595
        %v4597 = vmul.f32 %v1721, %v4595
        %v4598 = vadd.f32 %v4592, %v4596
        %v4599 = vadd.f32 %v4593, %v4597
        %s4600 = sld [smem:[#allocation4 + $0x186]]
        %v4601 = vstv %s4600
        %v4602 = vmul.f32 %v2229, %v4601
        %v4603 = vmul.f32 %v2234, %v4601
        %v4604 = vadd.f32 %v4598, %v4602
        %v4605 = vadd.f32 %v4599, %v4603
        %s4606 = sld [smem:[#allocation4 + $0x206]]
        %v4607 = vstv %s4606
        %v4608 = vmul.f32 %v2742, %v4607
        %v4609 = vmul.f32 %v2747, %v4607
        %v4610 = vadd.f32 %v4604, %v4608
        %v4611 = vadd.f32 %v4605, %v4609
        %s4612 = sld [smem:[#allocation4 + $0x286]]
        %v4613 = vstv %s4612
        %v4614 = vmul.f32 %v3255, %v4613
        %v4615 = vmul.f32 %v3260, %v4613
        %v4616 = vadd.f32 %v4610, %v4614
        %v4617 = vadd.f32 %v4611, %v4615
        %s4618 = sld [smem:[#allocation4 + $0x306]]
        %v4619 = vstv %s4618
        %v4620 = vmul.f32 %v3768, %v4619
        %v4621 = vmul.f32 %v3773, %v4619
        %v4622 = vadd.f32 %v4616, %v4620
        %v4623 = vadd.f32 %v4617, %v4621
        %s4624 = sld [smem:[#allocation4 + $0x386]]
        %v4625 = vstv %s4624
        %v4626 = vmul.f32 %v4281, %v4625
        %v4627 = vmul.f32 %v4286, %v4625
        %v4628 = vadd.f32 %v4622, %v4626
        %v4629 = vadd.f32 %v4623, %v4627
        %s4630 = scalar_lea.vmem %s144, 96
        %4631 = vst.msk [vmem:[%s4630] sm:$0xff] %vm4335, %v4628
        %4632 = vst.msk [vmem:[%s4630 + $0x8] sm:$0x3f] %vm4337, %v4629
        %s4633 = sld [smem:[#allocation4 + $0x7]]
        %v4634 = vstv %s4633
        %v4635 = vmul.f32 %v690, %v4634
        %v4636 = vmul.f32 %v695, %v4634
        %s4637 = sld [smem:[#allocation4 + $0x87]]
        %v4638 = vstv %s4637
        %v4639 = vmul.f32 %v1203, %v4638
        %v4640 = vmul.f32 %v1208, %v4638
        %v4641 = vadd.f32 %v4635, %v4639
        %v4642 = vadd.f32 %v4636, %v4640
        %s4643 = sld [smem:[#allocation4 + $0x107]]
        %v4644 = vstv %s4643
        %v4645 = vmul.f32 %v1716, %v4644
        %v4646 = vmul.f32 %v1721, %v4644
        %v4647 = vadd.f32 %v4641, %v4645
        %v4648 = vadd.f32 %v4642, %v4646
        %s4649 = sld [smem:[#allocation4 + $0x187]]
        %v4650 = vstv %s4649
        %v4651 = vmul.f32 %v2229, %v4650
        %v4652 = vmul.f32 %v2234, %v4650
        %v4653 = vadd.f32 %v4647, %v4651
        %v4654 = vadd.f32 %v4648, %v4652
        %s4655 = sld [smem:[#allocation4 + $0x207]]
        %v4656 = vstv %s4655
        %v4657 = vmul.f32 %v2742, %v4656
        %v4658 = vmul.f32 %v2747, %v4656
        %v4659 = vadd.f32 %v4653, %v4657
        %v4660 = vadd.f32 %v4654, %v4658
        %s4661 = sld [smem:[#allocation4 + $0x287]]
        %v4662 = vstv %s4661
        %v4663 = vmul.f32 %v3255, %v4662
        %v4664 = vmul.f32 %v3260, %v4662
        %v4665 = vadd.f32 %v4659, %v4663
        %v4666 = vadd.f32 %v4660, %v4664
        %s4667 = sld [smem:[#allocation4 + $0x307]]
        %v4668 = vstv %s4667
        %v4669 = vmul.f32 %v3768, %v4668
        %v4670 = vmul.f32 %v3773, %v4668
        %v4671 = vadd.f32 %v4665, %v4669
        %v4672 = vadd.f32 %v4666, %v4670
        %s4673 = sld [smem:[#allocation4 + $0x387]]
        %v4674 = vstv %s4673
        %v4675 = vmul.f32 %v4281, %v4674
        %v4676 = vmul.f32 %v4286, %v4674
        %v4677 = vadd.f32 %v4671, %v4675
        %v4678 = vadd.f32 %v4672, %v4676
        %s4679 = scalar_lea.vmem %s144, 112
        %4680 = vst.msk [vmem:[%s4679] sm:$0xff] %vm4335, %v4677
        %4681 = vst.msk [vmem:[%s4679 + $0x8] sm:$0x3f] %vm4337, %v4678
        %s4682 = sld [smem:[#allocation4 + $0x8]]
        %v4683 = vstv %s4682
        %v4684 = vmul.f32 %v690, %v4683
        %v4685 = vmul.f32 %v695, %v4683
        %s4686 = sld [smem:[#allocation4 + $0x88]]
        %v4687 = vstv %s4686
        %v4688 = vmul.f32 %v1203, %v4687
        %v4689 = vmul.f32 %v1208, %v4687
        %v4690 = vadd.f32 %v4684, %v4688
        %v4691 = vadd.f32 %v4685, %v4689
        %s4692 = sld [smem:[#allocation4 + $0x108]]
        %v4693 = vstv %s4692
        %v4694 = vmul.f32 %v1716, %v4693
        %v4695 = vmul.f32 %v1721, %v4693
        %v4696 = vadd.f32 %v4690, %v4694
        %v4697 = vadd.f32 %v4691, %v4695
        %s4698 = sld [smem:[#allocation4 + $0x188]]
        %v4699 = vstv %s4698
        %v4700 = vmul.f32 %v2229, %v4699
        %v4701 = vmul.f32 %v2234, %v4699
        %v4702 = vadd.f32 %v4696, %v4700
        %v4703 = vadd.f32 %v4697, %v4701
        %s4704 = sld [smem:[#allocation4 + $0x208]]
        %v4705 = vstv %s4704
        %v4706 = vmul.f32 %v2742, %v4705
        %v4707 = vmul.f32 %v2747, %v4705
        %v4708 = vadd.f32 %v4702, %v4706
        %v4709 = vadd.f32 %v4703, %v4707
        %s4710 = sld [smem:[#allocation4 + $0x288]]
        %v4711 = vstv %s4710
        %v4712 = vmul.f32 %v3255, %v4711
        %v4713 = vmul.f32 %v3260, %v4711
        %v4714 = vadd.f32 %v4708, %v4712
        %v4715 = vadd.f32 %v4709, %v4713
        %s4716 = sld [smem:[#allocation4 + $0x308]]
        %v4717 = vstv %s4716
        %v4718 = vmul.f32 %v3768, %v4717
        %v4719 = vmul.f32 %v3773, %v4717
        %v4720 = vadd.f32 %v4714, %v4718
        %v4721 = vadd.f32 %v4715, %v4719
        %s4722 = sld [smem:[#allocation4 + $0x388]]
        %v4723 = vstv %s4722
        %v4724 = vmul.f32 %v4281, %v4723
        %v4725 = vmul.f32 %v4286, %v4723
        %v4726 = vadd.f32 %v4720, %v4724
        %v4727 = vadd.f32 %v4721, %v4725
        %s4728 = scalar_lea.vmem %s144, 128
        %4729 = vst.msk [vmem:[%s4728] sm:$0xff] %vm4335, %v4726
        %4730 = vst.msk [vmem:[%s4728 + $0x8] sm:$0x3f] %vm4337, %v4727
        %s4731 = sld [smem:[#allocation4 + $0x9]]
        %v4732 = vstv %s4731
        %v4733 = vmul.f32 %v690, %v4732
        %v4734 = vmul.f32 %v695, %v4732
        %s4735 = sld [smem:[#allocation4 + $0x89]]
        %v4736 = vstv %s4735
        %v4737 = vmul.f32 %v1203, %v4736
        %v4738 = vmul.f32 %v1208, %v4736
        %v4739 = vadd.f32 %v4733, %v4737
        %v4740 = vadd.f32 %v4734, %v4738
        %s4741 = sld [smem:[#allocation4 + $0x109]]
        %v4742 = vstv %s4741
        %v4743 = vmul.f32 %v1716, %v4742
        %v4744 = vmul.f32 %v1721, %v4742
        %v4745 = vadd.f32 %v4739, %v4743
        %v4746 = vadd.f32 %v4740, %v4744
        %s4747 = sld [smem:[#allocation4 + $0x189]]
        %v4748 = vstv %s4747
        %v4749 = vmul.f32 %v2229, %v4748
        %v4750 = vmul.f32 %v2234, %v4748
        %v4751 = vadd.f32 %v4745, %v4749
        %v4752 = vadd.f32 %v4746, %v4750
        %s4753 = sld [smem:[#allocation4 + $0x209]]
        %v4754 = vstv %s4753
        %v4755 = vmul.f32 %v2742, %v4754
        %v4756 = vmul.f32 %v2747, %v4754
        %v4757 = vadd.f32 %v4751, %v4755
        %v4758 = vadd.f32 %v4752, %v4756
        %s4759 = sld [smem:[#allocation4 + $0x289]]
        %v4760 = vstv %s4759
        %v4761 = vmul.f32 %v3255, %v4760
        %v4762 = vmul.f32 %v3260, %v4760
        %v4763 = vadd.f32 %v4757, %v4761
        %v4764 = vadd.f32 %v4758, %v4762
        %s4765 = sld [smem:[#allocation4 + $0x309]]
        %v4766 = vstv %s4765
        %v4767 = vmul.f32 %v3768, %v4766
        %v4768 = vmul.f32 %v3773, %v4766
        %v4769 = vadd.f32 %v4763, %v4767
        %v4770 = vadd.f32 %v4764, %v4768
        %s4771 = sld [smem:[#allocation4 + $0x389]]
        %v4772 = vstv %s4771
        %v4773 = vmul.f32 %v4281, %v4772
        %v4774 = vmul.f32 %v4286, %v4772
        %v4775 = vadd.f32 %v4769, %v4773
        %v4776 = vadd.f32 %v4770, %v4774
        %s4777 = scalar_lea.vmem %s144, 144
        %4778 = vst.msk [vmem:[%s4777] sm:$0xff] %vm4335, %v4775
        %4779 = vst.msk [vmem:[%s4777 + $0x8] sm:$0x3f] %vm4337, %v4776
        %s4780 = sld [smem:[#allocation4 + $0xa]]
        %v4781 = vstv %s4780
        %v4782 = vmul.f32 %v690, %v4781
        %v4783 = vmul.f32 %v695, %v4781
        %s4784 = sld [smem:[#allocation4 + $0x8a]]
        %v4785 = vstv %s4784
        %v4786 = vmul.f32 %v1203, %v4785
        %v4787 = vmul.f32 %v1208, %v4785
        %v4788 = vadd.f32 %v4782, %v4786
        %v4789 = vadd.f32 %v4783, %v4787
        %s4790 = sld [smem:[#allocation4 + $0x10a]]
        %v4791 = vstv %s4790
        %v4792 = vmul.f32 %v1716, %v4791
        %v4793 = vmul.f32 %v1721, %v4791
        %v4794 = vadd.f32 %v4788, %v4792
        %v4795 = vadd.f32 %v4789, %v4793
        %s4796 = sld [smem:[#allocation4 + $0x18a]]
        %v4797 = vstv %s4796
        %v4798 = vmul.f32 %v2229, %v4797
        %v4799 = vmul.f32 %v2234, %v4797
        %v4800 = vadd.f32 %v4794, %v4798
        %v4801 = vadd.f32 %v4795, %v4799
        %s4802 = sld [smem:[#allocation4 + $0x20a]]
        %v4803 = vstv %s4802
        %v4804 = vmul.f32 %v2742, %v4803
        %v4805 = vmul.f32 %v2747, %v4803
        %v4806 = vadd.f32 %v4800, %v4804
        %v4807 = vadd.f32 %v4801, %v4805
        %s4808 = sld [smem:[#allocation4 + $0x28a]]
        %v4809 = vstv %s4808
        %v4810 = vmul.f32 %v3255, %v4809
        %v4811 = vmul.f32 %v3260, %v4809
        %v4812 = vadd.f32 %v4806, %v4810
        %v4813 = vadd.f32 %v4807, %v4811
        %s4814 = sld [smem:[#allocation4 + $0x30a]]
        %v4815 = vstv %s4814
        %v4816 = vmul.f32 %v3768, %v4815
        %v4817 = vmul.f32 %v3773, %v4815
        %v4818 = vadd.f32 %v4812, %v4816
        %v4819 = vadd.f32 %v4813, %v4817
        %s4820 = sld [smem:[#allocation4 + $0x38a]]
        %v4821 = vstv %s4820
        %v4822 = vmul.f32 %v4281, %v4821
        %v4823 = vmul.f32 %v4286, %v4821
        %v4824 = vadd.f32 %v4818, %v4822
        %v4825 = vadd.f32 %v4819, %v4823
        %s4826 = scalar_lea.vmem %s144, 160
        %4827 = vst.msk [vmem:[%s4826] sm:$0xff] %vm4335, %v4824
        %4828 = vst.msk [vmem:[%s4826 + $0x8] sm:$0x3f] %vm4337, %v4825
        %s4829 = sld [smem:[#allocation4 + $0xb]]
        %v4830 = vstv %s4829
        %v4831 = vmul.f32 %v690, %v4830
        %v4832 = vmul.f32 %v695, %v4830
        %s4833 = sld [smem:[#allocation4 + $0x8b]]
        %v4834 = vstv %s4833
        %v4835 = vmul.f32 %v1203, %v4834
        %v4836 = vmul.f32 %v1208, %v4834
        %v4837 = vadd.f32 %v4831, %v4835
        %v4838 = vadd.f32 %v4832, %v4836
        %s4839 = sld [smem:[#allocation4 + $0x10b]]
        %v4840 = vstv %s4839
        %v4841 = vmul.f32 %v1716, %v4840
        %v4842 = vmul.f32 %v1721, %v4840
        %v4843 = vadd.f32 %v4837, %v4841
        %v4844 = vadd.f32 %v4838, %v4842
        %s4845 = sld [smem:[#allocation4 + $0x18b]]
        %v4846 = vstv %s4845
        %v4847 = vmul.f32 %v2229, %v4846
        %v4848 = vmul.f32 %v2234, %v4846
        %v4849 = vadd.f32 %v4843, %v4847
        %v4850 = vadd.f32 %v4844, %v4848
        %s4851 = sld [smem:[#allocation4 + $0x20b]]
        %v4852 = vstv %s4851
        %v4853 = vmul.f32 %v2742, %v4852
        %v4854 = vmul.f32 %v2747, %v4852
        %v4855 = vadd.f32 %v4849, %v4853
        %v4856 = vadd.f32 %v4850, %v4854
        %s4857 = sld [smem:[#allocation4 + $0x28b]]
        %v4858 = vstv %s4857
        %v4859 = vmul.f32 %v3255, %v4858
        %v4860 = vmul.f32 %v3260, %v4858
        %v4861 = vadd.f32 %v4855, %v4859
        %v4862 = vadd.f32 %v4856, %v4860
        %s4863 = sld [smem:[#allocation4 + $0x30b]]
        %v4864 = vstv %s4863
        %v4865 = vmul.f32 %v3768, %v4864
        %v4866 = vmul.f32 %v3773, %v4864
        %v4867 = vadd.f32 %v4861, %v4865
        %v4868 = vadd.f32 %v4862, %v4866
        %s4869 = sld [smem:[#allocation4 + $0x38b]]
        %v4870 = vstv %s4869
        %v4871 = vmul.f32 %v4281, %v4870
        %v4872 = vmul.f32 %v4286, %v4870
        %v4873 = vadd.f32 %v4867, %v4871
        %v4874 = vadd.f32 %v4868, %v4872
        %s4875 = scalar_lea.vmem %s144, 176
        %4876 = vst.msk [vmem:[%s4875] sm:$0xff] %vm4335, %v4873
        %4877 = vst.msk [vmem:[%s4875 + $0x8] sm:$0x3f] %vm4337, %v4874
        %s4878 = sld [smem:[#allocation4 + $0xc]]
        %v4879 = vstv %s4878
        %v4880 = vmul.f32 %v690, %v4879
        %v4881 = vmul.f32 %v695, %v4879
        %s4882 = sld [smem:[#allocation4 + $0x8c]]
        %v4883 = vstv %s4882
        %v4884 = vmul.f32 %v1203, %v4883
        %v4885 = vmul.f32 %v1208, %v4883
        %v4886 = vadd.f32 %v4880, %v4884
        %v4887 = vadd.f32 %v4881, %v4885
        %s4888 = sld [smem:[#allocation4 + $0x10c]]
        %v4889 = vstv %s4888
        %v4890 = vmul.f32 %v1716, %v4889
        %v4891 = vmul.f32 %v1721, %v4889
        %v4892 = vadd.f32 %v4886, %v4890
        %v4893 = vadd.f32 %v4887, %v4891
        %s4894 = sld [smem:[#allocation4 + $0x18c]]
        %v4895 = vstv %s4894
        %v4896 = vmul.f32 %v2229, %v4895
        %v4897 = vmul.f32 %v2234, %v4895
        %v4898 = vadd.f32 %v4892, %v4896
        %v4899 = vadd.f32 %v4893, %v4897
        %s4900 = sld [smem:[#allocation4 + $0x20c]]
        %v4901 = vstv %s4900
        %v4902 = vmul.f32 %v2742, %v4901
        %v4903 = vmul.f32 %v2747, %v4901
        %v4904 = vadd.f32 %v4898, %v4902
        %v4905 = vadd.f32 %v4899, %v4903
        %s4906 = sld [smem:[#allocation4 + $0x28c]]
        %v4907 = vstv %s4906
        %v4908 = vmul.f32 %v3255, %v4907
        %v4909 = vmul.f32 %v3260, %v4907
        %v4910 = vadd.f32 %v4904, %v4908
        %v4911 = vadd.f32 %v4905, %v4909
        %s4912 = sld [smem:[#allocation4 + $0x30c]]
        %v4913 = vstv %s4912
        %v4914 = vmul.f32 %v3768, %v4913
        %v4915 = vmul.f32 %v3773, %v4913
        %v4916 = vadd.f32 %v4910, %v4914
        %v4917 = vadd.f32 %v4911, %v4915
        %s4918 = sld [smem:[#allocation4 + $0x38c]]
        %v4919 = vstv %s4918
        %v4920 = vmul.f32 %v4281, %v4919
        %v4921 = vmul.f32 %v4286, %v4919
        %v4922 = vadd.f32 %v4916, %v4920
        %v4923 = vadd.f32 %v4917, %v4921
        %s4924 = scalar_lea.vmem %s144, 192
        %4925 = vst.msk [vmem:[%s4924] sm:$0xff] %vm4335, %v4922
        %4926 = vst.msk [vmem:[%s4924 + $0x8] sm:$0x3f] %vm4337, %v4923
        %s4927 = sld [smem:[#allocation4 + $0xd]]
        %v4928 = vstv %s4927
        %v4929 = vmul.f32 %v690, %v4928
        %v4930 = vmul.f32 %v695, %v4928
        %s4931 = sld [smem:[#allocation4 + $0x8d]]
        %v4932 = vstv %s4931
        %v4933 = vmul.f32 %v1203, %v4932
        %v4934 = vmul.f32 %v1208, %v4932
        %v4935 = vadd.f32 %v4929, %v4933
        %v4936 = vadd.f32 %v4930, %v4934
        %s4937 = sld [smem:[#allocation4 + $0x10d]]
        %v4938 = vstv %s4937
        %v4939 = vmul.f32 %v1716, %v4938
        %v4940 = vmul.f32 %v1721, %v4938
        %v4941 = vadd.f32 %v4935, %v4939
        %v4942 = vadd.f32 %v4936, %v4940
        %s4943 = sld [smem:[#allocation4 + $0x18d]]
        %v4944 = vstv %s4943
        %v4945 = vmul.f32 %v2229, %v4944
        %v4946 = vmul.f32 %v2234, %v4944
        %v4947 = vadd.f32 %v4941, %v4945
        %v4948 = vadd.f32 %v4942, %v4946
        %s4949 = sld [smem:[#allocation4 + $0x20d]]
        %v4950 = vstv %s4949
        %v4951 = vmul.f32 %v2742, %v4950
        %v4952 = vmul.f32 %v2747, %v4950
        %v4953 = vadd.f32 %v4947, %v4951
        %v4954 = vadd.f32 %v4948, %v4952
        %s4955 = sld [smem:[#allocation4 + $0x28d]]
        %v4956 = vstv %s4955
        %v4957 = vmul.f32 %v3255, %v4956
        %v4958 = vmul.f32 %v3260, %v4956
        %v4959 = vadd.f32 %v4953, %v4957
        %v4960 = vadd.f32 %v4954, %v4958
        %s4961 = sld [smem:[#allocation4 + $0x30d]]
        %v4962 = vstv %s4961
        %v4963 = vmul.f32 %v3768, %v4962
        %v4964 = vmul.f32 %v3773, %v4962
        %v4965 = vadd.f32 %v4959, %v4963
        %v4966 = vadd.f32 %v4960, %v4964
        %s4967 = sld [smem:[#allocation4 + $0x38d]]
        %v4968 = vstv %s4967
        %v4969 = vmul.f32 %v4281, %v4968
        %v4970 = vmul.f32 %v4286, %v4968
        %v4971 = vadd.f32 %v4965, %v4969
        %v4972 = vadd.f32 %v4966, %v4970
        %s4973 = scalar_lea.vmem %s144, 208
        %4974 = vst.msk [vmem:[%s4973] sm:$0xff] %vm4335, %v4971
        %4975 = vst.msk [vmem:[%s4973 + $0x8] sm:$0x3f] %vm4337, %v4972
        %s4976 = sld [smem:[#allocation4 + $0xe]]
        %v4977 = vstv %s4976
        %v4978 = vmul.f32 %v690, %v4977
        %v4979 = vmul.f32 %v695, %v4977
        %s4980 = sld [smem:[#allocation4 + $0x8e]]
        %v4981 = vstv %s4980
        %v4982 = vmul.f32 %v1203, %v4981
        %v4983 = vmul.f32 %v1208, %v4981
        %v4984 = vadd.f32 %v4978, %v4982
        %v4985 = vadd.f32 %v4979, %v4983
        %s4986 = sld [smem:[#allocation4 + $0x10e]]
        %v4987 = vstv %s4986
        %v4988 = vmul.f32 %v1716, %v4987
        %v4989 = vmul.f32 %v1721, %v4987
        %v4990 = vadd.f32 %v4984, %v4988
        %v4991 = vadd.f32 %v4985, %v4989
        %s4992 = sld [smem:[#allocation4 + $0x18e]]
        %v4993 = vstv %s4992
        %v4994 = vmul.f32 %v2229, %v4993
        %v4995 = vmul.f32 %v2234, %v4993
        %v4996 = vadd.f32 %v4990, %v4994
        %v4997 = vadd.f32 %v4991, %v4995
        %s4998 = sld [smem:[#allocation4 + $0x20e]]
        %v4999 = vstv %s4998
        %v5000 = vmul.f32 %v2742, %v4999
        %v5001 = vmul.f32 %v2747, %v4999
        %v5002 = vadd.f32 %v4996, %v5000
        %v5003 = vadd.f32 %v4997, %v5001
        %s5004 = sld [smem:[#allocation4 + $0x28e]]
        %v5005 = vstv %s5004
        %v5006 = vmul.f32 %v3255, %v5005
        %v5007 = vmul.f32 %v3260, %v5005
        %v5008 = vadd.f32 %v5002, %v5006
        %v5009 = vadd.f32 %v5003, %v5007
        %s5010 = sld [smem:[#allocation4 + $0x30e]]
        %v5011 = vstv %s5010
        %v5012 = vmul.f32 %v3768, %v5011
        %v5013 = vmul.f32 %v3773, %v5011
        %v5014 = vadd.f32 %v5008, %v5012
        %v5015 = vadd.f32 %v5009, %v5013
        %s5016 = sld [smem:[#allocation4 + $0x38e]]
        %v5017 = vstv %s5016
        %v5018 = vmul.f32 %v4281, %v5017
        %v5019 = vmul.f32 %v4286, %v5017
        %v5020 = vadd.f32 %v5014, %v5018
        %v5021 = vadd.f32 %v5015, %v5019
        %s5022 = scalar_lea.vmem %s144, 224
        %5023 = vst.msk [vmem:[%s5022] sm:$0xff] %vm4335, %v5020
        %5024 = vst.msk [vmem:[%s5022 + $0x8] sm:$0x3f] %vm4337, %v5021
        %s5025 = sld [smem:[#allocation4 + $0xf]]
        %v5026 = vstv %s5025
        %v5027 = vmul.f32 %v690, %v5026
        %v5028 = vmul.f32 %v695, %v5026
        %s5029 = sld [smem:[#allocation4 + $0x8f]]
        %v5030 = vstv %s5029
        %v5031 = vmul.f32 %v1203, %v5030
        %v5032 = vmul.f32 %v1208, %v5030
        %v5033 = vadd.f32 %v5027, %v5031
        %v5034 = vadd.f32 %v5028, %v5032
        %s5035 = sld [smem:[#allocation4 + $0x10f]]
        %v5036 = vstv %s5035
        %v5037 = vmul.f32 %v1716, %v5036
        %v5038 = vmul.f32 %v1721, %v5036
        %v5039 = vadd.f32 %v5033, %v5037
        %v5040 = vadd.f32 %v5034, %v5038
        %s5041 = sld [smem:[#allocation4 + $0x18f]]
        %v5042 = vstv %s5041
        %v5043 = vmul.f32 %v2229, %v5042
        %v5044 = vmul.f32 %v2234, %v5042
        %v5045 = vadd.f32 %v5039, %v5043
        %v5046 = vadd.f32 %v5040, %v5044
        %s5047 = sld [smem:[#allocation4 + $0x20f]]
        %v5048 = vstv %s5047
        %v5049 = vmul.f32 %v2742, %v5048
        %v5050 = vmul.f32 %v2747, %v5048
        %v5051 = vadd.f32 %v5045, %v5049
        %v5052 = vadd.f32 %v5046, %v5050
        %s5053 = sld [smem:[#allocation4 + $0x28f]]
        %v5054 = vstv %s5053
        %v5055 = vmul.f32 %v3255, %v5054
        %v5056 = vmul.f32 %v3260, %v5054
        %v5057 = vadd.f32 %v5051, %v5055
        %v5058 = vadd.f32 %v5052, %v5056
        %s5059 = sld [smem:[#allocation4 + $0x30f]]
        %v5060 = vstv %s5059
        %v5061 = vmul.f32 %v3768, %v5060
        %v5062 = vmul.f32 %v3773, %v5060
        %v5063 = vadd.f32 %v5057, %v5061
        %v5064 = vadd.f32 %v5058, %v5062
        %s5065 = sld [smem:[#allocation4 + $0x38f]]
        %v5066 = vstv %s5065
        %v5067 = vmul.f32 %v4281, %v5066
        %v5068 = vmul.f32 %v4286, %v5066
        %v5069 = vadd.f32 %v5063, %v5067
        %v5070 = vadd.f32 %v5064, %v5068
        %s5071 = scalar_lea.vmem %s144, 240
        %5072 = vst.msk [vmem:[%s5071] sm:$0xff] %vm4335, %v5069
        %5073 = vst.msk [vmem:[%s5071 + $0x8] sm:$0x3f] %vm4337, %v5070
        %p5074 = scmp.lt.s32.totalorder %s23, 1
        %s5075 = scalar_select %p5074, %s23, 1
        %s5076 = smul.addr %s5075, 32
        %s5077 = smul.addr %s5076, 8
        %s5078 = scalar_lea.vmem %s3, %s5077
        // Predicated region
        $region29: #{tpu_custom_call.1} parent=23 // pred_check
          %p5079 = pneg %p67
        $region30: #{tpu_custom_call.1} parent=23 // pred_check_branch
          %5081 = sbr.rel (%p5079) target = $region32
        $region31: #{tpu_custom_call.1} parent=23 // pred_region
          _
        $region32: #{tpu_custom_call.1} parent=23 // pred_fallthru
          _
      $region24: #{tpu_custom_call.1} parent=5 // pred_fallthru
        _
      %p5082 = scmp.le.s32.totalorder 2, %s18
      // Predicated region
      $region33: #{tpu_custom_call.1} parent=5 // pred_check
        %p5083 = pneg %p5082
      $region34: #{tpu_custom_call.1} parent=5 // pred_check_branch
        %5085 = sbr.rel (%p5083) target = $region36
      $region35: #{tpu_custom_call.1} parent=5 // pred_region
        %s5086 = ssub.s32 %s18, 2
        // Predicated region
        $region37: #{tpu_custom_call.1} parent=35 // pred_check
          %p5087 = pneg %p73
        $region38: #{tpu_custom_call.1} parent=35 // pred_check_branch
          %5089 = sbr.rel (%p5087) target = $region40
        $region39: #{tpu_custom_call.1} parent=35 // pred_region
          %p5090 = scmp.lt.s32.totalorder %s24, 1
          %s5091 = scalar_select %p5090, %s24, 1
          %s5092 = smul.addr %s5091, 32
          %s5093 = smul.addr %s5092, 8
          %s5094 = scalar_lea.vmem %s3, %s5093
        $region40: #{tpu_custom_call.1} parent=35 // pred_fallthru
          _
      $region36: #{tpu_custom_call.1} parent=5 // pred_fallthru
        _
    $region6: #{tpu_custom_call.1} parent=1 // loop_footer
      %s22 = sadd.s32 1, %s18
    $region7: #{tpu_custom_call.1} parent=1 // loop_footer_branch
      %17 = sbr.rel target = $region3
    $region8: #{tpu_custom_call.1} parent=1 // loop_exit
      _
    %5095 = vsyncpa [#allocation6], 1
    %s5096 = scalar_lea.sflag [#allocation6], 1
    %5097 = vsyncpa %s5096, 1

</llo_original>
